<compile_context>
chip_gen: v6e
topology: v6e:2x2x1
jax: 0.10.0
libtpu: 0.0.40
codegen_flags: <defaults>
</compile_context>

<pallas_src>
import functools

import jax
import jax.numpy as jnp
from jax import lax
from jax.experimental import pallas as pl
from jax.experimental.pallas import tpu as pltpu

# ---- small, module-consistent sizes -----------------------------------------
H = 32          # hidden size
V = 64          # vocabulary size
T = 8           # input sequence length
L = 2           # n_layers (encoder & decoder)
MAX_LEN = 10    # greedy decode steps
SOS_TOKEN = 1   # decoder_input = ones(1,1) * 1
OUT_W = 128     # lane-padded output width for tokens/scores (sliced in wrapper)

_VMEM = pl.BlockSpec(memory_space=pltpu.MemorySpace.VMEM)

# static row offsets inside the packed bf16 weight slab (lane width = 6H = 192)
_R_W0 = 0                      # (2V, 6H) enc L0 input  (embedding folded, fwd|rev stacked on K)
_R_WHH0 = _R_W0 + 2 * V        # (2H, 6H) enc L0 hidden (block-diag over directions)
_R_W1 = _R_WHH0 + 2 * H        # (4H, 6H) enc L1 input  (fwd|rev stacked on K)
_R_WHH1 = _R_W1 + 4 * H        # (2H, 6H) enc L1 hidden
_R_DW0 = _R_WHH1 + 2 * H       # (V+H, 4H) dec L0 combined (embedding folded)
_R_DW1 = _R_DW0 + V + H        # (2H, 4H)  dec L1 combined
_R_WC = _R_DW1 + 2 * H         # (2H, H)   concat projection
_R_WO = _R_WC + 2 * H          # (H, V)    output projection
_W_ROWS = _R_WO + H            # 640 total slab rows


def _gru_cell_combined(g, h, H_):
    """GRU update from one combined (1, 4H) pre-activation:
       g[:, :2H]   = Wi_rz x + Wh_rz h + b_rz (summed)
       g[:, 2H:3H] = Wi_n x + bi_n
       g[:, 3H:4H] = Wh_n h + bh_n
    """
    rz = jax.nn.sigmoid(g[:, :2 * H_])
    r, z = rz[:, :H_], rz[:, H_:]
    n = jnp.tanh(g[:, 2 * H_:3 * H_] + r * g[:, 3 * H_:])
    return (1.0 - z) * n + z * h


# =============================================================================
# Fused kernel.
#   seq_ref : (T, 2) int32 — column 0 = token ids, column 1 = time-reversed ids
#   w_ref   : (640, 192) bf16 packed weight slab (row offsets above)
#   b_ref   : (8, 192) f32 packed bias slab
# outputs (lane-padded, sliced in the wrapper):
#   tokens_ref : (1, OUT_W) int32, scores_ref : (1, OUT_W) float32
# scratch:
#   x1_scr : (T, 4H) f32 — layer-1 fused input [x1(t) | x1(T-1-t)]
#   l1_scr : (T, 2H) f32 — layer-1 time-ordered [fwd | bwd] outputs
# =============================================================================
def greedy_kernel(seq_ref, w_ref, b_ref, tokens_ref, scores_ref,
                  x1_scr, l1_scr, *, ml):
    f32, bf16 = jnp.float32, jnp.bfloat16
    T_ = seq_ref.shape[0]
    H2, H4 = 2 * H, 4 * H

    # ============================ encoder ====================================
    # one-hot inputs (fwd + time-reversed) from the (T, 2) id matrix
    iota_tv = lax.broadcasted_iota(jnp.int32, (T_, V), 1)
    oh_f = (seq_ref[:, 0:1] == iota_tv).astype(f32).astype(bf16)    # (T, V)
    oh_b = (seq_ref[:, 1:2] == iota_tv).astype(f32).astype(bf16)    # (T, V)
    x0 = jnp.concatenate([oh_f, oh_b], axis=1)                      # (T, 2V)

    def run_layer(gi_step, r_whh, r_bhh, store_fn):
        """Fused fwd+bwd GRU recurrence; h = [h_fwd | h_bwd] (1, 2H).

        6H gate layout: [r_f r_b z_f z_b n_f n_b].  Row t of gi_step holds the
        fwd gates for time t and the bwd gates for time T-1-t.
        """
        h = jnp.zeros((1, H2), f32)
        for t in range(T_):                         # fully unrolled, static idx
            gi = gi_step[t:t + 1, :]                                  # (1, 6H)
            gh = jnp.dot(h.astype(bf16), w_ref[r_whh:r_whh + H2, :],
                         preferred_element_type=f32) + b_ref[r_bhh:r_bhh + 1, :]
            rz = jax.nn.sigmoid(gi[:, :H4] + gh[:, :H4])              # fused r/z
            r, z = rz[:, :H2], rz[:, H2:]
            n = jnp.tanh(gi[:, H4:] + r * gh[:, H4:])
            h = (1.0 - z) * n + z * h
            store_fn(t, h)
        return h

    # ----- layer 0 (input = token one-hots; embedding folded into the slab)
    gi0 = jnp.dot(x0, w_ref[_R_W0:_R_W0 + 2 * V, :],
                  preferred_element_type=f32) + b_ref[0:1, :]         # (T, 6H)

    def store_l0(t, h):
        hf, hb = h[:, :H], h[:, H:]
        # x1_scr row r = [x1(time r) | x1(time T-1-r)] so layer 1's fused
        # recurrence reads ONE lane-dense (T, 4H) input (no flips/concats).
        x1_scr[t:t + 1, 0:H] = hf                    # fwd output of time t
        x1_scr[T_ - 1 - t:T_ - t, H:H2] = hb         # bwd output of time T-1-t
        x1_scr[T_ - 1 - t:T_ - t, H2:H2 + H] = hf    # reversed copies
        x1_scr[t:t + 1, H2 + H:H4] = hb

    h_l0 = run_layer(gi0, _R_WHH0, 1, store_l0)

    # ----- layer 1
    gi1 = jnp.dot(x1_scr[...].astype(bf16), w_ref[_R_W1:_R_W1 + H4, :],
                  preferred_element_type=f32) + b_ref[2:3, :]         # (T, 6H)

    def store_l1(t, h):
        l1_scr[t:t + 1, 0:H] = h[:, :H]              # fwd, time-ordered
        l1_scr[T_ - 1 - t:T_ - t, H:H2] = h[:, H:]   # bwd, time-ordered

    run_layer(gi1, _R_WHH1, 3, store_l1)

    l1 = l1_scr[...]
    enc = l1[:, :H] + l1[:, H:]                      # (T, H) fwd + bwd sum

    # decoder_hidden = encoder_hidden[:n_layers] = [L0 fwd final, L0 bwd final]
    h0 = h_l0[:, :H]
    h1 = h_l0[:, H:]

    # ============================ decoder ====================================
    enc_t = enc.T.astype(bf16)                       # (H, T), transposed once
    # Fold the attention context into the concat projection:
    #   ctx_term = softmax(e) @ enc @ wc[H:2H] = (exp(e) @ enc_wc) / sum(exp(e))
    enc_wc = jnp.dot(enc.astype(bf16), w_ref[_R_WC + H:_R_WC + H2, 0:H],
                     preferred_element_type=f32).astype(bf16)         # (T, H)

    iota_v = lax.broadcasted_iota(jnp.int32, (1, V), 1)
    iota_o = lax.broadcasted_iota(jnp.int32, (1, tokens_ref.shape[1]), 1)
    onehot = (iota_v == SOS_TOKEN).astype(f32).astype(bf16)           # SOS token
    tok_vec = jnp.zeros((1, tokens_ref.shape[1]), jnp.int32)
    sc_vec = jnp.zeros((1, tokens_ref.shape[1]), f32)

    for step in range(ml):                           # fully unrolled decode
        # dec GRU layer 0 (token re-embedding folded into the combined weights)
        g0 = jnp.dot(jnp.concatenate([onehot, h0.astype(bf16)], axis=1),
                     w_ref[_R_DW0:_R_DW0 + V + H, 0:H4],
                     preferred_element_type=f32) + b_ref[4:5, 0:H4]
        h0 = _gru_cell_combined(g0, h0, H)
        # dec GRU layer 1
        g1 = jnp.dot(jnp.concatenate([h0.astype(bf16), h1.astype(bf16)], axis=1),
                     w_ref[_R_DW1:_R_DW1 + H2, 0:H4],
                     preferred_element_type=f32) + b_ref[5:6, 0:H4]
        h1 = _gru_cell_combined(g1, h1, H)
        rnn_bf = h1.astype(bf16)                                      # (1, H)

        # ---- Luong dot attention + concat projection (restructured: the two
        # dots below are independent; no (1,2H) lane concat, no lane-wide div)
        e = jnp.dot(rnn_bf, enc_t, preferred_element_type=f32)        # (1, T)
        ew = jnp.exp(e - jnp.max(e, axis=1, keepdims=True))
        inv_att = pl.reciprocal(jnp.sum(ew, axis=1, keepdims=True), approx=True)
        ctx_term = jnp.dot(ew.astype(bf16), enc_wc,
                           preferred_element_type=f32) * inv_att      # (1, H)
        rnn_term = jnp.dot(rnn_bf, w_ref[_R_WC:_R_WC + H, 0:H],
                           preferred_element_type=f32)                # (1, H)
        c = jnp.tanh(rnn_term + ctx_term + b_ref[6:7, 0:H])           # (1, H)

        # ---- output projection + greedy max (softmax prob never materialized)
        logits = jnp.dot(c.astype(bf16), w_ref[_R_WO:_R_WO + H, 0:V],
                         preferred_element_type=f32) + b_ref[7:8, 0:V]
        lmax = jnp.max(logits, axis=1, keepdims=True)
        ssum = jnp.sum(jnp.exp(logits - lmax), axis=1, keepdims=True)
        pmax = pl.reciprocal(ssum, approx=True)      # = max softmax probability
        idx = jnp.min(jnp.where(logits >= lmax, iota_v, V),
                      axis=1, keepdims=True)         # first-occurrence argmax

        tok_vec = jnp.where(iota_o == step, idx, tok_vec)
        sc_vec = jnp.where(iota_o == step, pmax, sc_vec)
        onehot = (iota_v == idx).astype(f32).astype(bf16)

    tokens_ref[...] = tok_vec                        # one lane-dense store each
    scores_ref[...] = sc_vec


# =============================================================================
# Host-side weight packing (runs inside the jitted wrapper)
# =============================================================================
def _pack_weights(p):
    f32 = jnp.float32

    def place_dir(w3, d):
        # (rows, 3H) [r|z|n] -> (rows, 6H) laid out [r_f r_b z_f z_b n_f n_b]
        zero = jnp.zeros((w3.shape[0], H), f32)
        r, z, n = w3[:, :H], w3[:, H:2 * H], w3[:, 2 * H:]
        if d == 0:
            return jnp.concatenate([r, zero, z, zero, n, zero], axis=1)
        return jnp.concatenate([zero, r, zero, z, zero, n], axis=1)

    def bias_cat(bf, bb):
        return jnp.concatenate([bf[:, :H], bb[:, :H],
                                bf[:, H:2 * H], bb[:, H:2 * H],
                                bf[:, 2 * H:], bb[:, 2 * H:]], axis=1)

    emb = p["emb"]
    # encoder layer 0 (input width H): fold the embedding into the input weights
    w0_stack = jnp.concatenate(
        [place_dir(emb @ p["e_wih"][0][:H, :], 0),
         place_dir(emb @ p["e_wih"][1][:H, :], 1)], axis=0)      # (2V, 6H)
    whh0 = jnp.concatenate([place_dir(p["e_whh"][0], 0),
                            place_dir(p["e_whh"][1], 1)], axis=0)  # (2H, 6H)
    # encoder layer 1 (input width 2H)
    w1_stack = jnp.concatenate([place_dir(p["e_wih"][2], 0),
                                place_dir(p["e_wih"][3], 1)], axis=0)  # (4H, 6H)
    whh1 = jnp.concatenate([place_dir(p["e_whh"][2], 0),
                            place_dir(p["e_whh"][3], 1)], axis=0)      # (2H, 6H)
    bih0 = bias_cat(p["e_bih"][0], p["e_bih"][1])
    bhh0 = bias_cat(p["e_bhh"][0], p["e_bhh"][1])
    bih1 = bias_cat(p["e_bih"][2], p["e_bih"][3])
    bhh1 = bias_cat(p["e_bhh"][2], p["e_bhh"][3])

    # decoder combined weights: cols [r|z (input+hidden summed at use), n_in, n_h]
    def combine(w_i, w_h):
        zi = jnp.zeros((w_i.shape[0], H), f32)
        zh = jnp.zeros((w_h.shape[0], H), f32)
        top = jnp.concatenate([w_i[:, :2 * H], w_i[:, 2 * H:], zi], axis=1)
        bot = jnp.concatenate([w_h[:, :2 * H], zh, w_h[:, 2 * H:]], axis=1)
        return jnp.concatenate([top, bot], axis=0)

    def combine_bias(b_i, b_h):
        return jnp.concatenate([b_i[:, :2 * H] + b_h[:, :2 * H],
                                b_i[:, 2 * H:], b_h[:, 2 * H:]], axis=1)

    d_w0 = combine(emb @ p["d_wih"][0], p["d_whh"][0])   # (V+H, 4H), emb folded
    d_b0 = combine_bias(p["d_bih"][0], p["d_bhh"][0])
    d_w1 = combine(p["d_wih"][1], p["d_whh"][1])         # (2H, 4H)
    d_b1 = combine_bias(p["d_bih"][1], p["d_bhh"][1])

    lw = 6 * H

    def pad_lanes(w):
        return jnp.pad(w, ((0, 0), (0, lw - w.shape[1])))

    w_slab = jnp.concatenate(
        [w0_stack, whh0, w1_stack, whh1,
         pad_lanes(d_w0), pad_lanes(d_w1),
         pad_lanes(p["wc"]), pad_lanes(p["wo"])], axis=0).astype(jnp.bfloat16)
    b_slab = jnp.concatenate(
        [bih0, bhh0, bih1, bhh1,
         pad_lanes(d_b0), pad_lanes(d_b1),
         pad_lanes(p["bc"]), pad_lanes(p["bo"])], axis=0).astype(f32)
    assert w_slab.shape == (_W_ROWS, lw) and b_slab.shape == (8, lw)
    return w_slab, b_slab


@functools.partial(jax.jit, static_argnames=("max_length",))
def greedy_search_decode(params, input_seq, input_length, max_length):
    # TODO(synk): pack_padded_sequence is a no-op here (batch=1, full length),
    # so input_length is accepted only for API parity.
    del input_length
    assert max_length <= OUT_W
    w_slab, b_slab = _pack_weights(params)
    seq = input_seq.astype(jnp.int32)
    seq2 = jnp.stack([seq, seq[::-1]], axis=1)           # (T, 2) fwd / reversed

    tokens, scores = pl.pallas_call(
        functools.partial(greedy_kernel, ml=max_length),
        out_shape=(jax.ShapeDtypeStruct((1, OUT_W), jnp.int32),
                   jax.ShapeDtypeStruct((1, OUT_W), jnp.float32)),
        in_specs=[_VMEM, _VMEM, _VMEM],
        out_specs=(_VMEM, _VMEM),
        scratch_shapes=[pltpu.VMEM((T, 4 * H), jnp.float32),
                        pltpu.VMEM((T, 2 * H), jnp.float32)],
    )(seq2, w_slab, b_slab)

    # PyTorch returns int64 tokens; int32 is used here (TPU-native).
    return tokens[0, :max_length], scores[0, :max_length]


def init_params(key):
    ks = jax.random.split(key, 13)
    s = 0.3
    emb = jax.random.normal(ks[0], (V, H), jnp.float32) * s
    # encoder bidirectional GRU, layer-major / direction-minor; layer-0 real
    # input width is H (only the first H rows are used).
    e_wih = jax.random.normal(ks[1], (2 * L, 2 * H, 3 * H), jnp.float32) * s
    e_whh = jax.random.normal(ks[2], (2 * L, H, 3 * H), jnp.float32) * s
    e_bih = jax.random.normal(ks[3], (2 * L, 1, 3 * H), jnp.float32) * s
    e_bhh = jax.random.normal(ks[4], (2 * L, 1, 3 * H), jnp.float32) * s
    # decoder unidirectional GRU (input size H everywhere)
    d_wih = jax.random.normal(ks[5], (L, H, 3 * H), jnp.float32) * s
    d_whh = jax.random.normal(ks[6], (L, H, 3 * H), jnp.float32) * s
    d_bih = jax.random.normal(ks[7], (L, 1, 3 * H), jnp.float32) * s
    d_bhh = jax.random.normal(ks[8], (L, 1, 3 * H), jnp.float32) * s
    # Luong attn "concat" Linear(2H -> H) and output Linear(H -> V)
    wc = jax.random.normal(ks[9], (2 * H, H), jnp.float32) * s
    bc = jax.random.normal(ks[10], (1, H), jnp.float32) * s
    wo = jax.random.normal(ks[11], (H, V), jnp.float32) * s
    bo = jax.random.normal(ks[12], (1, V), jnp.float32) * s
    return dict(emb=emb, e_wih=e_wih, e_whh=e_whh, e_bih=e_bih, e_bhh=e_bhh,
                d_wih=d_wih, d_whh=d_whh, d_bih=d_bih, d_bhh=d_bhh,
                wc=wc, bc=bc, wo=wo, bo=bo)


if __name__ == "__main__":
    key = jax.random.PRNGKey(0)
    pkey, ikey = jax.random.split(key)
    params = init_params(pkey)

    input_seq = jax.random.randint(ikey, (T,), 0, V, dtype=jnp.int32)
    input_length = jnp.array([T], jnp.int32)

    all_tokens, all_scores = greedy_search_decode(params, input_seq,
                                                  input_length, MAX_LEN)
    jax.block_until_ready((all_tokens, all_scores))

    assert all_tokens.shape == (MAX_LEN,) and all_tokens.dtype == jnp.int32
    assert all_scores.shape == (MAX_LEN,) and all_scores.dtype == jnp.float32
    assert bool(jnp.all((all_tokens >= 0) & (all_tokens < V)))
    # approx reciprocal may overshoot 1.0 by ~1e-4 when the softmax is peaked
    assert bool(jnp.all((all_scores > 0.0) & (all_scores <= 1.0 + 1e-3)))
    print("KERNEL_OK")
</pallas_src>

<mosaic_0001>
module attributes {stable_mosaic.version = 11 : i64} {
  func.func @greedy_kernel(%arg0: memref<8x2xi32, #tpu.memory_space<vmem>>, %arg1: memref<640x192xbf16, #tpu.memory_space<vmem>>, %arg2: memref<8x192xf32, #tpu.memory_space<vmem>>, %arg3: memref<1x128xi32, #tpu.memory_space<vmem>>, %arg4: memref<1x128xf32, #tpu.memory_space<vmem>>, %arg5: memref<8x128xf32, #tpu.memory_space<vmem>>, %arg6: memref<8x64xf32, #tpu.memory_space<vmem>>) attributes {dimension_semantics = [], scalar_prefetch = 0 : i64, scratch_operands = 2 : i64, tpu.core_type = #tpu.core_type<tc>} {
    %0 = tpu.iota {dimensions = array<i32: 1>} : vector<8x64xi32>
    %c0 = arith.constant 0 : index
    %c0_0 = arith.constant 0 : index
    %1 = vector.load %arg0[%c0, %c0_0] : memref<8x2xi32, #tpu.memory_space<vmem>>, vector<8x1xi32>
    %2 = vector.broadcast %1 : vector<8x1xi32> to vector<8x64xi32>
    %3 = arith.cmpi eq, %2, %0 : vector<8x64xi32>
    %4 = arith.extui %3 : vector<8x64xi1> to vector<8x64xi32>
    %5 = arith.sitofp %4 : vector<8x64xi32> to vector<8x64xf32>
    %6 = arith.truncf %5 : vector<8x64xf32> to vector<8x64xbf16>
    %c0_1 = arith.constant 0 : index
    %c1 = arith.constant 1 : index
    %7 = vector.load %arg0[%c0_1, %c1] : memref<8x2xi32, #tpu.memory_space<vmem>>, vector<8x1xi32>
    %8 = vector.broadcast %7 : vector<8x1xi32> to vector<8x64xi32>
    %9 = arith.cmpi eq, %8, %0 : vector<8x64xi32>
    %10 = arith.extui %9 : vector<8x64xi1> to vector<8x64xi32>
    %11 = arith.sitofp %10 : vector<8x64xi32> to vector<8x64xf32>
    %12 = arith.truncf %11 : vector<8x64xf32> to vector<8x64xbf16>
    %13 = tpu.concatenate %6, %12 in 1 : vector<8x64xbf16>, vector<8x64xbf16> -> vector<8x128xbf16>
    %c0_2 = arith.constant 0 : index
    %c0_3 = arith.constant 0 : index
    %14 = vector.load %arg1[%c0_2, %c0_3] : memref<640x192xbf16, #tpu.memory_space<vmem>>, vector<128x192xbf16>
    %cst = arith.constant dense<0.000000e+00> : vector<8x192xf32>
    %15 = tpu.matmul %13, %14, %cst {dimension_numbers = #tpu.dot_dimension_numbers<[1], [0], [0], [1], [0, 0, 1, 1], [], []>} : vector<8x128xbf16>, vector<128x192xbf16>, vector<8x192xf32> -> vector<8x192xf32>
    %c0_4 = arith.constant 0 : index
    %c0_5 = arith.constant 0 : index
    %16 = vector.load %arg2[%c0_4, %c0_5] : memref<8x192xf32, #tpu.memory_space<vmem>>, vector<1x192xf32>
    %17 = vector.broadcast %16 : vector<1x192xf32> to vector<8x192xf32>
    %18 = arith.addf %15, %17 : vector<8x192xf32>
    %cst_6 = arith.constant 0.000000e+00 : f32
    %19 = vector.broadcast %cst_6 : f32 to vector<1x64xf32>
    %20 = vector.extract_strided_slice %18 {offsets = [0, 0], sizes = [1, 192], strides = [1, 1]} : vector<8x192xf32> to vector<1x192xf32>
    %21 = arith.truncf %19 : vector<1x64xf32> to vector<1x64xbf16>
    %c128 = arith.constant 128 : index
    %c0_7 = arith.constant 0 : index
    %22 = vector.load %arg1[%c128, %c0_7] : memref<640x192xbf16, #tpu.memory_space<vmem>>, vector<64x192xbf16>
    %cst_8 = arith.constant dense<0.000000e+00> : vector<1x192xf32>
    %23 = tpu.matmul %21, %22, %cst_8 {dimension_numbers = #tpu.dot_dimension_numbers<[1], [0], [0], [1], [0, 0, 1, 1], [], []>} : vector<1x64xbf16>, vector<64x192xbf16>, vector<1x192xf32> -> vector<1x192xf32>
    %c1_9 = arith.constant 1 : index
    %c0_10 = arith.constant 0 : index
    %24 = vector.load %arg2[%c1_9, %c0_10] : memref<8x192xf32, #tpu.memory_space<vmem>>, vector<1x192xf32>
    %25 = arith.addf %23, %24 : vector<1x192xf32>
    %26 = vector.extract_strided_slice %20 {offsets = [0, 0], sizes = [1, 128], strides = [1, 1]} : vector<1x192xf32> to vector<1x128xf32>
    %27 = vector.extract_strided_slice %25 {offsets = [0, 0], sizes = [1, 128], strides = [1, 1]} : vector<1x192xf32> to vector<1x128xf32>
    %28 = arith.addf %26, %27 : vector<1x128xf32>
    %29 = arith.negf %28 : vector<1x128xf32>
    %30 = math.exp %29 : vector<1x128xf32>
    %cst_11 = arith.constant 1.000000e+00 : f32
    %31 = vector.broadcast %cst_11 : f32 to vector<1x128xf32>
    %32 = arith.addf %31, %30 : vector<1x128xf32>
    %33 = arith.divf %31, %32 : vector<1x128xf32>
    %34 = vector.extract_strided_slice %33 {offsets = [0, 0], sizes = [1, 64], strides = [1, 1]} : vector<1x128xf32> to vector<1x64xf32>
    %35 = vector.extract_strided_slice %33 {offsets = [0, 64], sizes = [1, 64], strides = [1, 1]} : vector<1x128xf32> to vector<1x64xf32>
    %36 = vector.extract_strided_slice %20 {offsets = [0, 128], sizes = [1, 64], strides = [1, 1]} : vector<1x192xf32> to vector<1x64xf32>
    %37 = vector.extract_strided_slice %25 {offsets = [0, 128], sizes = [1, 64], strides = [1, 1]} : vector<1x192xf32> to vector<1x64xf32>
    %38 = arith.mulf %34, %37 : vector<1x64xf32>
    %39 = arith.addf %36, %38 : vector<1x64xf32>
    %40 = math.tanh %39 : vector<1x64xf32>
    %cst_12 = arith.constant 1.000000e+00 : f32
    %41 = vector.broadcast %cst_12 : f32 to vector<1x64xf32>
    %42 = arith.subf %41, %35 : vector<1x64xf32>
    %43 = arith.mulf %42, %40 : vector<1x64xf32>
    %44 = arith.mulf %35, %19 : vector<1x64xf32>
    %45 = arith.addf %43, %44 : vector<1x64xf32>
    %46 = vector.extract_strided_slice %45 {offsets = [0, 0], sizes = [1, 32], strides = [1, 1]} : vector<1x64xf32> to vector<1x32xf32>
    %47 = vector.extract_strided_slice %45 {offsets = [0, 32], sizes = [1, 32], strides = [1, 1]} : vector<1x64xf32> to vector<1x32xf32>
    %c0_13 = arith.constant 0 : index
    %c0_14 = arith.constant 0 : index
    %48 = vector.load %arg5[%c0_13, %c0_14] : memref<8x128xf32, #tpu.memory_space<vmem>>, vector<1x32xf32>
    tpu.vector_store %arg5[%c0_13, %c0_14], %46 {strides = array<i32>} : memref<8x128xf32, #tpu.memory_space<vmem>>, vector<1x32xf32>,
    %c7 = arith.constant 7 : index
    %c32 = arith.constant 32 : index
    %49 = vector.load %arg5[%c7, %c32] : memref<8x128xf32, #tpu.memory_space<vmem>>, vector<1x32xf32>
    tpu.vector_store %arg5[%c7, %c32], %47 {strides = array<i32>} : memref<8x128xf32, #tpu.memory_space<vmem>>, vector<1x32xf32>,
    %c7_15 = arith.constant 7 : index
    %c64 = arith.constant 64 : index
    %50 = vector.load %arg5[%c7_15, %c64] : memref<8x128xf32, #tpu.memory_space<vmem>>, vector<1x32xf32>
    tpu.vector_store %arg5[%c7_15, %c64], %46 {strides = array<i32>} : memref<8x128xf32, #tpu.memory_space<vmem>>, vector<1x32xf32>,
    %c0_16 = arith.constant 0 : index
    %c96 = arith.constant 96 : index
    %51 = vector.load %arg5[%c0_16, %c96] : memref<8x128xf32, #tpu.memory_space<vmem>>, vector<1x32xf32>
    tpu.vector_store %arg5[%c0_16, %c96], %47 {strides = array<i32>} : memref<8x128xf32, #tpu.memory_space<vmem>>, vector<1x32xf32>,
    %52 = vector.extract_strided_slice %18 {offsets = [1, 0], sizes = [1, 192], strides = [1, 1]} : vector<8x192xf32> to vector<1x192xf32>
    %53 = arith.truncf %45 : vector<1x64xf32> to vector<1x64xbf16>
    %c128_17 = arith.constant 128 : index
    %c0_18 = arith.constant 0 : index
    %54 = vector.load %arg1[%c128_17, %c0_18] : memref<640x192xbf16, #tpu.memory_space<vmem>>, vector<64x192xbf16>
    %cst_19 = arith.constant dense<0.000000e+00> : vector<1x192xf32>
    %55 = tpu.matmul %53, %54, %cst_19 {dimension_numbers = #tpu.dot_dimension_numbers<[1], [0], [0], [1], [0, 0, 1, 1], [], []>} : vector<1x64xbf16>, vector<64x192xbf16>, vector<1x192xf32> -> vector<1x192xf32>
    %c1_20 = arith.constant 1 : index
    %c0_21 = arith.constant 0 : index
    %56 = vector.load %arg2[%c1_20, %c0_21] : memref<8x192xf32, #tpu.memory_space<vmem>>, vector<1x192xf32>
    %57 = arith.addf %55, %56 : vector<1x192xf32>
    %58 = vector.extract_strided_slice %52 {offsets = [0, 0], sizes = [1, 128], strides = [1, 1]} : vector<1x192xf32> to vector<1x128xf32>
    %59 = vector.extract_strided_slice %57 {offsets = [0, 0], sizes = [1, 128], strides = [1, 1]} : vector<1x192xf32> to vector<1x128xf32>
    %60 = arith.addf %58, %59 : vector<1x128xf32>
    %61 = arith.negf %60 : vector<1x128xf32>
    %62 = math.exp %61 : vector<1x128xf32>
    %cst_22 = arith.constant 1.000000e+00 : f32
    %63 = vector.broadcast %cst_22 : f32 to vector<1x128xf32>
    %64 = arith.addf %63, %62 : vector<1x128xf32>
    %65 = arith.divf %63, %64 : vector<1x128xf32>
    %66 = vector.extract_strided_slice %65 {offsets = [0, 0], sizes = [1, 64], strides = [1, 1]} : vector<1x128xf32> to vector<1x64xf32>
    %67 = vector.extract_strided_slice %65 {offsets = [0, 64], sizes = [1, 64], strides = [1, 1]} : vector<1x128xf32> to vector<1x64xf32>
    %68 = vector.extract_strided_slice %52 {offsets = [0, 128], sizes = [1, 64], strides = [1, 1]} : vector<1x192xf32> to vector<1x64xf32>
    %69 = vector.extract_strided_slice %57 {offsets = [0, 128], sizes = [1, 64], strides = [1, 1]} : vector<1x192xf32> to vector<1x64xf32>
    %70 = arith.mulf %66, %69 : vector<1x64xf32>
    %71 = arith.addf %68, %70 : vector<1x64xf32>
    %72 = math.tanh %71 : vector<1x64xf32>
    %cst_23 = arith.constant 1.000000e+00 : f32
    %73 = vector.broadcast %cst_23 : f32 to vector<1x64xf32>
    %74 = arith.subf %73, %67 : vector<1x64xf32>
    %75 = arith.mulf %74, %72 : vector<1x64xf32>
    %76 = arith.mulf %67, %45 : vector<1x64xf32>
    %77 = arith.addf %75, %76 : vector<1x64xf32>
    %78 = vector.extract_strided_slice %77 {offsets = [0, 0], sizes = [1, 32], strides = [1, 1]} : vector<1x64xf32> to vector<1x32xf32>
    %79 = vector.extract_strided_slice %77 {offsets = [0, 32], sizes = [1, 32], strides = [1, 1]} : vector<1x64xf32> to vector<1x32xf32>
    %c1_24 = arith.constant 1 : index
    %c0_25 = arith.constant 0 : index
    %80 = vector.load %arg5[%c1_24, %c0_25] : memref<8x128xf32, #tpu.memory_space<vmem>>, vector<1x32xf32>
    tpu.vector_store %arg5[%c1_24, %c0_25], %78 {strides = array<i32>} : memref<8x128xf32, #tpu.memory_space<vmem>>, vector<1x32xf32>,
    %c6 = arith.constant 6 : index
    %c32_26 = arith.constant 32 : index
    %81 = vector.load %arg5[%c6, %c32_26] : memref<8x128xf32, #tpu.memory_space<vmem>>, vector<1x32xf32>
    tpu.vector_store %arg5[%c6, %c32_26], %79 {strides = array<i32>} : memref<8x128xf32, #tpu.memory_space<vmem>>, vector<1x32xf32>,
    %c6_27 = arith.constant 6 : index
    %c64_28 = arith.constant 64 : index
    %82 = vector.load %arg5[%c6_27, %c64_28] : memref<8x128xf32, #tpu.memory_space<vmem>>, vector<1x32xf32>
    tpu.vector_store %arg5[%c6_27, %c64_28], %78 {strides = array<i32>} : memref<8x128xf32, #tpu.memory_space<vmem>>, vector<1x32xf32>,
    %c1_29 = arith.constant 1 : index
    %c96_30 = arith.constant 96 : index
    %83 = vector.load %arg5[%c1_29, %c96_30] : memref<8x128xf32, #tpu.memory_space<vmem>>, vector<1x32xf32>
    tpu.vector_store %arg5[%c1_29, %c96_30], %79 {strides = array<i32>} : memref<8x128xf32, #tpu.memory_space<vmem>>, vector<1x32xf32>,
    %84 = vector.extract_strided_slice %18 {offsets = [2, 0], sizes = [1, 192], strides = [1, 1]} : vector<8x192xf32> to vector<1x192xf32>
    %85 = arith.truncf %77 : vector<1x64xf32> to vector<1x64xbf16>
    %c128_31 = arith.constant 128 : index
    %c0_32 = arith.constant 0 : index
    %86 = vector.load %arg1[%c128_31, %c0_32] : memref<640x192xbf16, #tpu.memory_space<vmem>>, vector<64x192xbf16>
    %cst_33 = arith.constant dense<0.000000e+00> : vector<1x192xf32>
    %87 = tpu.matmul %85, %86, %cst_33 {dimension_numbers = #tpu.dot_dimension_numbers<[1], [0], [0], [1], [0, 0, 1, 1], [], []>} : vector<1x64xbf16>, vector<64x192xbf16>, vector<1x192xf32> -> vector<1x192xf32>
    %c1_34 = arith.constant 1 : index
    %c0_35 = arith.constant 0 : index
    %88 = vector.load %arg2[%c1_34, %c0_35] : memref<8x192xf32, #tpu.memory_space<vmem>>, vector<1x192xf32>
    %89 = arith.addf %87, %88 : vector<1x192xf32>
    %90 = vector.extract_strided_slice %84 {offsets = [0, 0], sizes = [1, 128], strides = [1, 1]} : vector<1x192xf32> to vector<1x128xf32>
    %91 = vector.extract_strided_slice %89 {offsets = [0, 0], sizes = [1, 128], strides = [1, 1]} : vector<1x192xf32> to vector<1x128xf32>
    %92 = arith.addf %90, %91 : vector<1x128xf32>
    %93 = arith.negf %92 : vector<1x128xf32>
    %94 = math.exp %93 : vector<1x128xf32>
    %cst_36 = arith.constant 1.000000e+00 : f32
    %95 = vector.broadcast %cst_36 : f32 to vector<1x128xf32>
    %96 = arith.addf %95, %94 : vector<1x128xf32>
    %97 = arith.divf %95, %96 : vector<1x128xf32>
    %98 = vector.extract_strided_slice %97 {offsets = [0, 0], sizes = [1, 64], strides = [1, 1]} : vector<1x128xf32> to vector<1x64xf32>
    %99 = vector.extract_strided_slice %97 {offsets = [0, 64], sizes = [1, 64], strides = [1, 1]} : vector<1x128xf32> to vector<1x64xf32>
    %100 = vector.extract_strided_slice %84 {offsets = [0, 128], sizes = [1, 64], strides = [1, 1]} : vector<1x192xf32> to vector<1x64xf32>
    %101 = vector.extract_strided_slice %89 {offsets = [0, 128], sizes = [1, 64], strides = [1, 1]} : vector<1x192xf32> to vector<1x64xf32>
    %102 = arith.mulf %98, %101 : vector<1x64xf32>
    %103 = arith.addf %100, %102 : vector<1x64xf32>
    %104 = math.tanh %103 : vector<1x64xf32>
    %cst_37 = arith.constant 1.000000e+00 : f32
    %105 = vector.broadcast %cst_37 : f32 to vector<1x64xf32>
    %106 = arith.subf %105, %99 : vector<1x64xf32>
    %107 = arith.mulf %106, %104 : vector<1x64xf32>
    %108 = arith.mulf %99, %77 : vector<1x64xf32>
    %109 = arith.addf %107, %108 : vector<1x64xf32>
    %110 = vector.extract_strided_slice %109 {offsets = [0, 0], sizes = [1, 32], strides = [1, 1]} : vector<1x64xf32> to vector<1x32xf32>
    %111 = vector.extract_strided_slice %109 {offsets = [0, 32], sizes = [1, 32], strides = [1, 1]} : vector<1x64xf32> to vector<1x32xf32>
    %c2 = arith.constant 2 : index
    %c0_38 = arith.constant 0 : index
    %112 = vector.load %arg5[%c2, %c0_38] : memref<8x128xf32, #tpu.memory_space<vmem>>, vector<1x32xf32>
    tpu.vector_store %arg5[%c2, %c0_38], %110 {strides = array<i32>} : memref<8x128xf32, #tpu.memory_space<vmem>>, vector<1x32xf32>,
    %c5 = arith.constant 5 : index
    %c32_39 = arith.constant 32 : index
    %113 = vector.load %arg5[%c5, %c32_39] : memref<8x128xf32, #tpu.memory_space<vmem>>, vector<1x32xf32>
    tpu.vector_store %arg5[%c5, %c32_39], %111 {strides = array<i32>} : memref<8x128xf32, #tpu.memory_space<vmem>>, vector<1x32xf32>,
    %c5_40 = arith.constant 5 : index
    %c64_41 = arith.constant 64 : index
    %114 = vector.load %arg5[%c5_40, %c64_41] : memref<8x128xf32, #tpu.memory_space<vmem>>, vector<1x32xf32>
    tpu.vector_store %arg5[%c5_40, %c64_41], %110 {strides = array<i32>} : memref<8x128xf32, #tpu.memory_space<vmem>>, vector<1x32xf32>,
    %c2_42 = arith.constant 2 : index
    %c96_43 = arith.constant 96 : index
    %115 = vector.load %arg5[%c2_42, %c96_43] : memref<8x128xf32, #tpu.memory_space<vmem>>, vector<1x32xf32>
    tpu.vector_store %arg5[%c2_42, %c96_43], %111 {strides = array<i32>} : memref<8x128xf32, #tpu.memory_space<vmem>>, vector<1x32xf32>,
    %116 = vector.extract_strided_slice %18 {offsets = [3, 0], sizes = [1, 192], strides = [1, 1]} : vector<8x192xf32> to vector<1x192xf32>
    %117 = arith.truncf %109 : vector<1x64xf32> to vector<1x64xbf16>
    %c128_44 = arith.constant 128 : index
    %c0_45 = arith.constant 0 : index
    %118 = vector.load %arg1[%c128_44, %c0_45] : memref<640x192xbf16, #tpu.memory_space<vmem>>, vector<64x192xbf16>
    %cst_46 = arith.constant dense<0.000000e+00> : vector<1x192xf32>
    %119 = tpu.matmul %117, %118, %cst_46 {dimension_numbers = #tpu.dot_dimension_numbers<[1], [0], [0], [1], [0, 0, 1, 1], [], []>} : vector<1x64xbf16>, vector<64x192xbf16>, vector<1x192xf32> -> vector<1x192xf32>
    %c1_47 = arith.constant 1 : index
    %c0_48 = arith.constant 0 : index
    %120 = vector.load %arg2[%c1_47, %c0_48] : memref<8x192xf32, #tpu.memory_space<vmem>>, vector<1x192xf32>
    %121 = arith.addf %119, %120 : vector<1x192xf32>
    %122 = vector.extract_strided_slice %116 {offsets = [0, 0], sizes = [1, 128], strides = [1, 1]} : vector<1x192xf32> to vector<1x128xf32>
    %123 = vector.extract_strided_slice %121 {offsets = [0, 0], sizes = [1, 128], strides = [1, 1]} : vector<1x192xf32> to vector<1x128xf32>
    %124 = arith.addf %122, %123 : vector<1x128xf32>
    %125 = arith.negf %124 : vector<1x128xf32>
    %126 = math.exp %125 : vector<1x128xf32>
    %cst_49 = arith.constant 1.000000e+00 : f32
    %127 = vector.broadcast %cst_49 : f32 to vector<1x128xf32>
    %128 = arith.addf %127, %126 : vector<1x128xf32>
    %129 = arith.divf %127, %128 : vector<1x128xf32>
    %130 = vector.extract_strided_slice %129 {offsets = [0, 0], sizes = [1, 64], strides = [1, 1]} : vector<1x128xf32> to vector<1x64xf32>
    %131 = vector.extract_strided_slice %129 {offsets = [0, 64], sizes = [1, 64], strides = [1, 1]} : vector<1x128xf32> to vector<1x64xf32>
    %132 = vector.extract_strided_slice %116 {offsets = [0, 128], sizes = [1, 64], strides = [1, 1]} : vector<1x192xf32> to vector<1x64xf32>
    %133 = vector.extract_strided_slice %121 {offsets = [0, 128], sizes = [1, 64], strides = [1, 1]} : vector<1x192xf32> to vector<1x64xf32>
    %134 = arith.mulf %130, %133 : vector<1x64xf32>
    %135 = arith.addf %132, %134 : vector<1x64xf32>
    %136 = math.tanh %135 : vector<1x64xf32>
    %cst_50 = arith.constant 1.000000e+00 : f32
    %137 = vector.broadcast %cst_50 : f32 to vector<1x64xf32>
    %138 = arith.subf %137, %131 : vector<1x64xf32>
    %139 = arith.mulf %138, %136 : vector<1x64xf32>
    %140 = arith.mulf %131, %109 : vector<1x64xf32>
    %141 = arith.addf %139, %140 : vector<1x64xf32>
    %142 = vector.extract_strided_slice %141 {offsets = [0, 0], sizes = [1, 32], strides = [1, 1]} : vector<1x64xf32> to vector<1x32xf32>
    %143 = vector.extract_strided_slice %141 {offsets = [0, 32], sizes = [1, 32], strides = [1, 1]} : vector<1x64xf32> to vector<1x32xf32>
    %c3 = arith.constant 3 : index
    %c0_51 = arith.constant 0 : index
    %144 = vector.load %arg5[%c3, %c0_51] : memref<8x128xf32, #tpu.memory_space<vmem>>, vector<1x32xf32>
    tpu.vector_store %arg5[%c3, %c0_51], %142 {strides = array<i32>} : memref<8x128xf32, #tpu.memory_space<vmem>>, vector<1x32xf32>,
    %c4 = arith.constant 4 : index
    %c32_52 = arith.constant 32 : index
    %145 = vector.load %arg5[%c4, %c32_52] : memref<8x128xf32, #tpu.memory_space<vmem>>, vector<1x32xf32>
    tpu.vector_store %arg5[%c4, %c32_52], %143 {strides = array<i32>} : memref<8x128xf32, #tpu.memory_space<vmem>>, vector<1x32xf32>,
    %c4_53 = arith.constant 4 : index
    %c64_54 = arith.constant 64 : index
    %146 = vector.load %arg5[%c4_53, %c64_54] : memref<8x128xf32, #tpu.memory_space<vmem>>, vector<1x32xf32>
    tpu.vector_store %arg5[%c4_53, %c64_54], %142 {strides = array<i32>} : memref<8x128xf32, #tpu.memory_space<vmem>>, vector<1x32xf32>,
    %c3_55 = arith.constant 3 : index
    %c96_56 = arith.constant 96 : index
    %147 = vector.load %arg5[%c3_55, %c96_56] : memref<8x128xf32, #tpu.memory_space<vmem>>, vector<1x32xf32>
    tpu.vector_store %arg5[%c3_55, %c96_56], %143 {strides = array<i32>} : memref<8x128xf32, #tpu.memory_space<vmem>>, vector<1x32xf32>,
    %148 = vector.extract_strided_slice %18 {offsets = [4, 0], sizes = [1, 192], strides = [1, 1]} : vector<8x192xf32> to vector<1x192xf32>
    %149 = arith.truncf %141 : vector<1x64xf32> to vector<1x64xbf16>
    %c128_57 = arith.constant 128 : index
    %c0_58 = arith.constant 0 : index
    %150 = vector.load %arg1[%c128_57, %c0_58] : memref<640x192xbf16, #tpu.memory_space<vmem>>, vector<64x192xbf16>
    %cst_59 = arith.constant dense<0.000000e+00> : vector<1x192xf32>
    %151 = tpu.matmul %149, %150, %cst_59 {dimension_numbers = #tpu.dot_dimension_numbers<[1], [0], [0], [1], [0, 0, 1, 1], [], []>} : vector<1x64xbf16>, vector<64x192xbf16>, vector<1x192xf32> -> vector<1x192xf32>
    %c1_60 = arith.constant 1 : index
    %c0_61 = arith.constant 0 : index
    %152 = vector.load %arg2[%c1_60, %c0_61] : memref<8x192xf32, #tpu.memory_space<vmem>>, vector<1x192xf32>
    %153 = arith.addf %151, %152 : vector<1x192xf32>
    %154 = vector.extract_strided_slice %148 {offsets = [0, 0], sizes = [1, 128], strides = [1, 1]} : vector<1x192xf32> to vector<1x128xf32>
    %155 = vector.extract_strided_slice %153 {offsets = [0, 0], sizes = [1, 128], strides = [1, 1]} : vector<1x192xf32> to vector<1x128xf32>
    %156 = arith.addf %154, %155 : vector<1x128xf32>
    %157 = arith.negf %156 : vector<1x128xf32>
    %158 = math.exp %157 : vector<1x128xf32>
    %cst_62 = arith.constant 1.000000e+00 : f32
    %159 = vector.broadcast %cst_62 : f32 to vector<1x128xf32>
    %160 = arith.addf %159, %158 : vector<1x128xf32>
    %161 = arith.divf %159, %160 : vector<1x128xf32>
    %162 = vector.extract_strided_slice %161 {offsets = [0, 0], sizes = [1, 64], strides = [1, 1]} : vector<1x128xf32> to vector<1x64xf32>
    %163 = vector.extract_strided_slice %161 {offsets = [0, 64], sizes = [1, 64], strides = [1, 1]} : vector<1x128xf32> to vector<1x64xf32>
    %164 = vector.extract_strided_slice %148 {offsets = [0, 128], sizes = [1, 64], strides = [1, 1]} : vector<1x192xf32> to vector<1x64xf32>
    %165 = vector.extract_strided_slice %153 {offsets = [0, 128], sizes = [1, 64], strides = [1, 1]} : vector<1x192xf32> to vector<1x64xf32>
    %166 = arith.mulf %162, %165 : vector<1x64xf32>
    %167 = arith.addf %164, %166 : vector<1x64xf32>
    %168 = math.tanh %167 : vector<1x64xf32>
    %cst_63 = arith.constant 1.000000e+00 : f32
    %169 = vector.broadcast %cst_63 : f32 to vector<1x64xf32>
    %170 = arith.subf %169, %163 : vector<1x64xf32>
    %171 = arith.mulf %170, %168 : vector<1x64xf32>
    %172 = arith.mulf %163, %141 : vector<1x64xf32>
    %173 = arith.addf %171, %172 : vector<1x64xf32>
    %174 = vector.extract_strided_slice %173 {offsets = [0, 0], sizes = [1, 32], strides = [1, 1]} : vector<1x64xf32> to vector<1x32xf32>
    %175 = vector.extract_strided_slice %173 {offsets = [0, 32], sizes = [1, 32], strides = [1, 1]} : vector<1x64xf32> to vector<1x32xf32>
    %c4_64 = arith.constant 4 : index
    %c0_65 = arith.constant 0 : index
    %176 = vector.load %arg5[%c4_64, %c0_65] : memref<8x128xf32, #tpu.memory_space<vmem>>, vector<1x32xf32>
    tpu.vector_store %arg5[%c4_64, %c0_65], %174 {strides = array<i32>} : memref<8x128xf32, #tpu.memory_space<vmem>>, vector<1x32xf32>,
    %c3_66 = arith.constant 3 : index
    %c32_67 = arith.constant 32 : index
    %177 = vector.load %arg5[%c3_66, %c32_67] : memref<8x128xf32, #tpu.memory_space<vmem>>, vector<1x32xf32>
    tpu.vector_store %arg5[%c3_66, %c32_67], %175 {strides = array<i32>} : memref<8x128xf32, #tpu.memory_space<vmem>>, vector<1x32xf32>,
    %c3_68 = arith.constant 3 : index
    %c64_69 = arith.constant 64 : index
    %178 = vector.load %arg5[%c3_68, %c64_69] : memref<8x128xf32, #tpu.memory_space<vmem>>, vector<1x32xf32>
    tpu.vector_store %arg5[%c3_68, %c64_69], %174 {strides = array<i32>} : memref<8x128xf32, #tpu.memory_space<vmem>>, vector<1x32xf32>,
    %c4_70 = arith.constant 4 : index
    %c96_71 = arith.constant 96 : index
    %179 = vector.load %arg5[%c4_70, %c96_71] : memref<8x128xf32, #tpu.memory_space<vmem>>, vector<1x32xf32>
    tpu.vector_store %arg5[%c4_70, %c96_71], %175 {strides = array<i32>} : memref<8x128xf32, #tpu.memory_space<vmem>>, vector<1x32xf32>,
    %180 = vector.extract_strided_slice %18 {offsets = [5, 0], sizes = [1, 192], strides = [1, 1]} : vector<8x192xf32> to vector<1x192xf32>
    %181 = arith.truncf %173 : vector<1x64xf32> to vector<1x64xbf16>
    %c128_72 = arith.constant 128 : index
    %c0_73 = arith.constant 0 : index
    %182 = vector.load %arg1[%c128_72, %c0_73] : memref<640x192xbf16, #tpu.memory_space<vmem>>, vector<64x192xbf16>
    %cst_74 = arith.constant dense<0.000000e+00> : vector<1x192xf32>
    %183 = tpu.matmul %181, %182, %cst_74 {dimension_numbers = #tpu.dot_dimension_numbers<[1], [0], [0], [1], [0, 0, 1, 1], [], []>} : vector<1x64xbf16>, vector<64x192xbf16>, vector<1x192xf32> -> vector<1x192xf32>
    %c1_75 = arith.constant 1 : index
    %c0_76 = arith.constant 0 : index
    %184 = vector.load %arg2[%c1_75, %c0_76] : memref<8x192xf32, #tpu.memory_space<vmem>>, vector<1x192xf32>
    %185 = arith.addf %183, %184 : vector<1x192xf32>
    %186 = vector.extract_strided_slice %180 {offsets = [0, 0], sizes = [1, 128], strides = [1, 1]} : vector<1x192xf32> to vector<1x128xf32>
    %187 = vector.extract_strided_slice %185 {offsets = [0, 0], sizes = [1, 128], strides = [1, 1]} : vector<1x192xf32> to vector<1x128xf32>
    %188 = arith.addf %186, %187 : vector<1x128xf32>
    %189 = arith.negf %188 : vector<1x128xf32>
    %190 = math.exp %189 : vector<1x128xf32>
    %cst_77 = arith.constant 1.000000e+00 : f32
    %191 = vector.broadcast %cst_77 : f32 to vector<1x128xf32>
    %192 = arith.addf %191, %190 : vector<1x128xf32>
    %193 = arith.divf %191, %192 : vector<1x128xf32>
    %194 = vector.extract_strided_slice %193 {offsets = [0, 0], sizes = [1, 64], strides = [1, 1]} : vector<1x128xf32> to vector<1x64xf32>
    %195 = vector.extract_strided_slice %193 {offsets = [0, 64], sizes = [1, 64], strides = [1, 1]} : vector<1x128xf32> to vector<1x64xf32>
    %196 = vector.extract_strided_slice %180 {offsets = [0, 128], sizes = [1, 64], strides = [1, 1]} : vector<1x192xf32> to vector<1x64xf32>
    %197 = vector.extract_strided_slice %185 {offsets = [0, 128], sizes = [1, 64], strides = [1, 1]} : vector<1x192xf32> to vector<1x64xf32>
    %198 = arith.mulf %194, %197 : vector<1x64xf32>
    %199 = arith.addf %196, %198 : vector<1x64xf32>
    %200 = math.tanh %199 : vector<1x64xf32>
    %cst_78 = arith.constant 1.000000e+00 : f32
    %201 = vector.broadcast %cst_78 : f32 to vector<1x64xf32>
    %202 = arith.subf %201, %195 : vector<1x64xf32>
    %203 = arith.mulf %202, %200 : vector<1x64xf32>
    %204 = arith.mulf %195, %173 : vector<1x64xf32>
    %205 = arith.addf %203, %204 : vector<1x64xf32>
    %206 = vector.extract_strided_slice %205 {offsets = [0, 0], sizes = [1, 32], strides = [1, 1]} : vector<1x64xf32> to vector<1x32xf32>
    %207 = vector.extract_strided_slice %205 {offsets = [0, 32], sizes = [1, 32], strides = [1, 1]} : vector<1x64xf32> to vector<1x32xf32>
    %c5_79 = arith.constant 5 : index
    %c0_80 = arith.constant 0 : index
    %208 = vector.load %arg5[%c5_79, %c0_80] : memref<8x128xf32, #tpu.memory_space<vmem>>, vector<1x32xf32>
    tpu.vector_store %arg5[%c5_79, %c0_80], %206 {strides = array<i32>} : memref<8x128xf32, #tpu.memory_space<vmem>>, vector<1x32xf32>,
    %c2_81 = arith.constant 2 : index
    %c32_82 = arith.constant 32 : index
    %209 = vector.load %arg5[%c2_81, %c32_82] : memref<8x128xf32, #tpu.memory_space<vmem>>, vector<1x32xf32>
    tpu.vector_store %arg5[%c2_81, %c32_82], %207 {strides = array<i32>} : memref<8x128xf32, #tpu.memory_space<vmem>>, vector<1x32xf32>,
    %c2_83 = arith.constant 2 : index
    %c64_84 = arith.constant 64 : index
    %210 = vector.load %arg5[%c2_83, %c64_84] : memref<8x128xf32, #tpu.memory_space<vmem>>, vector<1x32xf32>
    tpu.vector_store %arg5[%c2_83, %c64_84], %206 {strides = array<i32>} : memref<8x128xf32, #tpu.memory_space<vmem>>, vector<1x32xf32>,
    %c5_85 = arith.constant 5 : index
    %c96_86 = arith.constant 96 : index
    %211 = vector.load %arg5[%c5_85, %c96_86] : memref<8x128xf32, #tpu.memory_space<vmem>>, vector<1x32xf32>
    tpu.vector_store %arg5[%c5_85, %c96_86], %207 {strides = array<i32>} : memref<8x128xf32, #tpu.memory_space<vmem>>, vector<1x32xf32>,
    %212 = vector.extract_strided_slice %18 {offsets = [6, 0], sizes = [1, 192], strides = [1, 1]} : vector<8x192xf32> to vector<1x192xf32>
    %213 = arith.truncf %205 : vector<1x64xf32> to vector<1x64xbf16>
    %c128_87 = arith.constant 128 : index
    %c0_88 = arith.constant 0 : index
    %214 = vector.load %arg1[%c128_87, %c0_88] : memref<640x192xbf16, #tpu.memory_space<vmem>>, vector<64x192xbf16>
    %cst_89 = arith.constant dense<0.000000e+00> : vector<1x192xf32>
    %215 = tpu.matmul %213, %214, %cst_89 {dimension_numbers = #tpu.dot_dimension_numbers<[1], [0], [0], [1], [0, 0, 1, 1], [], []>} : vector<1x64xbf16>, vector<64x192xbf16>, vector<1x192xf32> -> vector<1x192xf32>
    %c1_90 = arith.constant 1 : index
    %c0_91 = arith.constant 0 : index
    %216 = vector.load %arg2[%c1_90, %c0_91] : memref<8x192xf32, #tpu.memory_space<vmem>>, vector<1x192xf32>
    %217 = arith.addf %215, %216 : vector<1x192xf32>
    %218 = vector.extract_strided_slice %212 {offsets = [0, 0], sizes = [1, 128], strides = [1, 1]} : vector<1x192xf32> to vector<1x128xf32>
    %219 = vector.extract_strided_slice %217 {offsets = [0, 0], sizes = [1, 128], strides = [1, 1]} : vector<1x192xf32> to vector<1x128xf32>
    %220 = arith.addf %218, %219 : vector<1x128xf32>
    %221 = arith.negf %220 : vector<1x128xf32>
    %222 = math.exp %221 : vector<1x128xf32>
    %cst_92 = arith.constant 1.000000e+00 : f32
    %223 = vector.broadcast %cst_92 : f32 to vector<1x128xf32>
    %224 = arith.addf %223, %222 : vector<1x128xf32>
    %225 = arith.divf %223, %224 : vector<1x128xf32>
    %226 = vector.extract_strided_slice %225 {offsets = [0, 0], sizes = [1, 64], strides = [1, 1]} : vector<1x128xf32> to vector<1x64xf32>
    %227 = vector.extract_strided_slice %225 {offsets = [0, 64], sizes = [1, 64], strides = [1, 1]} : vector<1x128xf32> to vector<1x64xf32>
    %228 = vector.extract_strided_slice %212 {offsets = [0, 128], sizes = [1, 64], strides = [1, 1]} : vector<1x192xf32> to vector<1x64xf32>
    %229 = vector.extract_strided_slice %217 {offsets = [0, 128], sizes = [1, 64], strides = [1, 1]} : vector<1x192xf32> to vector<1x64xf32>
    %230 = arith.mulf %226, %229 : vector<1x64xf32>
    %231 = arith.addf %228, %230 : vector<1x64xf32>
    %232 = math.tanh %231 : vector<1x64xf32>
    %cst_93 = arith.constant 1.000000e+00 : f32
    %233 = vector.broadcast %cst_93 : f32 to vector<1x64xf32>
    %234 = arith.subf %233, %227 : vector<1x64xf32>
    %235 = arith.mulf %234, %232 : vector<1x64xf32>
    %236 = arith.mulf %227, %205 : vector<1x64xf32>
    %237 = arith.addf %235, %236 : vector<1x64xf32>
    %238 = vector.extract_strided_slice %237 {offsets = [0, 0], sizes = [1, 32], strides = [1, 1]} : vector<1x64xf32> to vector<1x32xf32>
    %239 = vector.extract_strided_slice %237 {offsets = [0, 32], sizes = [1, 32], strides = [1, 1]} : vector<1x64xf32> to vector<1x32xf32>
    %c6_94 = arith.constant 6 : index
    %c0_95 = arith.constant 0 : index
    %240 = vector.load %arg5[%c6_94, %c0_95] : memref<8x128xf32, #tpu.memory_space<vmem>>, vector<1x32xf32>
    tpu.vector_store %arg5[%c6_94, %c0_95], %238 {strides = array<i32>} : memref<8x128xf32, #tpu.memory_space<vmem>>, vector<1x32xf32>,
    %c1_96 = arith.constant 1 : index
    %c32_97 = arith.constant 32 : index
    %241 = vector.load %arg5[%c1_96, %c32_97] : memref<8x128xf32, #tpu.memory_space<vmem>>, vector<1x32xf32>
    tpu.vector_store %arg5[%c1_96, %c32_97], %239 {strides = array<i32>} : memref<8x128xf32, #tpu.memory_space<vmem>>, vector<1x32xf32>,
    %c1_98 = arith.constant 1 : index
    %c64_99 = arith.constant 64 : index
    %242 = vector.load %arg5[%c1_98, %c64_99] : memref<8x128xf32, #tpu.memory_space<vmem>>, vector<1x32xf32>
    tpu.vector_store %arg5[%c1_98, %c64_99], %238 {strides = array<i32>} : memref<8x128xf32, #tpu.memory_space<vmem>>, vector<1x32xf32>,
    %c6_100 = arith.constant 6 : index
    %c96_101 = arith.constant 96 : index
    %243 = vector.load %arg5[%c6_100, %c96_101] : memref<8x128xf32, #tpu.memory_space<vmem>>, vector<1x32xf32>
    tpu.vector_store %arg5[%c6_100, %c96_101], %239 {strides = array<i32>} : memref<8x128xf32, #tpu.memory_space<vmem>>, vector<1x32xf32>,
    %244 = vector.extract_strided_slice %18 {offsets = [7, 0], sizes = [1, 192], strides = [1, 1]} : vector<8x192xf32> to vector<1x192xf32>
    %245 = arith.truncf %237 : vector<1x64xf32> to vector<1x64xbf16>
    %c128_102 = arith.constant 128 : index
    %c0_103 = arith.constant 0 : index
    %246 = vector.load %arg1[%c128_102, %c0_103] : memref<640x192xbf16, #tpu.memory_space<vmem>>, vector<64x192xbf16>
    %cst_104 = arith.constant dense<0.000000e+00> : vector<1x192xf32>
    %247 = tpu.matmul %245, %246, %cst_104 {dimension_numbers = #tpu.dot_dimension_numbers<[1], [0], [0], [1], [0, 0, 1, 1], [], []>} : vector<1x64xbf16>, vector<64x192xbf16>, vector<1x192xf32> -> vector<1x192xf32>
    %c1_105 = arith.constant 1 : index
    %c0_106 = arith.constant 0 : index
    %248 = vector.load %arg2[%c1_105, %c0_106] : memref<8x192xf32, #tpu.memory_space<vmem>>, vector<1x192xf32>
    %249 = arith.addf %247, %248 : vector<1x192xf32>
    %250 = vector.extract_strided_slice %244 {offsets = [0, 0], sizes = [1, 128], strides = [1, 1]} : vector<1x192xf32> to vector<1x128xf32>
    %251 = vector.extract_strided_slice %249 {offsets = [0, 0], sizes = [1, 128], strides = [1, 1]} : vector<1x192xf32> to vector<1x128xf32>
    %252 = arith.addf %250, %251 : vector<1x128xf32>
    %253 = arith.negf %252 : vector<1x128xf32>
    %254 = math.exp %253 : vector<1x128xf32>
    %cst_107 = arith.constant 1.000000e+00 : f32
    %255 = vector.broadcast %cst_107 : f32 to vector<1x128xf32>
    %256 = arith.addf %255, %254 : vector<1x128xf32>
    %257 = arith.divf %255, %256 : vector<1x128xf32>
    %258 = vector.extract_strided_slice %257 {offsets = [0, 0], sizes = [1, 64], strides = [1, 1]} : vector<1x128xf32> to vector<1x64xf32>
    %259 = vector.extract_strided_slice %257 {offsets = [0, 64], sizes = [1, 64], strides = [1, 1]} : vector<1x128xf32> to vector<1x64xf32>
    %260 = vector.extract_strided_slice %244 {offsets = [0, 128], sizes = [1, 64], strides = [1, 1]} : vector<1x192xf32> to vector<1x64xf32>
    %261 = vector.extract_strided_slice %249 {offsets = [0, 128], sizes = [1, 64], strides = [1, 1]} : vector<1x192xf32> to vector<1x64xf32>
    %262 = arith.mulf %258, %261 : vector<1x64xf32>
    %263 = arith.addf %260, %262 : vector<1x64xf32>
    %264 = math.tanh %263 : vector<1x64xf32>
    %cst_108 = arith.constant 1.000000e+00 : f32
    %265 = vector.broadcast %cst_108 : f32 to vector<1x64xf32>
    %266 = arith.subf %265, %259 : vector<1x64xf32>
    %267 = arith.mulf %266, %264 : vector<1x64xf32>
    %268 = arith.mulf %259, %237 : vector<1x64xf32>
    %269 = arith.addf %267, %268 : vector<1x64xf32>
    %270 = vector.extract_strided_slice %269 {offsets = [0, 0], sizes = [1, 32], strides = [1, 1]} : vector<1x64xf32> to vector<1x32xf32>
    %271 = vector.extract_strided_slice %269 {offsets = [0, 32], sizes = [1, 32], strides = [1, 1]} : vector<1x64xf32> to vector<1x32xf32>
    %c7_109 = arith.constant 7 : index
    %c0_110 = arith.constant 0 : index
    %272 = vector.load %arg5[%c7_109, %c0_110] : memref<8x128xf32, #tpu.memory_space<vmem>>, vector<1x32xf32>
    tpu.vector_store %arg5[%c7_109, %c0_110], %270 {strides = array<i32>} : memref<8x128xf32, #tpu.memory_space<vmem>>, vector<1x32xf32>,
    %c0_111 = arith.constant 0 : index
    %c32_112 = arith.constant 32 : index
    %273 = vector.load %arg5[%c0_111, %c32_112] : memref<8x128xf32, #tpu.memory_space<vmem>>, vector<1x32xf32>
    tpu.vector_store %arg5[%c0_111, %c32_112], %271 {strides = array<i32>} : memref<8x128xf32, #tpu.memory_space<vmem>>, vector<1x32xf32>,
    %c0_113 = arith.constant 0 : index
    %c64_114 = arith.constant 64 : index
    %274 = vector.load %arg5[%c0_113, %c64_114] : memref<8x128xf32, #tpu.memory_space<vmem>>, vector<1x32xf32>
    tpu.vector_store %arg5[%c0_113, %c64_114], %270 {strides = array<i32>} : memref<8x128xf32, #tpu.memory_space<vmem>>, vector<1x32xf32>,
    %c7_115 = arith.constant 7 : index
    %c96_116 = arith.constant 96 : index
    %275 = vector.load %arg5[%c7_115, %c96_116] : memref<8x128xf32, #tpu.memory_space<vmem>>, vector<1x32xf32>
    tpu.vector_store %arg5[%c7_115, %c96_116], %271 {strides = array<i32>} : memref<8x128xf32, #tpu.memory_space<vmem>>, vector<1x32xf32>,
    %c0_117 = arith.constant 0 : index
    %c0_118 = arith.constant 0 : index
    %276 = vector.load %arg5[%c0_117, %c0_118] : memref<8x128xf32, #tpu.memory_space<vmem>>, vector<8x128xf32>
    %277 = arith.truncf %276 : vector<8x128xf32> to vector<8x128xbf16>
    %c192 = arith.constant 192 : index
    %c0_119 = arith.constant 0 : index
    %278 = vector.load %arg1[%c192, %c0_119] : memref<640x192xbf16, #tpu.memory_space<vmem>>, vector<128x192xbf16>
    %cst_120 = arith.constant dense<0.000000e+00> : vector<8x192xf32>
    %279 = tpu.matmul %277, %278, %cst_120 {dimension_numbers = #tpu.dot_dimension_numbers<[1], [0], [0], [1], [0, 0, 1, 1], [], []>} : vector<8x128xbf16>, vector<128x192xbf16>, vector<8x192xf32> -> vector<8x192xf32>
    %c2_121 = arith.constant 2 : index
    %c0_122 = arith.constant 0 : index
    %280 = vector.load %arg2[%c2_121, %c0_122] : memref<8x192xf32, #tpu.memory_space<vmem>>, vector<1x192xf32>
    %281 = vector.broadcast %280 : vector<1x192xf32> to vector<8x192xf32>
    %282 = arith.addf %279, %281 : vector<8x192xf32>
    %cst_123 = arith.constant 0.000000e+00 : f32
    %283 = vector.broadcast %cst_123 : f32 to vector<1x64xf32>
    %284 = vector.extract_strided_slice %282 {offsets = [0, 0], sizes = [1, 192], strides = [1, 1]} : vector<8x192xf32> to vector<1x192xf32>
    %285 = arith.truncf %283 : vector<1x64xf32> to vector<1x64xbf16>
    %c320 = arith.constant 320 : index
    %c0_124 = arith.constant 0 : index
    %286 = vector.load %arg1[%c320, %c0_124] : memref<640x192xbf16, #tpu.memory_space<vmem>>, vector<64x192xbf16>
    %cst_125 = arith.constant dense<0.000000e+00> : vector<1x192xf32>
    %287 = tpu.matmul %285, %286, %cst_125 {dimension_numbers = #tpu.dot_dimension_numbers<[1], [0], [0], [1], [0, 0, 1, 1], [], []>} : vector<1x64xbf16>, vector<64x192xbf16>, vector<1x192xf32> -> vector<1x192xf32>
    %c3_126 = arith.constant 3 : index
    %c0_127 = arith.constant 0 : index
    %288 = vector.load %arg2[%c3_126, %c0_127] : memref<8x192xf32, #tpu.memory_space<vmem>>, vector<1x192xf32>
    %289 = arith.addf %287, %288 : vector<1x192xf32>
    %290 = vector.extract_strided_slice %284 {offsets = [0, 0], sizes = [1, 128], strides = [1, 1]} : vector<1x192xf32> to vector<1x128xf32>
    %291 = vector.extract_strided_slice %289 {offsets = [0, 0], sizes = [1, 128], strides = [1, 1]} : vector<1x192xf32> to vector<1x128xf32>
    %292 = arith.addf %290, %291 : vector<1x128xf32>
    %293 = arith.negf %292 : vector<1x128xf32>
    %294 = math.exp %293 : vector<1x128xf32>
    %cst_128 = arith.constant 1.000000e+00 : f32
    %295 = vector.broadcast %cst_128 : f32 to vector<1x128xf32>
    %296 = arith.addf %295, %294 : vector<1x128xf32>
    %297 = arith.divf %295, %296 : vector<1x128xf32>
    %298 = vector.extract_strided_slice %297 {offsets = [0, 0], sizes = [1, 64], strides = [1, 1]} : vector<1x128xf32> to vector<1x64xf32>
    %299 = vector.extract_strided_slice %297 {offsets = [0, 64], sizes = [1, 64], strides = [1, 1]} : vector<1x128xf32> to vector<1x64xf32>
    %300 = vector.extract_strided_slice %284 {offsets = [0, 128], sizes = [1, 64], strides = [1, 1]} : vector<1x192xf32> to vector<1x64xf32>
    %301 = vector.extract_strided_slice %289 {offsets = [0, 128], sizes = [1, 64], strides = [1, 1]} : vector<1x192xf32> to vector<1x64xf32>
    %302 = arith.mulf %298, %301 : vector<1x64xf32>
    %303 = arith.addf %300, %302 : vector<1x64xf32>
    %304 = math.tanh %303 : vector<1x64xf32>
    %cst_129 = arith.constant 1.000000e+00 : f32
    %305 = vector.broadcast %cst_129 : f32 to vector<1x64xf32>
    %306 = arith.subf %305, %299 : vector<1x64xf32>
    %307 = arith.mulf %306, %304 : vector<1x64xf32>
    %308 = arith.mulf %299, %283 : vector<1x64xf32>
    %309 = arith.addf %307, %308 : vector<1x64xf32>
    %310 = vector.extract_strided_slice %309 {offsets = [0, 0], sizes = [1, 32], strides = [1, 1]} : vector<1x64xf32> to vector<1x32xf32>
    %c0_130 = arith.constant 0 : index
    %c0_131 = arith.constant 0 : index
    %311 = vector.load %arg6[%c0_130, %c0_131] : memref<8x64xf32, #tpu.memory_space<vmem>>, vector<1x32xf32>
    tpu.vector_store %arg6[%c0_130, %c0_131], %310 {strides = array<i32>} : memref<8x64xf32, #tpu.memory_space<vmem>>, vector<1x32xf32>,
    %312 = vector.extract_strided_slice %309 {offsets = [0, 32], sizes = [1, 32], strides = [1, 1]} : vector<1x64xf32> to vector<1x32xf32>
    %c7_132 = arith.constant 7 : index
    %c32_133 = arith.constant 32 : index
    %313 = vector.load %arg6[%c7_132, %c32_133] : memref<8x64xf32, #tpu.memory_space<vmem>>, vector<1x32xf32>
    tpu.vector_store %arg6[%c7_132, %c32_133], %312 {strides = array<i32>} : memref<8x64xf32, #tpu.memory_space<vmem>>, vector<1x32xf32>,
    %314 = vector.extract_strided_slice %282 {offsets = [1, 0], sizes = [1, 192], strides = [1, 1]} : vector<8x192xf32> to vector<1x192xf32>
    %315 = arith.truncf %309 : vector<1x64xf32> to vector<1x64xbf16>
    %c320_134 = arith.constant 320 : index
    %c0_135 = arith.constant 0 : index
    %316 = vector.load %arg1[%c320_134, %c0_135] : memref<640x192xbf16, #tpu.memory_space<vmem>>, vector<64x192xbf16>
    %cst_136 = arith.constant dense<0.000000e+00> : vector<1x192xf32>
    %317 = tpu.matmul %315, %316, %cst_136 {dimension_numbers = #tpu.dot_dimension_numbers<[1], [0], [0], [1], [0, 0, 1, 1], [], []>} : vector<1x64xbf16>, vector<64x192xbf16>, vector<1x192xf32> -> vector<1x192xf32>
    %c3_137 = arith.constant 3 : index
    %c0_138 = arith.constant 0 : index
    %318 = vector.load %arg2[%c3_137, %c0_138] : memref<8x192xf32, #tpu.memory_space<vmem>>, vector<1x192xf32>
    %319 = arith.addf %317, %318 : vector<1x192xf32>
    %320 = vector.extract_strided_slice %314 {offsets = [0, 0], sizes = [1, 128], strides = [1, 1]} : vector<1x192xf32> to vector<1x128xf32>
    %321 = vector.extract_strided_slice %319 {offsets = [0, 0], sizes = [1, 128], strides = [1, 1]} : vector<1x192xf32> to vector<1x128xf32>
    %322 = arith.addf %320, %321 : vector<1x128xf32>
    %323 = arith.negf %322 : vector<1x128xf32>
    %324 = math.exp %323 : vector<1x128xf32>
    %cst_139 = arith.constant 1.000000e+00 : f32
    %325 = vector.broadcast %cst_139 : f32 to vector<1x128xf32>
    %326 = arith.addf %325, %324 : vector<1x128xf32>
    %327 = arith.divf %325, %326 : vector<1x128xf32>
    %328 = vector.extract_strided_slice %327 {offsets = [0, 0], sizes = [1, 64], strides = [1, 1]} : vector<1x128xf32> to vector<1x64xf32>
    %329 = vector.extract_strided_slice %327 {offsets = [0, 64], sizes = [1, 64], strides = [1, 1]} : vector<1x128xf32> to vector<1x64xf32>
    %330 = vector.extract_strided_slice %314 {offsets = [0, 128], sizes = [1, 64], strides = [1, 1]} : vector<1x192xf32> to vector<1x64xf32>
    %331 = vector.extract_strided_slice %319 {offsets = [0, 128], sizes = [1, 64], strides = [1, 1]} : vector<1x192xf32> to vector<1x64xf32>
    %332 = arith.mulf %328, %331 : vector<1x64xf32>
    %333 = arith.addf %330, %332 : vector<1x64xf32>
    %334 = math.tanh %333 : vector<1x64xf32>
    %cst_140 = arith.constant 1.000000e+00 : f32
    %335 = vector.broadcast %cst_140 : f32 to vector<1x64xf32>
    %336 = arith.subf %335, %329 : vector<1x64xf32>
    %337 = arith.mulf %336, %334 : vector<1x64xf32>
    %338 = arith.mulf %329, %309 : vector<1x64xf32>
    %339 = arith.addf %337, %338 : vector<1x64xf32>
    %340 = vector.extract_strided_slice %339 {offsets = [0, 0], sizes = [1, 32], strides = [1, 1]} : vector<1x64xf32> to vector<1x32xf32>
    %c1_141 = arith.constant 1 : index
    %c0_142 = arith.constant 0 : index
    %341 = vector.load %arg6[%c1_141, %c0_142] : memref<8x64xf32, #tpu.memory_space<vmem>>, vector<1x32xf32>
    tpu.vector_store %arg6[%c1_141, %c0_142], %340 {strides = array<i32>} : memref<8x64xf32, #tpu.memory_space<vmem>>, vector<1x32xf32>,
    %342 = vector.extract_strided_slice %339 {offsets = [0, 32], sizes = [1, 32], strides = [1, 1]} : vector<1x64xf32> to vector<1x32xf32>
    %c6_143 = arith.constant 6 : index
    %c32_144 = arith.constant 32 : index
    %343 = vector.load %arg6[%c6_143, %c32_144] : memref<8x64xf32, #tpu.memory_space<vmem>>, vector<1x32xf32>
    tpu.vector_store %arg6[%c6_143, %c32_144], %342 {strides = array<i32>} : memref<8x64xf32, #tpu.memory_space<vmem>>, vector<1x32xf32>,
    %344 = vector.extract_strided_slice %282 {offsets = [2, 0], sizes = [1, 192], strides = [1, 1]} : vector<8x192xf32> to vector<1x192xf32>
    %345 = arith.truncf %339 : vector<1x64xf32> to vector<1x64xbf16>
    %c320_145 = arith.constant 320 : index
    %c0_146 = arith.constant 0 : index
    %346 = vector.load %arg1[%c320_145, %c0_146] : memref<640x192xbf16, #tpu.memory_space<vmem>>, vector<64x192xbf16>
    %cst_147 = arith.constant dense<0.000000e+00> : vector<1x192xf32>
    %347 = tpu.matmul %345, %346, %cst_147 {dimension_numbers = #tpu.dot_dimension_numbers<[1], [0], [0], [1], [0, 0, 1, 1], [], []>} : vector<1x64xbf16>, vector<64x192xbf16>, vector<1x192xf32> -> vector<1x192xf32>
    %c3_148 = arith.constant 3 : index
    %c0_149 = arith.constant 0 : index
    %348 = vector.load %arg2[%c3_148, %c0_149] : memref<8x192xf32, #tpu.memory_space<vmem>>, vector<1x192xf32>
    %349 = arith.addf %347, %348 : vector<1x192xf32>
    %350 = vector.extract_strided_slice %344 {offsets = [0, 0], sizes = [1, 128], strides = [1, 1]} : vector<1x192xf32> to vector<1x128xf32>
    %351 = vector.extract_strided_slice %349 {offsets = [0, 0], sizes = [1, 128], strides = [1, 1]} : vector<1x192xf32> to vector<1x128xf32>
    %352 = arith.addf %350, %351 : vector<1x128xf32>
    %353 = arith.negf %352 : vector<1x128xf32>
    %354 = math.exp %353 : vector<1x128xf32>
    %cst_150 = arith.constant 1.000000e+00 : f32
    %355 = vector.broadcast %cst_150 : f32 to vector<1x128xf32>
    %356 = arith.addf %355, %354 : vector<1x128xf32>
    %357 = arith.divf %355, %356 : vector<1x128xf32>
    %358 = vector.extract_strided_slice %357 {offsets = [0, 0], sizes = [1, 64], strides = [1, 1]} : vector<1x128xf32> to vector<1x64xf32>
    %359 = vector.extract_strided_slice %357 {offsets = [0, 64], sizes = [1, 64], strides = [1, 1]} : vector<1x128xf32> to vector<1x64xf32>
    %360 = vector.extract_strided_slice %344 {offsets = [0, 128], sizes = [1, 64], strides = [1, 1]} : vector<1x192xf32> to vector<1x64xf32>
    %361 = vector.extract_strided_slice %349 {offsets = [0, 128], sizes = [1, 64], strides = [1, 1]} : vector<1x192xf32> to vector<1x64xf32>
    %362 = arith.mulf %358, %361 : vector<1x64xf32>
    %363 = arith.addf %360, %362 : vector<1x64xf32>
    %364 = math.tanh %363 : vector<1x64xf32>
    %cst_151 = arith.constant 1.000000e+00 : f32
    %365 = vector.broadcast %cst_151 : f32 to vector<1x64xf32>
    %366 = arith.subf %365, %359 : vector<1x64xf32>
    %367 = arith.mulf %366, %364 : vector<1x64xf32>
    %368 = arith.mulf %359, %339 : vector<1x64xf32>
    %369 = arith.addf %367, %368 : vector<1x64xf32>
    %370 = vector.extract_strided_slice %369 {offsets = [0, 0], sizes = [1, 32], strides = [1, 1]} : vector<1x64xf32> to vector<1x32xf32>
    %c2_152 = arith.constant 2 : index
    %c0_153 = arith.constant 0 : index
    %371 = vector.load %arg6[%c2_152, %c0_153] : memref<8x64xf32, #tpu.memory_space<vmem>>, vector<1x32xf32>
    tpu.vector_store %arg6[%c2_152, %c0_153], %370 {strides = array<i32>} : memref<8x64xf32, #tpu.memory_space<vmem>>, vector<1x32xf32>,
    %372 = vector.extract_strided_slice %369 {offsets = [0, 32], sizes = [1, 32], strides = [1, 1]} : vector<1x64xf32> to vector<1x32xf32>
    %c5_154 = arith.constant 5 : index
    %c32_155 = arith.constant 32 : index
    %373 = vector.load %arg6[%c5_154, %c32_155] : memref<8x64xf32, #tpu.memory_space<vmem>>, vector<1x32xf32>
    tpu.vector_store %arg6[%c5_154, %c32_155], %372 {strides = array<i32>} : memref<8x64xf32, #tpu.memory_space<vmem>>, vector<1x32xf32>,
    %374 = vector.extract_strided_slice %282 {offsets = [3, 0], sizes = [1, 192], strides = [1, 1]} : vector<8x192xf32> to vector<1x192xf32>
    %375 = arith.truncf %369 : vector<1x64xf32> to vector<1x64xbf16>
    %c320_156 = arith.constant 320 : index
    %c0_157 = arith.constant 0 : index
    %376 = vector.load %arg1[%c320_156, %c0_157] : memref<640x192xbf16, #tpu.memory_space<vmem>>, vector<64x192xbf16>
    %cst_158 = arith.constant dense<0.000000e+00> : vector<1x192xf32>
    %377 = tpu.matmul %375, %376, %cst_158 {dimension_numbers = #tpu.dot_dimension_numbers<[1], [0], [0], [1], [0, 0, 1, 1], [], []>} : vector<1x64xbf16>, vector<64x192xbf16>, vector<1x192xf32> -> vector<1x192xf32>
    %c3_159 = arith.constant 3 : index
    %c0_160 = arith.constant 0 : index
    %378 = vector.load %arg2[%c3_159, %c0_160] : memref<8x192xf32, #tpu.memory_space<vmem>>, vector<1x192xf32>
    %379 = arith.addf %377, %378 : vector<1x192xf32>
    %380 = vector.extract_strided_slice %374 {offsets = [0, 0], sizes = [1, 128], strides = [1, 1]} : vector<1x192xf32> to vector<1x128xf32>
    %381 = vector.extract_strided_slice %379 {offsets = [0, 0], sizes = [1, 128], strides = [1, 1]} : vector<1x192xf32> to vector<1x128xf32>
    %382 = arith.addf %380, %381 : vector<1x128xf32>
    %383 = arith.negf %382 : vector<1x128xf32>
    %384 = math.exp %383 : vector<1x128xf32>
    %cst_161 = arith.constant 1.000000e+00 : f32
    %385 = vector.broadcast %cst_161 : f32 to vector<1x128xf32>
    %386 = arith.addf %385, %384 : vector<1x128xf32>
    %387 = arith.divf %385, %386 : vector<1x128xf32>
    %388 = vector.extract_strided_slice %387 {offsets = [0, 0], sizes = [1, 64], strides = [1, 1]} : vector<1x128xf32> to vector<1x64xf32>
    %389 = vector.extract_strided_slice %387 {offsets = [0, 64], sizes = [1, 64], strides = [1, 1]} : vector<1x128xf32> to vector<1x64xf32>
    %390 = vector.extract_strided_slice %374 {offsets = [0, 128], sizes = [1, 64], strides = [1, 1]} : vector<1x192xf32> to vector<1x64xf32>
    %391 = vector.extract_strided_slice %379 {offsets = [0, 128], sizes = [1, 64], strides = [1, 1]} : vector<1x192xf32> to vector<1x64xf32>
    %392 = arith.mulf %388, %391 : vector<1x64xf32>
    %393 = arith.addf %390, %392 : vector<1x64xf32>
    %394 = math.tanh %393 : vector<1x64xf32>
    %cst_162 = arith.constant 1.000000e+00 : f32
    %395 = vector.broadcast %cst_162 : f32 to vector<1x64xf32>
    %396 = arith.subf %395, %389 : vector<1x64xf32>
    %397 = arith.mulf %396, %394 : vector<1x64xf32>
    %398 = arith.mulf %389, %369 : vector<1x64xf32>
    %399 = arith.addf %397, %398 : vector<1x64xf32>
    %400 = vector.extract_strided_slice %399 {offsets = [0, 0], sizes = [1, 32], strides = [1, 1]} : vector<1x64xf32> to vector<1x32xf32>
    %c3_163 = arith.constant 3 : index
    %c0_164 = arith.constant 0 : index
    %401 = vector.load %arg6[%c3_163, %c0_164] : memref<8x64xf32, #tpu.memory_space<vmem>>, vector<1x32xf32>
    tpu.vector_store %arg6[%c3_163, %c0_164], %400 {strides = array<i32>} : memref<8x64xf32, #tpu.memory_space<vmem>>, vector<1x32xf32>,
    %402 = vector.extract_strided_slice %399 {offsets = [0, 32], sizes = [1, 32], strides = [1, 1]} : vector<1x64xf32> to vector<1x32xf32>
    %c4_165 = arith.constant 4 : index
    %c32_166 = arith.constant 32 : index
    %403 = vector.load %arg6[%c4_165, %c32_166] : memref<8x64xf32, #tpu.memory_space<vmem>>, vector<1x32xf32>
    tpu.vector_store %arg6[%c4_165, %c32_166], %402 {strides = array<i32>} : memref<8x64xf32, #tpu.memory_space<vmem>>, vector<1x32xf32>,
    %404 = vector.extract_strided_slice %282 {offsets = [4, 0], sizes = [1, 192], strides = [1, 1]} : vector<8x192xf32> to vector<1x192xf32>
    %405 = arith.truncf %399 : vector<1x64xf32> to vector<1x64xbf16>
    %c320_167 = arith.constant 320 : index
    %c0_168 = arith.constant 0 : index
    %406 = vector.load %arg1[%c320_167, %c0_168] : memref<640x192xbf16, #tpu.memory_space<vmem>>, vector<64x192xbf16>
    %cst_169 = arith.constant dense<0.000000e+00> : vector<1x192xf32>
    %407 = tpu.matmul %405, %406, %cst_169 {dimension_numbers = #tpu.dot_dimension_numbers<[1], [0], [0], [1], [0, 0, 1, 1], [], []>} : vector<1x64xbf16>, vector<64x192xbf16>, vector<1x192xf32> -> vector<1x192xf32>
    %c3_170 = arith.constant 3 : index
    %c0_171 = arith.constant 0 : index
    %408 = vector.load %arg2[%c3_170, %c0_171] : memref<8x192xf32, #tpu.memory_space<vmem>>, vector<1x192xf32>
    %409 = arith.addf %407, %408 : vector<1x192xf32>
    %410 = vector.extract_strided_slice %404 {offsets = [0, 0], sizes = [1, 128], strides = [1, 1]} : vector<1x192xf32> to vector<1x128xf32>
    %411 = vector.extract_strided_slice %409 {offsets = [0, 0], sizes = [1, 128], strides = [1, 1]} : vector<1x192xf32> to vector<1x128xf32>
    %412 = arith.addf %410, %411 : vector<1x128xf32>
    %413 = arith.negf %412 : vector<1x128xf32>
    %414 = math.exp %413 : vector<1x128xf32>
    %cst_172 = arith.constant 1.000000e+00 : f32
    %415 = vector.broadcast %cst_172 : f32 to vector<1x128xf32>
    %416 = arith.addf %415, %414 : vector<1x128xf32>
    %417 = arith.divf %415, %416 : vector<1x128xf32>
    %418 = vector.extract_strided_slice %417 {offsets = [0, 0], sizes = [1, 64], strides = [1, 1]} : vector<1x128xf32> to vector<1x64xf32>
    %419 = vector.extract_strided_slice %417 {offsets = [0, 64], sizes = [1, 64], strides = [1, 1]} : vector<1x128xf32> to vector<1x64xf32>
    %420 = vector.extract_strided_slice %404 {offsets = [0, 128], sizes = [1, 64], strides = [1, 1]} : vector<1x192xf32> to vector<1x64xf32>
    %421 = vector.extract_strided_slice %409 {offsets = [0, 128], sizes = [1, 64], strides = [1, 1]} : vector<1x192xf32> to vector<1x64xf32>
    %422 = arith.mulf %418, %421 : vector<1x64xf32>
    %423 = arith.addf %420, %422 : vector<1x64xf32>
    %424 = math.tanh %423 : vector<1x64xf32>
    %cst_173 = arith.constant 1.000000e+00 : f32
    %425 = vector.broadcast %cst_173 : f32 to vector<1x64xf32>
    %426 = arith.subf %425, %419 : vector<1x64xf32>
    %427 = arith.mulf %426, %424 : vector<1x64xf32>
    %428 = arith.mulf %419, %399 : vector<1x64xf32>
    %429 = arith.addf %427, %428 : vector<1x64xf32>
    %430 = vector.extract_strided_slice %429 {offsets = [0, 0], sizes = [1, 32], strides = [1, 1]} : vector<1x64xf32> to vector<1x32xf32>
    %c4_174 = arith.constant 4 : index
    %c0_175 = arith.constant 0 : index
    %431 = vector.load %arg6[%c4_174, %c0_175] : memref<8x64xf32, #tpu.memory_space<vmem>>, vector<1x32xf32>
    tpu.vector_store %arg6[%c4_174, %c0_175], %430 {strides = array<i32>} : memref<8x64xf32, #tpu.memory_space<vmem>>, vector<1x32xf32>,
    %432 = vector.extract_strided_slice %429 {offsets = [0, 32], sizes = [1, 32], strides = [1, 1]} : vector<1x64xf32> to vector<1x32xf32>
    %c3_176 = arith.constant 3 : index
    %c32_177 = arith.constant 32 : index
    %433 = vector.load %arg6[%c3_176, %c32_177] : memref<8x64xf32, #tpu.memory_space<vmem>>, vector<1x32xf32>
    tpu.vector_store %arg6[%c3_176, %c32_177], %432 {strides = array<i32>} : memref<8x64xf32, #tpu.memory_space<vmem>>, vector<1x32xf32>,
    %434 = vector.extract_strided_slice %282 {offsets = [5, 0], sizes = [1, 192], strides = [1, 1]} : vector<8x192xf32> to vector<1x192xf32>
    %435 = arith.truncf %429 : vector<1x64xf32> to vector<1x64xbf16>
    %c320_178 = arith.constant 320 : index
    %c0_179 = arith.constant 0 : index
    %436 = vector.load %arg1[%c320_178, %c0_179] : memref<640x192xbf16, #tpu.memory_space<vmem>>, vector<64x192xbf16>
    %cst_180 = arith.constant dense<0.000000e+00> : vector<1x192xf32>
    %437 = tpu.matmul %435, %436, %cst_180 {dimension_numbers = #tpu.dot_dimension_numbers<[1], [0], [0], [1], [0, 0, 1, 1], [], []>} : vector<1x64xbf16>, vector<64x192xbf16>, vector<1x192xf32> -> vector<1x192xf32>
    %c3_181 = arith.constant 3 : index
    %c0_182 = arith.constant 0 : index
    %438 = vector.load %arg2[%c3_181, %c0_182] : memref<8x192xf32, #tpu.memory_space<vmem>>, vector<1x192xf32>
    %439 = arith.addf %437, %438 : vector<1x192xf32>
    %440 = vector.extract_strided_slice %434 {offsets = [0, 0], sizes = [1, 128], strides = [1, 1]} : vector<1x192xf32> to vector<1x128xf32>
    %441 = vector.extract_strided_slice %439 {offsets = [0, 0], sizes = [1, 128], strides = [1, 1]} : vector<1x192xf32> to vector<1x128xf32>
    %442 = arith.addf %440, %441 : vector<1x128xf32>
    %443 = arith.negf %442 : vector<1x128xf32>
    %444 = math.exp %443 : vector<1x128xf32>
    %cst_183 = arith.constant 1.000000e+00 : f32
    %445 = vector.broadcast %cst_183 : f32 to vector<1x128xf32>
    %446 = arith.addf %445, %444 : vector<1x128xf32>
    %447 = arith.divf %445, %446 : vector<1x128xf32>
    %448 = vector.extract_strided_slice %447 {offsets = [0, 0], sizes = [1, 64], strides = [1, 1]} : vector<1x128xf32> to vector<1x64xf32>
    %449 = vector.extract_strided_slice %447 {offsets = [0, 64], sizes = [1, 64], strides = [1, 1]} : vector<1x128xf32> to vector<1x64xf32>
    %450 = vector.extract_strided_slice %434 {offsets = [0, 128], sizes = [1, 64], strides = [1, 1]} : vector<1x192xf32> to vector<1x64xf32>
    %451 = vector.extract_strided_slice %439 {offsets = [0, 128], sizes = [1, 64], strides = [1, 1]} : vector<1x192xf32> to vector<1x64xf32>
    %452 = arith.mulf %448, %451 : vector<1x64xf32>
    %453 = arith.addf %450, %452 : vector<1x64xf32>
    %454 = math.tanh %453 : vector<1x64xf32>
    %cst_184 = arith.constant 1.000000e+00 : f32
    %455 = vector.broadcast %cst_184 : f32 to vector<1x64xf32>
    %456 = arith.subf %455, %449 : vector<1x64xf32>
    %457 = arith.mulf %456, %454 : vector<1x64xf32>
    %458 = arith.mulf %449, %429 : vector<1x64xf32>
    %459 = arith.addf %457, %458 : vector<1x64xf32>
    %460 = vector.extract_strided_slice %459 {offsets = [0, 0], sizes = [1, 32], strides = [1, 1]} : vector<1x64xf32> to vector<1x32xf32>
    %c5_185 = arith.constant 5 : index
    %c0_186 = arith.constant 0 : index
    %461 = vector.load %arg6[%c5_185, %c0_186] : memref<8x64xf32, #tpu.memory_space<vmem>>, vector<1x32xf32>
    tpu.vector_store %arg6[%c5_185, %c0_186], %460 {strides = array<i32>} : memref<8x64xf32, #tpu.memory_space<vmem>>, vector<1x32xf32>,
    %462 = vector.extract_strided_slice %459 {offsets = [0, 32], sizes = [1, 32], strides = [1, 1]} : vector<1x64xf32> to vector<1x32xf32>
    %c2_187 = arith.constant 2 : index
    %c32_188 = arith.constant 32 : index
    %463 = vector.load %arg6[%c2_187, %c32_188] : memref<8x64xf32, #tpu.memory_space<vmem>>, vector<1x32xf32>
    tpu.vector_store %arg6[%c2_187, %c32_188], %462 {strides = array<i32>} : memref<8x64xf32, #tpu.memory_space<vmem>>, vector<1x32xf32>,
    %464 = vector.extract_strided_slice %282 {offsets = [6, 0], sizes = [1, 192], strides = [1, 1]} : vector<8x192xf32> to vector<1x192xf32>
    %465 = arith.truncf %459 : vector<1x64xf32> to vector<1x64xbf16>
    %c320_189 = arith.constant 320 : index
    %c0_190 = arith.constant 0 : index
    %466 = vector.load %arg1[%c320_189, %c0_190] : memref<640x192xbf16, #tpu.memory_space<vmem>>, vector<64x192xbf16>
    %cst_191 = arith.constant dense<0.000000e+00> : vector<1x192xf32>
    %467 = tpu.matmul %465, %466, %cst_191 {dimension_numbers = #tpu.dot_dimension_numbers<[1], [0], [0], [1], [0, 0, 1, 1], [], []>} : vector<1x64xbf16>, vector<64x192xbf16>, vector<1x192xf32> -> vector<1x192xf32>
    %c3_192 = arith.constant 3 : index
    %c0_193 = arith.constant 0 : index
    %468 = vector.load %arg2[%c3_192, %c0_193] : memref<8x192xf32, #tpu.memory_space<vmem>>, vector<1x192xf32>
    %469 = arith.addf %467, %468 : vector<1x192xf32>
    %470 = vector.extract_strided_slice %464 {offsets = [0, 0], sizes = [1, 128], strides = [1, 1]} : vector<1x192xf32> to vector<1x128xf32>
    %471 = vector.extract_strided_slice %469 {offsets = [0, 0], sizes = [1, 128], strides = [1, 1]} : vector<1x192xf32> to vector<1x128xf32>
    %472 = arith.addf %470, %471 : vector<1x128xf32>
    %473 = arith.negf %472 : vector<1x128xf32>
    %474 = math.exp %473 : vector<1x128xf32>
    %cst_194 = arith.constant 1.000000e+00 : f32
    %475 = vector.broadcast %cst_194 : f32 to vector<1x128xf32>
    %476 = arith.addf %475, %474 : vector<1x128xf32>
    %477 = arith.divf %475, %476 : vector<1x128xf32>
    %478 = vector.extract_strided_slice %477 {offsets = [0, 0], sizes = [1, 64], strides = [1, 1]} : vector<1x128xf32> to vector<1x64xf32>
    %479 = vector.extract_strided_slice %477 {offsets = [0, 64], sizes = [1, 64], strides = [1, 1]} : vector<1x128xf32> to vector<1x64xf32>
    %480 = vector.extract_strided_slice %464 {offsets = [0, 128], sizes = [1, 64], strides = [1, 1]} : vector<1x192xf32> to vector<1x64xf32>
    %481 = vector.extract_strided_slice %469 {offsets = [0, 128], sizes = [1, 64], strides = [1, 1]} : vector<1x192xf32> to vector<1x64xf32>
    %482 = arith.mulf %478, %481 : vector<1x64xf32>
    %483 = arith.addf %480, %482 : vector<1x64xf32>
    %484 = math.tanh %483 : vector<1x64xf32>
    %cst_195 = arith.constant 1.000000e+00 : f32
    %485 = vector.broadcast %cst_195 : f32 to vector<1x64xf32>
    %486 = arith.subf %485, %479 : vector<1x64xf32>
    %487 = arith.mulf %486, %484 : vector<1x64xf32>
    %488 = arith.mulf %479, %459 : vector<1x64xf32>
    %489 = arith.addf %487, %488 : vector<1x64xf32>
    %490 = vector.extract_strided_slice %489 {offsets = [0, 0], sizes = [1, 32], strides = [1, 1]} : vector<1x64xf32> to vector<1x32xf32>
    %c6_196 = arith.constant 6 : index
    %c0_197 = arith.constant 0 : index
    %491 = vector.load %arg6[%c6_196, %c0_197] : memref<8x64xf32, #tpu.memory_space<vmem>>, vector<1x32xf32>
    tpu.vector_store %arg6[%c6_196, %c0_197], %490 {strides = array<i32>} : memref<8x64xf32, #tpu.memory_space<vmem>>, vector<1x32xf32>,
    %492 = vector.extract_strided_slice %489 {offsets = [0, 32], sizes = [1, 32], strides = [1, 1]} : vector<1x64xf32> to vector<1x32xf32>
    %c1_198 = arith.constant 1 : index
    %c32_199 = arith.constant 32 : index
    %493 = vector.load %arg6[%c1_198, %c32_199] : memref<8x64xf32, #tpu.memory_space<vmem>>, vector<1x32xf32>
    tpu.vector_store %arg6[%c1_198, %c32_199], %492 {strides = array<i32>} : memref<8x64xf32, #tpu.memory_space<vmem>>, vector<1x32xf32>,
    %494 = vector.extract_strided_slice %282 {offsets = [7, 0], sizes = [1, 192], strides = [1, 1]} : vector<8x192xf32> to vector<1x192xf32>
    %495 = arith.truncf %489 : vector<1x64xf32> to vector<1x64xbf16>
    %c320_200 = arith.constant 320 : index
    %c0_201 = arith.constant 0 : index
    %496 = vector.load %arg1[%c320_200, %c0_201] : memref<640x192xbf16, #tpu.memory_space<vmem>>, vector<64x192xbf16>
    %cst_202 = arith.constant dense<0.000000e+00> : vector<1x192xf32>
    %497 = tpu.matmul %495, %496, %cst_202 {dimension_numbers = #tpu.dot_dimension_numbers<[1], [0], [0], [1], [0, 0, 1, 1], [], []>} : vector<1x64xbf16>, vector<64x192xbf16>, vector<1x192xf32> -> vector<1x192xf32>
    %c3_203 = arith.constant 3 : index
    %c0_204 = arith.constant 0 : index
    %498 = vector.load %arg2[%c3_203, %c0_204] : memref<8x192xf32, #tpu.memory_space<vmem>>, vector<1x192xf32>
    %499 = arith.addf %497, %498 : vector<1x192xf32>
    %500 = vector.extract_strided_slice %494 {offsets = [0, 0], sizes = [1, 128], strides = [1, 1]} : vector<1x192xf32> to vector<1x128xf32>
    %501 = vector.extract_strided_slice %499 {offsets = [0, 0], sizes = [1, 128], strides = [1, 1]} : vector<1x192xf32> to vector<1x128xf32>
    %502 = arith.addf %500, %501 : vector<1x128xf32>
    %503 = arith.negf %502 : vector<1x128xf32>
    %504 = math.exp %503 : vector<1x128xf32>
    %cst_205 = arith.constant 1.000000e+00 : f32
    %505 = vector.broadcast %cst_205 : f32 to vector<1x128xf32>
    %506 = arith.addf %505, %504 : vector<1x128xf32>
    %507 = arith.divf %505, %506 : vector<1x128xf32>
    %508 = vector.extract_strided_slice %507 {offsets = [0, 0], sizes = [1, 64], strides = [1, 1]} : vector<1x128xf32> to vector<1x64xf32>
    %509 = vector.extract_strided_slice %507 {offsets = [0, 64], sizes = [1, 64], strides = [1, 1]} : vector<1x128xf32> to vector<1x64xf32>
    %510 = vector.extract_strided_slice %494 {offsets = [0, 128], sizes = [1, 64], strides = [1, 1]} : vector<1x192xf32> to vector<1x64xf32>
    %511 = vector.extract_strided_slice %499 {offsets = [0, 128], sizes = [1, 64], strides = [1, 1]} : vector<1x192xf32> to vector<1x64xf32>
    %512 = arith.mulf %508, %511 : vector<1x64xf32>
    %513 = arith.addf %510, %512 : vector<1x64xf32>
    %514 = math.tanh %513 : vector<1x64xf32>
    %cst_206 = arith.constant 1.000000e+00 : f32
    %515 = vector.broadcast %cst_206 : f32 to vector<1x64xf32>
    %516 = arith.subf %515, %509 : vector<1x64xf32>
    %517 = arith.mulf %516, %514 : vector<1x64xf32>
    %518 = arith.mulf %509, %489 : vector<1x64xf32>
    %519 = arith.addf %517, %518 : vector<1x64xf32>
    %520 = vector.extract_strided_slice %519 {offsets = [0, 0], sizes = [1, 32], strides = [1, 1]} : vector<1x64xf32> to vector<1x32xf32>
    %c7_207 = arith.constant 7 : index
    %c0_208 = arith.constant 0 : index
    %521 = vector.load %arg6[%c7_207, %c0_208] : memref<8x64xf32, #tpu.memory_space<vmem>>, vector<1x32xf32>
    tpu.vector_store %arg6[%c7_207, %c0_208], %520 {strides = array<i32>} : memref<8x64xf32, #tpu.memory_space<vmem>>, vector<1x32xf32>,
    %522 = vector.extract_strided_slice %519 {offsets = [0, 32], sizes = [1, 32], strides = [1, 1]} : vector<1x64xf32> to vector<1x32xf32>
    %c0_209 = arith.constant 0 : index
    %c32_210 = arith.constant 32 : index
    %523 = vector.load %arg6[%c0_209, %c32_210] : memref<8x64xf32, #tpu.memory_space<vmem>>, vector<1x32xf32>
    tpu.vector_store %arg6[%c0_209, %c32_210], %522 {strides = array<i32>} : memref<8x64xf32, #tpu.memory_space<vmem>>, vector<1x32xf32>,
    %c0_211 = arith.constant 0 : index
    %c0_212 = arith.constant 0 : index
    %524 = vector.load %arg6[%c0_211, %c0_212] : memref<8x64xf32, #tpu.memory_space<vmem>>, vector<8x64xf32>
    %525 = vector.extract_strided_slice %524 {offsets = [0, 0], sizes = [8, 32], strides = [1, 1]} : vector<8x64xf32> to vector<8x32xf32>
    %526 = vector.extract_strided_slice %524 {offsets = [0, 32], sizes = [8, 32], strides = [1, 1]} : vector<8x64xf32> to vector<8x32xf32>
    %527 = arith.addf %525, %526 : vector<8x32xf32>
    %528 = vector.extract_strided_slice %269 {offsets = [0, 0], sizes = [1, 32], strides = [1, 1]} : vector<1x64xf32> to vector<1x32xf32>
    %529 = vector.extract_strided_slice %269 {offsets = [0, 32], sizes = [1, 32], strides = [1, 1]} : vector<1x64xf32> to vector<1x32xf32>
    %530 = tpu.transpose %527, [1, 0] : vector<8x32xf32> -> vector<32x8xf32>
    %531 = arith.truncf %530 : vector<32x8xf32> to vector<32x8xbf16>
    %532 = arith.truncf %527 : vector<8x32xf32> to vector<8x32xbf16>
    %c576 = arith.constant 576 : index
    %c0_213 = arith.constant 0 : index
    %533 = vector.load %arg1[%c576, %c0_213] : memref<640x192xbf16, #tpu.memory_space<vmem>>, vector<32x32xbf16>
    %cst_214 = arith.constant dense<0.000000e+00> : vector<8x32xf32>
    %534 = tpu.matmul %532, %533, %cst_214 {dimension_numbers = #tpu.dot_dimension_numbers<[1], [0], [0], [1], [0, 0, 1, 1], [], []>} : vector<8x32xbf16>, vector<32x32xbf16>, vector<8x32xf32> -> vector<8x32xf32>
    %535 = arith.truncf %534 : vector<8x32xf32> to vector<8x32xbf16>
    %536 = tpu.iota {dimensions = array<i32: 1>} : vector<1x64xi32>
    %537 = tpu.iota {dimensions = array<i32: 1>} : vector<1x128xi32>
    %c1_i32 = arith.constant 1 : i32
    %538 = vector.broadcast %c1_i32 : i32 to vector<1x64xi32>
    %539 = arith.cmpi eq, %536, %538 : vector<1x64xi32>
    %540 = arith.extui %539 : vector<1x64xi1> to vector<1x64xi32>
    %541 = arith.sitofp %540 : vector<1x64xi32> to vector<1x64xf32>
    %542 = arith.truncf %541 : vector<1x64xf32> to vector<1x64xbf16>
    %c0_i32 = arith.constant 0 : i32
    %543 = vector.broadcast %c0_i32 : i32 to vector<1x128xi32>
    %cst_215 = arith.constant 0.000000e+00 : f32
    %544 = vector.broadcast %cst_215 : f32 to vector<1x128xf32>
    %545 = arith.truncf %528 : vector<1x32xf32> to vector<1x32xbf16>
    %546 = tpu.concatenate %542, %545 in 1 : vector<1x64xbf16>, vector<1x32xbf16> -> vector<1x96xbf16>
    %c384 = arith.constant 384 : index
    %c0_216 = arith.constant 0 : index
    %547 = vector.load %arg1[%c384, %c0_216] : memref<640x192xbf16, #tpu.memory_space<vmem>>, vector<96x128xbf16>
    %cst_217 = arith.constant dense<0.000000e+00> : vector<1x128xf32>
    %548 = tpu.matmul %546, %547, %cst_217 {dimension_numbers = #tpu.dot_dimension_numbers<[1], [0], [0], [1], [0, 0, 1, 1], [], []>} : vector<1x96xbf16>, vector<96x128xbf16>, vector<1x128xf32> -> vector<1x128xf32>
    %c4_218 = arith.constant 4 : index
    %c0_219 = arith.constant 0 : index
    %549 = vector.load %arg2[%c4_218, %c0_219] : memref<8x192xf32, #tpu.memory_space<vmem>>, vector<1x128xf32>
    %550 = arith.addf %548, %549 : vector<1x128xf32>
    %551 = vector.extract_strided_slice %550 {offsets = [0, 0], sizes = [1, 64], strides = [1, 1]} : vector<1x128xf32> to vector<1x64xf32>
    %552 = arith.negf %551 : vector<1x64xf32>
    %553 = math.exp %552 : vector<1x64xf32>
    %cst_220 = arith.constant 1.000000e+00 : f32
    %554 = vector.broadcast %cst_220 : f32 to vector<1x64xf32>
    %555 = arith.addf %554, %553 : vector<1x64xf32>
    %556 = arith.divf %554, %555 : vector<1x64xf32>
    %557 = vector.extract_strided_slice %556 {offsets = [0, 0], sizes = [1, 32], strides = [1, 1]} : vector<1x64xf32> to vector<1x32xf32>
    %558 = vector.extract_strided_slice %556 {offsets = [0, 32], sizes = [1, 32], strides = [1, 1]} : vector<1x64xf32> to vector<1x32xf32>
    %559 = vector.extract_strided_slice %550 {offsets = [0, 64], sizes = [1, 32], strides = [1, 1]} : vector<1x128xf32> to vector<1x32xf32>
    %560 = vector.extract_strided_slice %550 {offsets = [0, 96], sizes = [1, 32], strides = [1, 1]} : vector<1x128xf32> to vector<1x32xf32>
    %561 = arith.mulf %557, %560 : vector<1x32xf32>
    %562 = arith.addf %559, %561 : vector<1x32xf32>
    %563 = math.tanh %562 : vector<1x32xf32>
    %cst_221 = arith.constant 1.000000e+00 : f32
    %564 = vector.broadcast %cst_221 : f32 to vector<1x32xf32>
    %565 = arith.subf %564, %558 : vector<1x32xf32>
    %566 = arith.mulf %565, %563 : vector<1x32xf32>
    %567 = arith.mulf %558, %528 : vector<1x32xf32>
    %568 = arith.addf %566, %567 : vector<1x32xf32>
    %569 = arith.truncf %568 : vector<1x32xf32> to vector<1x32xbf16>
    %570 = arith.truncf %529 : vector<1x32xf32> to vector<1x32xbf16>
    %571 = tpu.concatenate %569, %570 in 1 : vector<1x32xbf16>, vector<1x32xbf16> -> vector<1x64xbf16>
    %c480 = arith.constant 480 : index
    %c0_222 = arith.constant 0 : index
    %572 = vector.load %arg1[%c480, %c0_222] : memref<640x192xbf16, #tpu.memory_space<vmem>>, vector<64x128xbf16>
    %cst_223 = arith.constant dense<0.000000e+00> : vector<1x128xf32>
    %573 = tpu.matmul %571, %572, %cst_223 {dimension_numbers = #tpu.dot_dimension_numbers<[1], [0], [0], [1], [0, 0, 1, 1], [], []>} : vector<1x64xbf16>, vector<64x128xbf16>, vector<1x128xf32> -> vector<1x128xf32>
    %c5_224 = arith.constant 5 : index
    %c0_225 = arith.constant 0 : index
    %574 = vector.load %arg2[%c5_224, %c0_225] : memref<8x192xf32, #tpu.memory_space<vmem>>, vector<1x128xf32>
    %575 = arith.addf %573, %574 : vector<1x128xf32>
    %576 = vector.extract_strided_slice %575 {offsets = [0, 0], sizes = [1, 64], strides = [1, 1]} : vector<1x128xf32> to vector<1x64xf32>
    %577 = arith.negf %576 : vector<1x64xf32>
    %578 = math.exp %577 : vector<1x64xf32>
    %cst_226 = arith.constant 1.000000e+00 : f32
    %579 = vector.broadcast %cst_226 : f32 to vector<1x64xf32>
    %580 = arith.addf %579, %578 : vector<1x64xf32>
    %581 = arith.divf %579, %580 : vector<1x64xf32>
    %582 = vector.extract_strided_slice %581 {offsets = [0, 0], sizes = [1, 32], strides = [1, 1]} : vector<1x64xf32> to vector<1x32xf32>
    %583 = vector.extract_strided_slice %581 {offsets = [0, 32], sizes = [1, 32], strides = [1, 1]} : vector<1x64xf32> to vector<1x32xf32>
    %584 = vector.extract_strided_slice %575 {offsets = [0, 64], sizes = [1, 32], strides = [1, 1]} : vector<1x128xf32> to vector<1x32xf32>
    %585 = vector.extract_strided_slice %575 {offsets = [0, 96], sizes = [1, 32], strides = [1, 1]} : vector<1x128xf32> to vector<1x32xf32>
    %586 = arith.mulf %582, %585 : vector<1x32xf32>
    %587 = arith.addf %584, %586 : vector<1x32xf32>
    %588 = math.tanh %587 : vector<1x32xf32>
    %cst_227 = arith.constant 1.000000e+00 : f32
    %589 = vector.broadcast %cst_227 : f32 to vector<1x32xf32>
    %590 = arith.subf %589, %583 : vector<1x32xf32>
    %591 = arith.mulf %590, %588 : vector<1x32xf32>
    %592 = arith.mulf %583, %529 : vector<1x32xf32>
    %593 = arith.addf %591, %592 : vector<1x32xf32>
    %594 = arith.truncf %593 : vector<1x32xf32> to vector<1x32xbf16>
    %cst_228 = arith.constant dense<0.000000e+00> : vector<1x8xf32>
    %595 = tpu.matmul %594, %531, %cst_228 {dimension_numbers = #tpu.dot_dimension_numbers<[1], [0], [0], [1], [0, 0, 1, 1], [], []>} : vector<1x32xbf16>, vector<32x8xbf16>, vector<1x8xf32> -> vector<1x8xf32>
    %cst_229 = arith.constant dense<0xFF800000> : vector<1xf32>
    %596 = vector.multi_reduction <maximumf>, %595, %cst_229 [1] : vector<1x8xf32> to vector<1xf32>
    %597 = vector.shape_cast %596 : vector<1xf32> to vector<1x1xf32>
    %598 = vector.broadcast %597 : vector<1x1xf32> to vector<1x8xf32>
    %599 = arith.subf %595, %598 : vector<1x8xf32>
    %600 = math.exp %599 : vector<1x8xf32>
    %cst_230 = arith.constant dense<0.000000e+00> : vector<1xf32>
    %601 = vector.multi_reduction <add>, %600, %cst_230 [1] : vector<1x8xf32> to vector<1xf32>
    %602 = vector.shape_cast %601 : vector<1xf32> to vector<1x1xf32>
    %603 = tpu.reciprocal %602 {approx = true} : vector<1x1xf32> -> vector<1x1xf32>
    %604 = arith.truncf %600 : vector<1x8xf32> to vector<1x8xbf16>
    %cst_231 = arith.constant dense<0.000000e+00> : vector<1x32xf32>
    %605 = tpu.matmul %604, %535, %cst_231 {dimension_numbers = #tpu.dot_dimension_numbers<[1], [0], [0], [1], [0, 0, 1, 1], [], []>} : vector<1x8xbf16>, vector<8x32xbf16>, vector<1x32xf32> -> vector<1x32xf32>
    %606 = vector.broadcast %603 : vector<1x1xf32> to vector<1x32xf32>
    %607 = arith.mulf %605, %606 : vector<1x32xf32>
    %c544 = arith.constant 544 : index
    %c0_232 = arith.constant 0 : index
    %608 = vector.load %arg1[%c544, %c0_232] : memref<640x192xbf16, #tpu.memory_space<vmem>>, vector<32x32xbf16>
    %cst_233 = arith.constant dense<0.000000e+00> : vector<1x32xf32>
    %609 = tpu.matmul %594, %608, %cst_233 {dimension_numbers = #tpu.dot_dimension_numbers<[1], [0], [0], [1], [0, 0, 1, 1], [], []>} : vector<1x32xbf16>, vector<32x32xbf16>, vector<1x32xf32> -> vector<1x32xf32>
    %610 = arith.addf %609, %607 : vector<1x32xf32>
    %c6_234 = arith.constant 6 : index
    %c0_235 = arith.constant 0 : index
    %611 = vector.load %arg2[%c6_234, %c0_235] : memref<8x192xf32, #tpu.memory_space<vmem>>, vector<1x32xf32>
    %612 = arith.addf %610, %611 : vector<1x32xf32>
    %613 = math.tanh %612 : vector<1x32xf32>
    %614 = arith.truncf %613 : vector<1x32xf32> to vector<1x32xbf16>
    %c608 = arith.constant 608 : index
    %c0_236 = arith.constant 0 : index
    %615 = vector.load %arg1[%c608, %c0_236] : memref<640x192xbf16, #tpu.memory_space<vmem>>, vector<32x64xbf16>
    %cst_237 = arith.constant dense<0.000000e+00> : vector<1x64xf32>
    %616 = tpu.matmul %614, %615, %cst_237 {dimension_numbers = #tpu.dot_dimension_numbers<[1], [0], [0], [1], [0, 0, 1, 1], [], []>} : vector<1x32xbf16>, vector<32x64xbf16>, vector<1x64xf32> -> vector<1x64xf32>
    %c7_238 = arith.constant 7 : index
    %c0_239 = arith.constant 0 : index
    %617 = vector.load %arg2[%c7_238, %c0_239] : memref<8x192xf32, #tpu.memory_space<vmem>>, vector<1x64xf32>
    %618 = arith.addf %616, %617 : vector<1x64xf32>
    %cst_240 = arith.constant dense<0xFF800000> : vector<1xf32>
    %619 = vector.multi_reduction <maximumf>, %618, %cst_240 [1] : vector<1x64xf32> to vector<1xf32>
    %620 = vector.shape_cast %619 : vector<1xf32> to vector<1x1xf32>
    %621 = vector.broadcast %620 : vector<1x1xf32> to vector<1x64xf32>
    %622 = arith.subf %618, %621 : vector<1x64xf32>
    %623 = math.exp %622 : vector<1x64xf32>
    %cst_241 = arith.constant dense<0.000000e+00> : vector<1xf32>
    %624 = vector.multi_reduction <add>, %623, %cst_241 [1] : vector<1x64xf32> to vector<1xf32>
    %625 = vector.shape_cast %624 : vector<1xf32> to vector<1x1xf32>
    %626 = tpu.reciprocal %625 {approx = true} : vector<1x1xf32> -> vector<1x1xf32>
    %627 = vector.broadcast %620 : vector<1x1xf32> to vector<1x64xf32>
    %628 = arith.cmpf oge, %618, %627 : vector<1x64xf32>
    %c64_i32 = arith.constant 64 : i32
    %629 = vector.broadcast %c64_i32 : i32 to vector<1x64xi32>
    %630 = arith.select %628, %536, %629 : vector<1x64xi1>, vector<1x64xi32>
    %cst_242 = arith.constant dense<2147483647> : vector<1xi32>
    %631 = vector.multi_reduction <minsi>, %630, %cst_242 [1] : vector<1x64xi32> to vector<1xi32>
    %632 = vector.shape_cast %631 : vector<1xi32> to vector<1x1xi32>
    %c0_i32_243 = arith.constant 0 : i32
    %633 = vector.broadcast %c0_i32_243 : i32 to vector<1x128xi32>
    %634 = arith.cmpi eq, %537, %633 : vector<1x128xi32>
    %635 = vector.shape_cast %632 : vector<1x1xi32> to vector<1x1xi32>
    %636 = vector.broadcast %635 : vector<1x1xi32> to vector<1x128xi32>
    %637 = arith.select %634, %636, %543 : vector<1x128xi1>, vector<1x128xi32>
    %c0_i32_244 = arith.constant 0 : i32
    %638 = vector.broadcast %c0_i32_244 : i32 to vector<1x128xi32>
    %639 = arith.cmpi eq, %537, %638 : vector<1x128xi32>
    %640 = vector.shape_cast %626 : vector<1x1xf32> to vector<1x1xf32>
    %641 = vector.broadcast %640 : vector<1x1xf32> to vector<1x128xf32>
    %642 = arith.select %639, %641, %544 : vector<1x128xi1>, vector<1x128xf32>
    %643 = vector.broadcast %632 : vector<1x1xi32> to vector<1x64xi32>
    %644 = arith.cmpi eq, %536, %643 : vector<1x64xi32>
    %645 = arith.extui %644 : vector<1x64xi1> to vector<1x64xi32>
    %646 = arith.sitofp %645 : vector<1x64xi32> to vector<1x64xf32>
    %647 = arith.truncf %646 : vector<1x64xf32> to vector<1x64xbf16>
    %648 = arith.truncf %568 : vector<1x32xf32> to vector<1x32xbf16>
    %649 = tpu.concatenate %647, %648 in 1 : vector<1x64xbf16>, vector<1x32xbf16> -> vector<1x96xbf16>
    %c384_245 = arith.constant 384 : index
    %c0_246 = arith.constant 0 : index
    %650 = vector.load %arg1[%c384_245, %c0_246] : memref<640x192xbf16, #tpu.memory_space<vmem>>, vector<96x128xbf16>
    %cst_247 = arith.constant dense<0.000000e+00> : vector<1x128xf32>
    %651 = tpu.matmul %649, %650, %cst_247 {dimension_numbers = #tpu.dot_dimension_numbers<[1], [0], [0], [1], [0, 0, 1, 1], [], []>} : vector<1x96xbf16>, vector<96x128xbf16>, vector<1x128xf32> -> vector<1x128xf32>
    %c4_248 = arith.constant 4 : index
    %c0_249 = arith.constant 0 : index
    %652 = vector.load %arg2[%c4_248, %c0_249] : memref<8x192xf32, #tpu.memory_space<vmem>>, vector<1x128xf32>
    %653 = arith.addf %651, %652 : vector<1x128xf32>
    %654 = vector.extract_strided_slice %653 {offsets = [0, 0], sizes = [1, 64], strides = [1, 1]} : vector<1x128xf32> to vector<1x64xf32>
    %655 = arith.negf %654 : vector<1x64xf32>
    %656 = math.exp %655 : vector<1x64xf32>
    %cst_250 = arith.constant 1.000000e+00 : f32
    %657 = vector.broadcast %cst_250 : f32 to vector<1x64xf32>
    %658 = arith.addf %657, %656 : vector<1x64xf32>
    %659 = arith.divf %657, %658 : vector<1x64xf32>
    %660 = vector.extract_strided_slice %659 {offsets = [0, 0], sizes = [1, 32], strides = [1, 1]} : vector<1x64xf32> to vector<1x32xf32>
    %661 = vector.extract_strided_slice %659 {offsets = [0, 32], sizes = [1, 32], strides = [1, 1]} : vector<1x64xf32> to vector<1x32xf32>
    %662 = vector.extract_strided_slice %653 {offsets = [0, 64], sizes = [1, 32], strides = [1, 1]} : vector<1x128xf32> to vector<1x32xf32>
    %663 = vector.extract_strided_slice %653 {offsets = [0, 96], sizes = [1, 32], strides = [1, 1]} : vector<1x128xf32> to vector<1x32xf32>
    %664 = arith.mulf %660, %663 : vector<1x32xf32>
    %665 = arith.addf %662, %664 : vector<1x32xf32>
    %666 = math.tanh %665 : vector<1x32xf32>
    %cst_251 = arith.constant 1.000000e+00 : f32
    %667 = vector.broadcast %cst_251 : f32 to vector<1x32xf32>
    %668 = arith.subf %667, %661 : vector<1x32xf32>
    %669 = arith.mulf %668, %666 : vector<1x32xf32>
    %670 = arith.mulf %661, %568 : vector<1x32xf32>
    %671 = arith.addf %669, %670 : vector<1x32xf32>
    %672 = arith.truncf %671 : vector<1x32xf32> to vector<1x32xbf16>
    %673 = arith.truncf %593 : vector<1x32xf32> to vector<1x32xbf16>
    %674 = tpu.concatenate %672, %673 in 1 : vector<1x32xbf16>, vector<1x32xbf16> -> vector<1x64xbf16>
    %c480_252 = arith.constant 480 : index
    %c0_253 = arith.constant 0 : index
    %675 = vector.load %arg1[%c480_252, %c0_253] : memref<640x192xbf16, #tpu.memory_space<vmem>>, vector<64x128xbf16>
    %cst_254 = arith.constant dense<0.000000e+00> : vector<1x128xf32>
    %676 = tpu.matmul %674, %675, %cst_254 {dimension_numbers = #tpu.dot_dimension_numbers<[1], [0], [0], [1], [0, 0, 1, 1], [], []>} : vector<1x64xbf16>, vector<64x128xbf16>, vector<1x128xf32> -> vector<1x128xf32>
    %c5_255 = arith.constant 5 : index
    %c0_256 = arith.constant 0 : index
    %677 = vector.load %arg2[%c5_255, %c0_256] : memref<8x192xf32, #tpu.memory_space<vmem>>, vector<1x128xf32>
    %678 = arith.addf %676, %677 : vector<1x128xf32>
    %679 = vector.extract_strided_slice %678 {offsets = [0, 0], sizes = [1, 64], strides = [1, 1]} : vector<1x128xf32> to vector<1x64xf32>
    %680 = arith.negf %679 : vector<1x64xf32>
    %681 = math.exp %680 : vector<1x64xf32>
    %cst_257 = arith.constant 1.000000e+00 : f32
    %682 = vector.broadcast %cst_257 : f32 to vector<1x64xf32>
    %683 = arith.addf %682, %681 : vector<1x64xf32>
    %684 = arith.divf %682, %683 : vector<1x64xf32>
    %685 = vector.extract_strided_slice %684 {offsets = [0, 0], sizes = [1, 32], strides = [1, 1]} : vector<1x64xf32> to vector<1x32xf32>
    %686 = vector.extract_strided_slice %684 {offsets = [0, 32], sizes = [1, 32], strides = [1, 1]} : vector<1x64xf32> to vector<1x32xf32>
    %687 = vector.extract_strided_slice %678 {offsets = [0, 64], sizes = [1, 32], strides = [1, 1]} : vector<1x128xf32> to vector<1x32xf32>
    %688 = vector.extract_strided_slice %678 {offsets = [0, 96], sizes = [1, 32], strides = [1, 1]} : vector<1x128xf32> to vector<1x32xf32>
    %689 = arith.mulf %685, %688 : vector<1x32xf32>
    %690 = arith.addf %687, %689 : vector<1x32xf32>
    %691 = math.tanh %690 : vector<1x32xf32>
    %cst_258 = arith.constant 1.000000e+00 : f32
    %692 = vector.broadcast %cst_258 : f32 to vector<1x32xf32>
    %693 = arith.subf %692, %686 : vector<1x32xf32>
    %694 = arith.mulf %693, %691 : vector<1x32xf32>
    %695 = arith.mulf %686, %593 : vector<1x32xf32>
    %696 = arith.addf %694, %695 : vector<1x32xf32>
    %697 = arith.truncf %696 : vector<1x32xf32> to vector<1x32xbf16>
    %cst_259 = arith.constant dense<0.000000e+00> : vector<1x8xf32>
    %698 = tpu.matmul %697, %531, %cst_259 {dimension_numbers = #tpu.dot_dimension_numbers<[1], [0], [0], [1], [0, 0, 1, 1], [], []>} : vector<1x32xbf16>, vector<32x8xbf16>, vector<1x8xf32> -> vector<1x8xf32>
    %cst_260 = arith.constant dense<0xFF800000> : vector<1xf32>
    %699 = vector.multi_reduction <maximumf>, %698, %cst_260 [1] : vector<1x8xf32> to vector<1xf32>
    %700 = vector.shape_cast %699 : vector<1xf32> to vector<1x1xf32>
    %701 = vector.broadcast %700 : vector<1x1xf32> to vector<1x8xf32>
    %702 = arith.subf %698, %701 : vector<1x8xf32>
    %703 = math.exp %702 : vector<1x8xf32>
    %cst_261 = arith.constant dense<0.000000e+00> : vector<1xf32>
    %704 = vector.multi_reduction <add>, %703, %cst_261 [1] : vector<1x8xf32> to vector<1xf32>
    %705 = vector.shape_cast %704 : vector<1xf32> to vector<1x1xf32>
    %706 = tpu.reciprocal %705 {approx = true} : vector<1x1xf32> -> vector<1x1xf32>
    %707 = arith.truncf %703 : vector<1x8xf32> to vector<1x8xbf16>
    %cst_262 = arith.constant dense<0.000000e+00> : vector<1x32xf32>
    %708 = tpu.matmul %707, %535, %cst_262 {dimension_numbers = #tpu.dot_dimension_numbers<[1], [0], [0], [1], [0, 0, 1, 1], [], []>} : vector<1x8xbf16>, vector<8x32xbf16>, vector<1x32xf32> -> vector<1x32xf32>
    %709 = vector.broadcast %706 : vector<1x1xf32> to vector<1x32xf32>
    %710 = arith.mulf %708, %709 : vector<1x32xf32>
    %c544_263 = arith.constant 544 : index
    %c0_264 = arith.constant 0 : index
    %711 = vector.load %arg1[%c544_263, %c0_264] : memref<640x192xbf16, #tpu.memory_space<vmem>>, vector<32x32xbf16>
    %cst_265 = arith.constant dense<0.000000e+00> : vector<1x32xf32>
    %712 = tpu.matmul %697, %711, %cst_265 {dimension_numbers = #tpu.dot_dimension_numbers<[1], [0], [0], [1], [0, 0, 1, 1], [], []>} : vector<1x32xbf16>, vector<32x32xbf16>, vector<1x32xf32> -> vector<1x32xf32>
    %713 = arith.addf %712, %710 : vector<1x32xf32>
    %c6_266 = arith.constant 6 : index
    %c0_267 = arith.constant 0 : index
    %714 = vector.load %arg2[%c6_266, %c0_267] : memref<8x192xf32, #tpu.memory_space<vmem>>, vector<1x32xf32>
    %715 = arith.addf %713, %714 : vector<1x32xf32>
    %716 = math.tanh %715 : vector<1x32xf32>
    %717 = arith.truncf %716 : vector<1x32xf32> to vector<1x32xbf16>
    %c608_268 = arith.constant 608 : index
    %c0_269 = arith.constant 0 : index
    %718 = vector.load %arg1[%c608_268, %c0_269] : memref<640x192xbf16, #tpu.memory_space<vmem>>, vector<32x64xbf16>
    %cst_270 = arith.constant dense<0.000000e+00> : vector<1x64xf32>
    %719 = tpu.matmul %717, %718, %cst_270 {dimension_numbers = #tpu.dot_dimension_numbers<[1], [0], [0], [1], [0, 0, 1, 1], [], []>} : vector<1x32xbf16>, vector<32x64xbf16>, vector<1x64xf32> -> vector<1x64xf32>
    %c7_271 = arith.constant 7 : index
    %c0_272 = arith.constant 0 : index
    %720 = vector.load %arg2[%c7_271, %c0_272] : memref<8x192xf32, #tpu.memory_space<vmem>>, vector<1x64xf32>
    %721 = arith.addf %719, %720 : vector<1x64xf32>
    %cst_273 = arith.constant dense<0xFF800000> : vector<1xf32>
    %722 = vector.multi_reduction <maximumf>, %721, %cst_273 [1] : vector<1x64xf32> to vector<1xf32>
    %723 = vector.shape_cast %722 : vector<1xf32> to vector<1x1xf32>
    %724 = vector.broadcast %723 : vector<1x1xf32> to vector<1x64xf32>
    %725 = arith.subf %721, %724 : vector<1x64xf32>
    %726 = math.exp %725 : vector<1x64xf32>
    %cst_274 = arith.constant dense<0.000000e+00> : vector<1xf32>
    %727 = vector.multi_reduction <add>, %726, %cst_274 [1] : vector<1x64xf32> to vector<1xf32>
    %728 = vector.shape_cast %727 : vector<1xf32> to vector<1x1xf32>
    %729 = tpu.reciprocal %728 {approx = true} : vector<1x1xf32> -> vector<1x1xf32>
    %730 = vector.broadcast %723 : vector<1x1xf32> to vector<1x64xf32>
    %731 = arith.cmpf oge, %721, %730 : vector<1x64xf32>
    %c64_i32_275 = arith.constant 64 : i32
    %732 = vector.broadcast %c64_i32_275 : i32 to vector<1x64xi32>
    %733 = arith.select %731, %536, %732 : vector<1x64xi1>, vector<1x64xi32>
    %cst_276 = arith.constant dense<2147483647> : vector<1xi32>
    %734 = vector.multi_reduction <minsi>, %733, %cst_276 [1] : vector<1x64xi32> to vector<1xi32>
    %735 = vector.shape_cast %734 : vector<1xi32> to vector<1x1xi32>
    %c1_i32_277 = arith.constant 1 : i32
    %736 = vector.broadcast %c1_i32_277 : i32 to vector<1x128xi32>
    %737 = arith.cmpi eq, %537, %736 : vector<1x128xi32>
    %738 = vector.shape_cast %735 : vector<1x1xi32> to vector<1x1xi32>
    %739 = vector.broadcast %738 : vector<1x1xi32> to vector<1x128xi32>
    %740 = arith.select %737, %739, %637 : vector<1x128xi1>, vector<1x128xi32>
    %c1_i32_278 = arith.constant 1 : i32
    %741 = vector.broadcast %c1_i32_278 : i32 to vector<1x128xi32>
    %742 = arith.cmpi eq, %537, %741 : vector<1x128xi32>
    %743 = vector.shape_cast %729 : vector<1x1xf32> to vector<1x1xf32>
    %744 = vector.broadcast %743 : vector<1x1xf32> to vector<1x128xf32>
    %745 = arith.select %742, %744, %642 : vector<1x128xi1>, vector<1x128xf32>
    %746 = vector.broadcast %735 : vector<1x1xi32> to vector<1x64xi32>
    %747 = arith.cmpi eq, %536, %746 : vector<1x64xi32>
    %748 = arith.extui %747 : vector<1x64xi1> to vector<1x64xi32>
    %749 = arith.sitofp %748 : vector<1x64xi32> to vector<1x64xf32>
    %750 = arith.truncf %749 : vector<1x64xf32> to vector<1x64xbf16>
    %751 = arith.truncf %671 : vector<1x32xf32> to vector<1x32xbf16>
    %752 = tpu.concatenate %750, %751 in 1 : vector<1x64xbf16>, vector<1x32xbf16> -> vector<1x96xbf16>
    %c384_279 = arith.constant 384 : index
    %c0_280 = arith.constant 0 : index
    %753 = vector.load %arg1[%c384_279, %c0_280] : memref<640x192xbf16, #tpu.memory_space<vmem>>, vector<96x128xbf16>
    %cst_281 = arith.constant dense<0.000000e+00> : vector<1x128xf32>
    %754 = tpu.matmul %752, %753, %cst_281 {dimension_numbers = #tpu.dot_dimension_numbers<[1], [0], [0], [1], [0, 0, 1, 1], [], []>} : vector<1x96xbf16>, vector<96x128xbf16>, vector<1x128xf32> -> vector<1x128xf32>
    %c4_282 = arith.constant 4 : index
    %c0_283 = arith.constant 0 : index
    %755 = vector.load %arg2[%c4_282, %c0_283] : memref<8x192xf32, #tpu.memory_space<vmem>>, vector<1x128xf32>
    %756 = arith.addf %754, %755 : vector<1x128xf32>
    %757 = vector.extract_strided_slice %756 {offsets = [0, 0], sizes = [1, 64], strides = [1, 1]} : vector<1x128xf32> to vector<1x64xf32>
    %758 = arith.negf %757 : vector<1x64xf32>
    %759 = math.exp %758 : vector<1x64xf32>
    %cst_284 = arith.constant 1.000000e+00 : f32
    %760 = vector.broadcast %cst_284 : f32 to vector<1x64xf32>
    %761 = arith.addf %760, %759 : vector<1x64xf32>
    %762 = arith.divf %760, %761 : vector<1x64xf32>
    %763 = vector.extract_strided_slice %762 {offsets = [0, 0], sizes = [1, 32], strides = [1, 1]} : vector<1x64xf32> to vector<1x32xf32>
    %764 = vector.extract_strided_slice %762 {offsets = [0, 32], sizes = [1, 32], strides = [1, 1]} : vector<1x64xf32> to vector<1x32xf32>
    %765 = vector.extract_strided_slice %756 {offsets = [0, 64], sizes = [1, 32], strides = [1, 1]} : vector<1x128xf32> to vector<1x32xf32>
    %766 = vector.extract_strided_slice %756 {offsets = [0, 96], sizes = [1, 32], strides = [1, 1]} : vector<1x128xf32> to vector<1x32xf32>
    %767 = arith.mulf %763, %766 : vector<1x32xf32>
    %768 = arith.addf %765, %767 : vector<1x32xf32>
    %769 = math.tanh %768 : vector<1x32xf32>
    %cst_285 = arith.constant 1.000000e+00 : f32
    %770 = vector.broadcast %cst_285 : f32 to vector<1x32xf32>
    %771 = arith.subf %770, %764 : vector<1x32xf32>
    %772 = arith.mulf %771, %769 : vector<1x32xf32>
    %773 = arith.mulf %764, %671 : vector<1x32xf32>
    %774 = arith.addf %772, %773 : vector<1x32xf32>
    %775 = arith.truncf %774 : vector<1x32xf32> to vector<1x32xbf16>
    %776 = arith.truncf %696 : vector<1x32xf32> to vector<1x32xbf16>
    %777 = tpu.concatenate %775, %776 in 1 : vector<1x32xbf16>, vector<1x32xbf16> -> vector<1x64xbf16>
    %c480_286 = arith.constant 480 : index
    %c0_287 = arith.constant 0 : index
    %778 = vector.load %arg1[%c480_286, %c0_287] : memref<640x192xbf16, #tpu.memory_space<vmem>>, vector<64x128xbf16>
    %cst_288 = arith.constant dense<0.000000e+00> : vector<1x128xf32>
    %779 = tpu.matmul %777, %778, %cst_288 {dimension_numbers = #tpu.dot_dimension_numbers<[1], [0], [0], [1], [0, 0, 1, 1], [], []>} : vector<1x64xbf16>, vector<64x128xbf16>, vector<1x128xf32> -> vector<1x128xf32>
    %c5_289 = arith.constant 5 : index
    %c0_290 = arith.constant 0 : index
    %780 = vector.load %arg2[%c5_289, %c0_290] : memref<8x192xf32, #tpu.memory_space<vmem>>, vector<1x128xf32>
    %781 = arith.addf %779, %780 : vector<1x128xf32>
    %782 = vector.extract_strided_slice %781 {offsets = [0, 0], sizes = [1, 64], strides = [1, 1]} : vector<1x128xf32> to vector<1x64xf32>
    %783 = arith.negf %782 : vector<1x64xf32>
    %784 = math.exp %783 : vector<1x64xf32>
    %cst_291 = arith.constant 1.000000e+00 : f32
    %785 = vector.broadcast %cst_291 : f32 to vector<1x64xf32>
    %786 = arith.addf %785, %784 : vector<1x64xf32>
    %787 = arith.divf %785, %786 : vector<1x64xf32>
    %788 = vector.extract_strided_slice %787 {offsets = [0, 0], sizes = [1, 32], strides = [1, 1]} : vector<1x64xf32> to vector<1x32xf32>
    %789 = vector.extract_strided_slice %787 {offsets = [0, 32], sizes = [1, 32], strides = [1, 1]} : vector<1x64xf32> to vector<1x32xf32>
    %790 = vector.extract_strided_slice %781 {offsets = [0, 64], sizes = [1, 32], strides = [1, 1]} : vector<1x128xf32> to vector<1x32xf32>
    %791 = vector.extract_strided_slice %781 {offsets = [0, 96], sizes = [1, 32], strides = [1, 1]} : vector<1x128xf32> to vector<1x32xf32>
    %792 = arith.mulf %788, %791 : vector<1x32xf32>
    %793 = arith.addf %790, %792 : vector<1x32xf32>
    %794 = math.tanh %793 : vector<1x32xf32>
    %cst_292 = arith.constant 1.000000e+00 : f32
    %795 = vector.broadcast %cst_292 : f32 to vector<1x32xf32>
    %796 = arith.subf %795, %789 : vector<1x32xf32>
    %797 = arith.mulf %796, %794 : vector<1x32xf32>
    %798 = arith.mulf %789, %696 : vector<1x32xf32>
    %799 = arith.addf %797, %798 : vector<1x32xf32>
    %800 = arith.truncf %799 : vector<1x32xf32> to vector<1x32xbf16>
    %cst_293 = arith.constant dense<0.000000e+00> : vector<1x8xf32>
    %801 = tpu.matmul %800, %531, %cst_293 {dimension_numbers = #tpu.dot_dimension_numbers<[1], [0], [0], [1], [0, 0, 1, 1], [], []>} : vector<1x32xbf16>, vector<32x8xbf16>, vector<1x8xf32> -> vector<1x8xf32>
    %cst_294 = arith.constant dense<0xFF800000> : vector<1xf32>
    %802 = vector.multi_reduction <maximumf>, %801, %cst_294 [1] : vector<1x8xf32> to vector<1xf32>
    %803 = vector.shape_cast %802 : vector<1xf32> to vector<1x1xf32>
    %804 = vector.broadcast %803 : vector<1x1xf32> to vector<1x8xf32>
    %805 = arith.subf %801, %804 : vector<1x8xf32>
    %806 = math.exp %805 : vector<1x8xf32>
    %cst_295 = arith.constant dense<0.000000e+00> : vector<1xf32>
    %807 = vector.multi_reduction <add>, %806, %cst_295 [1] : vector<1x8xf32> to vector<1xf32>
    %808 = vector.shape_cast %807 : vector<1xf32> to vector<1x1xf32>
    %809 = tpu.reciprocal %808 {approx = true} : vector<1x1xf32> -> vector<1x1xf32>
    %810 = arith.truncf %806 : vector<1x8xf32> to vector<1x8xbf16>
    %cst_296 = arith.constant dense<0.000000e+00> : vector<1x32xf32>
    %811 = tpu.matmul %810, %535, %cst_296 {dimension_numbers = #tpu.dot_dimension_numbers<[1], [0], [0], [1], [0, 0, 1, 1], [], []>} : vector<1x8xbf16>, vector<8x32xbf16>, vector<1x32xf32> -> vector<1x32xf32>
    %812 = vector.broadcast %809 : vector<1x1xf32> to vector<1x32xf32>
    %813 = arith.mulf %811, %812 : vector<1x32xf32>
    %c544_297 = arith.constant 544 : index
    %c0_298 = arith.constant 0 : index
    %814 = vector.load %arg1[%c544_297, %c0_298] : memref<640x192xbf16, #tpu.memory_space<vmem>>, vector<32x32xbf16>
    %cst_299 = arith.constant dense<0.000000e+00> : vector<1x32xf32>
    %815 = tpu.matmul %800, %814, %cst_299 {dimension_numbers = #tpu.dot_dimension_numbers<[1], [0], [0], [1], [0, 0, 1, 1], [], []>} : vector<1x32xbf16>, vector<32x32xbf16>, vector<1x32xf32> -> vector<1x32xf32>
    %816 = arith.addf %815, %813 : vector<1x32xf32>
    %c6_300 = arith.constant 6 : index
    %c0_301 = arith.constant 0 : index
    %817 = vector.load %arg2[%c6_300, %c0_301] : memref<8x192xf32, #tpu.memory_space<vmem>>, vector<1x32xf32>
    %818 = arith.addf %816, %817 : vector<1x32xf32>
    %819 = math.tanh %818 : vector<1x32xf32>
    %820 = arith.truncf %819 : vector<1x32xf32> to vector<1x32xbf16>
    %c608_302 = arith.constant 608 : index
    %c0_303 = arith.constant 0 : index
    %821 = vector.load %arg1[%c608_302, %c0_303] : memref<640x192xbf16, #tpu.memory_space<vmem>>, vector<32x64xbf16>
    %cst_304 = arith.constant dense<0.000000e+00> : vector<1x64xf32>
    %822 = tpu.matmul %820, %821, %cst_304 {dimension_numbers = #tpu.dot_dimension_numbers<[1], [0], [0], [1], [0, 0, 1, 1], [], []>} : vector<1x32xbf16>, vector<32x64xbf16>, vector<1x64xf32> -> vector<1x64xf32>
    %c7_305 = arith.constant 7 : index
    %c0_306 = arith.constant 0 : index
    %823 = vector.load %arg2[%c7_305, %c0_306] : memref<8x192xf32, #tpu.memory_space<vmem>>, vector<1x64xf32>
    %824 = arith.addf %822, %823 : vector<1x64xf32>
    %cst_307 = arith.constant dense<0xFF800000> : vector<1xf32>
    %825 = vector.multi_reduction <maximumf>, %824, %cst_307 [1] : vector<1x64xf32> to vector<1xf32>
    %826 = vector.shape_cast %825 : vector<1xf32> to vector<1x1xf32>
    %827 = vector.broadcast %826 : vector<1x1xf32> to vector<1x64xf32>
    %828 = arith.subf %824, %827 : vector<1x64xf32>
    %829 = math.exp %828 : vector<1x64xf32>
    %cst_308 = arith.constant dense<0.000000e+00> : vector<1xf32>
    %830 = vector.multi_reduction <add>, %829, %cst_308 [1] : vector<1x64xf32> to vector<1xf32>
    %831 = vector.shape_cast %830 : vector<1xf32> to vector<1x1xf32>
    %832 = tpu.reciprocal %831 {approx = true} : vector<1x1xf32> -> vector<1x1xf32>
    %833 = vector.broadcast %826 : vector<1x1xf32> to vector<1x64xf32>
    %834 = arith.cmpf oge, %824, %833 : vector<1x64xf32>
    %c64_i32_309 = arith.constant 64 : i32
    %835 = vector.broadcast %c64_i32_309 : i32 to vector<1x64xi32>
    %836 = arith.select %834, %536, %835 : vector<1x64xi1>, vector<1x64xi32>
    %cst_310 = arith.constant dense<2147483647> : vector<1xi32>
    %837 = vector.multi_reduction <minsi>, %836, %cst_310 [1] : vector<1x64xi32> to vector<1xi32>
    %838 = vector.shape_cast %837 : vector<1xi32> to vector<1x1xi32>
    %c2_i32 = arith.constant 2 : i32
    %839 = vector.broadcast %c2_i32 : i32 to vector<1x128xi32>
    %840 = arith.cmpi eq, %537, %839 : vector<1x128xi32>
    %841 = vector.shape_cast %838 : vector<1x1xi32> to vector<1x1xi32>
    %842 = vector.broadcast %841 : vector<1x1xi32> to vector<1x128xi32>
    %843 = arith.select %840, %842, %740 : vector<1x128xi1>, vector<1x128xi32>
    %c2_i32_311 = arith.constant 2 : i32
    %844 = vector.broadcast %c2_i32_311 : i32 to vector<1x128xi32>
    %845 = arith.cmpi eq, %537, %844 : vector<1x128xi32>
    %846 = vector.shape_cast %832 : vector<1x1xf32> to vector<1x1xf32>
    %847 = vector.broadcast %846 : vector<1x1xf32> to vector<1x128xf32>
    %848 = arith.select %845, %847, %745 : vector<1x128xi1>, vector<1x128xf32>
    %849 = vector.broadcast %838 : vector<1x1xi32> to vector<1x64xi32>
    %850 = arith.cmpi eq, %536, %849 : vector<1x64xi32>
    %851 = arith.extui %850 : vector<1x64xi1> to vector<1x64xi32>
    %852 = arith.sitofp %851 : vector<1x64xi32> to vector<1x64xf32>
    %853 = arith.truncf %852 : vector<1x64xf32> to vector<1x64xbf16>
    %854 = arith.truncf %774 : vector<1x32xf32> to vector<1x32xbf16>
    %855 = tpu.concatenate %853, %854 in 1 : vector<1x64xbf16>, vector<1x32xbf16> -> vector<1x96xbf16>
    %c384_312 = arith.constant 384 : index
    %c0_313 = arith.constant 0 : index
    %856 = vector.load %arg1[%c384_312, %c0_313] : memref<640x192xbf16, #tpu.memory_space<vmem>>, vector<96x128xbf16>
    %cst_314 = arith.constant dense<0.000000e+00> : vector<1x128xf32>
    %857 = tpu.matmul %855, %856, %cst_314 {dimension_numbers = #tpu.dot_dimension_numbers<[1], [0], [0], [1], [0, 0, 1, 1], [], []>} : vector<1x96xbf16>, vector<96x128xbf16>, vector<1x128xf32> -> vector<1x128xf32>
    %c4_315 = arith.constant 4 : index
    %c0_316 = arith.constant 0 : index
    %858 = vector.load %arg2[%c4_315, %c0_316] : memref<8x192xf32, #tpu.memory_space<vmem>>, vector<1x128xf32>
    %859 = arith.addf %857, %858 : vector<1x128xf32>
    %860 = vector.extract_strided_slice %859 {offsets = [0, 0], sizes = [1, 64], strides = [1, 1]} : vector<1x128xf32> to vector<1x64xf32>
    %861 = arith.negf %860 : vector<1x64xf32>
    %862 = math.exp %861 : vector<1x64xf32>
    %cst_317 = arith.constant 1.000000e+00 : f32
    %863 = vector.broadcast %cst_317 : f32 to vector<1x64xf32>
    %864 = arith.addf %863, %862 : vector<1x64xf32>
    %865 = arith.divf %863, %864 : vector<1x64xf32>
    %866 = vector.extract_strided_slice %865 {offsets = [0, 0], sizes = [1, 32], strides = [1, 1]} : vector<1x64xf32> to vector<1x32xf32>
    %867 = vector.extract_strided_slice %865 {offsets = [0, 32], sizes = [1, 32], strides = [1, 1]} : vector<1x64xf32> to vector<1x32xf32>
    %868 = vector.extract_strided_slice %859 {offsets = [0, 64], sizes = [1, 32], strides = [1, 1]} : vector<1x128xf32> to vector<1x32xf32>
    %869 = vector.extract_strided_slice %859 {offsets = [0, 96], sizes = [1, 32], strides = [1, 1]} : vector<1x128xf32> to vector<1x32xf32>
    %870 = arith.mulf %866, %869 : vector<1x32xf32>
    %871 = arith.addf %868, %870 : vector<1x32xf32>
    %872 = math.tanh %871 : vector<1x32xf32>
    %cst_318 = arith.constant 1.000000e+00 : f32
    %873 = vector.broadcast %cst_318 : f32 to vector<1x32xf32>
    %874 = arith.subf %873, %867 : vector<1x32xf32>
    %875 = arith.mulf %874, %872 : vector<1x32xf32>
    %876 = arith.mulf %867, %774 : vector<1x32xf32>
    %877 = arith.addf %875, %876 : vector<1x32xf32>
    %878 = arith.truncf %877 : vector<1x32xf32> to vector<1x32xbf16>
    %879 = arith.truncf %799 : vector<1x32xf32> to vector<1x32xbf16>
    %880 = tpu.concatenate %878, %879 in 1 : vector<1x32xbf16>, vector<1x32xbf16> -> vector<1x64xbf16>
    %c480_319 = arith.constant 480 : index
    %c0_320 = arith.constant 0 : index
    %881 = vector.load %arg1[%c480_319, %c0_320] : memref<640x192xbf16, #tpu.memory_space<vmem>>, vector<64x128xbf16>
    %cst_321 = arith.constant dense<0.000000e+00> : vector<1x128xf32>
    %882 = tpu.matmul %880, %881, %cst_321 {dimension_numbers = #tpu.dot_dimension_numbers<[1], [0], [0], [1], [0, 0, 1, 1], [], []>} : vector<1x64xbf16>, vector<64x128xbf16>, vector<1x128xf32> -> vector<1x128xf32>
    %c5_322 = arith.constant 5 : index
    %c0_323 = arith.constant 0 : index
    %883 = vector.load %arg2[%c5_322, %c0_323] : memref<8x192xf32, #tpu.memory_space<vmem>>, vector<1x128xf32>
    %884 = arith.addf %882, %883 : vector<1x128xf32>
    %885 = vector.extract_strided_slice %884 {offsets = [0, 0], sizes = [1, 64], strides = [1, 1]} : vector<1x128xf32> to vector<1x64xf32>
    %886 = arith.negf %885 : vector<1x64xf32>
    %887 = math.exp %886 : vector<1x64xf32>
    %cst_324 = arith.constant 1.000000e+00 : f32
    %888 = vector.broadcast %cst_324 : f32 to vector<1x64xf32>
    %889 = arith.addf %888, %887 : vector<1x64xf32>
    %890 = arith.divf %888, %889 : vector<1x64xf32>
    %891 = vector.extract_strided_slice %890 {offsets = [0, 0], sizes = [1, 32], strides = [1, 1]} : vector<1x64xf32> to vector<1x32xf32>
    %892 = vector.extract_strided_slice %890 {offsets = [0, 32], sizes = [1, 32], strides = [1, 1]} : vector<1x64xf32> to vector<1x32xf32>
    %893 = vector.extract_strided_slice %884 {offsets = [0, 64], sizes = [1, 32], strides = [1, 1]} : vector<1x128xf32> to vector<1x32xf32>
    %894 = vector.extract_strided_slice %884 {offsets = [0, 96], sizes = [1, 32], strides = [1, 1]} : vector<1x128xf32> to vector<1x32xf32>
    %895 = arith.mulf %891, %894 : vector<1x32xf32>
    %896 = arith.addf %893, %895 : vector<1x32xf32>
    %897 = math.tanh %896 : vector<1x32xf32>
    %cst_325 = arith.constant 1.000000e+00 : f32
    %898 = vector.broadcast %cst_325 : f32 to vector<1x32xf32>
    %899 = arith.subf %898, %892 : vector<1x32xf32>
    %900 = arith.mulf %899, %897 : vector<1x32xf32>
    %901 = arith.mulf %892, %799 : vector<1x32xf32>
    %902 = arith.addf %900, %901 : vector<1x32xf32>
    %903 = arith.truncf %902 : vector<1x32xf32> to vector<1x32xbf16>
    %cst_326 = arith.constant dense<0.000000e+00> : vector<1x8xf32>
    %904 = tpu.matmul %903, %531, %cst_326 {dimension_numbers = #tpu.dot_dimension_numbers<[1], [0], [0], [1], [0, 0, 1, 1], [], []>} : vector<1x32xbf16>, vector<32x8xbf16>, vector<1x8xf32> -> vector<1x8xf32>
    %cst_327 = arith.constant dense<0xFF800000> : vector<1xf32>
    %905 = vector.multi_reduction <maximumf>, %904, %cst_327 [1] : vector<1x8xf32> to vector<1xf32>
    %906 = vector.shape_cast %905 : vector<1xf32> to vector<1x1xf32>
    %907 = vector.broadcast %906 : vector<1x1xf32> to vector<1x8xf32>
    %908 = arith.subf %904, %907 : vector<1x8xf32>
    %909 = math.exp %908 : vector<1x8xf32>
    %cst_328 = arith.constant dense<0.000000e+00> : vector<1xf32>
    %910 = vector.multi_reduction <add>, %909, %cst_328 [1] : vector<1x8xf32> to vector<1xf32>
    %911 = vector.shape_cast %910 : vector<1xf32> to vector<1x1xf32>
    %912 = tpu.reciprocal %911 {approx = true} : vector<1x1xf32> -> vector<1x1xf32>
    %913 = arith.truncf %909 : vector<1x8xf32> to vector<1x8xbf16>
    %cst_329 = arith.constant dense<0.000000e+00> : vector<1x32xf32>
    %914 = tpu.matmul %913, %535, %cst_329 {dimension_numbers = #tpu.dot_dimension_numbers<[1], [0], [0], [1], [0, 0, 1, 1], [], []>} : vector<1x8xbf16>, vector<8x32xbf16>, vector<1x32xf32> -> vector<1x32xf32>
    %915 = vector.broadcast %912 : vector<1x1xf32> to vector<1x32xf32>
    %916 = arith.mulf %914, %915 : vector<1x32xf32>
    %c544_330 = arith.constant 544 : index
    %c0_331 = arith.constant 0 : index
    %917 = vector.load %arg1[%c544_330, %c0_331] : memref<640x192xbf16, #tpu.memory_space<vmem>>, vector<32x32xbf16>
    %cst_332 = arith.constant dense<0.000000e+00> : vector<1x32xf32>
    %918 = tpu.matmul %903, %917, %cst_332 {dimension_numbers = #tpu.dot_dimension_numbers<[1], [0], [0], [1], [0, 0, 1, 1], [], []>} : vector<1x32xbf16>, vector<32x32xbf16>, vector<1x32xf32> -> vector<1x32xf32>
    %919 = arith.addf %918, %916 : vector<1x32xf32>
    %c6_333 = arith.constant 6 : index
    %c0_334 = arith.constant 0 : index
    %920 = vector.load %arg2[%c6_333, %c0_334] : memref<8x192xf32, #tpu.memory_space<vmem>>, vector<1x32xf32>
    %921 = arith.addf %919, %920 : vector<1x32xf32>
    %922 = math.tanh %921 : vector<1x32xf32>
    %923 = arith.truncf %922 : vector<1x32xf32> to vector<1x32xbf16>
    %c608_335 = arith.constant 608 : index
    %c0_336 = arith.constant 0 : index
    %924 = vector.load %arg1[%c608_335, %c0_336] : memref<640x192xbf16, #tpu.memory_space<vmem>>, vector<32x64xbf16>
    %cst_337 = arith.constant dense<0.000000e+00> : vector<1x64xf32>
    %925 = tpu.matmul %923, %924, %cst_337 {dimension_numbers = #tpu.dot_dimension_numbers<[1], [0], [0], [1], [0, 0, 1, 1], [], []>} : vector<1x32xbf16>, vector<32x64xbf16>, vector<1x64xf32> -> vector<1x64xf32>
    %c7_338 = arith.constant 7 : index
    %c0_339 = arith.constant 0 : index
    %926 = vector.load %arg2[%c7_338, %c0_339] : memref<8x192xf32, #tpu.memory_space<vmem>>, vector<1x64xf32>
    %927 = arith.addf %925, %926 : vector<1x64xf32>
    %cst_340 = arith.constant dense<0xFF800000> : vector<1xf32>
    %928 = vector.multi_reduction <maximumf>, %927, %cst_340 [1] : vector<1x64xf32> to vector<1xf32>
    %929 = vector.shape_cast %928 : vector<1xf32> to vector<1x1xf32>
    %930 = vector.broadcast %929 : vector<1x1xf32> to vector<1x64xf32>
    %931 = arith.subf %927, %930 : vector<1x64xf32>
    %932 = math.exp %931 : vector<1x64xf32>
    %cst_341 = arith.constant dense<0.000000e+00> : vector<1xf32>
    %933 = vector.multi_reduction <add>, %932, %cst_341 [1] : vector<1x64xf32> to vector<1xf32>
    %934 = vector.shape_cast %933 : vector<1xf32> to vector<1x1xf32>
    %935 = tpu.reciprocal %934 {approx = true} : vector<1x1xf32> -> vector<1x1xf32>
    %936 = vector.broadcast %929 : vector<1x1xf32> to vector<1x64xf32>
    %937 = arith.cmpf oge, %927, %936 : vector<1x64xf32>
    %c64_i32_342 = arith.constant 64 : i32
    %938 = vector.broadcast %c64_i32_342 : i32 to vector<1x64xi32>
    %939 = arith.select %937, %536, %938 : vector<1x64xi1>, vector<1x64xi32>
    %cst_343 = arith.constant dense<2147483647> : vector<1xi32>
    %940 = vector.multi_reduction <minsi>, %939, %cst_343 [1] : vector<1x64xi32> to vector<1xi32>
    %941 = vector.shape_cast %940 : vector<1xi32> to vector<1x1xi32>
    %c3_i32 = arith.constant 3 : i32
    %942 = vector.broadcast %c3_i32 : i32 to vector<1x128xi32>
    %943 = arith.cmpi eq, %537, %942 : vector<1x128xi32>
    %944 = vector.shape_cast %941 : vector<1x1xi32> to vector<1x1xi32>
    %945 = vector.broadcast %944 : vector<1x1xi32> to vector<1x128xi32>
    %946 = arith.select %943, %945, %843 : vector<1x128xi1>, vector<1x128xi32>
    %c3_i32_344 = arith.constant 3 : i32
    %947 = vector.broadcast %c3_i32_344 : i32 to vector<1x128xi32>
    %948 = arith.cmpi eq, %537, %947 : vector<1x128xi32>
    %949 = vector.shape_cast %935 : vector<1x1xf32> to vector<1x1xf32>
    %950 = vector.broadcast %949 : vector<1x1xf32> to vector<1x128xf32>
    %951 = arith.select %948, %950, %848 : vector<1x128xi1>, vector<1x128xf32>
    %952 = vector.broadcast %941 : vector<1x1xi32> to vector<1x64xi32>
    %953 = arith.cmpi eq, %536, %952 : vector<1x64xi32>
    %954 = arith.extui %953 : vector<1x64xi1> to vector<1x64xi32>
    %955 = arith.sitofp %954 : vector<1x64xi32> to vector<1x64xf32>
    %956 = arith.truncf %955 : vector<1x64xf32> to vector<1x64xbf16>
    %957 = arith.truncf %877 : vector<1x32xf32> to vector<1x32xbf16>
    %958 = tpu.concatenate %956, %957 in 1 : vector<1x64xbf16>, vector<1x32xbf16> -> vector<1x96xbf16>
    %c384_345 = arith.constant 384 : index
    %c0_346 = arith.constant 0 : index
    %959 = vector.load %arg1[%c384_345, %c0_346] : memref<640x192xbf16, #tpu.memory_space<vmem>>, vector<96x128xbf16>
    %cst_347 = arith.constant dense<0.000000e+00> : vector<1x128xf32>
    %960 = tpu.matmul %958, %959, %cst_347 {dimension_numbers = #tpu.dot_dimension_numbers<[1], [0], [0], [1], [0, 0, 1, 1], [], []>} : vector<1x96xbf16>, vector<96x128xbf16>, vector<1x128xf32> -> vector<1x128xf32>
    %c4_348 = arith.constant 4 : index
    %c0_349 = arith.constant 0 : index
    %961 = vector.load %arg2[%c4_348, %c0_349] : memref<8x192xf32, #tpu.memory_space<vmem>>, vector<1x128xf32>
    %962 = arith.addf %960, %961 : vector<1x128xf32>
    %963 = vector.extract_strided_slice %962 {offsets = [0, 0], sizes = [1, 64], strides = [1, 1]} : vector<1x128xf32> to vector<1x64xf32>
    %964 = arith.negf %963 : vector<1x64xf32>
    %965 = math.exp %964 : vector<1x64xf32>
    %cst_350 = arith.constant 1.000000e+00 : f32
    %966 = vector.broadcast %cst_350 : f32 to vector<1x64xf32>
    %967 = arith.addf %966, %965 : vector<1x64xf32>
    %968 = arith.divf %966, %967 : vector<1x64xf32>
    %969 = vector.extract_strided_slice %968 {offsets = [0, 0], sizes = [1, 32], strides = [1, 1]} : vector<1x64xf32> to vector<1x32xf32>
    %970 = vector.extract_strided_slice %968 {offsets = [0, 32], sizes = [1, 32], strides = [1, 1]} : vector<1x64xf32> to vector<1x32xf32>
    %971 = vector.extract_strided_slice %962 {offsets = [0, 64], sizes = [1, 32], strides = [1, 1]} : vector<1x128xf32> to vector<1x32xf32>
    %972 = vector.extract_strided_slice %962 {offsets = [0, 96], sizes = [1, 32], strides = [1, 1]} : vector<1x128xf32> to vector<1x32xf32>
    %973 = arith.mulf %969, %972 : vector<1x32xf32>
    %974 = arith.addf %971, %973 : vector<1x32xf32>
    %975 = math.tanh %974 : vector<1x32xf32>
    %cst_351 = arith.constant 1.000000e+00 : f32
    %976 = vector.broadcast %cst_351 : f32 to vector<1x32xf32>
    %977 = arith.subf %976, %970 : vector<1x32xf32>
    %978 = arith.mulf %977, %975 : vector<1x32xf32>
    %979 = arith.mulf %970, %877 : vector<1x32xf32>
    %980 = arith.addf %978, %979 : vector<1x32xf32>
    %981 = arith.truncf %980 : vector<1x32xf32> to vector<1x32xbf16>
    %982 = arith.truncf %902 : vector<1x32xf32> to vector<1x32xbf16>
    %983 = tpu.concatenate %981, %982 in 1 : vector<1x32xbf16>, vector<1x32xbf16> -> vector<1x64xbf16>
    %c480_352 = arith.constant 480 : index
    %c0_353 = arith.constant 0 : index
    %984 = vector.load %arg1[%c480_352, %c0_353] : memref<640x192xbf16, #tpu.memory_space<vmem>>, vector<64x128xbf16>
    %cst_354 = arith.constant dense<0.000000e+00> : vector<1x128xf32>
    %985 = tpu.matmul %983, %984, %cst_354 {dimension_numbers = #tpu.dot_dimension_numbers<[1], [0], [0], [1], [0, 0, 1, 1], [], []>} : vector<1x64xbf16>, vector<64x128xbf16>, vector<1x128xf32> -> vector<1x128xf32>
    %c5_355 = arith.constant 5 : index
    %c0_356 = arith.constant 0 : index
    %986 = vector.load %arg2[%c5_355, %c0_356] : memref<8x192xf32, #tpu.memory_space<vmem>>, vector<1x128xf32>
    %987 = arith.addf %985, %986 : vector<1x128xf32>
    %988 = vector.extract_strided_slice %987 {offsets = [0, 0], sizes = [1, 64], strides = [1, 1]} : vector<1x128xf32> to vector<1x64xf32>
    %989 = arith.negf %988 : vector<1x64xf32>
    %990 = math.exp %989 : vector<1x64xf32>
    %cst_357 = arith.constant 1.000000e+00 : f32
    %991 = vector.broadcast %cst_357 : f32 to vector<1x64xf32>
    %992 = arith.addf %991, %990 : vector<1x64xf32>
    %993 = arith.divf %991, %992 : vector<1x64xf32>
    %994 = vector.extract_strided_slice %993 {offsets = [0, 0], sizes = [1, 32], strides = [1, 1]} : vector<1x64xf32> to vector<1x32xf32>
    %995 = vector.extract_strided_slice %993 {offsets = [0, 32], sizes = [1, 32], strides = [1, 1]} : vector<1x64xf32> to vector<1x32xf32>
    %996 = vector.extract_strided_slice %987 {offsets = [0, 64], sizes = [1, 32], strides = [1, 1]} : vector<1x128xf32> to vector<1x32xf32>
    %997 = vector.extract_strided_slice %987 {offsets = [0, 96], sizes = [1, 32], strides = [1, 1]} : vector<1x128xf32> to vector<1x32xf32>
    %998 = arith.mulf %994, %997 : vector<1x32xf32>
    %999 = arith.addf %996, %998 : vector<1x32xf32>
    %1000 = math.tanh %999 : vector<1x32xf32>
    %cst_358 = arith.constant 1.000000e+00 : f32
    %1001 = vector.broadcast %cst_358 : f32 to vector<1x32xf32>
    %1002 = arith.subf %1001, %995 : vector<1x32xf32>
    %1003 = arith.mulf %1002, %1000 : vector<1x32xf32>
    %1004 = arith.mulf %995, %902 : vector<1x32xf32>
    %1005 = arith.addf %1003, %1004 : vector<1x32xf32>
    %1006 = arith.truncf %1005 : vector<1x32xf32> to vector<1x32xbf16>
    %cst_359 = arith.constant dense<0.000000e+00> : vector<1x8xf32>
    %1007 = tpu.matmul %1006, %531, %cst_359 {dimension_numbers = #tpu.dot_dimension_numbers<[1], [0], [0], [1], [0, 0, 1, 1], [], []>} : vector<1x32xbf16>, vector<32x8xbf16>, vector<1x8xf32> -> vector<1x8xf32>
    %cst_360 = arith.constant dense<0xFF800000> : vector<1xf32>
    %1008 = vector.multi_reduction <maximumf>, %1007, %cst_360 [1] : vector<1x8xf32> to vector<1xf32>
    %1009 = vector.shape_cast %1008 : vector<1xf32> to vector<1x1xf32>
    %1010 = vector.broadcast %1009 : vector<1x1xf32> to vector<1x8xf32>
    %1011 = arith.subf %1007, %1010 : vector<1x8xf32>
    %1012 = math.exp %1011 : vector<1x8xf32>
    %cst_361 = arith.constant dense<0.000000e+00> : vector<1xf32>
    %1013 = vector.multi_reduction <add>, %1012, %cst_361 [1] : vector<1x8xf32> to vector<1xf32>
    %1014 = vector.shape_cast %1013 : vector<1xf32> to vector<1x1xf32>
    %1015 = tpu.reciprocal %1014 {approx = true} : vector<1x1xf32> -> vector<1x1xf32>
    %1016 = arith.truncf %1012 : vector<1x8xf32> to vector<1x8xbf16>
    %cst_362 = arith.constant dense<0.000000e+00> : vector<1x32xf32>
    %1017 = tpu.matmul %1016, %535, %cst_362 {dimension_numbers = #tpu.dot_dimension_numbers<[1], [0], [0], [1], [0, 0, 1, 1], [], []>} : vector<1x8xbf16>, vector<8x32xbf16>, vector<1x32xf32> -> vector<1x32xf32>
    %1018 = vector.broadcast %1015 : vector<1x1xf32> to vector<1x32xf32>
    %1019 = arith.mulf %1017, %1018 : vector<1x32xf32>
    %c544_363 = arith.constant 544 : index
    %c0_364 = arith.constant 0 : index
    %1020 = vector.load %arg1[%c544_363, %c0_364] : memref<640x192xbf16, #tpu.memory_space<vmem>>, vector<32x32xbf16>
    %cst_365 = arith.constant dense<0.000000e+00> : vector<1x32xf32>
    %1021 = tpu.matmul %1006, %1020, %cst_365 {dimension_numbers = #tpu.dot_dimension_numbers<[1], [0], [0], [1], [0, 0, 1, 1], [], []>} : vector<1x32xbf16>, vector<32x32xbf16>, vector<1x32xf32> -> vector<1x32xf32>
    %1022 = arith.addf %1021, %1019 : vector<1x32xf32>
    %c6_366 = arith.constant 6 : index
    %c0_367 = arith.constant 0 : index
    %1023 = vector.load %arg2[%c6_366, %c0_367] : memref<8x192xf32, #tpu.memory_space<vmem>>, vector<1x32xf32>
    %1024 = arith.addf %1022, %1023 : vector<1x32xf32>
    %1025 = math.tanh %1024 : vector<1x32xf32>
    %1026 = arith.truncf %1025 : vector<1x32xf32> to vector<1x32xbf16>
    %c608_368 = arith.constant 608 : index
    %c0_369 = arith.constant 0 : index
    %1027 = vector.load %arg1[%c608_368, %c0_369] : memref<640x192xbf16, #tpu.memory_space<vmem>>, vector<32x64xbf16>
    %cst_370 = arith.constant dense<0.000000e+00> : vector<1x64xf32>
    %1028 = tpu.matmul %1026, %1027, %cst_370 {dimension_numbers = #tpu.dot_dimension_numbers<[1], [0], [0], [1], [0, 0, 1, 1], [], []>} : vector<1x32xbf16>, vector<32x64xbf16>, vector<1x64xf32> -> vector<1x64xf32>
    %c7_371 = arith.constant 7 : index
    %c0_372 = arith.constant 0 : index
    %1029 = vector.load %arg2[%c7_371, %c0_372] : memref<8x192xf32, #tpu.memory_space<vmem>>, vector<1x64xf32>
    %1030 = arith.addf %1028, %1029 : vector<1x64xf32>
    %cst_373 = arith.constant dense<0xFF800000> : vector<1xf32>
    %1031 = vector.multi_reduction <maximumf>, %1030, %cst_373 [1] : vector<1x64xf32> to vector<1xf32>
    %1032 = vector.shape_cast %1031 : vector<1xf32> to vector<1x1xf32>
    %1033 = vector.broadcast %1032 : vector<1x1xf32> to vector<1x64xf32>
    %1034 = arith.subf %1030, %1033 : vector<1x64xf32>
    %1035 = math.exp %1034 : vector<1x64xf32>
    %cst_374 = arith.constant dense<0.000000e+00> : vector<1xf32>
    %1036 = vector.multi_reduction <add>, %1035, %cst_374 [1] : vector<1x64xf32> to vector<1xf32>
    %1037 = vector.shape_cast %1036 : vector<1xf32> to vector<1x1xf32>
    %1038 = tpu.reciprocal %1037 {approx = true} : vector<1x1xf32> -> vector<1x1xf32>
    %1039 = vector.broadcast %1032 : vector<1x1xf32> to vector<1x64xf32>
    %1040 = arith.cmpf oge, %1030, %1039 : vector<1x64xf32>
    %c64_i32_375 = arith.constant 64 : i32
    %1041 = vector.broadcast %c64_i32_375 : i32 to vector<1x64xi32>
    %1042 = arith.select %1040, %536, %1041 : vector<1x64xi1>, vector<1x64xi32>
    %cst_376 = arith.constant dense<2147483647> : vector<1xi32>
    %1043 = vector.multi_reduction <minsi>, %1042, %cst_376 [1] : vector<1x64xi32> to vector<1xi32>
    %1044 = vector.shape_cast %1043 : vector<1xi32> to vector<1x1xi32>
    %c4_i32 = arith.constant 4 : i32
    %1045 = vector.broadcast %c4_i32 : i32 to vector<1x128xi32>
    %1046 = arith.cmpi eq, %537, %1045 : vector<1x128xi32>
    %1047 = vector.shape_cast %1044 : vector<1x1xi32> to vector<1x1xi32>
    %1048 = vector.broadcast %1047 : vector<1x1xi32> to vector<1x128xi32>
    %1049 = arith.select %1046, %1048, %946 : vector<1x128xi1>, vector<1x128xi32>
    %c4_i32_377 = arith.constant 4 : i32
    %1050 = vector.broadcast %c4_i32_377 : i32 to vector<1x128xi32>
    %1051 = arith.cmpi eq, %537, %1050 : vector<1x128xi32>
    %1052 = vector.shape_cast %1038 : vector<1x1xf32> to vector<1x1xf32>
    %1053 = vector.broadcast %1052 : vector<1x1xf32> to vector<1x128xf32>
    %1054 = arith.select %1051, %1053, %951 : vector<1x128xi1>, vector<1x128xf32>
    %1055 = vector.broadcast %1044 : vector<1x1xi32> to vector<1x64xi32>
    %1056 = arith.cmpi eq, %536, %1055 : vector<1x64xi32>
    %1057 = arith.extui %1056 : vector<1x64xi1> to vector<1x64xi32>
    %1058 = arith.sitofp %1057 : vector<1x64xi32> to vector<1x64xf32>
    %1059 = arith.truncf %1058 : vector<1x64xf32> to vector<1x64xbf16>
    %1060 = arith.truncf %980 : vector<1x32xf32> to vector<1x32xbf16>
    %1061 = tpu.concatenate %1059, %1060 in 1 : vector<1x64xbf16>, vector<1x32xbf16> -> vector<1x96xbf16>
    %c384_378 = arith.constant 384 : index
    %c0_379 = arith.constant 0 : index
    %1062 = vector.load %arg1[%c384_378, %c0_379] : memref<640x192xbf16, #tpu.memory_space<vmem>>, vector<96x128xbf16>
    %cst_380 = arith.constant dense<0.000000e+00> : vector<1x128xf32>
    %1063 = tpu.matmul %1061, %1062, %cst_380 {dimension_numbers = #tpu.dot_dimension_numbers<[1], [0], [0], [1], [0, 0, 1, 1], [], []>} : vector<1x96xbf16>, vector<96x128xbf16>, vector<1x128xf32> -> vector<1x128xf32>
    %c4_381 = arith.constant 4 : index
    %c0_382 = arith.constant 0 : index
    %1064 = vector.load %arg2[%c4_381, %c0_382] : memref<8x192xf32, #tpu.memory_space<vmem>>, vector<1x128xf32>
    %1065 = arith.addf %1063, %1064 : vector<1x128xf32>
    %1066 = vector.extract_strided_slice %1065 {offsets = [0, 0], sizes = [1, 64], strides = [1, 1]} : vector<1x128xf32> to vector<1x64xf32>
    %1067 = arith.negf %1066 : vector<1x64xf32>
    %1068 = math.exp %1067 : vector<1x64xf32>
    %cst_383 = arith.constant 1.000000e+00 : f32
    %1069 = vector.broadcast %cst_383 : f32 to vector<1x64xf32>
    %1070 = arith.addf %1069, %1068 : vector<1x64xf32>
    %1071 = arith.divf %1069, %1070 : vector<1x64xf32>
    %1072 = vector.extract_strided_slice %1071 {offsets = [0, 0], sizes = [1, 32], strides = [1, 1]} : vector<1x64xf32> to vector<1x32xf32>
    %1073 = vector.extract_strided_slice %1071 {offsets = [0, 32], sizes = [1, 32], strides = [1, 1]} : vector<1x64xf32> to vector<1x32xf32>
    %1074 = vector.extract_strided_slice %1065 {offsets = [0, 64], sizes = [1, 32], strides = [1, 1]} : vector<1x128xf32> to vector<1x32xf32>
    %1075 = vector.extract_strided_slice %1065 {offsets = [0, 96], sizes = [1, 32], strides = [1, 1]} : vector<1x128xf32> to vector<1x32xf32>
    %1076 = arith.mulf %1072, %1075 : vector<1x32xf32>
    %1077 = arith.addf %1074, %1076 : vector<1x32xf32>
    %1078 = math.tanh %1077 : vector<1x32xf32>
    %cst_384 = arith.constant 1.000000e+00 : f32
    %1079 = vector.broadcast %cst_384 : f32 to vector<1x32xf32>
    %1080 = arith.subf %1079, %1073 : vector<1x32xf32>
    %1081 = arith.mulf %1080, %1078 : vector<1x32xf32>
    %1082 = arith.mulf %1073, %980 : vector<1x32xf32>
    %1083 = arith.addf %1081, %1082 : vector<1x32xf32>
    %1084 = arith.truncf %1083 : vector<1x32xf32> to vector<1x32xbf16>
    %1085 = arith.truncf %1005 : vector<1x32xf32> to vector<1x32xbf16>
    %1086 = tpu.concatenate %1084, %1085 in 1 : vector<1x32xbf16>, vector<1x32xbf16> -> vector<1x64xbf16>
    %c480_385 = arith.constant 480 : index
    %c0_386 = arith.constant 0 : index
    %1087 = vector.load %arg1[%c480_385, %c0_386] : memref<640x192xbf16, #tpu.memory_space<vmem>>, vector<64x128xbf16>
    %cst_387 = arith.constant dense<0.000000e+00> : vector<1x128xf32>
    %1088 = tpu.matmul %1086, %1087, %cst_387 {dimension_numbers = #tpu.dot_dimension_numbers<[1], [0], [0], [1], [0, 0, 1, 1], [], []>} : vector<1x64xbf16>, vector<64x128xbf16>, vector<1x128xf32> -> vector<1x128xf32>
    %c5_388 = arith.constant 5 : index
    %c0_389 = arith.constant 0 : index
    %1089 = vector.load %arg2[%c5_388, %c0_389] : memref<8x192xf32, #tpu.memory_space<vmem>>, vector<1x128xf32>
    %1090 = arith.addf %1088, %1089 : vector<1x128xf32>
    %1091 = vector.extract_strided_slice %1090 {offsets = [0, 0], sizes = [1, 64], strides = [1, 1]} : vector<1x128xf32> to vector<1x64xf32>
    %1092 = arith.negf %1091 : vector<1x64xf32>
    %1093 = math.exp %1092 : vector<1x64xf32>
    %cst_390 = arith.constant 1.000000e+00 : f32
    %1094 = vector.broadcast %cst_390 : f32 to vector<1x64xf32>
    %1095 = arith.addf %1094, %1093 : vector<1x64xf32>
    %1096 = arith.divf %1094, %1095 : vector<1x64xf32>
    %1097 = vector.extract_strided_slice %1096 {offsets = [0, 0], sizes = [1, 32], strides = [1, 1]} : vector<1x64xf32> to vector<1x32xf32>
    %1098 = vector.extract_strided_slice %1096 {offsets = [0, 32], sizes = [1, 32], strides = [1, 1]} : vector<1x64xf32> to vector<1x32xf32>
    %1099 = vector.extract_strided_slice %1090 {offsets = [0, 64], sizes = [1, 32], strides = [1, 1]} : vector<1x128xf32> to vector<1x32xf32>
    %1100 = vector.extract_strided_slice %1090 {offsets = [0, 96], sizes = [1, 32], strides = [1, 1]} : vector<1x128xf32> to vector<1x32xf32>
    %1101 = arith.mulf %1097, %1100 : vector<1x32xf32>
    %1102 = arith.addf %1099, %1101 : vector<1x32xf32>
    %1103 = math.tanh %1102 : vector<1x32xf32>
    %cst_391 = arith.constant 1.000000e+00 : f32
    %1104 = vector.broadcast %cst_391 : f32 to vector<1x32xf32>
    %1105 = arith.subf %1104, %1098 : vector<1x32xf32>
    %1106 = arith.mulf %1105, %1103 : vector<1x32xf32>
    %1107 = arith.mulf %1098, %1005 : vector<1x32xf32>
    %1108 = arith.addf %1106, %1107 : vector<1x32xf32>
    %1109 = arith.truncf %1108 : vector<1x32xf32> to vector<1x32xbf16>
    %cst_392 = arith.constant dense<0.000000e+00> : vector<1x8xf32>
    %1110 = tpu.matmul %1109, %531, %cst_392 {dimension_numbers = #tpu.dot_dimension_numbers<[1], [0], [0], [1], [0, 0, 1, 1], [], []>} : vector<1x32xbf16>, vector<32x8xbf16>, vector<1x8xf32> -> vector<1x8xf32>
    %cst_393 = arith.constant dense<0xFF800000> : vector<1xf32>
    %1111 = vector.multi_reduction <maximumf>, %1110, %cst_393 [1] : vector<1x8xf32> to vector<1xf32>
    %1112 = vector.shape_cast %1111 : vector<1xf32> to vector<1x1xf32>
    %1113 = vector.broadcast %1112 : vector<1x1xf32> to vector<1x8xf32>
    %1114 = arith.subf %1110, %1113 : vector<1x8xf32>
    %1115 = math.exp %1114 : vector<1x8xf32>
    %cst_394 = arith.constant dense<0.000000e+00> : vector<1xf32>
    %1116 = vector.multi_reduction <add>, %1115, %cst_394 [1] : vector<1x8xf32> to vector<1xf32>
    %1117 = vector.shape_cast %1116 : vector<1xf32> to vector<1x1xf32>
    %1118 = tpu.reciprocal %1117 {approx = true} : vector<1x1xf32> -> vector<1x1xf32>
    %1119 = arith.truncf %1115 : vector<1x8xf32> to vector<1x8xbf16>
    %cst_395 = arith.constant dense<0.000000e+00> : vector<1x32xf32>
    %1120 = tpu.matmul %1119, %535, %cst_395 {dimension_numbers = #tpu.dot_dimension_numbers<[1], [0], [0], [1], [0, 0, 1, 1], [], []>} : vector<1x8xbf16>, vector<8x32xbf16>, vector<1x32xf32> -> vector<1x32xf32>
    %1121 = vector.broadcast %1118 : vector<1x1xf32> to vector<1x32xf32>
    %1122 = arith.mulf %1120, %1121 : vector<1x32xf32>
    %c544_396 = arith.constant 544 : index
    %c0_397 = arith.constant 0 : index
    %1123 = vector.load %arg1[%c544_396, %c0_397] : memref<640x192xbf16, #tpu.memory_space<vmem>>, vector<32x32xbf16>
    %cst_398 = arith.constant dense<0.000000e+00> : vector<1x32xf32>
    %1124 = tpu.matmul %1109, %1123, %cst_398 {dimension_numbers = #tpu.dot_dimension_numbers<[1], [0], [0], [1], [0, 0, 1, 1], [], []>} : vector<1x32xbf16>, vector<32x32xbf16>, vector<1x32xf32> -> vector<1x32xf32>
    %1125 = arith.addf %1124, %1122 : vector<1x32xf32>
    %c6_399 = arith.constant 6 : index
    %c0_400 = arith.constant 0 : index
    %1126 = vector.load %arg2[%c6_399, %c0_400] : memref<8x192xf32, #tpu.memory_space<vmem>>, vector<1x32xf32>
    %1127 = arith.addf %1125, %1126 : vector<1x32xf32>
    %1128 = math.tanh %1127 : vector<1x32xf32>
    %1129 = arith.truncf %1128 : vector<1x32xf32> to vector<1x32xbf16>
    %c608_401 = arith.constant 608 : index
    %c0_402 = arith.constant 0 : index
    %1130 = vector.load %arg1[%c608_401, %c0_402] : memref<640x192xbf16, #tpu.memory_space<vmem>>, vector<32x64xbf16>
    %cst_403 = arith.constant dense<0.000000e+00> : vector<1x64xf32>
    %1131 = tpu.matmul %1129, %1130, %cst_403 {dimension_numbers = #tpu.dot_dimension_numbers<[1], [0], [0], [1], [0, 0, 1, 1], [], []>} : vector<1x32xbf16>, vector<32x64xbf16>, vector<1x64xf32> -> vector<1x64xf32>
    %c7_404 = arith.constant 7 : index
    %c0_405 = arith.constant 0 : index
    %1132 = vector.load %arg2[%c7_404, %c0_405] : memref<8x192xf32, #tpu.memory_space<vmem>>, vector<1x64xf32>
    %1133 = arith.addf %1131, %1132 : vector<1x64xf32>
    %cst_406 = arith.constant dense<0xFF800000> : vector<1xf32>
    %1134 = vector.multi_reduction <maximumf>, %1133, %cst_406 [1] : vector<1x64xf32> to vector<1xf32>
    %1135 = vector.shape_cast %1134 : vector<1xf32> to vector<1x1xf32>
    %1136 = vector.broadcast %1135 : vector<1x1xf32> to vector<1x64xf32>
    %1137 = arith.subf %1133, %1136 : vector<1x64xf32>
    %1138 = math.exp %1137 : vector<1x64xf32>
    %cst_407 = arith.constant dense<0.000000e+00> : vector<1xf32>
    %1139 = vector.multi_reduction <add>, %1138, %cst_407 [1] : vector<1x64xf32> to vector<1xf32>
    %1140 = vector.shape_cast %1139 : vector<1xf32> to vector<1x1xf32>
    %1141 = tpu.reciprocal %1140 {approx = true} : vector<1x1xf32> -> vector<1x1xf32>
    %1142 = vector.broadcast %1135 : vector<1x1xf32> to vector<1x64xf32>
    %1143 = arith.cmpf oge, %1133, %1142 : vector<1x64xf32>
    %c64_i32_408 = arith.constant 64 : i32
    %1144 = vector.broadcast %c64_i32_408 : i32 to vector<1x64xi32>
    %1145 = arith.select %1143, %536, %1144 : vector<1x64xi1>, vector<1x64xi32>
    %cst_409 = arith.constant dense<2147483647> : vector<1xi32>
    %1146 = vector.multi_reduction <minsi>, %1145, %cst_409 [1] : vector<1x64xi32> to vector<1xi32>
    %1147 = vector.shape_cast %1146 : vector<1xi32> to vector<1x1xi32>
    %c5_i32 = arith.constant 5 : i32
    %1148 = vector.broadcast %c5_i32 : i32 to vector<1x128xi32>
    %1149 = arith.cmpi eq, %537, %1148 : vector<1x128xi32>
    %1150 = vector.shape_cast %1147 : vector<1x1xi32> to vector<1x1xi32>
    %1151 = vector.broadcast %1150 : vector<1x1xi32> to vector<1x128xi32>
    %1152 = arith.select %1149, %1151, %1049 : vector<1x128xi1>, vector<1x128xi32>
    %c5_i32_410 = arith.constant 5 : i32
    %1153 = vector.broadcast %c5_i32_410 : i32 to vector<1x128xi32>
    %1154 = arith.cmpi eq, %537, %1153 : vector<1x128xi32>
    %1155 = vector.shape_cast %1141 : vector<1x1xf32> to vector<1x1xf32>
    %1156 = vector.broadcast %1155 : vector<1x1xf32> to vector<1x128xf32>
    %1157 = arith.select %1154, %1156, %1054 : vector<1x128xi1>, vector<1x128xf32>
    %1158 = vector.broadcast %1147 : vector<1x1xi32> to vector<1x64xi32>
    %1159 = arith.cmpi eq, %536, %1158 : vector<1x64xi32>
    %1160 = arith.extui %1159 : vector<1x64xi1> to vector<1x64xi32>
    %1161 = arith.sitofp %1160 : vector<1x64xi32> to vector<1x64xf32>
    %1162 = arith.truncf %1161 : vector<1x64xf32> to vector<1x64xbf16>
    %1163 = arith.truncf %1083 : vector<1x32xf32> to vector<1x32xbf16>
    %1164 = tpu.concatenate %1162, %1163 in 1 : vector<1x64xbf16>, vector<1x32xbf16> -> vector<1x96xbf16>
    %c384_411 = arith.constant 384 : index
    %c0_412 = arith.constant 0 : index
    %1165 = vector.load %arg1[%c384_411, %c0_412] : memref<640x192xbf16, #tpu.memory_space<vmem>>, vector<96x128xbf16>
    %cst_413 = arith.constant dense<0.000000e+00> : vector<1x128xf32>
    %1166 = tpu.matmul %1164, %1165, %cst_413 {dimension_numbers = #tpu.dot_dimension_numbers<[1], [0], [0], [1], [0, 0, 1, 1], [], []>} : vector<1x96xbf16>, vector<96x128xbf16>, vector<1x128xf32> -> vector<1x128xf32>
    %c4_414 = arith.constant 4 : index
    %c0_415 = arith.constant 0 : index
    %1167 = vector.load %arg2[%c4_414, %c0_415] : memref<8x192xf32, #tpu.memory_space<vmem>>, vector<1x128xf32>
    %1168 = arith.addf %1166, %1167 : vector<1x128xf32>
    %1169 = vector.extract_strided_slice %1168 {offsets = [0, 0], sizes = [1, 64], strides = [1, 1]} : vector<1x128xf32> to vector<1x64xf32>
    %1170 = arith.negf %1169 : vector<1x64xf32>
    %1171 = math.exp %1170 : vector<1x64xf32>
    %cst_416 = arith.constant 1.000000e+00 : f32
    %1172 = vector.broadcast %cst_416 : f32 to vector<1x64xf32>
    %1173 = arith.addf %1172, %1171 : vector<1x64xf32>
    %1174 = arith.divf %1172, %1173 : vector<1x64xf32>
    %1175 = vector.extract_strided_slice %1174 {offsets = [0, 0], sizes = [1, 32], strides = [1, 1]} : vector<1x64xf32> to vector<1x32xf32>
    %1176 = vector.extract_strided_slice %1174 {offsets = [0, 32], sizes = [1, 32], strides = [1, 1]} : vector<1x64xf32> to vector<1x32xf32>
    %1177 = vector.extract_strided_slice %1168 {offsets = [0, 64], sizes = [1, 32], strides = [1, 1]} : vector<1x128xf32> to vector<1x32xf32>
    %1178 = vector.extract_strided_slice %1168 {offsets = [0, 96], sizes = [1, 32], strides = [1, 1]} : vector<1x128xf32> to vector<1x32xf32>
    %1179 = arith.mulf %1175, %1178 : vector<1x32xf32>
    %1180 = arith.addf %1177, %1179 : vector<1x32xf32>
    %1181 = math.tanh %1180 : vector<1x32xf32>
    %cst_417 = arith.constant 1.000000e+00 : f32
    %1182 = vector.broadcast %cst_417 : f32 to vector<1x32xf32>
    %1183 = arith.subf %1182, %1176 : vector<1x32xf32>
    %1184 = arith.mulf %1183, %1181 : vector<1x32xf32>
    %1185 = arith.mulf %1176, %1083 : vector<1x32xf32>
    %1186 = arith.addf %1184, %1185 : vector<1x32xf32>
    %1187 = arith.truncf %1186 : vector<1x32xf32> to vector<1x32xbf16>
    %1188 = arith.truncf %1108 : vector<1x32xf32> to vector<1x32xbf16>
    %1189 = tpu.concatenate %1187, %1188 in 1 : vector<1x32xbf16>, vector<1x32xbf16> -> vector<1x64xbf16>
    %c480_418 = arith.constant 480 : index
    %c0_419 = arith.constant 0 : index
    %1190 = vector.load %arg1[%c480_418, %c0_419] : memref<640x192xbf16, #tpu.memory_space<vmem>>, vector<64x128xbf16>
    %cst_420 = arith.constant dense<0.000000e+00> : vector<1x128xf32>
    %1191 = tpu.matmul %1189, %1190, %cst_420 {dimension_numbers = #tpu.dot_dimension_numbers<[1], [0], [0], [1], [0, 0, 1, 1], [], []>} : vector<1x64xbf16>, vector<64x128xbf16>, vector<1x128xf32> -> vector<1x128xf32>
    %c5_421 = arith.constant 5 : index
    %c0_422 = arith.constant 0 : index
    %1192 = vector.load %arg2[%c5_421, %c0_422] : memref<8x192xf32, #tpu.memory_space<vmem>>, vector<1x128xf32>
    %1193 = arith.addf %1191, %1192 : vector<1x128xf32>
    %1194 = vector.extract_strided_slice %1193 {offsets = [0, 0], sizes = [1, 64], strides = [1, 1]} : vector<1x128xf32> to vector<1x64xf32>
    %1195 = arith.negf %1194 : vector<1x64xf32>
    %1196 = math.exp %1195 : vector<1x64xf32>
    %cst_423 = arith.constant 1.000000e+00 : f32
    %1197 = vector.broadcast %cst_423 : f32 to vector<1x64xf32>
    %1198 = arith.addf %1197, %1196 : vector<1x64xf32>
    %1199 = arith.divf %1197, %1198 : vector<1x64xf32>
    %1200 = vector.extract_strided_slice %1199 {offsets = [0, 0], sizes = [1, 32], strides = [1, 1]} : vector<1x64xf32> to vector<1x32xf32>
    %1201 = vector.extract_strided_slice %1199 {offsets = [0, 32], sizes = [1, 32], strides = [1, 1]} : vector<1x64xf32> to vector<1x32xf32>
    %1202 = vector.extract_strided_slice %1193 {offsets = [0, 64], sizes = [1, 32], strides = [1, 1]} : vector<1x128xf32> to vector<1x32xf32>
    %1203 = vector.extract_strided_slice %1193 {offsets = [0, 96], sizes = [1, 32], strides = [1, 1]} : vector<1x128xf32> to vector<1x32xf32>
    %1204 = arith.mulf %1200, %1203 : vector<1x32xf32>
    %1205 = arith.addf %1202, %1204 : vector<1x32xf32>
    %1206 = math.tanh %1205 : vector<1x32xf32>
    %cst_424 = arith.constant 1.000000e+00 : f32
    %1207 = vector.broadcast %cst_424 : f32 to vector<1x32xf32>
    %1208 = arith.subf %1207, %1201 : vector<1x32xf32>
    %1209 = arith.mulf %1208, %1206 : vector<1x32xf32>
    %1210 = arith.mulf %1201, %1108 : vector<1x32xf32>
    %1211 = arith.addf %1209, %1210 : vector<1x32xf32>
    %1212 = arith.truncf %1211 : vector<1x32xf32> to vector<1x32xbf16>
    %cst_425 = arith.constant dense<0.000000e+00> : vector<1x8xf32>
    %1213 = tpu.matmul %1212, %531, %cst_425 {dimension_numbers = #tpu.dot_dimension_numbers<[1], [0], [0], [1], [0, 0, 1, 1], [], []>} : vector<1x32xbf16>, vector<32x8xbf16>, vector<1x8xf32> -> vector<1x8xf32>
    %cst_426 = arith.constant dense<0xFF800000> : vector<1xf32>
    %1214 = vector.multi_reduction <maximumf>, %1213, %cst_426 [1] : vector<1x8xf32> to vector<1xf32>
    %1215 = vector.shape_cast %1214 : vector<1xf32> to vector<1x1xf32>
    %1216 = vector.broadcast %1215 : vector<1x1xf32> to vector<1x8xf32>
    %1217 = arith.subf %1213, %1216 : vector<1x8xf32>
    %1218 = math.exp %1217 : vector<1x8xf32>
    %cst_427 = arith.constant dense<0.000000e+00> : vector<1xf32>
    %1219 = vector.multi_reduction <add>, %1218, %cst_427 [1] : vector<1x8xf32> to vector<1xf32>
    %1220 = vector.shape_cast %1219 : vector<1xf32> to vector<1x1xf32>
    %1221 = tpu.reciprocal %1220 {approx = true} : vector<1x1xf32> -> vector<1x1xf32>
    %1222 = arith.truncf %1218 : vector<1x8xf32> to vector<1x8xbf16>
    %cst_428 = arith.constant dense<0.000000e+00> : vector<1x32xf32>
    %1223 = tpu.matmul %1222, %535, %cst_428 {dimension_numbers = #tpu.dot_dimension_numbers<[1], [0], [0], [1], [0, 0, 1, 1], [], []>} : vector<1x8xbf16>, vector<8x32xbf16>, vector<1x32xf32> -> vector<1x32xf32>
    %1224 = vector.broadcast %1221 : vector<1x1xf32> to vector<1x32xf32>
    %1225 = arith.mulf %1223, %1224 : vector<1x32xf32>
    %c544_429 = arith.constant 544 : index
    %c0_430 = arith.constant 0 : index
    %1226 = vector.load %arg1[%c544_429, %c0_430] : memref<640x192xbf16, #tpu.memory_space<vmem>>, vector<32x32xbf16>
    %cst_431 = arith.constant dense<0.000000e+00> : vector<1x32xf32>
    %1227 = tpu.matmul %1212, %1226, %cst_431 {dimension_numbers = #tpu.dot_dimension_numbers<[1], [0], [0], [1], [0, 0, 1, 1], [], []>} : vector<1x32xbf16>, vector<32x32xbf16>, vector<1x32xf32> -> vector<1x32xf32>
    %1228 = arith.addf %1227, %1225 : vector<1x32xf32>
    %c6_432 = arith.constant 6 : index
    %c0_433 = arith.constant 0 : index
    %1229 = vector.load %arg2[%c6_432, %c0_433] : memref<8x192xf32, #tpu.memory_space<vmem>>, vector<1x32xf32>
    %1230 = arith.addf %1228, %1229 : vector<1x32xf32>
    %1231 = math.tanh %1230 : vector<1x32xf32>
    %1232 = arith.truncf %1231 : vector<1x32xf32> to vector<1x32xbf16>
    %c608_434 = arith.constant 608 : index
    %c0_435 = arith.constant 0 : index
    %1233 = vector.load %arg1[%c608_434, %c0_435] : memref<640x192xbf16, #tpu.memory_space<vmem>>, vector<32x64xbf16>
    %cst_436 = arith.constant dense<0.000000e+00> : vector<1x64xf32>
    %1234 = tpu.matmul %1232, %1233, %cst_436 {dimension_numbers = #tpu.dot_dimension_numbers<[1], [0], [0], [1], [0, 0, 1, 1], [], []>} : vector<1x32xbf16>, vector<32x64xbf16>, vector<1x64xf32> -> vector<1x64xf32>
    %c7_437 = arith.constant 7 : index
    %c0_438 = arith.constant 0 : index
    %1235 = vector.load %arg2[%c7_437, %c0_438] : memref<8x192xf32, #tpu.memory_space<vmem>>, vector<1x64xf32>
    %1236 = arith.addf %1234, %1235 : vector<1x64xf32>
    %cst_439 = arith.constant dense<0xFF800000> : vector<1xf32>
    %1237 = vector.multi_reduction <maximumf>, %1236, %cst_439 [1] : vector<1x64xf32> to vector<1xf32>
    %1238 = vector.shape_cast %1237 : vector<1xf32> to vector<1x1xf32>
    %1239 = vector.broadcast %1238 : vector<1x1xf32> to vector<1x64xf32>
    %1240 = arith.subf %1236, %1239 : vector<1x64xf32>
    %1241 = math.exp %1240 : vector<1x64xf32>
    %cst_440 = arith.constant dense<0.000000e+00> : vector<1xf32>
    %1242 = vector.multi_reduction <add>, %1241, %cst_440 [1] : vector<1x64xf32> to vector<1xf32>
    %1243 = vector.shape_cast %1242 : vector<1xf32> to vector<1x1xf32>
    %1244 = tpu.reciprocal %1243 {approx = true} : vector<1x1xf32> -> vector<1x1xf32>
    %1245 = vector.broadcast %1238 : vector<1x1xf32> to vector<1x64xf32>
    %1246 = arith.cmpf oge, %1236, %1245 : vector<1x64xf32>
    %c64_i32_441 = arith.constant 64 : i32
    %1247 = vector.broadcast %c64_i32_441 : i32 to vector<1x64xi32>
    %1248 = arith.select %1246, %536, %1247 : vector<1x64xi1>, vector<1x64xi32>
    %cst_442 = arith.constant dense<2147483647> : vector<1xi32>
    %1249 = vector.multi_reduction <minsi>, %1248, %cst_442 [1] : vector<1x64xi32> to vector<1xi32>
    %1250 = vector.shape_cast %1249 : vector<1xi32> to vector<1x1xi32>
    %c6_i32 = arith.constant 6 : i32
    %1251 = vector.broadcast %c6_i32 : i32 to vector<1x128xi32>
    %1252 = arith.cmpi eq, %537, %1251 : vector<1x128xi32>
    %1253 = vector.shape_cast %1250 : vector<1x1xi32> to vector<1x1xi32>
    %1254 = vector.broadcast %1253 : vector<1x1xi32> to vector<1x128xi32>
    %1255 = arith.select %1252, %1254, %1152 : vector<1x128xi1>, vector<1x128xi32>
    %c6_i32_443 = arith.constant 6 : i32
    %1256 = vector.broadcast %c6_i32_443 : i32 to vector<1x128xi32>
    %1257 = arith.cmpi eq, %537, %1256 : vector<1x128xi32>
    %1258 = vector.shape_cast %1244 : vector<1x1xf32> to vector<1x1xf32>
    %1259 = vector.broadcast %1258 : vector<1x1xf32> to vector<1x128xf32>
    %1260 = arith.select %1257, %1259, %1157 : vector<1x128xi1>, vector<1x128xf32>
    %1261 = vector.broadcast %1250 : vector<1x1xi32> to vector<1x64xi32>
    %1262 = arith.cmpi eq, %536, %1261 : vector<1x64xi32>
    %1263 = arith.extui %1262 : vector<1x64xi1> to vector<1x64xi32>
    %1264 = arith.sitofp %1263 : vector<1x64xi32> to vector<1x64xf32>
    %1265 = arith.truncf %1264 : vector<1x64xf32> to vector<1x64xbf16>
    %1266 = arith.truncf %1186 : vector<1x32xf32> to vector<1x32xbf16>
    %1267 = tpu.concatenate %1265, %1266 in 1 : vector<1x64xbf16>, vector<1x32xbf16> -> vector<1x96xbf16>
    %c384_444 = arith.constant 384 : index
    %c0_445 = arith.constant 0 : index
    %1268 = vector.load %arg1[%c384_444, %c0_445] : memref<640x192xbf16, #tpu.memory_space<vmem>>, vector<96x128xbf16>
    %cst_446 = arith.constant dense<0.000000e+00> : vector<1x128xf32>
    %1269 = tpu.matmul %1267, %1268, %cst_446 {dimension_numbers = #tpu.dot_dimension_numbers<[1], [0], [0], [1], [0, 0, 1, 1], [], []>} : vector<1x96xbf16>, vector<96x128xbf16>, vector<1x128xf32> -> vector<1x128xf32>
    %c4_447 = arith.constant 4 : index
    %c0_448 = arith.constant 0 : index
    %1270 = vector.load %arg2[%c4_447, %c0_448] : memref<8x192xf32, #tpu.memory_space<vmem>>, vector<1x128xf32>
    %1271 = arith.addf %1269, %1270 : vector<1x128xf32>
    %1272 = vector.extract_strided_slice %1271 {offsets = [0, 0], sizes = [1, 64], strides = [1, 1]} : vector<1x128xf32> to vector<1x64xf32>
    %1273 = arith.negf %1272 : vector<1x64xf32>
    %1274 = math.exp %1273 : vector<1x64xf32>
    %cst_449 = arith.constant 1.000000e+00 : f32
    %1275 = vector.broadcast %cst_449 : f32 to vector<1x64xf32>
    %1276 = arith.addf %1275, %1274 : vector<1x64xf32>
    %1277 = arith.divf %1275, %1276 : vector<1x64xf32>
    %1278 = vector.extract_strided_slice %1277 {offsets = [0, 0], sizes = [1, 32], strides = [1, 1]} : vector<1x64xf32> to vector<1x32xf32>
    %1279 = vector.extract_strided_slice %1277 {offsets = [0, 32], sizes = [1, 32], strides = [1, 1]} : vector<1x64xf32> to vector<1x32xf32>
    %1280 = vector.extract_strided_slice %1271 {offsets = [0, 64], sizes = [1, 32], strides = [1, 1]} : vector<1x128xf32> to vector<1x32xf32>
    %1281 = vector.extract_strided_slice %1271 {offsets = [0, 96], sizes = [1, 32], strides = [1, 1]} : vector<1x128xf32> to vector<1x32xf32>
    %1282 = arith.mulf %1278, %1281 : vector<1x32xf32>
    %1283 = arith.addf %1280, %1282 : vector<1x32xf32>
    %1284 = math.tanh %1283 : vector<1x32xf32>
    %cst_450 = arith.constant 1.000000e+00 : f32
    %1285 = vector.broadcast %cst_450 : f32 to vector<1x32xf32>
    %1286 = arith.subf %1285, %1279 : vector<1x32xf32>
    %1287 = arith.mulf %1286, %1284 : vector<1x32xf32>
    %1288 = arith.mulf %1279, %1186 : vector<1x32xf32>
    %1289 = arith.addf %1287, %1288 : vector<1x32xf32>
    %1290 = arith.truncf %1289 : vector<1x32xf32> to vector<1x32xbf16>
    %1291 = arith.truncf %1211 : vector<1x32xf32> to vector<1x32xbf16>
    %1292 = tpu.concatenate %1290, %1291 in 1 : vector<1x32xbf16>, vector<1x32xbf16> -> vector<1x64xbf16>
    %c480_451 = arith.constant 480 : index
    %c0_452 = arith.constant 0 : index
    %1293 = vector.load %arg1[%c480_451, %c0_452] : memref<640x192xbf16, #tpu.memory_space<vmem>>, vector<64x128xbf16>
    %cst_453 = arith.constant dense<0.000000e+00> : vector<1x128xf32>
    %1294 = tpu.matmul %1292, %1293, %cst_453 {dimension_numbers = #tpu.dot_dimension_numbers<[1], [0], [0], [1], [0, 0, 1, 1], [], []>} : vector<1x64xbf16>, vector<64x128xbf16>, vector<1x128xf32> -> vector<1x128xf32>
    %c5_454 = arith.constant 5 : index
    %c0_455 = arith.constant 0 : index
    %1295 = vector.load %arg2[%c5_454, %c0_455] : memref<8x192xf32, #tpu.memory_space<vmem>>, vector<1x128xf32>
    %1296 = arith.addf %1294, %1295 : vector<1x128xf32>
    %1297 = vector.extract_strided_slice %1296 {offsets = [0, 0], sizes = [1, 64], strides = [1, 1]} : vector<1x128xf32> to vector<1x64xf32>
    %1298 = arith.negf %1297 : vector<1x64xf32>
    %1299 = math.exp %1298 : vector<1x64xf32>
    %cst_456 = arith.constant 1.000000e+00 : f32
    %1300 = vector.broadcast %cst_456 : f32 to vector<1x64xf32>
    %1301 = arith.addf %1300, %1299 : vector<1x64xf32>
    %1302 = arith.divf %1300, %1301 : vector<1x64xf32>
    %1303 = vector.extract_strided_slice %1302 {offsets = [0, 0], sizes = [1, 32], strides = [1, 1]} : vector<1x64xf32> to vector<1x32xf32>
    %1304 = vector.extract_strided_slice %1302 {offsets = [0, 32], sizes = [1, 32], strides = [1, 1]} : vector<1x64xf32> to vector<1x32xf32>
    %1305 = vector.extract_strided_slice %1296 {offsets = [0, 64], sizes = [1, 32], strides = [1, 1]} : vector<1x128xf32> to vector<1x32xf32>
    %1306 = vector.extract_strided_slice %1296 {offsets = [0, 96], sizes = [1, 32], strides = [1, 1]} : vector<1x128xf32> to vector<1x32xf32>
    %1307 = arith.mulf %1303, %1306 : vector<1x32xf32>
    %1308 = arith.addf %1305, %1307 : vector<1x32xf32>
    %1309 = math.tanh %1308 : vector<1x32xf32>
    %cst_457 = arith.constant 1.000000e+00 : f32
    %1310 = vector.broadcast %cst_457 : f32 to vector<1x32xf32>
    %1311 = arith.subf %1310, %1304 : vector<1x32xf32>
    %1312 = arith.mulf %1311, %1309 : vector<1x32xf32>
    %1313 = arith.mulf %1304, %1211 : vector<1x32xf32>
    %1314 = arith.addf %1312, %1313 : vector<1x32xf32>
    %1315 = arith.truncf %1314 : vector<1x32xf32> to vector<1x32xbf16>
    %cst_458 = arith.constant dense<0.000000e+00> : vector<1x8xf32>
    %1316 = tpu.matmul %1315, %531, %cst_458 {dimension_numbers = #tpu.dot_dimension_numbers<[1], [0], [0], [1], [0, 0, 1, 1], [], []>} : vector<1x32xbf16>, vector<32x8xbf16>, vector<1x8xf32> -> vector<1x8xf32>
    %cst_459 = arith.constant dense<0xFF800000> : vector<1xf32>
    %1317 = vector.multi_reduction <maximumf>, %1316, %cst_459 [1] : vector<1x8xf32> to vector<1xf32>
    %1318 = vector.shape_cast %1317 : vector<1xf32> to vector<1x1xf32>
    %1319 = vector.broadcast %1318 : vector<1x1xf32> to vector<1x8xf32>
    %1320 = arith.subf %1316, %1319 : vector<1x8xf32>
    %1321 = math.exp %1320 : vector<1x8xf32>
    %cst_460 = arith.constant dense<0.000000e+00> : vector<1xf32>
    %1322 = vector.multi_reduction <add>, %1321, %cst_460 [1] : vector<1x8xf32> to vector<1xf32>
    %1323 = vector.shape_cast %1322 : vector<1xf32> to vector<1x1xf32>
    %1324 = tpu.reciprocal %1323 {approx = true} : vector<1x1xf32> -> vector<1x1xf32>
    %1325 = arith.truncf %1321 : vector<1x8xf32> to vector<1x8xbf16>
    %cst_461 = arith.constant dense<0.000000e+00> : vector<1x32xf32>
    %1326 = tpu.matmul %1325, %535, %cst_461 {dimension_numbers = #tpu.dot_dimension_numbers<[1], [0], [0], [1], [0, 0, 1, 1], [], []>} : vector<1x8xbf16>, vector<8x32xbf16>, vector<1x32xf32> -> vector<1x32xf32>
    %1327 = vector.broadcast %1324 : vector<1x1xf32> to vector<1x32xf32>
    %1328 = arith.mulf %1326, %1327 : vector<1x32xf32>
    %c544_462 = arith.constant 544 : index
    %c0_463 = arith.constant 0 : index
    %1329 = vector.load %arg1[%c544_462, %c0_463] : memref<640x192xbf16, #tpu.memory_space<vmem>>, vector<32x32xbf16>
    %cst_464 = arith.constant dense<0.000000e+00> : vector<1x32xf32>
    %1330 = tpu.matmul %1315, %1329, %cst_464 {dimension_numbers = #tpu.dot_dimension_numbers<[1], [0], [0], [1], [0, 0, 1, 1], [], []>} : vector<1x32xbf16>, vector<32x32xbf16>, vector<1x32xf32> -> vector<1x32xf32>
    %1331 = arith.addf %1330, %1328 : vector<1x32xf32>
    %c6_465 = arith.constant 6 : index
    %c0_466 = arith.constant 0 : index
    %1332 = vector.load %arg2[%c6_465, %c0_466] : memref<8x192xf32, #tpu.memory_space<vmem>>, vector<1x32xf32>
    %1333 = arith.addf %1331, %1332 : vector<1x32xf32>
    %1334 = math.tanh %1333 : vector<1x32xf32>
    %1335 = arith.truncf %1334 : vector<1x32xf32> to vector<1x32xbf16>
    %c608_467 = arith.constant 608 : index
    %c0_468 = arith.constant 0 : index
    %1336 = vector.load %arg1[%c608_467, %c0_468] : memref<640x192xbf16, #tpu.memory_space<vmem>>, vector<32x64xbf16>
    %cst_469 = arith.constant dense<0.000000e+00> : vector<1x64xf32>
    %1337 = tpu.matmul %1335, %1336, %cst_469 {dimension_numbers = #tpu.dot_dimension_numbers<[1], [0], [0], [1], [0, 0, 1, 1], [], []>} : vector<1x32xbf16>, vector<32x64xbf16>, vector<1x64xf32> -> vector<1x64xf32>
    %c7_470 = arith.constant 7 : index
    %c0_471 = arith.constant 0 : index
    %1338 = vector.load %arg2[%c7_470, %c0_471] : memref<8x192xf32, #tpu.memory_space<vmem>>, vector<1x64xf32>
    %1339 = arith.addf %1337, %1338 : vector<1x64xf32>
    %cst_472 = arith.constant dense<0xFF800000> : vector<1xf32>
    %1340 = vector.multi_reduction <maximumf>, %1339, %cst_472 [1] : vector<1x64xf32> to vector<1xf32>
    %1341 = vector.shape_cast %1340 : vector<1xf32> to vector<1x1xf32>
    %1342 = vector.broadcast %1341 : vector<1x1xf32> to vector<1x64xf32>
    %1343 = arith.subf %1339, %1342 : vector<1x64xf32>
    %1344 = math.exp %1343 : vector<1x64xf32>
    %cst_473 = arith.constant dense<0.000000e+00> : vector<1xf32>
    %1345 = vector.multi_reduction <add>, %1344, %cst_473 [1] : vector<1x64xf32> to vector<1xf32>
    %1346 = vector.shape_cast %1345 : vector<1xf32> to vector<1x1xf32>
    %1347 = tpu.reciprocal %1346 {approx = true} : vector<1x1xf32> -> vector<1x1xf32>
    %1348 = vector.broadcast %1341 : vector<1x1xf32> to vector<1x64xf32>
    %1349 = arith.cmpf oge, %1339, %1348 : vector<1x64xf32>
    %c64_i32_474 = arith.constant 64 : i32
    %1350 = vector.broadcast %c64_i32_474 : i32 to vector<1x64xi32>
    %1351 = arith.select %1349, %536, %1350 : vector<1x64xi1>, vector<1x64xi32>
    %cst_475 = arith.constant dense<2147483647> : vector<1xi32>
    %1352 = vector.multi_reduction <minsi>, %1351, %cst_475 [1] : vector<1x64xi32> to vector<1xi32>
    %1353 = vector.shape_cast %1352 : vector<1xi32> to vector<1x1xi32>
    %c7_i32 = arith.constant 7 : i32
    %1354 = vector.broadcast %c7_i32 : i32 to vector<1x128xi32>
    %1355 = arith.cmpi eq, %537, %1354 : vector<1x128xi32>
    %1356 = vector.shape_cast %1353 : vector<1x1xi32> to vector<1x1xi32>
    %1357 = vector.broadcast %1356 : vector<1x1xi32> to vector<1x128xi32>
    %1358 = arith.select %1355, %1357, %1255 : vector<1x128xi1>, vector<1x128xi32>
    %c7_i32_476 = arith.constant 7 : i32
    %1359 = vector.broadcast %c7_i32_476 : i32 to vector<1x128xi32>
    %1360 = arith.cmpi eq, %537, %1359 : vector<1x128xi32>
    %1361 = vector.shape_cast %1347 : vector<1x1xf32> to vector<1x1xf32>
    %1362 = vector.broadcast %1361 : vector<1x1xf32> to vector<1x128xf32>
    %1363 = arith.select %1360, %1362, %1260 : vector<1x128xi1>, vector<1x128xf32>
    %1364 = vector.broadcast %1353 : vector<1x1xi32> to vector<1x64xi32>
    %1365 = arith.cmpi eq, %536, %1364 : vector<1x64xi32>
    %1366 = arith.extui %1365 : vector<1x64xi1> to vector<1x64xi32>
    %1367 = arith.sitofp %1366 : vector<1x64xi32> to vector<1x64xf32>
    %1368 = arith.truncf %1367 : vector<1x64xf32> to vector<1x64xbf16>
    %1369 = arith.truncf %1289 : vector<1x32xf32> to vector<1x32xbf16>
    %1370 = tpu.concatenate %1368, %1369 in 1 : vector<1x64xbf16>, vector<1x32xbf16> -> vector<1x96xbf16>
    %c384_477 = arith.constant 384 : index
    %c0_478 = arith.constant 0 : index
    %1371 = vector.load %arg1[%c384_477, %c0_478] : memref<640x192xbf16, #tpu.memory_space<vmem>>, vector<96x128xbf16>
    %cst_479 = arith.constant dense<0.000000e+00> : vector<1x128xf32>
    %1372 = tpu.matmul %1370, %1371, %cst_479 {dimension_numbers = #tpu.dot_dimension_numbers<[1], [0], [0], [1], [0, 0, 1, 1], [], []>} : vector<1x96xbf16>, vector<96x128xbf16>, vector<1x128xf32> -> vector<1x128xf32>
    %c4_480 = arith.constant 4 : index
    %c0_481 = arith.constant 0 : index
    %1373 = vector.load %arg2[%c4_480, %c0_481] : memref<8x192xf32, #tpu.memory_space<vmem>>, vector<1x128xf32>
    %1374 = arith.addf %1372, %1373 : vector<1x128xf32>
    %1375 = vector.extract_strided_slice %1374 {offsets = [0, 0], sizes = [1, 64], strides = [1, 1]} : vector<1x128xf32> to vector<1x64xf32>
    %1376 = arith.negf %1375 : vector<1x64xf32>
    %1377 = math.exp %1376 : vector<1x64xf32>
    %cst_482 = arith.constant 1.000000e+00 : f32
    %1378 = vector.broadcast %cst_482 : f32 to vector<1x64xf32>
    %1379 = arith.addf %1378, %1377 : vector<1x64xf32>
    %1380 = arith.divf %1378, %1379 : vector<1x64xf32>
    %1381 = vector.extract_strided_slice %1380 {offsets = [0, 0], sizes = [1, 32], strides = [1, 1]} : vector<1x64xf32> to vector<1x32xf32>
    %1382 = vector.extract_strided_slice %1380 {offsets = [0, 32], sizes = [1, 32], strides = [1, 1]} : vector<1x64xf32> to vector<1x32xf32>
    %1383 = vector.extract_strided_slice %1374 {offsets = [0, 64], sizes = [1, 32], strides = [1, 1]} : vector<1x128xf32> to vector<1x32xf32>
    %1384 = vector.extract_strided_slice %1374 {offsets = [0, 96], sizes = [1, 32], strides = [1, 1]} : vector<1x128xf32> to vector<1x32xf32>
    %1385 = arith.mulf %1381, %1384 : vector<1x32xf32>
    %1386 = arith.addf %1383, %1385 : vector<1x32xf32>
    %1387 = math.tanh %1386 : vector<1x32xf32>
    %cst_483 = arith.constant 1.000000e+00 : f32
    %1388 = vector.broadcast %cst_483 : f32 to vector<1x32xf32>
    %1389 = arith.subf %1388, %1382 : vector<1x32xf32>
    %1390 = arith.mulf %1389, %1387 : vector<1x32xf32>
    %1391 = arith.mulf %1382, %1289 : vector<1x32xf32>
    %1392 = arith.addf %1390, %1391 : vector<1x32xf32>
    %1393 = arith.truncf %1392 : vector<1x32xf32> to vector<1x32xbf16>
    %1394 = arith.truncf %1314 : vector<1x32xf32> to vector<1x32xbf16>
    %1395 = tpu.concatenate %1393, %1394 in 1 : vector<1x32xbf16>, vector<1x32xbf16> -> vector<1x64xbf16>
    %c480_484 = arith.constant 480 : index
    %c0_485 = arith.constant 0 : index
    %1396 = vector.load %arg1[%c480_484, %c0_485] : memref<640x192xbf16, #tpu.memory_space<vmem>>, vector<64x128xbf16>
    %cst_486 = arith.constant dense<0.000000e+00> : vector<1x128xf32>
    %1397 = tpu.matmul %1395, %1396, %cst_486 {dimension_numbers = #tpu.dot_dimension_numbers<[1], [0], [0], [1], [0, 0, 1, 1], [], []>} : vector<1x64xbf16>, vector<64x128xbf16>, vector<1x128xf32> -> vector<1x128xf32>
    %c5_487 = arith.constant 5 : index
    %c0_488 = arith.constant 0 : index
    %1398 = vector.load %arg2[%c5_487, %c0_488] : memref<8x192xf32, #tpu.memory_space<vmem>>, vector<1x128xf32>
    %1399 = arith.addf %1397, %1398 : vector<1x128xf32>
    %1400 = vector.extract_strided_slice %1399 {offsets = [0, 0], sizes = [1, 64], strides = [1, 1]} : vector<1x128xf32> to vector<1x64xf32>
    %1401 = arith.negf %1400 : vector<1x64xf32>
    %1402 = math.exp %1401 : vector<1x64xf32>
    %cst_489 = arith.constant 1.000000e+00 : f32
    %1403 = vector.broadcast %cst_489 : f32 to vector<1x64xf32>
    %1404 = arith.addf %1403, %1402 : vector<1x64xf32>
    %1405 = arith.divf %1403, %1404 : vector<1x64xf32>
    %1406 = vector.extract_strided_slice %1405 {offsets = [0, 0], sizes = [1, 32], strides = [1, 1]} : vector<1x64xf32> to vector<1x32xf32>
    %1407 = vector.extract_strided_slice %1405 {offsets = [0, 32], sizes = [1, 32], strides = [1, 1]} : vector<1x64xf32> to vector<1x32xf32>
    %1408 = vector.extract_strided_slice %1399 {offsets = [0, 64], sizes = [1, 32], strides = [1, 1]} : vector<1x128xf32> to vector<1x32xf32>
    %1409 = vector.extract_strided_slice %1399 {offsets = [0, 96], sizes = [1, 32], strides = [1, 1]} : vector<1x128xf32> to vector<1x32xf32>
    %1410 = arith.mulf %1406, %1409 : vector<1x32xf32>
    %1411 = arith.addf %1408, %1410 : vector<1x32xf32>
    %1412 = math.tanh %1411 : vector<1x32xf32>
    %cst_490 = arith.constant 1.000000e+00 : f32
    %1413 = vector.broadcast %cst_490 : f32 to vector<1x32xf32>
    %1414 = arith.subf %1413, %1407 : vector<1x32xf32>
    %1415 = arith.mulf %1414, %1412 : vector<1x32xf32>
    %1416 = arith.mulf %1407, %1314 : vector<1x32xf32>
    %1417 = arith.addf %1415, %1416 : vector<1x32xf32>
    %1418 = arith.truncf %1417 : vector<1x32xf32> to vector<1x32xbf16>
    %cst_491 = arith.constant dense<0.000000e+00> : vector<1x8xf32>
    %1419 = tpu.matmul %1418, %531, %cst_491 {dimension_numbers = #tpu.dot_dimension_numbers<[1], [0], [0], [1], [0, 0, 1, 1], [], []>} : vector<1x32xbf16>, vector<32x8xbf16>, vector<1x8xf32> -> vector<1x8xf32>
    %cst_492 = arith.constant dense<0xFF800000> : vector<1xf32>
    %1420 = vector.multi_reduction <maximumf>, %1419, %cst_492 [1] : vector<1x8xf32> to vector<1xf32>
    %1421 = vector.shape_cast %1420 : vector<1xf32> to vector<1x1xf32>
    %1422 = vector.broadcast %1421 : vector<1x1xf32> to vector<1x8xf32>
    %1423 = arith.subf %1419, %1422 : vector<1x8xf32>
    %1424 = math.exp %1423 : vector<1x8xf32>
    %cst_493 = arith.constant dense<0.000000e+00> : vector<1xf32>
    %1425 = vector.multi_reduction <add>, %1424, %cst_493 [1] : vector<1x8xf32> to vector<1xf32>
    %1426 = vector.shape_cast %1425 : vector<1xf32> to vector<1x1xf32>
    %1427 = tpu.reciprocal %1426 {approx = true} : vector<1x1xf32> -> vector<1x1xf32>
    %1428 = arith.truncf %1424 : vector<1x8xf32> to vector<1x8xbf16>
    %cst_494 = arith.constant dense<0.000000e+00> : vector<1x32xf32>
    %1429 = tpu.matmul %1428, %535, %cst_494 {dimension_numbers = #tpu.dot_dimension_numbers<[1], [0], [0], [1], [0, 0, 1, 1], [], []>} : vector<1x8xbf16>, vector<8x32xbf16>, vector<1x32xf32> -> vector<1x32xf32>
    %1430 = vector.broadcast %1427 : vector<1x1xf32> to vector<1x32xf32>
    %1431 = arith.mulf %1429, %1430 : vector<1x32xf32>
    %c544_495 = arith.constant 544 : index
    %c0_496 = arith.constant 0 : index
    %1432 = vector.load %arg1[%c544_495, %c0_496] : memref<640x192xbf16, #tpu.memory_space<vmem>>, vector<32x32xbf16>
    %cst_497 = arith.constant dense<0.000000e+00> : vector<1x32xf32>
    %1433 = tpu.matmul %1418, %1432, %cst_497 {dimension_numbers = #tpu.dot_dimension_numbers<[1], [0], [0], [1], [0, 0, 1, 1], [], []>} : vector<1x32xbf16>, vector<32x32xbf16>, vector<1x32xf32> -> vector<1x32xf32>
    %1434 = arith.addf %1433, %1431 : vector<1x32xf32>
    %c6_498 = arith.constant 6 : index
    %c0_499 = arith.constant 0 : index
    %1435 = vector.load %arg2[%c6_498, %c0_499] : memref<8x192xf32, #tpu.memory_space<vmem>>, vector<1x32xf32>
    %1436 = arith.addf %1434, %1435 : vector<1x32xf32>
    %1437 = math.tanh %1436 : vector<1x32xf32>
    %1438 = arith.truncf %1437 : vector<1x32xf32> to vector<1x32xbf16>
    %c608_500 = arith.constant 608 : index
    %c0_501 = arith.constant 0 : index
    %1439 = vector.load %arg1[%c608_500, %c0_501] : memref<640x192xbf16, #tpu.memory_space<vmem>>, vector<32x64xbf16>
    %cst_502 = arith.constant dense<0.000000e+00> : vector<1x64xf32>
    %1440 = tpu.matmul %1438, %1439, %cst_502 {dimension_numbers = #tpu.dot_dimension_numbers<[1], [0], [0], [1], [0, 0, 1, 1], [], []>} : vector<1x32xbf16>, vector<32x64xbf16>, vector<1x64xf32> -> vector<1x64xf32>
    %c7_503 = arith.constant 7 : index
    %c0_504 = arith.constant 0 : index
    %1441 = vector.load %arg2[%c7_503, %c0_504] : memref<8x192xf32, #tpu.memory_space<vmem>>, vector<1x64xf32>
    %1442 = arith.addf %1440, %1441 : vector<1x64xf32>
    %cst_505 = arith.constant dense<0xFF800000> : vector<1xf32>
    %1443 = vector.multi_reduction <maximumf>, %1442, %cst_505 [1] : vector<1x64xf32> to vector<1xf32>
    %1444 = vector.shape_cast %1443 : vector<1xf32> to vector<1x1xf32>
    %1445 = vector.broadcast %1444 : vector<1x1xf32> to vector<1x64xf32>
    %1446 = arith.subf %1442, %1445 : vector<1x64xf32>
    %1447 = math.exp %1446 : vector<1x64xf32>
    %cst_506 = arith.constant dense<0.000000e+00> : vector<1xf32>
    %1448 = vector.multi_reduction <add>, %1447, %cst_506 [1] : vector<1x64xf32> to vector<1xf32>
    %1449 = vector.shape_cast %1448 : vector<1xf32> to vector<1x1xf32>
    %1450 = tpu.reciprocal %1449 {approx = true} : vector<1x1xf32> -> vector<1x1xf32>
    %1451 = vector.broadcast %1444 : vector<1x1xf32> to vector<1x64xf32>
    %1452 = arith.cmpf oge, %1442, %1451 : vector<1x64xf32>
    %c64_i32_507 = arith.constant 64 : i32
    %1453 = vector.broadcast %c64_i32_507 : i32 to vector<1x64xi32>
    %1454 = arith.select %1452, %536, %1453 : vector<1x64xi1>, vector<1x64xi32>
    %cst_508 = arith.constant dense<2147483647> : vector<1xi32>
    %1455 = vector.multi_reduction <minsi>, %1454, %cst_508 [1] : vector<1x64xi32> to vector<1xi32>
    %1456 = vector.shape_cast %1455 : vector<1xi32> to vector<1x1xi32>
    %c8_i32 = arith.constant 8 : i32
    %1457 = vector.broadcast %c8_i32 : i32 to vector<1x128xi32>
    %1458 = arith.cmpi eq, %537, %1457 : vector<1x128xi32>
    %1459 = vector.shape_cast %1456 : vector<1x1xi32> to vector<1x1xi32>
    %1460 = vector.broadcast %1459 : vector<1x1xi32> to vector<1x128xi32>
    %1461 = arith.select %1458, %1460, %1358 : vector<1x128xi1>, vector<1x128xi32>
    %c8_i32_509 = arith.constant 8 : i32
    %1462 = vector.broadcast %c8_i32_509 : i32 to vector<1x128xi32>
    %1463 = arith.cmpi eq, %537, %1462 : vector<1x128xi32>
    %1464 = vector.shape_cast %1450 : vector<1x1xf32> to vector<1x1xf32>
    %1465 = vector.broadcast %1464 : vector<1x1xf32> to vector<1x128xf32>
    %1466 = arith.select %1463, %1465, %1363 : vector<1x128xi1>, vector<1x128xf32>
    %1467 = vector.broadcast %1456 : vector<1x1xi32> to vector<1x64xi32>
    %1468 = arith.cmpi eq, %536, %1467 : vector<1x64xi32>
    %1469 = arith.extui %1468 : vector<1x64xi1> to vector<1x64xi32>
    %1470 = arith.sitofp %1469 : vector<1x64xi32> to vector<1x64xf32>
    %1471 = arith.truncf %1470 : vector<1x64xf32> to vector<1x64xbf16>
    %1472 = arith.truncf %1392 : vector<1x32xf32> to vector<1x32xbf16>
    %1473 = tpu.concatenate %1471, %1472 in 1 : vector<1x64xbf16>, vector<1x32xbf16> -> vector<1x96xbf16>
    %c384_510 = arith.constant 384 : index
    %c0_511 = arith.constant 0 : index
    %1474 = vector.load %arg1[%c384_510, %c0_511] : memref<640x192xbf16, #tpu.memory_space<vmem>>, vector<96x128xbf16>
    %cst_512 = arith.constant dense<0.000000e+00> : vector<1x128xf32>
    %1475 = tpu.matmul %1473, %1474, %cst_512 {dimension_numbers = #tpu.dot_dimension_numbers<[1], [0], [0], [1], [0, 0, 1, 1], [], []>} : vector<1x96xbf16>, vector<96x128xbf16>, vector<1x128xf32> -> vector<1x128xf32>
    %c4_513 = arith.constant 4 : index
    %c0_514 = arith.constant 0 : index
    %1476 = vector.load %arg2[%c4_513, %c0_514] : memref<8x192xf32, #tpu.memory_space<vmem>>, vector<1x128xf32>
    %1477 = arith.addf %1475, %1476 : vector<1x128xf32>
    %1478 = vector.extract_strided_slice %1477 {offsets = [0, 0], sizes = [1, 64], strides = [1, 1]} : vector<1x128xf32> to vector<1x64xf32>
    %1479 = arith.negf %1478 : vector<1x64xf32>
    %1480 = math.exp %1479 : vector<1x64xf32>
    %cst_515 = arith.constant 1.000000e+00 : f32
    %1481 = vector.broadcast %cst_515 : f32 to vector<1x64xf32>
    %1482 = arith.addf %1481, %1480 : vector<1x64xf32>
    %1483 = arith.divf %1481, %1482 : vector<1x64xf32>
    %1484 = vector.extract_strided_slice %1483 {offsets = [0, 0], sizes = [1, 32], strides = [1, 1]} : vector<1x64xf32> to vector<1x32xf32>
    %1485 = vector.extract_strided_slice %1483 {offsets = [0, 32], sizes = [1, 32], strides = [1, 1]} : vector<1x64xf32> to vector<1x32xf32>
    %1486 = vector.extract_strided_slice %1477 {offsets = [0, 64], sizes = [1, 32], strides = [1, 1]} : vector<1x128xf32> to vector<1x32xf32>
    %1487 = vector.extract_strided_slice %1477 {offsets = [0, 96], sizes = [1, 32], strides = [1, 1]} : vector<1x128xf32> to vector<1x32xf32>
    %1488 = arith.mulf %1484, %1487 : vector<1x32xf32>
    %1489 = arith.addf %1486, %1488 : vector<1x32xf32>
    %1490 = math.tanh %1489 : vector<1x32xf32>
    %cst_516 = arith.constant 1.000000e+00 : f32
    %1491 = vector.broadcast %cst_516 : f32 to vector<1x32xf32>
    %1492 = arith.subf %1491, %1485 : vector<1x32xf32>
    %1493 = arith.mulf %1492, %1490 : vector<1x32xf32>
    %1494 = arith.mulf %1485, %1392 : vector<1x32xf32>
    %1495 = arith.addf %1493, %1494 : vector<1x32xf32>
    %1496 = arith.truncf %1495 : vector<1x32xf32> to vector<1x32xbf16>
    %1497 = arith.truncf %1417 : vector<1x32xf32> to vector<1x32xbf16>
    %1498 = tpu.concatenate %1496, %1497 in 1 : vector<1x32xbf16>, vector<1x32xbf16> -> vector<1x64xbf16>
    %c480_517 = arith.constant 480 : index
    %c0_518 = arith.constant 0 : index
    %1499 = vector.load %arg1[%c480_517, %c0_518] : memref<640x192xbf16, #tpu.memory_space<vmem>>, vector<64x128xbf16>
    %cst_519 = arith.constant dense<0.000000e+00> : vector<1x128xf32>
    %1500 = tpu.matmul %1498, %1499, %cst_519 {dimension_numbers = #tpu.dot_dimension_numbers<[1], [0], [0], [1], [0, 0, 1, 1], [], []>} : vector<1x64xbf16>, vector<64x128xbf16>, vector<1x128xf32> -> vector<1x128xf32>
    %c5_520 = arith.constant 5 : index
    %c0_521 = arith.constant 0 : index
    %1501 = vector.load %arg2[%c5_520, %c0_521] : memref<8x192xf32, #tpu.memory_space<vmem>>, vector<1x128xf32>
    %1502 = arith.addf %1500, %1501 : vector<1x128xf32>
    %1503 = vector.extract_strided_slice %1502 {offsets = [0, 0], sizes = [1, 64], strides = [1, 1]} : vector<1x128xf32> to vector<1x64xf32>
    %1504 = arith.negf %1503 : vector<1x64xf32>
    %1505 = math.exp %1504 : vector<1x64xf32>
    %cst_522 = arith.constant 1.000000e+00 : f32
    %1506 = vector.broadcast %cst_522 : f32 to vector<1x64xf32>
    %1507 = arith.addf %1506, %1505 : vector<1x64xf32>
    %1508 = arith.divf %1506, %1507 : vector<1x64xf32>
    %1509 = vector.extract_strided_slice %1508 {offsets = [0, 0], sizes = [1, 32], strides = [1, 1]} : vector<1x64xf32> to vector<1x32xf32>
    %1510 = vector.extract_strided_slice %1508 {offsets = [0, 32], sizes = [1, 32], strides = [1, 1]} : vector<1x64xf32> to vector<1x32xf32>
    %1511 = vector.extract_strided_slice %1502 {offsets = [0, 64], sizes = [1, 32], strides = [1, 1]} : vector<1x128xf32> to vector<1x32xf32>
    %1512 = vector.extract_strided_slice %1502 {offsets = [0, 96], sizes = [1, 32], strides = [1, 1]} : vector<1x128xf32> to vector<1x32xf32>
    %1513 = arith.mulf %1509, %1512 : vector<1x32xf32>
    %1514 = arith.addf %1511, %1513 : vector<1x32xf32>
    %1515 = math.tanh %1514 : vector<1x32xf32>
    %cst_523 = arith.constant 1.000000e+00 : f32
    %1516 = vector.broadcast %cst_523 : f32 to vector<1x32xf32>
    %1517 = arith.subf %1516, %1510 : vector<1x32xf32>
    %1518 = arith.mulf %1517, %1515 : vector<1x32xf32>
    %1519 = arith.mulf %1510, %1417 : vector<1x32xf32>
    %1520 = arith.addf %1518, %1519 : vector<1x32xf32>
    %1521 = arith.truncf %1520 : vector<1x32xf32> to vector<1x32xbf16>
    %cst_524 = arith.constant dense<0.000000e+00> : vector<1x8xf32>
    %1522 = tpu.matmul %1521, %531, %cst_524 {dimension_numbers = #tpu.dot_dimension_numbers<[1], [0], [0], [1], [0, 0, 1, 1], [], []>} : vector<1x32xbf16>, vector<32x8xbf16>, vector<1x8xf32> -> vector<1x8xf32>
    %cst_525 = arith.constant dense<0xFF800000> : vector<1xf32>
    %1523 = vector.multi_reduction <maximumf>, %1522, %cst_525 [1] : vector<1x8xf32> to vector<1xf32>
    %1524 = vector.shape_cast %1523 : vector<1xf32> to vector<1x1xf32>
    %1525 = vector.broadcast %1524 : vector<1x1xf32> to vector<1x8xf32>
    %1526 = arith.subf %1522, %1525 : vector<1x8xf32>
    %1527 = math.exp %1526 : vector<1x8xf32>
    %cst_526 = arith.constant dense<0.000000e+00> : vector<1xf32>
    %1528 = vector.multi_reduction <add>, %1527, %cst_526 [1] : vector<1x8xf32> to vector<1xf32>
    %1529 = vector.shape_cast %1528 : vector<1xf32> to vector<1x1xf32>
    %1530 = tpu.reciprocal %1529 {approx = true} : vector<1x1xf32> -> vector<1x1xf32>
    %1531 = arith.truncf %1527 : vector<1x8xf32> to vector<1x8xbf16>
    %cst_527 = arith.constant dense<0.000000e+00> : vector<1x32xf32>
    %1532 = tpu.matmul %1531, %535, %cst_527 {dimension_numbers = #tpu.dot_dimension_numbers<[1], [0], [0], [1], [0, 0, 1, 1], [], []>} : vector<1x8xbf16>, vector<8x32xbf16>, vector<1x32xf32> -> vector<1x32xf32>
    %1533 = vector.broadcast %1530 : vector<1x1xf32> to vector<1x32xf32>
    %1534 = arith.mulf %1532, %1533 : vector<1x32xf32>
    %c544_528 = arith.constant 544 : index
    %c0_529 = arith.constant 0 : index
    %1535 = vector.load %arg1[%c544_528, %c0_529] : memref<640x192xbf16, #tpu.memory_space<vmem>>, vector<32x32xbf16>
    %cst_530 = arith.constant dense<0.000000e+00> : vector<1x32xf32>
    %1536 = tpu.matmul %1521, %1535, %cst_530 {dimension_numbers = #tpu.dot_dimension_numbers<[1], [0], [0], [1], [0, 0, 1, 1], [], []>} : vector<1x32xbf16>, vector<32x32xbf16>, vector<1x32xf32> -> vector<1x32xf32>
    %1537 = arith.addf %1536, %1534 : vector<1x32xf32>
    %c6_531 = arith.constant 6 : index
    %c0_532 = arith.constant 0 : index
    %1538 = vector.load %arg2[%c6_531, %c0_532] : memref<8x192xf32, #tpu.memory_space<vmem>>, vector<1x32xf32>
    %1539 = arith.addf %1537, %1538 : vector<1x32xf32>
    %1540 = math.tanh %1539 : vector<1x32xf32>
    %1541 = arith.truncf %1540 : vector<1x32xf32> to vector<1x32xbf16>
    %c608_533 = arith.constant 608 : index
    %c0_534 = arith.constant 0 : index
    %1542 = vector.load %arg1[%c608_533, %c0_534] : memref<640x192xbf16, #tpu.memory_space<vmem>>, vector<32x64xbf16>
    %cst_535 = arith.constant dense<0.000000e+00> : vector<1x64xf32>
    %1543 = tpu.matmul %1541, %1542, %cst_535 {dimension_numbers = #tpu.dot_dimension_numbers<[1], [0], [0], [1], [0, 0, 1, 1], [], []>} : vector<1x32xbf16>, vector<32x64xbf16>, vector<1x64xf32> -> vector<1x64xf32>
    %c7_536 = arith.constant 7 : index
    %c0_537 = arith.constant 0 : index
    %1544 = vector.load %arg2[%c7_536, %c0_537] : memref<8x192xf32, #tpu.memory_space<vmem>>, vector<1x64xf32>
    %1545 = arith.addf %1543, %1544 : vector<1x64xf32>
    %cst_538 = arith.constant dense<0xFF800000> : vector<1xf32>
    %1546 = vector.multi_reduction <maximumf>, %1545, %cst_538 [1] : vector<1x64xf32> to vector<1xf32>
    %1547 = vector.shape_cast %1546 : vector<1xf32> to vector<1x1xf32>
    %1548 = vector.broadcast %1547 : vector<1x1xf32> to vector<1x64xf32>
    %1549 = arith.subf %1545, %1548 : vector<1x64xf32>
    %1550 = math.exp %1549 : vector<1x64xf32>
    %cst_539 = arith.constant dense<0.000000e+00> : vector<1xf32>
    %1551 = vector.multi_reduction <add>, %1550, %cst_539 [1] : vector<1x64xf32> to vector<1xf32>
    %1552 = vector.shape_cast %1551 : vector<1xf32> to vector<1x1xf32>
    %1553 = tpu.reciprocal %1552 {approx = true} : vector<1x1xf32> -> vector<1x1xf32>
    %1554 = vector.broadcast %1547 : vector<1x1xf32> to vector<1x64xf32>
    %1555 = arith.cmpf oge, %1545, %1554 : vector<1x64xf32>
    %c64_i32_540 = arith.constant 64 : i32
    %1556 = vector.broadcast %c64_i32_540 : i32 to vector<1x64xi32>
    %1557 = arith.select %1555, %536, %1556 : vector<1x64xi1>, vector<1x64xi32>
    %cst_541 = arith.constant dense<2147483647> : vector<1xi32>
    %1558 = vector.multi_reduction <minsi>, %1557, %cst_541 [1] : vector<1x64xi32> to vector<1xi32>
    %1559 = vector.shape_cast %1558 : vector<1xi32> to vector<1x1xi32>
    %c9_i32 = arith.constant 9 : i32
    %1560 = vector.broadcast %c9_i32 : i32 to vector<1x128xi32>
    %1561 = arith.cmpi eq, %537, %1560 : vector<1x128xi32>
    %1562 = vector.shape_cast %1559 : vector<1x1xi32> to vector<1x1xi32>
    %1563 = vector.broadcast %1562 : vector<1x1xi32> to vector<1x128xi32>
    %1564 = arith.select %1561, %1563, %1461 : vector<1x128xi1>, vector<1x128xi32>
    %c9_i32_542 = arith.constant 9 : i32
    %1565 = vector.broadcast %c9_i32_542 : i32 to vector<1x128xi32>
    %1566 = arith.cmpi eq, %537, %1565 : vector<1x128xi32>
    %1567 = vector.shape_cast %1553 : vector<1x1xf32> to vector<1x1xf32>
    %1568 = vector.broadcast %1567 : vector<1x1xf32> to vector<1x128xf32>
    %1569 = arith.select %1566, %1568, %1466 : vector<1x128xi1>, vector<1x128xf32>
    %c0_543 = arith.constant 0 : index
    %c0_544 = arith.constant 0 : index
    %1570 = vector.load %arg3[%c0_543, %c0_544] : memref<1x128xi32, #tpu.memory_space<vmem>>, vector<1x128xi32>
    tpu.vector_store %arg3[%c0_543, %c0_544], %1564 {strides = array<i32>} : memref<1x128xi32, #tpu.memory_space<vmem>>, vector<1x128xi32>,
    %c0_545 = arith.constant 0 : index
    %c0_546 = arith.constant 0 : index
    %1571 = vector.load %arg4[%c0_545, %c0_546] : memref<1x128xf32, #tpu.memory_space<vmem>>, vector<1x128xf32>
    tpu.vector_store %arg4[%c0_545, %c0_546], %1569 {strides = array<i32>} : memref<1x128xf32, #tpu.memory_space<vmem>>, vector<1x128xf32>,
    return
  }
}

</mosaic_0001>

<llo_original>
// kernel: greedy_search_decode.1
$region0: #{greedy_search_decode.1}
  #allocation0 [shape = 'u32[]', space=smem, size = 0x4, offset = 0x4, fixed_abs, tag = 'smem constant byte address 0x4 - core index']
  #allocation1 [shape = 'u32[144,128]{1,0:T(1,128)}', space=vmem, size = 0x12000, scoped, tag = 'internal scratch']
  #allocation2 [shape = 'f32[8,128]{1,0:T(8,128)}', space=vmem, size = 0x1000, scoped, tag = 'scratch operand']
  #allocation3 [shape = 'f32[8,64]{1,0:T(8,128)}', space=vmem, size = 0x1000, scoped, tag = 'scratch operand']
  %s0 = inlined_call_operand.vmem [shape: s32[8,2], index: 0, kind: input, shape index: {}]
  %s1 = inlined_call_operand.vmem [shape: bf16[640,192], index: 1, kind: input, shape index: {}]
  %s2 = inlined_call_operand.vmem [shape: f32[8,192], index: 2, kind: input, shape index: {}]
  %s3 = inlined_call_operand.vmem [shape: s32[1,128], index: 3, kind: output, shape index: {0}]
  %s4 = inlined_call_operand.vmem [shape: f32[1,128], index: 4, kind: output, shape index: {1}]
  %5 = xla_tuple %s3, %s4
  %s6 = sld [smem:[#allocation0]]
  $region30: #{greedy_search_decode.1} parent=0
    _
  %s8 = ssub.s32 1, %s6
  %s9 = scalar_select 0, %s8, %s6
  // Predicated region
  $region2: #{greedy_search_decode.1} parent=0 // pred_check
    _
  $region3: #{greedy_search_decode.1} parent=0 // pred_check_branch
    %11 = sbr.rel (0) target = $region5
  $region4: #{greedy_search_decode.1} parent=0 // pred_region
    _
  $region5: #{greedy_search_decode.1} parent=0 // pred_fallthru
    _
  // Predicated region
  $region6: #{greedy_search_decode.1} parent=0 // pred_check
    _
  $region7: #{greedy_search_decode.1} parent=0 // pred_check_branch
    %13 = sbr.rel (0) target = $region9
  $region8: #{greedy_search_decode.1} parent=0 // pred_region
    _
  $region9: #{greedy_search_decode.1} parent=0 // pred_fallthru
    _
  // Predicated region
  $region10: #{greedy_search_decode.1} parent=0 // pred_check
    _
  $region11: #{greedy_search_decode.1} parent=0 // pred_check_branch
    %15 = sbr.rel (0) target = $region13
  $region12: #{greedy_search_decode.1} parent=0 // pred_region
    _
  $region13: #{greedy_search_decode.1} parent=0 // pred_fallthru
    _
  %v17 = vlaneseq
  %v18 = vand.u32 %v17, 127
  %v19 = vld [vmem:[%s0] sm:$0xff]
  %20 = vset.pattern.permute.xlu0 0
  %21 = vperm.xlu0 %20, %v19
  %v22 = vpop.permute.xlu0 %21
  %vm23 = vcmp.eq.s32.totalorder %v22, %v18
  %v24 = vsel %vm23, 1, 0
  %v25 = vcvt.s32.f32 %v24
  %v26 = vpack.c.bf16 %v25, %v25
  %27 = vset.pattern.permute.xlu0 1
  %28 = vperm.xlu0 %27, %v19
  %v29 = vpop.permute.xlu0 %28
  %vm30 = vcmp.eq.s32.totalorder %v29, %v18
  %v31 = vsel %vm30, 1, 0
  %v32 = vcvt.s32.f32 %v31
  %v33 = vpack.c.bf16 %v32, %v32
  %35 = vrot.lane.b32.xlu0 %v33, 64
  %v36 = vpop.permute.xlu0 %35
  %vm37 = vcmask 523264
  %v40 = vsel %vm37, %v26, %v36
  %v42 = vld [vmem:[%s1] sm:$0xff]
  %v43 = vld [vmem:[%s1 + $0x8] sm:$0xff]
  %v44 = vld [vmem:[%s1 + $0x10] sm:$0xff]
  %v45 = vld [vmem:[%s1 + $0x18] sm:$0xff]
  %v46 = vld [vmem:[%s1 + $0x20] sm:$0xff]
  %v47 = vld [vmem:[%s1 + $0x28] sm:$0xff]
  %v48 = vld [vmem:[%s1 + $0x30] sm:$0xff]
  %v49 = vld [vmem:[%s1 + $0x38] sm:$0xff]
  %v50 = vld [vmem:[%s1 + $0x40] sm:$0xff]
  %v51 = vld [vmem:[%s1 + $0x48] sm:$0xff]
  %v52 = vld [vmem:[%s1 + $0x50] sm:$0xff]
  %v53 = vld [vmem:[%s1 + $0x58] sm:$0xff]
  %v54 = vld [vmem:[%s1 + $0x60] sm:$0xff]
  %v55 = vld [vmem:[%s1 + $0x68] sm:$0xff]
  %v56 = vld [vmem:[%s1 + $0x70] sm:$0xff]
  %v57 = vld [vmem:[%s1 + $0x78] sm:$0xff]
  %v58 = vld [vmem:[%s2] ss:$8 sm:$0x3]
  %v60 = vlaneseq
  %v61 = vshrl.u32 %v60, 7
  %v62 = vsub.s32 0, %v61
  %v63 = vrot.slane %v58, %v62
  %v64 = vlaneseq
  %v65 = vshrl.u32 %v64, 7
  %v66 = vsub.s32 1, %v65
  %v67 = vrot.slane %v58, %v66
  %v86 = vunpack.c.l.b16 %v42
  %v87 = vunpack.c.h.b16 %v42
  %v88 = vunpack.c.l.b16 %v43
  %v89 = vunpack.c.h.b16 %v43
  %v90 = vunpack.c.l.b16 %v44
  %v91 = vunpack.c.h.b16 %v44
  %v92 = vunpack.c.l.b16 %v45
  %v93 = vunpack.c.h.b16 %v45
  %v94 = vunpack.c.l.b16 %v46
  %v95 = vunpack.c.h.b16 %v46
  %v96 = vunpack.c.l.b16 %v47
  %v97 = vunpack.c.h.b16 %v47
  %v98 = vunpack.c.l.b16 %v48
  %v99 = vunpack.c.h.b16 %v48
  %v100 = vunpack.c.l.b16 %v49
  %v101 = vunpack.c.h.b16 %v49
  %v102 = vunpack.c.l.b16 %v50
  %v103 = vunpack.c.h.b16 %v50
  %v104 = vunpack.c.l.b16 %v51
  %v105 = vunpack.c.h.b16 %v51
  %v106 = vunpack.c.l.b16 %v52
  %v107 = vunpack.c.h.b16 %v52
  %v108 = vunpack.c.l.b16 %v53
  %v109 = vunpack.c.h.b16 %v53
  %v110 = vunpack.c.l.b16 %v54
  %v111 = vunpack.c.h.b16 %v54
  %v112 = vunpack.c.l.b16 %v55
  %v113 = vunpack.c.h.b16 %v55
  %v114 = vunpack.c.l.b16 %v56
  %v115 = vunpack.c.h.b16 %v56
  %v116 = vunpack.c.l.b16 %v57
  %v117 = vunpack.c.h.b16 %v57
  %v118 = vpack.c.b16 %v88, %v86
  %v119 = vpack.c.b16 %v89, %v87
  %v120 = vpack.c.b16 %v92, %v90
  %v121 = vpack.c.b16 %v93, %v91
  %v122 = vpack.c.b16 %v96, %v94
  %v123 = vpack.c.b16 %v97, %v95
  %v124 = vpack.c.b16 %v100, %v98
  %v125 = vpack.c.b16 %v101, %v99
  %v126 = vpack.c.b16 %v104, %v102
  %v127 = vpack.c.b16 %v105, %v103
  %v128 = vpack.c.b16 %v108, %v106
  %v129 = vpack.c.b16 %v109, %v107
  %v130 = vpack.c.b16 %v112, %v110
  %v131 = vpack.c.b16 %v113, %v111
  %v132 = vpack.c.b16 %v116, %v114
  %v133 = vpack.c.b16 %v117, %v115
  %150 = vmatprep.subr.bf16.mxu0 %v133
  %151 = vmatpush1.bf16.msra.mxu0 %v132
  %152 = vmatprep.subr.bf16.mxu0 %v131
  %153 = vmatpush1.bf16.msra.mxu0 %v130
  %154 = vmatprep.subr.bf16.mxu0 %v129
  %155 = vmatpush1.bf16.msra.mxu0 %v128
  %156 = vmatprep.subr.bf16.mxu0 %v127
  %157 = vmatpush1.bf16.msra.mxu0 %v126
  %158 = vmatprep.subr.bf16.mxu0 %v125
  %159 = vmatpush1.bf16.msra.mxu0 %v124
  %160 = vmatprep.subr.bf16.mxu0 %v123
  %161 = vmatpush1.bf16.msra.mxu0 %v122
  %162 = vmatprep.subr.bf16.mxu0 %v121
  %163 = vmatpush1.bf16.msra.mxu0 %v120
  %164 = vmatprep.subr.bf16.mxu0 %v119
  %165 = vmatpush1.bf16.msra.mxu0 %v118
  %166 = vmatprep.subr.bf16.mxu0 0
  %167 = vmatpush2.bf16.msra.mxu0 0
  %168 = vmatprep.subr.bf16.mxu0 0
  %169 = vmatpush2.bf16.msra.mxu0 0
  %170 = vmatprep.subr.bf16.mxu0 0
  %171 = vmatpush2.bf16.msra.mxu0 0
  %172 = vmatprep.subr.bf16.mxu0 0
  %173 = vmatpush2.bf16.msra.mxu0 0
  %174 = vmatprep.subr.bf16.mxu0 0
  %175 = vmatpush2.bf16.msra.mxu0 0
  %176 = vmatprep.subr.bf16.mxu0 0
  %177 = vmatpush2.bf16.msra.mxu0 0
  %178 = vmatprep.subr.bf16.mxu0 0
  %179 = vmatpush2.bf16.msra.mxu0 0
  %180 = vmatprep.subr.bf16.mxu0 0
  %181 = vmatpush2.bf16.msra.mxu0 0
  %182 = vmatprep.mubr.bf16.mxu0 0
  %183 = vmatmul.mubr.bf16.gmra.mxu0 %v40
  %v184 = vpop.f32.mrf.mxu0
  %v185 = vadd.f32 %v63, %v184
  %v186 = vpop.f32.mrf.mxu0
  %v187 = vadd.f32 %v67, %v186
  %v188 = vpop.f32.mrf.mxu0
  %v189 = vpop.f32.mrf.mxu0
  %190 = vdwg.mxu0
  %v191 = vld [vmem:[%s1 + $0x80] sm:$0xff]
  %v192 = vld [vmem:[%s1 + $0x88] sm:$0xff]
  %v193 = vld [vmem:[%s1 + $0x90] sm:$0xff]
  %v194 = vld [vmem:[%s1 + $0x98] sm:$0xff]
  %v195 = vld [vmem:[%s1 + $0xa0] sm:$0xff]
  %v196 = vld [vmem:[%s1 + $0xa8] sm:$0xff]
  %v197 = vld [vmem:[%s1 + $0xb0] sm:$0xff]
  %v198 = vld [vmem:[%s1 + $0xb8] sm:$0xff]
  %s199 = scalar_lea.vmem %s2, 1
  %v200 = vld [vmem:[%s199] ss:$8 sm:$0x3]
  %v209 = vunpack.c.l.b16 %v191
  %v210 = vunpack.c.h.b16 %v191
  %v211 = vunpack.c.l.b16 %v192
  %v212 = vunpack.c.h.b16 %v192
  %v213 = vunpack.c.l.b16 %v193
  %v214 = vunpack.c.h.b16 %v193
  %v215 = vunpack.c.l.b16 %v194
  %v216 = vunpack.c.h.b16 %v194
  %v217 = vunpack.c.l.b16 %v195
  %v218 = vunpack.c.h.b16 %v195
  %v219 = vunpack.c.l.b16 %v196
  %v220 = vunpack.c.h.b16 %v196
  %v221 = vunpack.c.l.b16 %v197
  %v222 = vunpack.c.h.b16 %v197
  %v223 = vunpack.c.l.b16 %v198
  %v224 = vunpack.c.h.b16 %v198
  %v225 = vpack.c.b16 %v211, %v209
  %v226 = vpack.c.b16 %v212, %v210
  %v227 = vpack.c.b16 %v215, %v213
  %v228 = vpack.c.b16 %v216, %v214
  %v229 = vpack.c.b16 %v219, %v217
  %v230 = vpack.c.b16 %v220, %v218
  %v231 = vpack.c.b16 %v223, %v221
  %v232 = vpack.c.b16 %v224, %v222
  %v242 = vlaneseq
  %v243 = vshrl.u32 %v242, 7
  %v244 = vsub.s32 0, %v243
  %v245 = vrot.slane %v200, %v244
  %v246 = vlaneseq
  %v247 = vshrl.u32 %v246, 7
  %v248 = vsub.s32 1, %v247
  %v249 = vrot.slane %v200, %v248
  %v253 = vsel %vm37, 0, 0
  %255 = vmatprep.subr.bf16.mxu0 0
  %256 = vmatpush1.bf16.msra.mxu0 0
  %257 = vmatprep.subr.bf16.mxu0 0
  %258 = vmatpush1.bf16.msra.mxu0 0
  %259 = vmatprep.subr.bf16.mxu0 0
  %260 = vmatpush1.bf16.msra.mxu0 0
  %261 = vmatprep.subr.bf16.mxu0 0
  %262 = vmatpush1.bf16.msra.mxu0 0
  %263 = vmatprep.subr.bf16.mxu0 %v232
  %264 = vmatpush1.bf16.msra.mxu0 %v231
  %265 = vmatprep.subr.bf16.mxu0 %v230
  %266 = vmatpush1.bf16.msra.mxu0 %v229
  %267 = vmatprep.subr.bf16.mxu0 %v228
  %268 = vmatpush1.bf16.msra.mxu0 %v227
  %269 = vmatprep.subr.bf16.mxu0 %v226
  %270 = vmatpush1.bf16.msra.mxu0 %v225
  %271 = vmatprep.subr.bf16.mxu0 0
  %272 = vmatpush2.bf16.msra.mxu0 0
  %273 = vmatprep.subr.bf16.mxu0 0
  %274 = vmatpush2.bf16.msra.mxu0 0
  %275 = vmatprep.subr.bf16.mxu0 0
  %276 = vmatpush2.bf16.msra.mxu0 0
  %277 = vmatprep.subr.bf16.mxu0 0
  %278 = vmatpush2.bf16.msra.mxu0 0
  %279 = vmatprep.subr.bf16.mxu0 0
  %280 = vmatpush2.bf16.msra.mxu0 0
  %281 = vmatprep.subr.bf16.mxu0 0
  %282 = vmatpush2.bf16.msra.mxu0 0
  %283 = vmatprep.subr.bf16.mxu0 0
  %284 = vmatpush2.bf16.msra.mxu0 0
  %285 = vmatprep.subr.bf16.mxu0 0
  %286 = vmatpush2.bf16.msra.mxu0 0
  %287 = vmatprep.mubr.bf16.mxu0 0
  %288 = vmatmul.mubr.bf16.gmra.mxu0 %v253
  %v289 = vpop.f32.mrf.mxu0
  %v290 = vadd.f32 %v245, %v289
  %v291 = vpop.f32.mrf.mxu0
  %v292 = vadd.f32 %v249, %v291
  %v293 = vpop.f32.mrf.mxu0
  %v294 = vpop.f32.mrf.mxu0
  %295 = vdwg.mxu0
  %v296 = vadd.f32 %v185, %v290
  %v297 = vxor.u32 %v296, 2147483648
  %v298 = vmul.f32 %v297, 1.442695
  %v299 = vpow.pop %v298
  %v300 = vadd.f32 %v299, 1.0
  %v301 = vrcp.pop %v300
  %v302 = vmul.f32 1.0, %v301
  %v303 = vmul.f32 %v302, %v292
  %v304 = vadd.f32 %v187, %v303
  %v305 = vtanh.pop %v304
  %v306 = vsub.f32 1.0, %v302
  %308 = vrot.lane.b32.xlu0 %v305, 64
  %v309 = vpop.permute.xlu0 %308
  %v311 = vmul.f32 %v306, %v309
  %v312 = vmul.f32 %v302, 0.0
  %v313 = vadd.f32 %v311, %v312
  %315 = vrot.lane.b32.xlu0 %v313, 64
  %v316 = vpop.permute.xlu0 %315
  %vm318 = vcmask 253952
  %319 = vst.msk [vmem:[#allocation2] sm:$0x1] %vm318, %v316
  %vm320 = vcmask 516352
  %321 = vst.msk [vmem:[#allocation2 + $0x7] sm:$0x1] %vm320, %v316
  %vm322 = vcmask 778752
  %323 = vst.msk [vmem:[#allocation2 + $0x7] sm:$0x1] %vm322, %v313
  %vm324 = vcmask 1041152
  %325 = vst.msk [vmem:[#allocation2] sm:$0x1] %vm324, %v313
  %v326 = vpack.c.bf16 %v313, %v313
  %v327 = vld [vmem:[%s1 + $0x80] sm:$0xff]
  %v328 = vld [vmem:[%s1 + $0x88] sm:$0xff]
  %v329 = vld [vmem:[%s1 + $0x90] sm:$0xff]
  %v330 = vld [vmem:[%s1 + $0x98] sm:$0xff]
  %v331 = vld [vmem:[%s1 + $0xa0] sm:$0xff]
  %v332 = vld [vmem:[%s1 + $0xa8] sm:$0xff]
  %v333 = vld [vmem:[%s1 + $0xb0] sm:$0xff]
  %v334 = vld [vmem:[%s1 + $0xb8] sm:$0xff]
  %v335 = vld [vmem:[%s199] ss:$8 sm:$0x3]
  %337 = vrot.lane.b32.xlu0 %v326, 64
  %v338 = vpop.permute.xlu0 %337
  %v347 = vunpack.c.l.b16 %v327
  %v348 = vunpack.c.h.b16 %v327
  %v349 = vunpack.c.l.b16 %v328
  %v350 = vunpack.c.h.b16 %v328
  %v351 = vunpack.c.l.b16 %v329
  %v352 = vunpack.c.h.b16 %v329
  %v353 = vunpack.c.l.b16 %v330
  %v354 = vunpack.c.h.b16 %v330
  %v355 = vunpack.c.l.b16 %v331
  %v356 = vunpack.c.h.b16 %v331
  %v357 = vunpack.c.l.b16 %v332
  %v358 = vunpack.c.h.b16 %v332
  %v359 = vunpack.c.l.b16 %v333
  %v360 = vunpack.c.h.b16 %v333
  %v361 = vunpack.c.l.b16 %v334
  %v362 = vunpack.c.h.b16 %v334
  %v363 = vpack.c.b16 %v349, %v347
  %v364 = vpack.c.b16 %v350, %v348
  %v365 = vpack.c.b16 %v353, %v351
  %v366 = vpack.c.b16 %v354, %v352
  %v367 = vpack.c.b16 %v357, %v355
  %v368 = vpack.c.b16 %v358, %v356
  %v369 = vpack.c.b16 %v361, %v359
  %v370 = vpack.c.b16 %v362, %v360
  %v380 = vlaneseq
  %v381 = vshrl.u32 %v380, 7
  %v382 = vsub.s32 0, %v381
  %v383 = vrot.slane %v335, %v382
  %v384 = vlaneseq
  %v385 = vshrl.u32 %v384, 7
  %v386 = vsub.s32 1, %v385
  %v387 = vrot.slane %v335, %v386
  %v391 = vsel %vm37, %v338, 0
  %393 = vmatprep.subr.bf16.mxu0 0
  %394 = vmatpush1.bf16.msra.mxu0 0
  %395 = vmatprep.subr.bf16.mxu0 0
  %396 = vmatpush1.bf16.msra.mxu0 0
  %397 = vmatprep.subr.bf16.mxu0 0
  %398 = vmatpush1.bf16.msra.mxu0 0
  %399 = vmatprep.subr.bf16.mxu0 0
  %400 = vmatpush1.bf16.msra.mxu0 0
  %401 = vmatprep.subr.bf16.mxu0 %v370
  %402 = vmatpush1.bf16.msra.mxu0 %v369
  %403 = vmatprep.subr.bf16.mxu0 %v368
  %404 = vmatpush1.bf16.msra.mxu0 %v367
  %405 = vmatprep.subr.bf16.mxu0 %v366
  %406 = vmatpush1.bf16.msra.mxu0 %v365
  %407 = vmatprep.subr.bf16.mxu0 %v364
  %408 = vmatpush1.bf16.msra.mxu0 %v363
  %409 = vmatprep.subr.bf16.mxu0 0
  %410 = vmatpush2.bf16.msra.mxu0 0
  %411 = vmatprep.subr.bf16.mxu0 0
  %412 = vmatpush2.bf16.msra.mxu0 0
  %413 = vmatprep.subr.bf16.mxu0 0
  %414 = vmatpush2.bf16.msra.mxu0 0
  %415 = vmatprep.subr.bf16.mxu0 0
  %416 = vmatpush2.bf16.msra.mxu0 0
  %417 = vmatprep.subr.bf16.mxu0 0
  %418 = vmatpush2.bf16.msra.mxu0 0
  %419 = vmatprep.subr.bf16.mxu0 0
  %420 = vmatpush2.bf16.msra.mxu0 0
  %421 = vmatprep.subr.bf16.mxu0 0
  %422 = vmatpush2.bf16.msra.mxu0 0
  %423 = vmatprep.subr.bf16.mxu0 0
  %424 = vmatpush2.bf16.msra.mxu0 0
  %425 = vmatprep.mubr.bf16.mxu0 0
  %426 = vmatmul.mubr.bf16.gmra.mxu0 %v391
  %v427 = vpop.f32.mrf.mxu0
  %v428 = vadd.f32 %v383, %v427
  %v429 = vpop.f32.mrf.mxu0
  %v430 = vadd.f32 %v387, %v429
  %v431 = vpop.f32.mrf.mxu0
  %v432 = vpop.f32.mrf.mxu0
  %433 = vdwg.mxu0
  %v435 = vrot.slane %v428, 7
  %v437 = vadd.f32 %v185, %v435
  %v438 = vxor.u32 %v437, 2147483648
  %v439 = vmul.f32 %v438, 1.442695
  %v440 = vpow.pop %v439
  %v441 = vadd.f32 %v440, 1.0
  %v442 = vrcp.pop %v441
  %v443 = vmul.f32 1.0, %v442
  %v445 = vrot.slane %v430, 7
  %v447 = vmul.f32 %v443, %v445
  %v448 = vadd.f32 %v187, %v447
  %v449 = vtanh.pop %v448
  %v450 = vsub.f32 1.0, %v443
  %452 = vrot.lane.b32.xlu0 %v449, 64
  %v453 = vpop.permute.xlu0 %452
  %v455 = vmul.f32 %v450, %v453
  %v456 = vrot.slane %v313, 7
  %v458 = vmul.f32 %v443, %v456
  %v459 = vadd.f32 %v455, %v458
  %461 = vrot.lane.b32.xlu0 %v459, 64
  %v462 = vpop.permute.xlu0 %461
  %vm464 = vcmask 254977
  %465 = vst.msk [vmem:[#allocation2] sm:$0x2] %vm464, %v462
  %vm466 = vcmask 517377
  %467 = vst.msk [vmem:[#allocation2 + $0x5] sm:$0x2] %vm466, %v462
  %vm468 = vcmask 779777
  %469 = vst.msk [vmem:[#allocation2 + $0x5] sm:$0x2] %vm468, %v459
  %vm470 = vcmask 1042177
  %471 = vst.msk [vmem:[#allocation2] sm:$0x2] %vm470, %v459
  %v472 = vpack.c.bf16 %v459, %v459
  %v473 = vld [vmem:[%s1 + $0x80] sm:$0xff]
  %v474 = vld [vmem:[%s1 + $0x88] sm:$0xff]
  %v475 = vld [vmem:[%s1 + $0x90] sm:$0xff]
  %v476 = vld [vmem:[%s1 + $0x98] sm:$0xff]
  %v477 = vld [vmem:[%s1 + $0xa0] sm:$0xff]
  %v478 = vld [vmem:[%s1 + $0xa8] sm:$0xff]
  %v479 = vld [vmem:[%s1 + $0xb0] sm:$0xff]
  %v480 = vld [vmem:[%s1 + $0xb8] sm:$0xff]
  %v481 = vld [vmem:[%s199] ss:$8 sm:$0x3]
  %v483 = vshrl.u32 %v472, 16
  %485 = vrot.lane.b32.xlu0 %v483, 64
  %v486 = vpop.permute.xlu0 %485
  %v495 = vunpack.c.l.b16 %v473
  %v496 = vunpack.c.h.b16 %v473
  %v497 = vunpack.c.l.b16 %v474
  %v498 = vunpack.c.h.b16 %v474
  %v499 = vunpack.c.l.b16 %v475
  %v500 = vunpack.c.h.b16 %v475
  %v501 = vunpack.c.l.b16 %v476
  %v502 = vunpack.c.h.b16 %v476
  %v503 = vunpack.c.l.b16 %v477
  %v504 = vunpack.c.h.b16 %v477
  %v505 = vunpack.c.l.b16 %v478
  %v506 = vunpack.c.h.b16 %v478
  %v507 = vunpack.c.l.b16 %v479
  %v508 = vunpack.c.h.b16 %v479
  %v509 = vunpack.c.l.b16 %v480
  %v510 = vunpack.c.h.b16 %v480
  %v511 = vpack.c.b16 %v497, %v495
  %v512 = vpack.c.b16 %v498, %v496
  %v513 = vpack.c.b16 %v501, %v499
  %v514 = vpack.c.b16 %v502, %v500
  %v515 = vpack.c.b16 %v505, %v503
  %v516 = vpack.c.b16 %v506, %v504
  %v517 = vpack.c.b16 %v509, %v507
  %v518 = vpack.c.b16 %v510, %v508
  %v528 = vlaneseq
  %v529 = vshrl.u32 %v528, 7
  %v530 = vsub.s32 0, %v529
  %v531 = vrot.slane %v481, %v530
  %v532 = vlaneseq
  %v533 = vshrl.u32 %v532, 7
  %v534 = vsub.s32 1, %v533
  %v535 = vrot.slane %v481, %v534
  %v539 = vsel %vm37, %v486, 0
  %541 = vmatprep.subr.bf16.mxu0 0
  %542 = vmatpush1.bf16.msra.mxu0 0
  %543 = vmatprep.subr.bf16.mxu0 0
  %544 = vmatpush1.bf16.msra.mxu0 0
  %545 = vmatprep.subr.bf16.mxu0 0
  %546 = vmatpush1.bf16.msra.mxu0 0
  %547 = vmatprep.subr.bf16.mxu0 0
  %548 = vmatpush1.bf16.msra.mxu0 0
  %549 = vmatprep.subr.bf16.mxu0 %v518
  %550 = vmatpush1.bf16.msra.mxu0 %v517
  %551 = vmatprep.subr.bf16.mxu0 %v516
  %552 = vmatpush1.bf16.msra.mxu0 %v515
  %553 = vmatprep.subr.bf16.mxu0 %v514
  %554 = vmatpush1.bf16.msra.mxu0 %v513
  %555 = vmatprep.subr.bf16.mxu0 %v512
  %556 = vmatpush1.bf16.msra.mxu0 %v511
  %557 = vmatprep.subr.bf16.mxu0 0
  %558 = vmatpush2.bf16.msra.mxu0 0
  %559 = vmatprep.subr.bf16.mxu0 0
  %560 = vmatpush2.bf16.msra.mxu0 0
  %561 = vmatprep.subr.bf16.mxu0 0
  %562 = vmatpush2.bf16.msra.mxu0 0
  %563 = vmatprep.subr.bf16.mxu0 0
  %564 = vmatpush2.bf16.msra.mxu0 0
  %565 = vmatprep.subr.bf16.mxu0 0
  %566 = vmatpush2.bf16.msra.mxu0 0
  %567 = vmatprep.subr.bf16.mxu0 0
  %568 = vmatpush2.bf16.msra.mxu0 0
  %569 = vmatprep.subr.bf16.mxu0 0
  %570 = vmatpush2.bf16.msra.mxu0 0
  %571 = vmatprep.subr.bf16.mxu0 0
  %572 = vmatpush2.bf16.msra.mxu0 0
  %573 = vmatprep.mubr.bf16.mxu0 0
  %574 = vmatmul.mubr.bf16.gmra.mxu0 %v539
  %v575 = vpop.f32.mrf.mxu0
  %v576 = vadd.f32 %v531, %v575
  %v577 = vpop.f32.mrf.mxu0
  %v578 = vadd.f32 %v535, %v577
  %v579 = vpop.f32.mrf.mxu0
  %v580 = vpop.f32.mrf.mxu0
  %581 = vdwg.mxu0
  %v583 = vrot.slane %v576, 6
  %v585 = vadd.f32 %v185, %v583
  %v586 = vxor.u32 %v585, 2147483648
  %v587 = vmul.f32 %v586, 1.442695
  %v588 = vpow.pop %v587
  %v589 = vadd.f32 %v588, 1.0
  %v590 = vrcp.pop %v589
  %v591 = vmul.f32 1.0, %v590
  %v593 = vrot.slane %v578, 6
  %v595 = vmul.f32 %v591, %v593
  %v596 = vadd.f32 %v187, %v595
  %v597 = vtanh.pop %v596
  %v598 = vsub.f32 1.0, %v591
  %600 = vrot.lane.b32.xlu0 %v597, 64
  %v601 = vpop.permute.xlu0 %600
  %v603 = vmul.f32 %v598, %v601
  %v604 = vrot.slane %v459, 7
  %v606 = vmul.f32 %v591, %v604
  %v607 = vadd.f32 %v603, %v606
  %609 = vrot.lane.b32.xlu0 %v607, 64
  %v610 = vpop.permute.xlu0 %609
  %vm612 = vcmask 256002
  %613 = vst.msk [vmem:[#allocation2] sm:$0x4] %vm612, %v610
  %vm614 = vcmask 518402
  %615 = vst.msk [vmem:[#allocation2 + $0x3] sm:$0x4] %vm614, %v610
  %vm616 = vcmask 780802
  %617 = vst.msk [vmem:[#allocation2 + $0x3] sm:$0x4] %vm616, %v607
  %vm618 = vcmask 1043202
  %619 = vst.msk [vmem:[#allocation2] sm:$0x4] %vm618, %v607
  %v620 = vpack.c.bf16 %v607, %v607
  %v621 = vld [vmem:[%s1 + $0x80] sm:$0xff]
  %v622 = vld [vmem:[%s1 + $0x88] sm:$0xff]
  %v623 = vld [vmem:[%s1 + $0x90] sm:$0xff]
  %v624 = vld [vmem:[%s1 + $0x98] sm:$0xff]
  %v625 = vld [vmem:[%s1 + $0xa0] sm:$0xff]
  %v626 = vld [vmem:[%s1 + $0xa8] sm:$0xff]
  %v627 = vld [vmem:[%s1 + $0xb0] sm:$0xff]
  %v628 = vld [vmem:[%s1 + $0xb8] sm:$0xff]
  %v629 = vld [vmem:[%s199] ss:$8 sm:$0x3]
  %v631 = vrot.slane %v620, 1
  %632 = vrot.lane.b32.xlu0 %v631, 64
  %v633 = vpop.permute.xlu0 %632
  %v642 = vunpack.c.l.b16 %v621
  %v643 = vunpack.c.h.b16 %v621
  %v644 = vunpack.c.l.b16 %v622
  %v645 = vunpack.c.h.b16 %v622
  %v646 = vunpack.c.l.b16 %v623
  %v647 = vunpack.c.h.b16 %v623
  %v648 = vunpack.c.l.b16 %v624
  %v649 = vunpack.c.h.b16 %v624
  %v650 = vunpack.c.l.b16 %v625
  %v651 = vunpack.c.h.b16 %v625
  %v652 = vunpack.c.l.b16 %v626
  %v653 = vunpack.c.h.b16 %v626
  %v654 = vunpack.c.l.b16 %v627
  %v655 = vunpack.c.h.b16 %v627
  %v656 = vunpack.c.l.b16 %v628
  %v657 = vunpack.c.h.b16 %v628
  %v658 = vpack.c.b16 %v644, %v642
  %v659 = vpack.c.b16 %v645, %v643
  %v660 = vpack.c.b16 %v648, %v646
  %v661 = vpack.c.b16 %v649, %v647
  %v662 = vpack.c.b16 %v652, %v650
  %v663 = vpack.c.b16 %v653, %v651
  %v664 = vpack.c.b16 %v656, %v654
  %v665 = vpack.c.b16 %v657, %v655
  %v675 = vlaneseq
  %v676 = vshrl.u32 %v675, 7
  %v677 = vsub.s32 0, %v676
  %v678 = vrot.slane %v629, %v677
  %v679 = vlaneseq
  %v680 = vshrl.u32 %v679, 7
  %v681 = vsub.s32 1, %v680
  %v682 = vrot.slane %v629, %v681
  %v686 = vsel %vm37, %v633, 0
  %688 = vmatprep.subr.bf16.mxu0 0
  %689 = vmatpush1.bf16.msra.mxu0 0
  %690 = vmatprep.subr.bf16.mxu0 0
  %691 = vmatpush1.bf16.msra.mxu0 0
  %692 = vmatprep.subr.bf16.mxu0 0
  %693 = vmatpush1.bf16.msra.mxu0 0
  %694 = vmatprep.subr.bf16.mxu0 0
  %695 = vmatpush1.bf16.msra.mxu0 0
  %696 = vmatprep.subr.bf16.mxu0 %v665
  %697 = vmatpush1.bf16.msra.mxu0 %v664
  %698 = vmatprep.subr.bf16.mxu0 %v663
  %699 = vmatpush1.bf16.msra.mxu0 %v662
  %700 = vmatprep.subr.bf16.mxu0 %v661
  %701 = vmatpush1.bf16.msra.mxu0 %v660
  %702 = vmatprep.subr.bf16.mxu0 %v659
  %703 = vmatpush1.bf16.msra.mxu0 %v658
  %704 = vmatprep.subr.bf16.mxu0 0
  %705 = vmatpush2.bf16.msra.mxu0 0
  %706 = vmatprep.subr.bf16.mxu0 0
  %707 = vmatpush2.bf16.msra.mxu0 0
  %708 = vmatprep.subr.bf16.mxu0 0
  %709 = vmatpush2.bf16.msra.mxu0 0
  %710 = vmatprep.subr.bf16.mxu0 0
  %711 = vmatpush2.bf16.msra.mxu0 0
  %712 = vmatprep.subr.bf16.mxu0 0
  %713 = vmatpush2.bf16.msra.mxu0 0
  %714 = vmatprep.subr.bf16.mxu0 0
  %715 = vmatpush2.bf16.msra.mxu0 0
  %716 = vmatprep.subr.bf16.mxu0 0
  %717 = vmatpush2.bf16.msra.mxu0 0
  %718 = vmatprep.subr.bf16.mxu0 0
  %719 = vmatpush2.bf16.msra.mxu0 0
  %720 = vmatprep.mubr.bf16.mxu0 0
  %721 = vmatmul.mubr.bf16.gmra.mxu0 %v686
  %v722 = vpop.f32.mrf.mxu0
  %v723 = vadd.f32 %v678, %v722
  %v724 = vpop.f32.mrf.mxu0
  %v725 = vadd.f32 %v682, %v724
  %v726 = vpop.f32.mrf.mxu0
  %v727 = vpop.f32.mrf.mxu0
  %728 = vdwg.mxu0
  %v730 = vrot.slane %v723, 5
  %v732 = vadd.f32 %v185, %v730
  %v733 = vxor.u32 %v732, 2147483648
  %v734 = vmul.f32 %v733, 1.442695
  %v735 = vpow.pop %v734
  %v736 = vadd.f32 %v735, 1.0
  %v737 = vrcp.pop %v736
  %v738 = vmul.f32 1.0, %v737
  %v740 = vrot.slane %v725, 5
  %v742 = vmul.f32 %v738, %v740
  %v743 = vadd.f32 %v187, %v742
  %v744 = vtanh.pop %v743
  %v745 = vsub.f32 1.0, %v738
  %747 = vrot.lane.b32.xlu0 %v744, 64
  %v748 = vpop.permute.xlu0 %747
  %v750 = vmul.f32 %v745, %v748
  %v751 = vrot.slane %v607, 7
  %v753 = vmul.f32 %v738, %v751
  %v754 = vadd.f32 %v750, %v753
  %756 = vrot.lane.b32.xlu0 %v754, 64
  %v757 = vpop.permute.xlu0 %756
  %vm759 = vcmask 257027
  %760 = vst.msk [vmem:[#allocation2] sm:$0x8] %vm759, %v757
  %vm761 = vcmask 519427
  %762 = vst.msk [vmem:[#allocation2 + $0x1] sm:$0x8] %vm761, %v757
  %vm763 = vcmask 781827
  %764 = vst.msk [vmem:[#allocation2 + $0x1] sm:$0x8] %vm763, %v754
  %vm765 = vcmask 1044227
  %766 = vst.msk [vmem:[#allocation2] sm:$0x8] %vm765, %v754
  %v767 = vpack.c.bf16 %v754, %v754
  %v768 = vld [vmem:[%s1 + $0x80] sm:$0xff]
  %v769 = vld [vmem:[%s1 + $0x88] sm:$0xff]
  %v770 = vld [vmem:[%s1 + $0x90] sm:$0xff]
  %v771 = vld [vmem:[%s1 + $0x98] sm:$0xff]
  %v772 = vld [vmem:[%s1 + $0xa0] sm:$0xff]
  %v773 = vld [vmem:[%s1 + $0xa8] sm:$0xff]
  %v774 = vld [vmem:[%s1 + $0xb0] sm:$0xff]
  %v775 = vld [vmem:[%s1 + $0xb8] sm:$0xff]
  %v776 = vld [vmem:[%s199] ss:$8 sm:$0x3]
  %v778 = vshrl.u32 %v767, 16
  %v780 = vrot.slane %v778, 1
  %781 = vrot.lane.b32.xlu0 %v780, 64
  %v782 = vpop.permute.xlu0 %781
  %v791 = vunpack.c.l.b16 %v768
  %v792 = vunpack.c.h.b16 %v768
  %v793 = vunpack.c.l.b16 %v769
  %v794 = vunpack.c.h.b16 %v769
  %v795 = vunpack.c.l.b16 %v770
  %v796 = vunpack.c.h.b16 %v770
  %v797 = vunpack.c.l.b16 %v771
  %v798 = vunpack.c.h.b16 %v771
  %v799 = vunpack.c.l.b16 %v772
  %v800 = vunpack.c.h.b16 %v772
  %v801 = vunpack.c.l.b16 %v773
  %v802 = vunpack.c.h.b16 %v773
  %v803 = vunpack.c.l.b16 %v774
  %v804 = vunpack.c.h.b16 %v774
  %v805 = vunpack.c.l.b16 %v775
  %v806 = vunpack.c.h.b16 %v775
  %v807 = vpack.c.b16 %v793, %v791
  %v808 = vpack.c.b16 %v794, %v792
  %v809 = vpack.c.b16 %v797, %v795
  %v810 = vpack.c.b16 %v798, %v796
  %v811 = vpack.c.b16 %v801, %v799
  %v812 = vpack.c.b16 %v802, %v800
  %v813 = vpack.c.b16 %v805, %v803
  %v814 = vpack.c.b16 %v806, %v804
  %v824 = vlaneseq
  %v825 = vshrl.u32 %v824, 7
  %v826 = vsub.s32 0, %v825
  %v827 = vrot.slane %v776, %v826
  %v828 = vlaneseq
  %v829 = vshrl.u32 %v828, 7
  %v830 = vsub.s32 1, %v829
  %v831 = vrot.slane %v776, %v830
  %v835 = vsel %vm37, %v782, 0
  %837 = vmatprep.subr.bf16.mxu0 0
  %838 = vmatpush1.bf16.msra.mxu0 0
  %839 = vmatprep.subr.bf16.mxu0 0
  %840 = vmatpush1.bf16.msra.mxu0 0
  %841 = vmatprep.subr.bf16.mxu0 0
  %842 = vmatpush1.bf16.msra.mxu0 0
  %843 = vmatprep.subr.bf16.mxu0 0
  %844 = vmatpush1.bf16.msra.mxu0 0
  %845 = vmatprep.subr.bf16.mxu0 %v814
  %846 = vmatpush1.bf16.msra.mxu0 %v813
  %847 = vmatprep.subr.bf16.mxu0 %v812
  %848 = vmatpush1.bf16.msra.mxu0 %v811
  %849 = vmatprep.subr.bf16.mxu0 %v810
  %850 = vmatpush1.bf16.msra.mxu0 %v809
  %851 = vmatprep.subr.bf16.mxu0 %v808
  %852 = vmatpush1.bf16.msra.mxu0 %v807
  %853 = vmatprep.subr.bf16.mxu0 0
  %854 = vmatpush2.bf16.msra.mxu0 0
  %855 = vmatprep.subr.bf16.mxu0 0
  %856 = vmatpush2.bf16.msra.mxu0 0
  %857 = vmatprep.subr.bf16.mxu0 0
  %858 = vmatpush2.bf16.msra.mxu0 0
  %859 = vmatprep.subr.bf16.mxu0 0
  %860 = vmatpush2.bf16.msra.mxu0 0
  %861 = vmatprep.subr.bf16.mxu0 0
  %862 = vmatpush2.bf16.msra.mxu0 0
  %863 = vmatprep.subr.bf16.mxu0 0
  %864 = vmatpush2.bf16.msra.mxu0 0
  %865 = vmatprep.subr.bf16.mxu0 0
  %866 = vmatpush2.bf16.msra.mxu0 0
  %867 = vmatprep.subr.bf16.mxu0 0
  %868 = vmatpush2.bf16.msra.mxu0 0
  %869 = vmatprep.mubr.bf16.mxu0 0
  %870 = vmatmul.mubr.bf16.gmra.mxu0 %v835
  %v871 = vpop.f32.mrf.mxu0
  %v872 = vadd.f32 %v827, %v871
  %v873 = vpop.f32.mrf.mxu0
  %v874 = vadd.f32 %v831, %v873
  %v875 = vpop.f32.mrf.mxu0
  %v876 = vpop.f32.mrf.mxu0
  %877 = vdwg.mxu0
  %v879 = vrot.slane %v872, 4
  %v881 = vadd.f32 %v185, %v879
  %v882 = vxor.u32 %v881, 2147483648
  %v883 = vmul.f32 %v882, 1.442695
  %v884 = vpow.pop %v883
  %v885 = vadd.f32 %v884, 1.0
  %v886 = vrcp.pop %v885
  %v887 = vmul.f32 1.0, %v886
  %v889 = vrot.slane %v874, 4
  %v891 = vmul.f32 %v887, %v889
  %v892 = vadd.f32 %v187, %v891
  %v893 = vtanh.pop %v892
  %v894 = vsub.f32 1.0, %v887
  %896 = vrot.lane.b32.xlu0 %v893, 64
  %v897 = vpop.permute.xlu0 %896
  %v899 = vmul.f32 %v894, %v897
  %v900 = vrot.slane %v754, 7
  %v902 = vmul.f32 %v887, %v900
  %v903 = vadd.f32 %v899, %v902
  %905 = vrot.lane.b32.xlu0 %v903, 64
  %v906 = vpop.permute.xlu0 %905
  %vm908 = vcmask 258052
  %909 = vst.msk [vmem:[#allocation2] sm:$0x10] %vm908, %v906
  %vm910 = vcmask 520452
  %911 = vst.msk [vmem:[#allocation2 - $0x1] sm:$0x10] %vm910, %v906
  %vm912 = vcmask 782852
  %913 = vst.msk [vmem:[#allocation2 - $0x1] sm:$0x10] %vm912, %v903
  %vm914 = vcmask 1045252
  %915 = vst.msk [vmem:[#allocation2] sm:$0x10] %vm914, %v903
  %v916 = vpack.c.bf16 %v903, %v903
  %v917 = vld [vmem:[%s1 + $0x80] sm:$0xff]
  %v918 = vld [vmem:[%s1 + $0x88] sm:$0xff]
  %v919 = vld [vmem:[%s1 + $0x90] sm:$0xff]
  %v920 = vld [vmem:[%s1 + $0x98] sm:$0xff]
  %v921 = vld [vmem:[%s1 + $0xa0] sm:$0xff]
  %v922 = vld [vmem:[%s1 + $0xa8] sm:$0xff]
  %v923 = vld [vmem:[%s1 + $0xb0] sm:$0xff]
  %v924 = vld [vmem:[%s1 + $0xb8] sm:$0xff]
  %v925 = vld [vmem:[%s199] ss:$8 sm:$0x3]
  %v927 = vrot.slane %v916, 2
  %928 = vrot.lane.b32.xlu0 %v927, 64
  %v929 = vpop.permute.xlu0 %928
  %v938 = vunpack.c.l.b16 %v917
  %v939 = vunpack.c.h.b16 %v917
  %v940 = vunpack.c.l.b16 %v918
  %v941 = vunpack.c.h.b16 %v918
  %v942 = vunpack.c.l.b16 %v919
  %v943 = vunpack.c.h.b16 %v919
  %v944 = vunpack.c.l.b16 %v920
  %v945 = vunpack.c.h.b16 %v920
  %v946 = vunpack.c.l.b16 %v921
  %v947 = vunpack.c.h.b16 %v921
  %v948 = vunpack.c.l.b16 %v922
  %v949 = vunpack.c.h.b16 %v922
  %v950 = vunpack.c.l.b16 %v923
  %v951 = vunpack.c.h.b16 %v923
  %v952 = vunpack.c.l.b16 %v924
  %v953 = vunpack.c.h.b16 %v924
  %v954 = vpack.c.b16 %v940, %v938
  %v955 = vpack.c.b16 %v941, %v939
  %v956 = vpack.c.b16 %v944, %v942
  %v957 = vpack.c.b16 %v945, %v943
  %v958 = vpack.c.b16 %v948, %v946
  %v959 = vpack.c.b16 %v949, %v947
  %v960 = vpack.c.b16 %v952, %v950
  %v961 = vpack.c.b16 %v953, %v951
  %v971 = vlaneseq
  %v972 = vshrl.u32 %v971, 7
  %v973 = vsub.s32 0, %v972
  %v974 = vrot.slane %v925, %v973
  %v975 = vlaneseq
  %v976 = vshrl.u32 %v975, 7
  %v977 = vsub.s32 1, %v976
  %v978 = vrot.slane %v925, %v977
  %v982 = vsel %vm37, %v929, 0
  %984 = vmatprep.subr.bf16.mxu0 0
  %985 = vmatpush1.bf16.msra.mxu0 0
  %986 = vmatprep.subr.bf16.mxu0 0
  %987 = vmatpush1.bf16.msra.mxu0 0
  %988 = vmatprep.subr.bf16.mxu0 0
  %989 = vmatpush1.bf16.msra.mxu0 0
  %990 = vmatprep.subr.bf16.mxu0 0
  %991 = vmatpush1.bf16.msra.mxu0 0
  %992 = vmatprep.subr.bf16.mxu0 %v961
  %993 = vmatpush1.bf16.msra.mxu0 %v960
  %994 = vmatprep.subr.bf16.mxu0 %v959
  %995 = vmatpush1.bf16.msra.mxu0 %v958
  %996 = vmatprep.subr.bf16.mxu0 %v957
  %997 = vmatpush1.bf16.msra.mxu0 %v956
  %998 = vmatprep.subr.bf16.mxu0 %v955
  %999 = vmatpush1.bf16.msra.mxu0 %v954
  %1000 = vmatprep.subr.bf16.mxu0 0
  %1001 = vmatpush2.bf16.msra.mxu0 0
  %1002 = vmatprep.subr.bf16.mxu0 0
  %1003 = vmatpush2.bf16.msra.mxu0 0
  %1004 = vmatprep.subr.bf16.mxu0 0
  %1005 = vmatpush2.bf16.msra.mxu0 0
  %1006 = vmatprep.subr.bf16.mxu0 0
  %1007 = vmatpush2.bf16.msra.mxu0 0
  %1008 = vmatprep.subr.bf16.mxu0 0
  %1009 = vmatpush2.bf16.msra.mxu0 0
  %1010 = vmatprep.subr.bf16.mxu0 0
  %1011 = vmatpush2.bf16.msra.mxu0 0
  %1012 = vmatprep.subr.bf16.mxu0 0
  %1013 = vmatpush2.bf16.msra.mxu0 0
  %1014 = vmatprep.subr.bf16.mxu0 0
  %1015 = vmatpush2.bf16.msra.mxu0 0
  %1016 = vmatprep.mubr.bf16.mxu0 0
  %1017 = vmatmul.mubr.bf16.gmra.mxu0 %v982
  %v1018 = vpop.f32.mrf.mxu0
  %v1019 = vadd.f32 %v974, %v1018
  %v1020 = vpop.f32.mrf.mxu0
  %v1021 = vadd.f32 %v978, %v1020
  %v1022 = vpop.f32.mrf.mxu0
  %v1023 = vpop.f32.mrf.mxu0
  %1024 = vdwg.mxu0
  %v1026 = vrot.slane %v1019, 3
  %v1028 = vadd.f32 %v185, %v1026
  %v1029 = vxor.u32 %v1028, 2147483648
  %v1030 = vmul.f32 %v1029, 1.442695
  %v1031 = vpow.pop %v1030
  %v1032 = vadd.f32 %v1031, 1.0
  %v1033 = vrcp.pop %v1032
  %v1034 = vmul.f32 1.0, %v1033
  %v1036 = vrot.slane %v1021, 3
  %v1038 = vmul.f32 %v1034, %v1036
  %v1039 = vadd.f32 %v187, %v1038
  %v1040 = vtanh.pop %v1039
  %v1041 = vsub.f32 1.0, %v1034
  %1043 = vrot.lane.b32.xlu0 %v1040, 64
  %v1044 = vpop.permute.xlu0 %1043
  %v1046 = vmul.f32 %v1041, %v1044
  %v1047 = vrot.slane %v903, 7
  %v1049 = vmul.f32 %v1034, %v1047
  %v1050 = vadd.f32 %v1046, %v1049
  %1052 = vrot.lane.b32.xlu0 %v1050, 64
  %v1053 = vpop.permute.xlu0 %1052
  %vm1055 = vcmask 259077
  %1056 = vst.msk [vmem:[#allocation2] sm:$0x20] %vm1055, %v1053
  %vm1057 = vcmask 521477
  %1058 = vst.msk [vmem:[#allocation2 - $0x3] sm:$0x20] %vm1057, %v1053
  %vm1059 = vcmask 783877
  %1060 = vst.msk [vmem:[#allocation2 - $0x3] sm:$0x20] %vm1059, %v1050
  %vm1061 = vcmask 1046277
  %1062 = vst.msk [vmem:[#allocation2] sm:$0x20] %vm1061, %v1050
  %v1063 = vpack.c.bf16 %v1050, %v1050
  %v1064 = vld [vmem:[%s1 + $0x80] sm:$0xff]
  %v1065 = vld [vmem:[%s1 + $0x88] sm:$0xff]
  %v1066 = vld [vmem:[%s1 + $0x90] sm:$0xff]
  %v1067 = vld [vmem:[%s1 + $0x98] sm:$0xff]
  %v1068 = vld [vmem:[%s1 + $0xa0] sm:$0xff]
  %v1069 = vld [vmem:[%s1 + $0xa8] sm:$0xff]
  %v1070 = vld [vmem:[%s1 + $0xb0] sm:$0xff]
  %v1071 = vld [vmem:[%s1 + $0xb8] sm:$0xff]
  %v1072 = vld [vmem:[%s199] ss:$8 sm:$0x3]
  %v1074 = vshrl.u32 %v1063, 16
  %v1076 = vrot.slane %v1074, 2
  %1077 = vrot.lane.b32.xlu0 %v1076, 64
  %v1078 = vpop.permute.xlu0 %1077
  %v1087 = vunpack.c.l.b16 %v1064
  %v1088 = vunpack.c.h.b16 %v1064
  %v1089 = vunpack.c.l.b16 %v1065
  %v1090 = vunpack.c.h.b16 %v1065
  %v1091 = vunpack.c.l.b16 %v1066
  %v1092 = vunpack.c.h.b16 %v1066
  %v1093 = vunpack.c.l.b16 %v1067
  %v1094 = vunpack.c.h.b16 %v1067
  %v1095 = vunpack.c.l.b16 %v1068
  %v1096 = vunpack.c.h.b16 %v1068
  %v1097 = vunpack.c.l.b16 %v1069
  %v1098 = vunpack.c.h.b16 %v1069
  %v1099 = vunpack.c.l.b16 %v1070
  %v1100 = vunpack.c.h.b16 %v1070
  %v1101 = vunpack.c.l.b16 %v1071
  %v1102 = vunpack.c.h.b16 %v1071
  %v1103 = vpack.c.b16 %v1089, %v1087
  %v1104 = vpack.c.b16 %v1090, %v1088
  %v1105 = vpack.c.b16 %v1093, %v1091
  %v1106 = vpack.c.b16 %v1094, %v1092
  %v1107 = vpack.c.b16 %v1097, %v1095
  %v1108 = vpack.c.b16 %v1098, %v1096
  %v1109 = vpack.c.b16 %v1101, %v1099
  %v1110 = vpack.c.b16 %v1102, %v1100
  %v1120 = vlaneseq
  %v1121 = vshrl.u32 %v1120, 7
  %v1122 = vsub.s32 0, %v1121
  %v1123 = vrot.slane %v1072, %v1122
  %v1124 = vlaneseq
  %v1125 = vshrl.u32 %v1124, 7
  %v1126 = vsub.s32 1, %v1125
  %v1127 = vrot.slane %v1072, %v1126
  %v1131 = vsel %vm37, %v1078, 0
  %1133 = vmatprep.subr.bf16.mxu0 0
  %1134 = vmatpush1.bf16.msra.mxu0 0
  %1135 = vmatprep.subr.bf16.mxu0 0
  %1136 = vmatpush1.bf16.msra.mxu0 0
  %1137 = vmatprep.subr.bf16.mxu0 0
  %1138 = vmatpush1.bf16.msra.mxu0 0
  %1139 = vmatprep.subr.bf16.mxu0 0
  %1140 = vmatpush1.bf16.msra.mxu0 0
  %1141 = vmatprep.subr.bf16.mxu0 %v1110
  %1142 = vmatpush1.bf16.msra.mxu0 %v1109
  %1143 = vmatprep.subr.bf16.mxu0 %v1108
  %1144 = vmatpush1.bf16.msra.mxu0 %v1107
  %1145 = vmatprep.subr.bf16.mxu0 %v1106
  %1146 = vmatpush1.bf16.msra.mxu0 %v1105
  %1147 = vmatprep.subr.bf16.mxu0 %v1104
  %1148 = vmatpush1.bf16.msra.mxu0 %v1103
  %1149 = vmatprep.subr.bf16.mxu0 0
  %1150 = vmatpush2.bf16.msra.mxu0 0
  %1151 = vmatprep.subr.bf16.mxu0 0
  %1152 = vmatpush2.bf16.msra.mxu0 0
  %1153 = vmatprep.subr.bf16.mxu0 0
  %1154 = vmatpush2.bf16.msra.mxu0 0
  %1155 = vmatprep.subr.bf16.mxu0 0
  %1156 = vmatpush2.bf16.msra.mxu0 0
  %1157 = vmatprep.subr.bf16.mxu0 0
  %1158 = vmatpush2.bf16.msra.mxu0 0
  %1159 = vmatprep.subr.bf16.mxu0 0
  %1160 = vmatpush2.bf16.msra.mxu0 0
  %1161 = vmatprep.subr.bf16.mxu0 0
  %1162 = vmatpush2.bf16.msra.mxu0 0
  %1163 = vmatprep.subr.bf16.mxu0 0
  %1164 = vmatpush2.bf16.msra.mxu0 0
  %1165 = vmatprep.mubr.bf16.mxu0 0
  %1166 = vmatmul.mubr.bf16.gmra.mxu0 %v1131
  %v1167 = vpop.f32.mrf.mxu0
  %v1168 = vadd.f32 %v1123, %v1167
  %v1169 = vpop.f32.mrf.mxu0
  %v1170 = vadd.f32 %v1127, %v1169
  %v1171 = vpop.f32.mrf.mxu0
  %v1172 = vpop.f32.mrf.mxu0
  %1173 = vdwg.mxu0
  %v1175 = vrot.slane %v1168, 2
  %v1177 = vadd.f32 %v185, %v1175
  %v1178 = vxor.u32 %v1177, 2147483648
  %v1179 = vmul.f32 %v1178, 1.442695
  %v1180 = vpow.pop %v1179
  %v1181 = vadd.f32 %v1180, 1.0
  %v1182 = vrcp.pop %v1181
  %v1183 = vmul.f32 1.0, %v1182
  %v1185 = vrot.slane %v1170, 2
  %v1187 = vmul.f32 %v1183, %v1185
  %v1188 = vadd.f32 %v187, %v1187
  %v1189 = vtanh.pop %v1188
  %v1190 = vsub.f32 1.0, %v1183
  %1192 = vrot.lane.b32.xlu0 %v1189, 64
  %v1193 = vpop.permute.xlu0 %1192
  %v1195 = vmul.f32 %v1190, %v1193
  %v1196 = vrot.slane %v1050, 7
  %v1198 = vmul.f32 %v1183, %v1196
  %v1199 = vadd.f32 %v1195, %v1198
  %1201 = vrot.lane.b32.xlu0 %v1199, 64
  %v1202 = vpop.permute.xlu0 %1201
  %vm1204 = vcmask 260102
  %1205 = vst.msk [vmem:[#allocation2] sm:$0x40] %vm1204, %v1202
  %vm1206 = vcmask 522502
  %1207 = vst.msk [vmem:[#allocation2 - $0x5] sm:$0x40] %vm1206, %v1202
  %vm1208 = vcmask 784902
  %1209 = vst.msk [vmem:[#allocation2 - $0x5] sm:$0x40] %vm1208, %v1199
  %vm1210 = vcmask 1047302
  %1211 = vst.msk [vmem:[#allocation2] sm:$0x40] %vm1210, %v1199
  %v1212 = vpack.c.bf16 %v1199, %v1199
  %v1213 = vld [vmem:[%s1 + $0x80] sm:$0xff]
  %v1214 = vld [vmem:[%s1 + $0x88] sm:$0xff]
  %v1215 = vld [vmem:[%s1 + $0x90] sm:$0xff]
  %v1216 = vld [vmem:[%s1 + $0x98] sm:$0xff]
  %v1217 = vld [vmem:[%s1 + $0xa0] sm:$0xff]
  %v1218 = vld [vmem:[%s1 + $0xa8] sm:$0xff]
  %v1219 = vld [vmem:[%s1 + $0xb0] sm:$0xff]
  %v1220 = vld [vmem:[%s1 + $0xb8] sm:$0xff]
  %v1221 = vld [vmem:[%s199] ss:$8 sm:$0x3]
  %v1223 = vrot.slane %v1212, 3
  %1224 = vrot.lane.b32.xlu0 %v1223, 64
  %v1225 = vpop.permute.xlu0 %1224
  %v1234 = vunpack.c.l.b16 %v1213
  %v1235 = vunpack.c.h.b16 %v1213
  %v1236 = vunpack.c.l.b16 %v1214
  %v1237 = vunpack.c.h.b16 %v1214
  %v1238 = vunpack.c.l.b16 %v1215
  %v1239 = vunpack.c.h.b16 %v1215
  %v1240 = vunpack.c.l.b16 %v1216
  %v1241 = vunpack.c.h.b16 %v1216
  %v1242 = vunpack.c.l.b16 %v1217
  %v1243 = vunpack.c.h.b16 %v1217
  %v1244 = vunpack.c.l.b16 %v1218
  %v1245 = vunpack.c.h.b16 %v1218
  %v1246 = vunpack.c.l.b16 %v1219
  %v1247 = vunpack.c.h.b16 %v1219
  %v1248 = vunpack.c.l.b16 %v1220
  %v1249 = vunpack.c.h.b16 %v1220
  %v1250 = vpack.c.b16 %v1236, %v1234
  %v1251 = vpack.c.b16 %v1237, %v1235
  %v1252 = vpack.c.b16 %v1240, %v1238
  %v1253 = vpack.c.b16 %v1241, %v1239
  %v1254 = vpack.c.b16 %v1244, %v1242
  %v1255 = vpack.c.b16 %v1245, %v1243
  %v1256 = vpack.c.b16 %v1248, %v1246
  %v1257 = vpack.c.b16 %v1249, %v1247
  %v1267 = vlaneseq
  %v1268 = vshrl.u32 %v1267, 7
  %v1269 = vsub.s32 0, %v1268
  %v1270 = vrot.slane %v1221, %v1269
  %v1271 = vlaneseq
  %v1272 = vshrl.u32 %v1271, 7
  %v1273 = vsub.s32 1, %v1272
  %v1274 = vrot.slane %v1221, %v1273
  %v1278 = vsel %vm37, %v1225, 0
  %1280 = vmatprep.subr.bf16.mxu0 0
  %1281 = vmatpush1.bf16.msra.mxu0 0
  %1282 = vmatprep.subr.bf16.mxu0 0
  %1283 = vmatpush1.bf16.msra.mxu0 0
  %1284 = vmatprep.subr.bf16.mxu0 0
  %1285 = vmatpush1.bf16.msra.mxu0 0
  %1286 = vmatprep.subr.bf16.mxu0 0
  %1287 = vmatpush1.bf16.msra.mxu0 0
  %1288 = vmatprep.subr.bf16.mxu0 %v1257
  %1289 = vmatpush1.bf16.msra.mxu0 %v1256
  %1290 = vmatprep.subr.bf16.mxu0 %v1255
  %1291 = vmatpush1.bf16.msra.mxu0 %v1254
  %1292 = vmatprep.subr.bf16.mxu0 %v1253
  %1293 = vmatpush1.bf16.msra.mxu0 %v1252
  %1294 = vmatprep.subr.bf16.mxu0 %v1251
  %1295 = vmatpush1.bf16.msra.mxu0 %v1250
  %1296 = vmatprep.subr.bf16.mxu0 0
  %1297 = vmatpush2.bf16.msra.mxu0 0
  %1298 = vmatprep.subr.bf16.mxu0 0
  %1299 = vmatpush2.bf16.msra.mxu0 0
  %1300 = vmatprep.subr.bf16.mxu0 0
  %1301 = vmatpush2.bf16.msra.mxu0 0
  %1302 = vmatprep.subr.bf16.mxu0 0
  %1303 = vmatpush2.bf16.msra.mxu0 0
  %1304 = vmatprep.subr.bf16.mxu0 0
  %1305 = vmatpush2.bf16.msra.mxu0 0
  %1306 = vmatprep.subr.bf16.mxu0 0
  %1307 = vmatpush2.bf16.msra.mxu0 0
  %1308 = vmatprep.subr.bf16.mxu0 0
  %1309 = vmatpush2.bf16.msra.mxu0 0
  %1310 = vmatprep.subr.bf16.mxu0 0
  %1311 = vmatpush2.bf16.msra.mxu0 0
  %1312 = vmatprep.mubr.bf16.mxu0 0
  %1313 = vmatmul.mubr.bf16.gmra.mxu0 %v1278
  %v1314 = vpop.f32.mrf.mxu0
  %v1315 = vadd.f32 %v1270, %v1314
  %v1316 = vpop.f32.mrf.mxu0
  %v1317 = vadd.f32 %v1274, %v1316
  %v1318 = vpop.f32.mrf.mxu0
  %v1319 = vpop.f32.mrf.mxu0
  %1320 = vdwg.mxu0
  %v1322 = vrot.slane %v1315, 1
  %v1324 = vadd.f32 %v185, %v1322
  %v1325 = vxor.u32 %v1324, 2147483648
  %v1326 = vmul.f32 %v1325, 1.442695
  %v1327 = vpow.pop %v1326
  %v1328 = vadd.f32 %v1327, 1.0
  %v1329 = vrcp.pop %v1328
  %v1330 = vmul.f32 1.0, %v1329
  %v1332 = vrot.slane %v1317, 1
  %v1334 = vmul.f32 %v1330, %v1332
  %v1335 = vadd.f32 %v187, %v1334
  %v1336 = vtanh.pop %v1335
  %v1337 = vsub.f32 1.0, %v1330
  %1339 = vrot.lane.b32.xlu0 %v1336, 64
  %v1340 = vpop.permute.xlu0 %1339
  %v1342 = vmul.f32 %v1337, %v1340
  %v1343 = vrot.slane %v1199, 7
  %v1345 = vmul.f32 %v1330, %v1343
  %v1346 = vadd.f32 %v1342, %v1345
  %1348 = vrot.lane.b32.xlu0 %v1346, 64
  %v1349 = vpop.permute.xlu0 %1348
  %vm1351 = vcmask 261127
  %1352 = vst.msk [vmem:[#allocation2] sm:$0x80] %vm1351, %v1349
  %vm1353 = vcmask 523527
  %1354 = vst.msk [vmem:[#allocation2 - $0x7] sm:$0x80] %vm1353, %v1349
  %vm1355 = vcmask 785927
  %1356 = vst.msk [vmem:[#allocation2 - $0x7] sm:$0x80] %vm1355, %v1346
  %vm1357 = vcmask 1048327
  %1358 = vst.msk [vmem:[#allocation2] sm:$0x80] %vm1357, %v1346
  %v1359 = vld [vmem:[#allocation2] sm:$0xff]
  %v1360 = vpack.c.bf16 %v1359, %v1359
  %v1361 = vld [vmem:[%s1 + $0xc0] sm:$0xff]
  %v1362 = vld [vmem:[%s1 + $0xc8] sm:$0xff]
  %v1363 = vld [vmem:[%s1 + $0xd0] sm:$0xff]
  %v1364 = vld [vmem:[%s1 + $0xd8] sm:$0xff]
  %v1365 = vld [vmem:[%s1 + $0xe0] sm:$0xff]
  %v1366 = vld [vmem:[%s1 + $0xe8] sm:$0xff]
  %v1367 = vld [vmem:[%s1 + $0xf0] sm:$0xff]
  %v1368 = vld [vmem:[%s1 + $0xf8] sm:$0xff]
  %v1369 = vld [vmem:[%s1 + $0x100] sm:$0xff]
  %v1370 = vld [vmem:[%s1 + $0x108] sm:$0xff]
  %v1371 = vld [vmem:[%s1 + $0x110] sm:$0xff]
  %v1372 = vld [vmem:[%s1 + $0x118] sm:$0xff]
  %v1373 = vld [vmem:[%s1 + $0x120] sm:$0xff]
  %v1374 = vld [vmem:[%s1 + $0x128] sm:$0xff]
  %v1375 = vld [vmem:[%s1 + $0x130] sm:$0xff]
  %v1376 = vld [vmem:[%s1 + $0x138] sm:$0xff]
  %s1377 = scalar_lea.vmem %s2, 2
  %v1378 = vld [vmem:[%s1377] ss:$8 sm:$0x3]
  %v1380 = vlaneseq
  %v1381 = vshrl.u32 %v1380, 7
  %v1382 = vsub.s32 0, %v1381
  %v1383 = vrot.slane %v1378, %v1382
  %v1384 = vlaneseq
  %v1385 = vshrl.u32 %v1384, 7
  %v1386 = vsub.s32 1, %v1385
  %v1387 = vrot.slane %v1378, %v1386
  %v1406 = vunpack.c.l.b16 %v1361
  %v1407 = vunpack.c.h.b16 %v1361
  %v1408 = vunpack.c.l.b16 %v1362
  %v1409 = vunpack.c.h.b16 %v1362
  %v1410 = vunpack.c.l.b16 %v1363
  %v1411 = vunpack.c.h.b16 %v1363
  %v1412 = vunpack.c.l.b16 %v1364
  %v1413 = vunpack.c.h.b16 %v1364
  %v1414 = vunpack.c.l.b16 %v1365
  %v1415 = vunpack.c.h.b16 %v1365
  %v1416 = vunpack.c.l.b16 %v1366
  %v1417 = vunpack.c.h.b16 %v1366
  %v1418 = vunpack.c.l.b16 %v1367
  %v1419 = vunpack.c.h.b16 %v1367
  %v1420 = vunpack.c.l.b16 %v1368
  %v1421 = vunpack.c.h.b16 %v1368
  %v1422 = vunpack.c.l.b16 %v1369
  %v1423 = vunpack.c.h.b16 %v1369
  %v1424 = vunpack.c.l.b16 %v1370
  %v1425 = vunpack.c.h.b16 %v1370
  %v1426 = vunpack.c.l.b16 %v1371
  %v1427 = vunpack.c.h.b16 %v1371
  %v1428 = vunpack.c.l.b16 %v1372
  %v1429 = vunpack.c.h.b16 %v1372
  %v1430 = vunpack.c.l.b16 %v1373
  %v1431 = vunpack.c.h.b16 %v1373
  %v1432 = vunpack.c.l.b16 %v1374
  %v1433 = vunpack.c.h.b16 %v1374
  %v1434 = vunpack.c.l.b16 %v1375
  %v1435 = vunpack.c.h.b16 %v1375
  %v1436 = vunpack.c.l.b16 %v1376
  %v1437 = vunpack.c.h.b16 %v1376
  %v1438 = vpack.c.b16 %v1408, %v1406
  %v1439 = vpack.c.b16 %v1409, %v1407
  %v1440 = vpack.c.b16 %v1412, %v1410
  %v1441 = vpack.c.b16 %v1413, %v1411
  %v1442 = vpack.c.b16 %v1416, %v1414
  %v1443 = vpack.c.b16 %v1417, %v1415
  %v1444 = vpack.c.b16 %v1420, %v1418
  %v1445 = vpack.c.b16 %v1421, %v1419
  %v1446 = vpack.c.b16 %v1424, %v1422
  %v1447 = vpack.c.b16 %v1425, %v1423
  %v1448 = vpack.c.b16 %v1428, %v1426
  %v1449 = vpack.c.b16 %v1429, %v1427
  %v1450 = vpack.c.b16 %v1432, %v1430
  %v1451 = vpack.c.b16 %v1433, %v1431
  %v1452 = vpack.c.b16 %v1436, %v1434
  %v1453 = vpack.c.b16 %v1437, %v1435
  %1470 = vmatprep.subr.bf16.mxu0 %v1453
  %1471 = vmatpush1.bf16.msra.mxu0 %v1452
  %1472 = vmatprep.subr.bf16.mxu0 %v1451
  %1473 = vmatpush1.bf16.msra.mxu0 %v1450
  %1474 = vmatprep.subr.bf16.mxu0 %v1449
  %1475 = vmatpush1.bf16.msra.mxu0 %v1448
  %1476 = vmatprep.subr.bf16.mxu0 %v1447
  %1477 = vmatpush1.bf16.msra.mxu0 %v1446
  %1478 = vmatprep.subr.bf16.mxu0 %v1445
  %1479 = vmatpush1.bf16.msra.mxu0 %v1444
  %1480 = vmatprep.subr.bf16.mxu0 %v1443
  %1481 = vmatpush1.bf16.msra.mxu0 %v1442
  %1482 = vmatprep.subr.bf16.mxu0 %v1441
  %1483 = vmatpush1.bf16.msra.mxu0 %v1440
  %1484 = vmatprep.subr.bf16.mxu0 %v1439
  %1485 = vmatpush1.bf16.msra.mxu0 %v1438
  %1486 = vmatprep.subr.bf16.mxu0 0
  %1487 = vmatpush2.bf16.msra.mxu0 0
  %1488 = vmatprep.subr.bf16.mxu0 0
  %1489 = vmatpush2.bf16.msra.mxu0 0
  %1490 = vmatprep.subr.bf16.mxu0 0
  %1491 = vmatpush2.bf16.msra.mxu0 0
  %1492 = vmatprep.subr.bf16.mxu0 0
  %1493 = vmatpush2.bf16.msra.mxu0 0
  %1494 = vmatprep.subr.bf16.mxu0 0
  %1495 = vmatpush2.bf16.msra.mxu0 0
  %1496 = vmatprep.subr.bf16.mxu0 0
  %1497 = vmatpush2.bf16.msra.mxu0 0
  %1498 = vmatprep.subr.bf16.mxu0 0
  %1499 = vmatpush2.bf16.msra.mxu0 0
  %1500 = vmatprep.subr.bf16.mxu0 0
  %1501 = vmatpush2.bf16.msra.mxu0 0
  %1502 = vmatprep.mubr.bf16.mxu0 0
  %1503 = vmatmul.mubr.bf16.gmra.mxu0 %v1360
  %v1504 = vpop.f32.mrf.mxu0
  %v1505 = vadd.f32 %v1383, %v1504
  %v1506 = vpop.f32.mrf.mxu0
  %v1507 = vadd.f32 %v1387, %v1506
  %v1508 = vpop.f32.mrf.mxu0
  %v1509 = vpop.f32.mrf.mxu0
  %1510 = vdwg.mxu0
  %v1511 = vld [vmem:[%s1 + $0x140] sm:$0xff]
  %v1512 = vld [vmem:[%s1 + $0x148] sm:$0xff]
  %v1513 = vld [vmem:[%s1 + $0x150] sm:$0xff]
  %v1514 = vld [vmem:[%s1 + $0x158] sm:$0xff]
  %v1515 = vld [vmem:[%s1 + $0x160] sm:$0xff]
  %v1516 = vld [vmem:[%s1 + $0x168] sm:$0xff]
  %v1517 = vld [vmem:[%s1 + $0x170] sm:$0xff]
  %v1518 = vld [vmem:[%s1 + $0x178] sm:$0xff]
  %s1519 = scalar_lea.vmem %s2, 3
  %v1520 = vld [vmem:[%s1519] ss:$8 sm:$0x3]
  %v1529 = vunpack.c.l.b16 %v1511
  %v1530 = vunpack.c.h.b16 %v1511
  %v1531 = vunpack.c.l.b16 %v1512
  %v1532 = vunpack.c.h.b16 %v1512
  %v1533 = vunpack.c.l.b16 %v1513
  %v1534 = vunpack.c.h.b16 %v1513
  %v1535 = vunpack.c.l.b16 %v1514
  %v1536 = vunpack.c.h.b16 %v1514
  %v1537 = vunpack.c.l.b16 %v1515
  %v1538 = vunpack.c.h.b16 %v1515
  %v1539 = vunpack.c.l.b16 %v1516
  %v1540 = vunpack.c.h.b16 %v1516
  %v1541 = vunpack.c.l.b16 %v1517
  %v1542 = vunpack.c.h.b16 %v1517
  %v1543 = vunpack.c.l.b16 %v1518
  %v1544 = vunpack.c.h.b16 %v1518
  %v1545 = vpack.c.b16 %v1531, %v1529
  %v1546 = vpack.c.b16 %v1532, %v1530
  %v1547 = vpack.c.b16 %v1535, %v1533
  %v1548 = vpack.c.b16 %v1536, %v1534
  %v1549 = vpack.c.b16 %v1539, %v1537
  %v1550 = vpack.c.b16 %v1540, %v1538
  %v1551 = vpack.c.b16 %v1543, %v1541
  %v1552 = vpack.c.b16 %v1544, %v1542
  %v1562 = vlaneseq
  %v1563 = vshrl.u32 %v1562, 7
  %v1564 = vsub.s32 0, %v1563
  %v1565 = vrot.slane %v1520, %v1564
  %v1566 = vlaneseq
  %v1567 = vshrl.u32 %v1566, 7
  %v1568 = vsub.s32 1, %v1567
  %v1569 = vrot.slane %v1520, %v1568
  %1572 = vmatprep.subr.bf16.mxu0 0
  %1573 = vmatpush1.bf16.msra.mxu0 0
  %1574 = vmatprep.subr.bf16.mxu0 0
  %1575 = vmatpush1.bf16.msra.mxu0 0
  %1576 = vmatprep.subr.bf16.mxu0 0
  %1577 = vmatpush1.bf16.msra.mxu0 0
  %1578 = vmatprep.subr.bf16.mxu0 0
  %1579 = vmatpush1.bf16.msra.mxu0 0
  %1580 = vmatprep.subr.bf16.mxu0 %v1552
  %1581 = vmatpush1.bf16.msra.mxu0 %v1551
  %1582 = vmatprep.subr.bf16.mxu0 %v1550
  %1583 = vmatpush1.bf16.msra.mxu0 %v1549
  %1584 = vmatprep.subr.bf16.mxu0 %v1548
  %1585 = vmatpush1.bf16.msra.mxu0 %v1547
  %1586 = vmatprep.subr.bf16.mxu0 %v1546
  %1587 = vmatpush1.bf16.msra.mxu0 %v1545
  %1588 = vmatprep.subr.bf16.mxu0 0
  %1589 = vmatpush2.bf16.msra.mxu0 0
  %1590 = vmatprep.subr.bf16.mxu0 0
  %1591 = vmatpush2.bf16.msra.mxu0 0
  %1592 = vmatprep.subr.bf16.mxu0 0
  %1593 = vmatpush2.bf16.msra.mxu0 0
  %1594 = vmatprep.subr.bf16.mxu0 0
  %1595 = vmatpush2.bf16.msra.mxu0 0
  %1596 = vmatprep.subr.bf16.mxu0 0
  %1597 = vmatpush2.bf16.msra.mxu0 0
  %1598 = vmatprep.subr.bf16.mxu0 0
  %1599 = vmatpush2.bf16.msra.mxu0 0
  %1600 = vmatprep.subr.bf16.mxu0 0
  %1601 = vmatpush2.bf16.msra.mxu0 0
  %1602 = vmatprep.subr.bf16.mxu0 0
  %1603 = vmatpush2.bf16.msra.mxu0 0
  %1604 = vmatprep.mubr.bf16.mxu0 0
  %1605 = vmatmul.mubr.bf16.gmra.mxu0 %v253
  %v1606 = vpop.f32.mrf.mxu0
  %v1607 = vadd.f32 %v1565, %v1606
  %v1608 = vpop.f32.mrf.mxu0
  %v1609 = vadd.f32 %v1569, %v1608
  %v1610 = vpop.f32.mrf.mxu0
  %v1611 = vpop.f32.mrf.mxu0
  %1612 = vdwg.mxu0
  %v1613 = vadd.f32 %v1505, %v1607
  %v1614 = vxor.u32 %v1613, 2147483648
  %v1615 = vmul.f32 %v1614, 1.442695
  %v1616 = vpow.pop %v1615
  %v1617 = vadd.f32 %v1616, 1.0
  %v1618 = vrcp.pop %v1617
  %v1619 = vmul.f32 1.0, %v1618
  %v1620 = vmul.f32 %v1619, %v1609
  %v1621 = vadd.f32 %v1507, %v1620
  %v1622 = vtanh.pop %v1621
  %v1623 = vsub.f32 1.0, %v1619
  %1625 = vrot.lane.b32.xlu0 %v1622, 64
  %v1626 = vpop.permute.xlu0 %1625
  %v1628 = vmul.f32 %v1623, %v1626
  %v1629 = vmul.f32 %v1619, 0.0
  %v1630 = vadd.f32 %v1628, %v1629
  %1632 = vrot.lane.b32.xlu0 %v1630, 64
  %v1633 = vpop.permute.xlu0 %1632
  %1635 = vst.msk [vmem:[#allocation3] sm:$0x1] %vm318, %v1633
  %1636 = vst.msk [vmem:[#allocation3 + $0x7] sm:$0x1] %vm320, %v1633
  %v1637 = vpack.c.bf16 %v1630, %v1630
  %v1638 = vld [vmem:[%s1 + $0x140] sm:$0xff]
  %v1639 = vld [vmem:[%s1 + $0x148] sm:$0xff]
  %v1640 = vld [vmem:[%s1 + $0x150] sm:$0xff]
  %v1641 = vld [vmem:[%s1 + $0x158] sm:$0xff]
  %v1642 = vld [vmem:[%s1 + $0x160] sm:$0xff]
  %v1643 = vld [vmem:[%s1 + $0x168] sm:$0xff]
  %v1644 = vld [vmem:[%s1 + $0x170] sm:$0xff]
  %v1645 = vld [vmem:[%s1 + $0x178] sm:$0xff]
  %v1646 = vld [vmem:[%s1519] ss:$8 sm:$0x3]
  %1648 = vrot.lane.b32.xlu0 %v1637, 64
  %v1649 = vpop.permute.xlu0 %1648
  %v1658 = vunpack.c.l.b16 %v1638
  %v1659 = vunpack.c.h.b16 %v1638
  %v1660 = vunpack.c.l.b16 %v1639
  %v1661 = vunpack.c.h.b16 %v1639
  %v1662 = vunpack.c.l.b16 %v1640
  %v1663 = vunpack.c.h.b16 %v1640
  %v1664 = vunpack.c.l.b16 %v1641
  %v1665 = vunpack.c.h.b16 %v1641
  %v1666 = vunpack.c.l.b16 %v1642
  %v1667 = vunpack.c.h.b16 %v1642
  %v1668 = vunpack.c.l.b16 %v1643
  %v1669 = vunpack.c.h.b16 %v1643
  %v1670 = vunpack.c.l.b16 %v1644
  %v1671 = vunpack.c.h.b16 %v1644
  %v1672 = vunpack.c.l.b16 %v1645
  %v1673 = vunpack.c.h.b16 %v1645
  %v1674 = vpack.c.b16 %v1660, %v1658
  %v1675 = vpack.c.b16 %v1661, %v1659
  %v1676 = vpack.c.b16 %v1664, %v1662
  %v1677 = vpack.c.b16 %v1665, %v1663
  %v1678 = vpack.c.b16 %v1668, %v1666
  %v1679 = vpack.c.b16 %v1669, %v1667
  %v1680 = vpack.c.b16 %v1672, %v1670
  %v1681 = vpack.c.b16 %v1673, %v1671
  %v1691 = vlaneseq
  %v1692 = vshrl.u32 %v1691, 7
  %v1693 = vsub.s32 0, %v1692
  %v1694 = vrot.slane %v1646, %v1693
  %v1695 = vlaneseq
  %v1696 = vshrl.u32 %v1695, 7
  %v1697 = vsub.s32 1, %v1696
  %v1698 = vrot.slane %v1646, %v1697
  %v1702 = vsel %vm37, %v1649, 0
  %1704 = vmatprep.subr.bf16.mxu0 0
  %1705 = vmatpush1.bf16.msra.mxu0 0
  %1706 = vmatprep.subr.bf16.mxu0 0
  %1707 = vmatpush1.bf16.msra.mxu0 0
  %1708 = vmatprep.subr.bf16.mxu0 0
  %1709 = vmatpush1.bf16.msra.mxu0 0
  %1710 = vmatprep.subr.bf16.mxu0 0
  %1711 = vmatpush1.bf16.msra.mxu0 0
  %1712 = vmatprep.subr.bf16.mxu0 %v1681
  %1713 = vmatpush1.bf16.msra.mxu0 %v1680
  %1714 = vmatprep.subr.bf16.mxu0 %v1679
  %1715 = vmatpush1.bf16.msra.mxu0 %v1678
  %1716 = vmatprep.subr.bf16.mxu0 %v1677
  %1717 = vmatpush1.bf16.msra.mxu0 %v1676
  %1718 = vmatprep.subr.bf16.mxu0 %v1675
  %1719 = vmatpush1.bf16.msra.mxu0 %v1674
  %1720 = vmatprep.subr.bf16.mxu0 0
  %1721 = vmatpush2.bf16.msra.mxu0 0
  %1722 = vmatprep.subr.bf16.mxu0 0
  %1723 = vmatpush2.bf16.msra.mxu0 0
  %1724 = vmatprep.subr.bf16.mxu0 0
  %1725 = vmatpush2.bf16.msra.mxu0 0
  %1726 = vmatprep.subr.bf16.mxu0 0
  %1727 = vmatpush2.bf16.msra.mxu0 0
  %1728 = vmatprep.subr.bf16.mxu0 0
  %1729 = vmatpush2.bf16.msra.mxu0 0
  %1730 = vmatprep.subr.bf16.mxu0 0
  %1731 = vmatpush2.bf16.msra.mxu0 0
  %1732 = vmatprep.subr.bf16.mxu0 0
  %1733 = vmatpush2.bf16.msra.mxu0 0
  %1734 = vmatprep.subr.bf16.mxu0 0
  %1735 = vmatpush2.bf16.msra.mxu0 0
  %1736 = vmatprep.mubr.bf16.mxu0 0
  %1737 = vmatmul.mubr.bf16.gmra.mxu0 %v1702
  %v1738 = vpop.f32.mrf.mxu0
  %v1739 = vadd.f32 %v1694, %v1738
  %v1740 = vpop.f32.mrf.mxu0
  %v1741 = vadd.f32 %v1698, %v1740
  %v1742 = vpop.f32.mrf.mxu0
  %v1743 = vpop.f32.mrf.mxu0
  %1744 = vdwg.mxu0
  %v1746 = vrot.slane %v1739, 7
  %v1748 = vadd.f32 %v1505, %v1746
  %v1749 = vxor.u32 %v1748, 2147483648
  %v1750 = vmul.f32 %v1749, 1.442695
  %v1751 = vpow.pop %v1750
  %v1752 = vadd.f32 %v1751, 1.0
  %v1753 = vrcp.pop %v1752
  %v1754 = vmul.f32 1.0, %v1753
  %v1756 = vrot.slane %v1741, 7
  %v1758 = vmul.f32 %v1754, %v1756
  %v1759 = vadd.f32 %v1507, %v1758
  %v1760 = vtanh.pop %v1759
  %v1761 = vsub.f32 1.0, %v1754
  %1763 = vrot.lane.b32.xlu0 %v1760, 64
  %v1764 = vpop.permute.xlu0 %1763
  %v1766 = vmul.f32 %v1761, %v1764
  %v1767 = vrot.slane %v1630, 7
  %v1769 = vmul.f32 %v1754, %v1767
  %v1770 = vadd.f32 %v1766, %v1769
  %1772 = vrot.lane.b32.xlu0 %v1770, 64
  %v1773 = vpop.permute.xlu0 %1772
  %1775 = vst.msk [vmem:[#allocation3] sm:$0x2] %vm464, %v1773
  %1776 = vst.msk [vmem:[#allocation3 + $0x5] sm:$0x2] %vm466, %v1773
  %v1777 = vpack.c.bf16 %v1770, %v1770
  %v1778 = vld [vmem:[%s1 + $0x140] sm:$0xff]
  %v1779 = vld [vmem:[%s1 + $0x148] sm:$0xff]
  %v1780 = vld [vmem:[%s1 + $0x150] sm:$0xff]
  %v1781 = vld [vmem:[%s1 + $0x158] sm:$0xff]
  %v1782 = vld [vmem:[%s1 + $0x160] sm:$0xff]
  %v1783 = vld [vmem:[%s1 + $0x168] sm:$0xff]
  %v1784 = vld [vmem:[%s1 + $0x170] sm:$0xff]
  %v1785 = vld [vmem:[%s1 + $0x178] sm:$0xff]
  %v1786 = vld [vmem:[%s1519] ss:$8 sm:$0x3]
  %v1788 = vshrl.u32 %v1777, 16
  %1790 = vrot.lane.b32.xlu0 %v1788, 64
  %v1791 = vpop.permute.xlu0 %1790
  %v1800 = vunpack.c.l.b16 %v1778
  %v1801 = vunpack.c.h.b16 %v1778
  %v1802 = vunpack.c.l.b16 %v1779
  %v1803 = vunpack.c.h.b16 %v1779
  %v1804 = vunpack.c.l.b16 %v1780
  %v1805 = vunpack.c.h.b16 %v1780
  %v1806 = vunpack.c.l.b16 %v1781
  %v1807 = vunpack.c.h.b16 %v1781
  %v1808 = vunpack.c.l.b16 %v1782
  %v1809 = vunpack.c.h.b16 %v1782
  %v1810 = vunpack.c.l.b16 %v1783
  %v1811 = vunpack.c.h.b16 %v1783
  %v1812 = vunpack.c.l.b16 %v1784
  %v1813 = vunpack.c.h.b16 %v1784
  %v1814 = vunpack.c.l.b16 %v1785
  %v1815 = vunpack.c.h.b16 %v1785
  %v1816 = vpack.c.b16 %v1802, %v1800
  %v1817 = vpack.c.b16 %v1803, %v1801
  %v1818 = vpack.c.b16 %v1806, %v1804
  %v1819 = vpack.c.b16 %v1807, %v1805
  %v1820 = vpack.c.b16 %v1810, %v1808
  %v1821 = vpack.c.b16 %v1811, %v1809
  %v1822 = vpack.c.b16 %v1814, %v1812
  %v1823 = vpack.c.b16 %v1815, %v1813
  %v1833 = vlaneseq
  %v1834 = vshrl.u32 %v1833, 7
  %v1835 = vsub.s32 0, %v1834
  %v1836 = vrot.slane %v1786, %v1835
  %v1837 = vlaneseq
  %v1838 = vshrl.u32 %v1837, 7
  %v1839 = vsub.s32 1, %v1838
  %v1840 = vrot.slane %v1786, %v1839
  %v1844 = vsel %vm37, %v1791, 0
  %1846 = vmatprep.subr.bf16.mxu0 0
  %1847 = vmatpush1.bf16.msra.mxu0 0
  %1848 = vmatprep.subr.bf16.mxu0 0
  %1849 = vmatpush1.bf16.msra.mxu0 0
  %1850 = vmatprep.subr.bf16.mxu0 0
  %1851 = vmatpush1.bf16.msra.mxu0 0
  %1852 = vmatprep.subr.bf16.mxu0 0
  %1853 = vmatpush1.bf16.msra.mxu0 0
  %1854 = vmatprep.subr.bf16.mxu0 %v1823
  %1855 = vmatpush1.bf16.msra.mxu0 %v1822
  %1856 = vmatprep.subr.bf16.mxu0 %v1821
  %1857 = vmatpush1.bf16.msra.mxu0 %v1820
  %1858 = vmatprep.subr.bf16.mxu0 %v1819
  %1859 = vmatpush1.bf16.msra.mxu0 %v1818
  %1860 = vmatprep.subr.bf16.mxu0 %v1817
  %1861 = vmatpush1.bf16.msra.mxu0 %v1816
  %1862 = vmatprep.subr.bf16.mxu0 0
  %1863 = vmatpush2.bf16.msra.mxu0 0
  %1864 = vmatprep.subr.bf16.mxu0 0
  %1865 = vmatpush2.bf16.msra.mxu0 0
  %1866 = vmatprep.subr.bf16.mxu0 0
  %1867 = vmatpush2.bf16.msra.mxu0 0
  %1868 = vmatprep.subr.bf16.mxu0 0
  %1869 = vmatpush2.bf16.msra.mxu0 0
  %1870 = vmatprep.subr.bf16.mxu0 0
  %1871 = vmatpush2.bf16.msra.mxu0 0
  %1872 = vmatprep.subr.bf16.mxu0 0
  %1873 = vmatpush2.bf16.msra.mxu0 0
  %1874 = vmatprep.subr.bf16.mxu0 0
  %1875 = vmatpush2.bf16.msra.mxu0 0
  %1876 = vmatprep.subr.bf16.mxu0 0
  %1877 = vmatpush2.bf16.msra.mxu0 0
  %1878 = vmatprep.mubr.bf16.mxu0 0
  %1879 = vmatmul.mubr.bf16.gmra.mxu0 %v1844
  %v1880 = vpop.f32.mrf.mxu0
  %v1881 = vadd.f32 %v1836, %v1880
  %v1882 = vpop.f32.mrf.mxu0
  %v1883 = vadd.f32 %v1840, %v1882
  %v1884 = vpop.f32.mrf.mxu0
  %v1885 = vpop.f32.mrf.mxu0
  %1886 = vdwg.mxu0
  %v1888 = vrot.slane %v1881, 6
  %v1890 = vadd.f32 %v1505, %v1888
  %v1891 = vxor.u32 %v1890, 2147483648
  %v1892 = vmul.f32 %v1891, 1.442695
  %v1893 = vpow.pop %v1892
  %v1894 = vadd.f32 %v1893, 1.0
  %v1895 = vrcp.pop %v1894
  %v1896 = vmul.f32 1.0, %v1895
  %v1898 = vrot.slane %v1883, 6
  %v1900 = vmul.f32 %v1896, %v1898
  %v1901 = vadd.f32 %v1507, %v1900
  %v1902 = vtanh.pop %v1901
  %v1903 = vsub.f32 1.0, %v1896
  %1905 = vrot.lane.b32.xlu0 %v1902, 64
  %v1906 = vpop.permute.xlu0 %1905
  %v1908 = vmul.f32 %v1903, %v1906
  %v1909 = vrot.slane %v1770, 7
  %v1911 = vmul.f32 %v1896, %v1909
  %v1912 = vadd.f32 %v1908, %v1911
  %1914 = vrot.lane.b32.xlu0 %v1912, 64
  %v1915 = vpop.permute.xlu0 %1914
  %1917 = vst.msk [vmem:[#allocation3] sm:$0x4] %vm612, %v1915
  %1918 = vst.msk [vmem:[#allocation3 + $0x3] sm:$0x4] %vm614, %v1915
  %v1919 = vpack.c.bf16 %v1912, %v1912
  %v1920 = vld [vmem:[%s1 + $0x140] sm:$0xff]
  %v1921 = vld [vmem:[%s1 + $0x148] sm:$0xff]
  %v1922 = vld [vmem:[%s1 + $0x150] sm:$0xff]
  %v1923 = vld [vmem:[%s1 + $0x158] sm:$0xff]
  %v1924 = vld [vmem:[%s1 + $0x160] sm:$0xff]
  %v1925 = vld [vmem:[%s1 + $0x168] sm:$0xff]
  %v1926 = vld [vmem:[%s1 + $0x170] sm:$0xff]
  %v1927 = vld [vmem:[%s1 + $0x178] sm:$0xff]
  %v1928 = vld [vmem:[%s1519] ss:$8 sm:$0x3]
  %v1930 = vrot.slane %v1919, 1
  %1931 = vrot.lane.b32.xlu0 %v1930, 64
  %v1932 = vpop.permute.xlu0 %1931
  %v1941 = vunpack.c.l.b16 %v1920
  %v1942 = vunpack.c.h.b16 %v1920
  %v1943 = vunpack.c.l.b16 %v1921
  %v1944 = vunpack.c.h.b16 %v1921
  %v1945 = vunpack.c.l.b16 %v1922
  %v1946 = vunpack.c.h.b16 %v1922
  %v1947 = vunpack.c.l.b16 %v1923
  %v1948 = vunpack.c.h.b16 %v1923
  %v1949 = vunpack.c.l.b16 %v1924
  %v1950 = vunpack.c.h.b16 %v1924
  %v1951 = vunpack.c.l.b16 %v1925
  %v1952 = vunpack.c.h.b16 %v1925
  %v1953 = vunpack.c.l.b16 %v1926
  %v1954 = vunpack.c.h.b16 %v1926
  %v1955 = vunpack.c.l.b16 %v1927
  %v1956 = vunpack.c.h.b16 %v1927
  %v1957 = vpack.c.b16 %v1943, %v1941
  %v1958 = vpack.c.b16 %v1944, %v1942
  %v1959 = vpack.c.b16 %v1947, %v1945
  %v1960 = vpack.c.b16 %v1948, %v1946
  %v1961 = vpack.c.b16 %v1951, %v1949
  %v1962 = vpack.c.b16 %v1952, %v1950
  %v1963 = vpack.c.b16 %v1955, %v1953
  %v1964 = vpack.c.b16 %v1956, %v1954
  %v1974 = vlaneseq
  %v1975 = vshrl.u32 %v1974, 7
  %v1976 = vsub.s32 0, %v1975
  %v1977 = vrot.slane %v1928, %v1976
  %v1978 = vlaneseq
  %v1979 = vshrl.u32 %v1978, 7
  %v1980 = vsub.s32 1, %v1979
  %v1981 = vrot.slane %v1928, %v1980
  %v1985 = vsel %vm37, %v1932, 0
  %1987 = vmatprep.subr.bf16.mxu0 0
  %1988 = vmatpush1.bf16.msra.mxu0 0
  %1989 = vmatprep.subr.bf16.mxu0 0
  %1990 = vmatpush1.bf16.msra.mxu0 0
  %1991 = vmatprep.subr.bf16.mxu0 0
  %1992 = vmatpush1.bf16.msra.mxu0 0
  %1993 = vmatprep.subr.bf16.mxu0 0
  %1994 = vmatpush1.bf16.msra.mxu0 0
  %1995 = vmatprep.subr.bf16.mxu0 %v1964
  %1996 = vmatpush1.bf16.msra.mxu0 %v1963
  %1997 = vmatprep.subr.bf16.mxu0 %v1962
  %1998 = vmatpush1.bf16.msra.mxu0 %v1961
  %1999 = vmatprep.subr.bf16.mxu0 %v1960
  %2000 = vmatpush1.bf16.msra.mxu0 %v1959
  %2001 = vmatprep.subr.bf16.mxu0 %v1958
  %2002 = vmatpush1.bf16.msra.mxu0 %v1957
  %2003 = vmatprep.subr.bf16.mxu0 0
  %2004 = vmatpush2.bf16.msra.mxu0 0
  %2005 = vmatprep.subr.bf16.mxu0 0
  %2006 = vmatpush2.bf16.msra.mxu0 0
  %2007 = vmatprep.subr.bf16.mxu0 0
  %2008 = vmatpush2.bf16.msra.mxu0 0
  %2009 = vmatprep.subr.bf16.mxu0 0
  %2010 = vmatpush2.bf16.msra.mxu0 0
  %2011 = vmatprep.subr.bf16.mxu0 0
  %2012 = vmatpush2.bf16.msra.mxu0 0
  %2013 = vmatprep.subr.bf16.mxu0 0
  %2014 = vmatpush2.bf16.msra.mxu0 0
  %2015 = vmatprep.subr.bf16.mxu0 0
  %2016 = vmatpush2.bf16.msra.mxu0 0
  %2017 = vmatprep.subr.bf16.mxu0 0
  %2018 = vmatpush2.bf16.msra.mxu0 0
  %2019 = vmatprep.mubr.bf16.mxu0 0
  %2020 = vmatmul.mubr.bf16.gmra.mxu0 %v1985
  %v2021 = vpop.f32.mrf.mxu0
  %v2022 = vadd.f32 %v1977, %v2021
  %v2023 = vpop.f32.mrf.mxu0
  %v2024 = vadd.f32 %v1981, %v2023
  %v2025 = vpop.f32.mrf.mxu0
  %v2026 = vpop.f32.mrf.mxu0
  %2027 = vdwg.mxu0
  %v2029 = vrot.slane %v2022, 5
  %v2031 = vadd.f32 %v1505, %v2029
  %v2032 = vxor.u32 %v2031, 2147483648
  %v2033 = vmul.f32 %v2032, 1.442695
  %v2034 = vpow.pop %v2033
  %v2035 = vadd.f32 %v2034, 1.0
  %v2036 = vrcp.pop %v2035
  %v2037 = vmul.f32 1.0, %v2036
  %v2039 = vrot.slane %v2024, 5
  %v2041 = vmul.f32 %v2037, %v2039
  %v2042 = vadd.f32 %v1507, %v2041
  %v2043 = vtanh.pop %v2042
  %v2044 = vsub.f32 1.0, %v2037
  %2046 = vrot.lane.b32.xlu0 %v2043, 64
  %v2047 = vpop.permute.xlu0 %2046
  %v2049 = vmul.f32 %v2044, %v2047
  %v2050 = vrot.slane %v1912, 7
  %v2052 = vmul.f32 %v2037, %v2050
  %v2053 = vadd.f32 %v2049, %v2052
  %2055 = vrot.lane.b32.xlu0 %v2053, 64
  %v2056 = vpop.permute.xlu0 %2055
  %2058 = vst.msk [vmem:[#allocation3] sm:$0x8] %vm759, %v2056
  %2059 = vst.msk [vmem:[#allocation3 + $0x1] sm:$0x8] %vm761, %v2056
  %v2060 = vpack.c.bf16 %v2053, %v2053
  %v2061 = vld [vmem:[%s1 + $0x140] sm:$0xff]
  %v2062 = vld [vmem:[%s1 + $0x148] sm:$0xff]
  %v2063 = vld [vmem:[%s1 + $0x150] sm:$0xff]
  %v2064 = vld [vmem:[%s1 + $0x158] sm:$0xff]
  %v2065 = vld [vmem:[%s1 + $0x160] sm:$0xff]
  %v2066 = vld [vmem:[%s1 + $0x168] sm:$0xff]
  %v2067 = vld [vmem:[%s1 + $0x170] sm:$0xff]
  %v2068 = vld [vmem:[%s1 + $0x178] sm:$0xff]
  %v2069 = vld [vmem:[%s1519] ss:$8 sm:$0x3]
  %v2071 = vshrl.u32 %v2060, 16
  %v2073 = vrot.slane %v2071, 1
  %2074 = vrot.lane.b32.xlu0 %v2073, 64
  %v2075 = vpop.permute.xlu0 %2074
  %v2084 = vunpack.c.l.b16 %v2061
  %v2085 = vunpack.c.h.b16 %v2061
  %v2086 = vunpack.c.l.b16 %v2062
  %v2087 = vunpack.c.h.b16 %v2062
  %v2088 = vunpack.c.l.b16 %v2063
  %v2089 = vunpack.c.h.b16 %v2063
  %v2090 = vunpack.c.l.b16 %v2064
  %v2091 = vunpack.c.h.b16 %v2064
  %v2092 = vunpack.c.l.b16 %v2065
  %v2093 = vunpack.c.h.b16 %v2065
  %v2094 = vunpack.c.l.b16 %v2066
  %v2095 = vunpack.c.h.b16 %v2066
  %v2096 = vunpack.c.l.b16 %v2067
  %v2097 = vunpack.c.h.b16 %v2067
  %v2098 = vunpack.c.l.b16 %v2068
  %v2099 = vunpack.c.h.b16 %v2068
  %v2100 = vpack.c.b16 %v2086, %v2084
  %v2101 = vpack.c.b16 %v2087, %v2085
  %v2102 = vpack.c.b16 %v2090, %v2088
  %v2103 = vpack.c.b16 %v2091, %v2089
  %v2104 = vpack.c.b16 %v2094, %v2092
  %v2105 = vpack.c.b16 %v2095, %v2093
  %v2106 = vpack.c.b16 %v2098, %v2096
  %v2107 = vpack.c.b16 %v2099, %v2097
  %v2117 = vlaneseq
  %v2118 = vshrl.u32 %v2117, 7
  %v2119 = vsub.s32 0, %v2118
  %v2120 = vrot.slane %v2069, %v2119
  %v2121 = vlaneseq
  %v2122 = vshrl.u32 %v2121, 7
  %v2123 = vsub.s32 1, %v2122
  %v2124 = vrot.slane %v2069, %v2123
  %v2128 = vsel %vm37, %v2075, 0
  %2130 = vmatprep.subr.bf16.mxu0 0
  %2131 = vmatpush1.bf16.msra.mxu0 0
  %2132 = vmatprep.subr.bf16.mxu0 0
  %2133 = vmatpush1.bf16.msra.mxu0 0
  %2134 = vmatprep.subr.bf16.mxu0 0
  %2135 = vmatpush1.bf16.msra.mxu0 0
  %2136 = vmatprep.subr.bf16.mxu0 0
  %2137 = vmatpush1.bf16.msra.mxu0 0
  %2138 = vmatprep.subr.bf16.mxu0 %v2107
  %2139 = vmatpush1.bf16.msra.mxu0 %v2106
  %2140 = vmatprep.subr.bf16.mxu0 %v2105
  %2141 = vmatpush1.bf16.msra.mxu0 %v2104
  %2142 = vmatprep.subr.bf16.mxu0 %v2103
  %2143 = vmatpush1.bf16.msra.mxu0 %v2102
  %2144 = vmatprep.subr.bf16.mxu0 %v2101
  %2145 = vmatpush1.bf16.msra.mxu0 %v2100
  %2146 = vmatprep.subr.bf16.mxu0 0
  %2147 = vmatpush2.bf16.msra.mxu0 0
  %2148 = vmatprep.subr.bf16.mxu0 0
  %2149 = vmatpush2.bf16.msra.mxu0 0
  %2150 = vmatprep.subr.bf16.mxu0 0
  %2151 = vmatpush2.bf16.msra.mxu0 0
  %2152 = vmatprep.subr.bf16.mxu0 0
  %2153 = vmatpush2.bf16.msra.mxu0 0
  %2154 = vmatprep.subr.bf16.mxu0 0
  %2155 = vmatpush2.bf16.msra.mxu0 0
  %2156 = vmatprep.subr.bf16.mxu0 0
  %2157 = vmatpush2.bf16.msra.mxu0 0
  %2158 = vmatprep.subr.bf16.mxu0 0
  %2159 = vmatpush2.bf16.msra.mxu0 0
  %2160 = vmatprep.subr.bf16.mxu0 0
  %2161 = vmatpush2.bf16.msra.mxu0 0
  %2162 = vmatprep.mubr.bf16.mxu0 0
  %2163 = vmatmul.mubr.bf16.gmra.mxu0 %v2128
  %v2164 = vpop.f32.mrf.mxu0
  %v2165 = vadd.f32 %v2120, %v2164
  %v2166 = vpop.f32.mrf.mxu0
  %v2167 = vadd.f32 %v2124, %v2166
  %v2168 = vpop.f32.mrf.mxu0
  %v2169 = vpop.f32.mrf.mxu0
  %2170 = vdwg.mxu0
  %v2172 = vrot.slane %v2165, 4
  %v2174 = vadd.f32 %v1505, %v2172
  %v2175 = vxor.u32 %v2174, 2147483648
  %v2176 = vmul.f32 %v2175, 1.442695
  %v2177 = vpow.pop %v2176
  %v2178 = vadd.f32 %v2177, 1.0
  %v2179 = vrcp.pop %v2178
  %v2180 = vmul.f32 1.0, %v2179
  %v2182 = vrot.slane %v2167, 4
  %v2184 = vmul.f32 %v2180, %v2182
  %v2185 = vadd.f32 %v1507, %v2184
  %v2186 = vtanh.pop %v2185
  %v2187 = vsub.f32 1.0, %v2180
  %2189 = vrot.lane.b32.xlu0 %v2186, 64
  %v2190 = vpop.permute.xlu0 %2189
  %v2192 = vmul.f32 %v2187, %v2190
  %v2193 = vrot.slane %v2053, 7
  %v2195 = vmul.f32 %v2180, %v2193
  %v2196 = vadd.f32 %v2192, %v2195
  %2198 = vrot.lane.b32.xlu0 %v2196, 64
  %v2199 = vpop.permute.xlu0 %2198
  %2201 = vst.msk [vmem:[#allocation3] sm:$0x10] %vm908, %v2199
  %2202 = vst.msk [vmem:[#allocation3 - $0x1] sm:$0x10] %vm910, %v2199
  %v2203 = vpack.c.bf16 %v2196, %v2196
  %v2204 = vld [vmem:[%s1 + $0x140] sm:$0xff]
  %v2205 = vld [vmem:[%s1 + $0x148] sm:$0xff]
  %v2206 = vld [vmem:[%s1 + $0x150] sm:$0xff]
  %v2207 = vld [vmem:[%s1 + $0x158] sm:$0xff]
  %v2208 = vld [vmem:[%s1 + $0x160] sm:$0xff]
  %v2209 = vld [vmem:[%s1 + $0x168] sm:$0xff]
  %v2210 = vld [vmem:[%s1 + $0x170] sm:$0xff]
  %v2211 = vld [vmem:[%s1 + $0x178] sm:$0xff]
  %v2212 = vld [vmem:[%s1519] ss:$8 sm:$0x3]
  %v2214 = vrot.slane %v2203, 2
  %2215 = vrot.lane.b32.xlu0 %v2214, 64
  %v2216 = vpop.permute.xlu0 %2215
  %v2225 = vunpack.c.l.b16 %v2204
  %v2226 = vunpack.c.h.b16 %v2204
  %v2227 = vunpack.c.l.b16 %v2205
  %v2228 = vunpack.c.h.b16 %v2205
  %v2229 = vunpack.c.l.b16 %v2206
  %v2230 = vunpack.c.h.b16 %v2206
  %v2231 = vunpack.c.l.b16 %v2207
  %v2232 = vunpack.c.h.b16 %v2207
  %v2233 = vunpack.c.l.b16 %v2208
  %v2234 = vunpack.c.h.b16 %v2208
  %v2235 = vunpack.c.l.b16 %v2209
  %v2236 = vunpack.c.h.b16 %v2209
  %v2237 = vunpack.c.l.b16 %v2210
  %v2238 = vunpack.c.h.b16 %v2210
  %v2239 = vunpack.c.l.b16 %v2211
  %v2240 = vunpack.c.h.b16 %v2211
  %v2241 = vpack.c.b16 %v2227, %v2225
  %v2242 = vpack.c.b16 %v2228, %v2226
  %v2243 = vpack.c.b16 %v2231, %v2229
  %v2244 = vpack.c.b16 %v2232, %v2230
  %v2245 = vpack.c.b16 %v2235, %v2233
  %v2246 = vpack.c.b16 %v2236, %v2234
  %v2247 = vpack.c.b16 %v2239, %v2237
  %v2248 = vpack.c.b16 %v2240, %v2238
  %v2258 = vlaneseq
  %v2259 = vshrl.u32 %v2258, 7
  %v2260 = vsub.s32 0, %v2259
  %v2261 = vrot.slane %v2212, %v2260
  %v2262 = vlaneseq
  %v2263 = vshrl.u32 %v2262, 7
  %v2264 = vsub.s32 1, %v2263
  %v2265 = vrot.slane %v2212, %v2264
  %v2269 = vsel %vm37, %v2216, 0
  %2271 = vmatprep.subr.bf16.mxu0 0
  %2272 = vmatpush1.bf16.msra.mxu0 0
  %2273 = vmatprep.subr.bf16.mxu0 0
  %2274 = vmatpush1.bf16.msra.mxu0 0
  %2275 = vmatprep.subr.bf16.mxu0 0
  %2276 = vmatpush1.bf16.msra.mxu0 0
  %2277 = vmatprep.subr.bf16.mxu0 0
  %2278 = vmatpush1.bf16.msra.mxu0 0
  %2279 = vmatprep.subr.bf16.mxu0 %v2248
  %2280 = vmatpush1.bf16.msra.mxu0 %v2247
  %2281 = vmatprep.subr.bf16.mxu0 %v2246
  %2282 = vmatpush1.bf16.msra.mxu0 %v2245
  %2283 = vmatprep.subr.bf16.mxu0 %v2244
  %2284 = vmatpush1.bf16.msra.mxu0 %v2243
  %2285 = vmatprep.subr.bf16.mxu0 %v2242
  %2286 = vmatpush1.bf16.msra.mxu0 %v2241
  %2287 = vmatprep.subr.bf16.mxu0 0
  %2288 = vmatpush2.bf16.msra.mxu0 0
  %2289 = vmatprep.subr.bf16.mxu0 0
  %2290 = vmatpush2.bf16.msra.mxu0 0
  %2291 = vmatprep.subr.bf16.mxu0 0
  %2292 = vmatpush2.bf16.msra.mxu0 0
  %2293 = vmatprep.subr.bf16.mxu0 0
  %2294 = vmatpush2.bf16.msra.mxu0 0
  %2295 = vmatprep.subr.bf16.mxu0 0
  %2296 = vmatpush2.bf16.msra.mxu0 0
  %2297 = vmatprep.subr.bf16.mxu0 0
  %2298 = vmatpush2.bf16.msra.mxu0 0
  %2299 = vmatprep.subr.bf16.mxu0 0
  %2300 = vmatpush2.bf16.msra.mxu0 0
  %2301 = vmatprep.subr.bf16.mxu0 0
  %2302 = vmatpush2.bf16.msra.mxu0 0
  %2303 = vmatprep.mubr.bf16.mxu0 0
  %2304 = vmatmul.mubr.bf16.gmra.mxu0 %v2269
  %v2305 = vpop.f32.mrf.mxu0
  %v2306 = vadd.f32 %v2261, %v2305
  %v2307 = vpop.f32.mrf.mxu0
  %v2308 = vadd.f32 %v2265, %v2307
  %v2309 = vpop.f32.mrf.mxu0
  %v2310 = vpop.f32.mrf.mxu0
  %2311 = vdwg.mxu0
  %v2313 = vrot.slane %v2306, 3
  %v2315 = vadd.f32 %v1505, %v2313
  %v2316 = vxor.u32 %v2315, 2147483648
  %v2317 = vmul.f32 %v2316, 1.442695
  %v2318 = vpow.pop %v2317
  %v2319 = vadd.f32 %v2318, 1.0
  %v2320 = vrcp.pop %v2319
  %v2321 = vmul.f32 1.0, %v2320
  %v2323 = vrot.slane %v2308, 3
  %v2325 = vmul.f32 %v2321, %v2323
  %v2326 = vadd.f32 %v1507, %v2325
  %v2327 = vtanh.pop %v2326
  %v2328 = vsub.f32 1.0, %v2321
  %2330 = vrot.lane.b32.xlu0 %v2327, 64
  %v2331 = vpop.permute.xlu0 %2330
  %v2333 = vmul.f32 %v2328, %v2331
  %v2334 = vrot.slane %v2196, 7
  %v2336 = vmul.f32 %v2321, %v2334
  %v2337 = vadd.f32 %v2333, %v2336
  %2339 = vrot.lane.b32.xlu0 %v2337, 64
  %v2340 = vpop.permute.xlu0 %2339
  %2342 = vst.msk [vmem:[#allocation3] sm:$0x20] %vm1055, %v2340
  %2343 = vst.msk [vmem:[#allocation3 - $0x3] sm:$0x20] %vm1057, %v2340
  %v2344 = vpack.c.bf16 %v2337, %v2337
  %v2345 = vld [vmem:[%s1 + $0x140] sm:$0xff]
  %v2346 = vld [vmem:[%s1 + $0x148] sm:$0xff]
  %v2347 = vld [vmem:[%s1 + $0x150] sm:$0xff]
  %v2348 = vld [vmem:[%s1 + $0x158] sm:$0xff]
  %v2349 = vld [vmem:[%s1 + $0x160] sm:$0xff]
  %v2350 = vld [vmem:[%s1 + $0x168] sm:$0xff]
  %v2351 = vld [vmem:[%s1 + $0x170] sm:$0xff]
  %v2352 = vld [vmem:[%s1 + $0x178] sm:$0xff]
  %v2353 = vld [vmem:[%s1519] ss:$8 sm:$0x3]
  %v2355 = vshrl.u32 %v2344, 16
  %v2357 = vrot.slane %v2355, 2
  %2358 = vrot.lane.b32.xlu0 %v2357, 64
  %v2359 = vpop.permute.xlu0 %2358
  %v2368 = vunpack.c.l.b16 %v2345
  %v2369 = vunpack.c.h.b16 %v2345
  %v2370 = vunpack.c.l.b16 %v2346
  %v2371 = vunpack.c.h.b16 %v2346
  %v2372 = vunpack.c.l.b16 %v2347
  %v2373 = vunpack.c.h.b16 %v2347
  %v2374 = vunpack.c.l.b16 %v2348
  %v2375 = vunpack.c.h.b16 %v2348
  %v2376 = vunpack.c.l.b16 %v2349
  %v2377 = vunpack.c.h.b16 %v2349
  %v2378 = vunpack.c.l.b16 %v2350
  %v2379 = vunpack.c.h.b16 %v2350
  %v2380 = vunpack.c.l.b16 %v2351
  %v2381 = vunpack.c.h.b16 %v2351
  %v2382 = vunpack.c.l.b16 %v2352
  %v2383 = vunpack.c.h.b16 %v2352
  %v2384 = vpack.c.b16 %v2370, %v2368
  %v2385 = vpack.c.b16 %v2371, %v2369
  %v2386 = vpack.c.b16 %v2374, %v2372
  %v2387 = vpack.c.b16 %v2375, %v2373
  %v2388 = vpack.c.b16 %v2378, %v2376
  %v2389 = vpack.c.b16 %v2379, %v2377
  %v2390 = vpack.c.b16 %v2382, %v2380
  %v2391 = vpack.c.b16 %v2383, %v2381
  %v2401 = vlaneseq
  %v2402 = vshrl.u32 %v2401, 7
  %v2403 = vsub.s32 0, %v2402
  %v2404 = vrot.slane %v2353, %v2403
  %v2405 = vlaneseq
  %v2406 = vshrl.u32 %v2405, 7
  %v2407 = vsub.s32 1, %v2406
  %v2408 = vrot.slane %v2353, %v2407
  %v2412 = vsel %vm37, %v2359, 0
  %2414 = vmatprep.subr.bf16.mxu0 0
  %2415 = vmatpush1.bf16.msra.mxu0 0
  %2416 = vmatprep.subr.bf16.mxu0 0
  %2417 = vmatpush1.bf16.msra.mxu0 0
  %2418 = vmatprep.subr.bf16.mxu0 0
  %2419 = vmatpush1.bf16.msra.mxu0 0
  %2420 = vmatprep.subr.bf16.mxu0 0
  %2421 = vmatpush1.bf16.msra.mxu0 0
  %2422 = vmatprep.subr.bf16.mxu0 %v2391
  %2423 = vmatpush1.bf16.msra.mxu0 %v2390
  %2424 = vmatprep.subr.bf16.mxu0 %v2389
  %2425 = vmatpush1.bf16.msra.mxu0 %v2388
  %2426 = vmatprep.subr.bf16.mxu0 %v2387
  %2427 = vmatpush1.bf16.msra.mxu0 %v2386
  %2428 = vmatprep.subr.bf16.mxu0 %v2385
  %2429 = vmatpush1.bf16.msra.mxu0 %v2384
  %2430 = vmatprep.subr.bf16.mxu0 0
  %2431 = vmatpush2.bf16.msra.mxu0 0
  %2432 = vmatprep.subr.bf16.mxu0 0
  %2433 = vmatpush2.bf16.msra.mxu0 0
  %2434 = vmatprep.subr.bf16.mxu0 0
  %2435 = vmatpush2.bf16.msra.mxu0 0
  %2436 = vmatprep.subr.bf16.mxu0 0
  %2437 = vmatpush2.bf16.msra.mxu0 0
  %2438 = vmatprep.subr.bf16.mxu0 0
  %2439 = vmatpush2.bf16.msra.mxu0 0
  %2440 = vmatprep.subr.bf16.mxu0 0
  %2441 = vmatpush2.bf16.msra.mxu0 0
  %2442 = vmatprep.subr.bf16.mxu0 0
  %2443 = vmatpush2.bf16.msra.mxu0 0
  %2444 = vmatprep.subr.bf16.mxu0 0
  %2445 = vmatpush2.bf16.msra.mxu0 0
  %2446 = vmatprep.mubr.bf16.mxu0 0
  %2447 = vmatmul.mubr.bf16.gmra.mxu0 %v2412
  %v2448 = vpop.f32.mrf.mxu0
  %v2449 = vadd.f32 %v2404, %v2448
  %v2450 = vpop.f32.mrf.mxu0
  %v2451 = vadd.f32 %v2408, %v2450
  %v2452 = vpop.f32.mrf.mxu0
  %v2453 = vpop.f32.mrf.mxu0
  %2454 = vdwg.mxu0
  %v2456 = vrot.slane %v2449, 2
  %v2458 = vadd.f32 %v1505, %v2456
  %v2459 = vxor.u32 %v2458, 2147483648
  %v2460 = vmul.f32 %v2459, 1.442695
  %v2461 = vpow.pop %v2460
  %v2462 = vadd.f32 %v2461, 1.0
  %v2463 = vrcp.pop %v2462
  %v2464 = vmul.f32 1.0, %v2463
  %v2466 = vrot.slane %v2451, 2
  %v2468 = vmul.f32 %v2464, %v2466
  %v2469 = vadd.f32 %v1507, %v2468
  %v2470 = vtanh.pop %v2469
  %v2471 = vsub.f32 1.0, %v2464
  %2473 = vrot.lane.b32.xlu0 %v2470, 64
  %v2474 = vpop.permute.xlu0 %2473
  %v2476 = vmul.f32 %v2471, %v2474
  %v2477 = vrot.slane %v2337, 7
  %v2479 = vmul.f32 %v2464, %v2477
  %v2480 = vadd.f32 %v2476, %v2479
  %2482 = vrot.lane.b32.xlu0 %v2480, 64
  %v2483 = vpop.permute.xlu0 %2482
  %2485 = vst.msk [vmem:[#allocation3] sm:$0x40] %vm1204, %v2483
  %2486 = vst.msk [vmem:[#allocation3 - $0x5] sm:$0x40] %vm1206, %v2483
  %v2487 = vpack.c.bf16 %v2480, %v2480
  %v2488 = vld [vmem:[%s1 + $0x140] sm:$0xff]
  %v2489 = vld [vmem:[%s1 + $0x148] sm:$0xff]
  %v2490 = vld [vmem:[%s1 + $0x150] sm:$0xff]
  %v2491 = vld [vmem:[%s1 + $0x158] sm:$0xff]
  %v2492 = vld [vmem:[%s1 + $0x160] sm:$0xff]
  %v2493 = vld [vmem:[%s1 + $0x168] sm:$0xff]
  %v2494 = vld [vmem:[%s1 + $0x170] sm:$0xff]
  %v2495 = vld [vmem:[%s1 + $0x178] sm:$0xff]
  %v2496 = vld [vmem:[%s1519] ss:$8 sm:$0x3]
  %v2498 = vrot.slane %v2487, 3
  %2499 = vrot.lane.b32.xlu0 %v2498, 64
  %v2500 = vpop.permute.xlu0 %2499
  %v2509 = vunpack.c.l.b16 %v2488
  %v2510 = vunpack.c.h.b16 %v2488
  %v2511 = vunpack.c.l.b16 %v2489
  %v2512 = vunpack.c.h.b16 %v2489
  %v2513 = vunpack.c.l.b16 %v2490
  %v2514 = vunpack.c.h.b16 %v2490
  %v2515 = vunpack.c.l.b16 %v2491
  %v2516 = vunpack.c.h.b16 %v2491
  %v2517 = vunpack.c.l.b16 %v2492
  %v2518 = vunpack.c.h.b16 %v2492
  %v2519 = vunpack.c.l.b16 %v2493
  %v2520 = vunpack.c.h.b16 %v2493
  %v2521 = vunpack.c.l.b16 %v2494
  %v2522 = vunpack.c.h.b16 %v2494
  %v2523 = vunpack.c.l.b16 %v2495
  %v2524 = vunpack.c.h.b16 %v2495
  %v2525 = vpack.c.b16 %v2511, %v2509
  %v2526 = vpack.c.b16 %v2512, %v2510
  %v2527 = vpack.c.b16 %v2515, %v2513
  %v2528 = vpack.c.b16 %v2516, %v2514
  %v2529 = vpack.c.b16 %v2519, %v2517
  %v2530 = vpack.c.b16 %v2520, %v2518
  %v2531 = vpack.c.b16 %v2523, %v2521
  %v2532 = vpack.c.b16 %v2524, %v2522
  %v2542 = vlaneseq
  %v2543 = vshrl.u32 %v2542, 7
  %v2544 = vsub.s32 0, %v2543
  %v2545 = vrot.slane %v2496, %v2544
  %v2546 = vlaneseq
  %v2547 = vshrl.u32 %v2546, 7
  %v2548 = vsub.s32 1, %v2547
  %v2549 = vrot.slane %v2496, %v2548
  %v2553 = vsel %vm37, %v2500, 0
  %2555 = vmatprep.subr.bf16.mxu0 0
  %2556 = vmatpush1.bf16.msra.mxu0 0
  %2557 = vmatprep.subr.bf16.mxu0 0
  %2558 = vmatpush1.bf16.msra.mxu0 0
  %2559 = vmatprep.subr.bf16.mxu0 0
  %2560 = vmatpush1.bf16.msra.mxu0 0
  %2561 = vmatprep.subr.bf16.mxu0 0
  %2562 = vmatpush1.bf16.msra.mxu0 0
  %2563 = vmatprep.subr.bf16.mxu0 %v2532
  %2564 = vmatpush1.bf16.msra.mxu0 %v2531
  %2565 = vmatprep.subr.bf16.mxu0 %v2530
  %2566 = vmatpush1.bf16.msra.mxu0 %v2529
  %2567 = vmatprep.subr.bf16.mxu0 %v2528
  %2568 = vmatpush1.bf16.msra.mxu0 %v2527
  %2569 = vmatprep.subr.bf16.mxu0 %v2526
  %2570 = vmatpush1.bf16.msra.mxu0 %v2525
  %2571 = vmatprep.subr.bf16.mxu0 0
  %2572 = vmatpush2.bf16.msra.mxu0 0
  %2573 = vmatprep.subr.bf16.mxu0 0
  %2574 = vmatpush2.bf16.msra.mxu0 0
  %2575 = vmatprep.subr.bf16.mxu0 0
  %2576 = vmatpush2.bf16.msra.mxu0 0
  %2577 = vmatprep.subr.bf16.mxu0 0
  %2578 = vmatpush2.bf16.msra.mxu0 0
  %2579 = vmatprep.subr.bf16.mxu0 0
  %2580 = vmatpush2.bf16.msra.mxu0 0
  %2581 = vmatprep.subr.bf16.mxu0 0
  %2582 = vmatpush2.bf16.msra.mxu0 0
  %2583 = vmatprep.subr.bf16.mxu0 0
  %2584 = vmatpush2.bf16.msra.mxu0 0
  %2585 = vmatprep.subr.bf16.mxu0 0
  %2586 = vmatpush2.bf16.msra.mxu0 0
  %2587 = vmatprep.mubr.bf16.mxu0 0
  %2588 = vmatmul.mubr.bf16.gmra.mxu0 %v2553
  %v2589 = vpop.f32.mrf.mxu0
  %v2590 = vadd.f32 %v2545, %v2589
  %v2591 = vpop.f32.mrf.mxu0
  %v2592 = vadd.f32 %v2549, %v2591
  %v2593 = vpop.f32.mrf.mxu0
  %v2594 = vpop.f32.mrf.mxu0
  %2595 = vdwg.mxu0
  %v2597 = vrot.slane %v2590, 1
  %v2599 = vadd.f32 %v1505, %v2597
  %v2600 = vxor.u32 %v2599, 2147483648
  %v2601 = vmul.f32 %v2600, 1.442695
  %v2602 = vpow.pop %v2601
  %v2603 = vadd.f32 %v2602, 1.0
  %v2604 = vrcp.pop %v2603
  %v2605 = vmul.f32 1.0, %v2604
  %v2607 = vrot.slane %v2592, 1
  %v2609 = vmul.f32 %v2605, %v2607
  %v2610 = vadd.f32 %v1507, %v2609
  %v2611 = vtanh.pop %v2610
  %v2612 = vsub.f32 1.0, %v2605
  %2614 = vrot.lane.b32.xlu0 %v2611, 64
  %v2615 = vpop.permute.xlu0 %2614
  %v2617 = vmul.f32 %v2612, %v2615
  %v2618 = vrot.slane %v2480, 7
  %v2620 = vmul.f32 %v2605, %v2618
  %v2621 = vadd.f32 %v2617, %v2620
  %2623 = vrot.lane.b32.xlu0 %v2621, 64
  %v2624 = vpop.permute.xlu0 %2623
  %2626 = vst.msk [vmem:[#allocation3] sm:$0x80] %vm1351, %v2624
  %2627 = vst.msk [vmem:[#allocation3 - $0x7] sm:$0x80] %vm1353, %v2624
  %v2628 = vld [vmem:[#allocation3] sm:$0xff]
  %2630 = vrot.lane.b32.xlu0 %v2628, 96
  %v2631 = vpop.permute.xlu0 %2630
  %v2633 = vadd.f32 %v2628, %v2631
  %2634 = vxpose.xlu0.b32.start [1/16] %v2633, 128
  %2635 = vxpose.xlu0.b32.cont [2/16] 0.0, 128
  %2636 = vxpose.xlu0.b32.cont [3/16] 0.0, 128
  %2637 = vxpose.xlu0.b32.cont [4/16] 0.0, 128
  %2638 = vxpose.xlu0.b32.cont [5/16] 0.0, 128
  %2639 = vxpose.xlu0.b32.cont [6/16] 0.0, 128
  %2640 = vxpose.xlu0.b32.cont [7/16] 0.0, 128
  %2641 = vxpose.xlu0.b32.cont [8/16] 0.0, 128
  %2642 = vxpose.xlu0.b32.cont [9/16] 0.0, 128
  %2643 = vxpose.xlu0.b32.cont [10/16] 0.0, 128
  %2644 = vxpose.xlu0.b32.cont [11/16] 0.0, 128
  %2645 = vxpose.xlu0.b32.cont [12/16] 0.0, 128
  %2646 = vxpose.xlu0.b32.cont [13/16] 0.0, 128
  %2647 = vxpose.xlu0.b32.cont [14/16] 0.0, 128
  %2648 = vxpose.xlu0.b32.cont [15/16] 0.0, 128
  %2649 = vxpose.xlu0.b32.end [16/16] 0.0, 128
  %v2650 = vpop.trf.xlu0
  %v2651 = vpop.trf.xlu0
  %v2652 = vpop.trf.xlu0
  %v2653 = vpop.trf.xlu0
  %v2654 = vpop.trf.xlu0
  %v2655 = vpop.trf.xlu0
  %v2656 = vpop.trf.xlu0
  %v2657 = vpop.trf.xlu0
  %v2658 = vpop.trf.xlu0
  %v2659 = vpop.trf.xlu0
  %v2660 = vpop.trf.xlu0
  %v2661 = vpop.trf.xlu0
  %v2662 = vpop.trf.xlu0
  %v2663 = vpop.trf.xlu0
  %v2664 = vpop.trf.xlu0
  %v2665 = vpop.trf.xlu0
  %v2666 = vpack.c.bf16 %v2651, %v2650
  %v2667 = vpack.c.bf16 %v2653, %v2652
  %v2668 = vpack.c.bf16 %v2633, %v2633
  %v2669 = vld [vmem:[%s1 + $0x240] sm:$0xf]
  %v2670 = vld [vmem:[%s1 + $0x248] sm:$0xf]
  %v2671 = vld [vmem:[%s1 + $0x250] sm:$0xf]
  %v2672 = vld [vmem:[%s1 + $0x258] sm:$0xf]
  %v2677 = vunpack.c.l.b16 %v2669
  %v2678 = vunpack.c.l.b16 %v2670
  %v2679 = vunpack.c.l.b16 %v2671
  %v2680 = vunpack.c.l.b16 %v2672
  %v2681 = vpack.c.b16 %v2678, %v2677
  %v2682 = vpack.c.b16 %v2680, %v2679
  %vm2685 = vcmask 261120
  %v2687 = vsel %vm2685, %v2668, 0
  %2689 = vmatprep.subr.bf16.mxu0 0
  %2690 = vmatpush1.bf16.msra.mxu0 0
  %2691 = vmatprep.subr.bf16.mxu0 0
  %2692 = vmatpush1.bf16.msra.mxu0 0
  %2693 = vmatprep.subr.bf16.mxu0 0
  %2694 = vmatpush1.bf16.msra.mxu0 0
  %2695 = vmatprep.subr.bf16.mxu0 0
  %2696 = vmatpush1.bf16.msra.mxu0 0
  %2697 = vmatprep.subr.bf16.mxu0 0
  %2698 = vmatpush1.bf16.msra.mxu0 0
  %2699 = vmatprep.subr.bf16.mxu0 0
  %2700 = vmatpush1.bf16.msra.mxu0 0
  %2701 = vmatprep.subr.bf16.mxu0 0
  %2702 = vmatpush1.bf16.msra.mxu0 %v2682
  %2703 = vmatprep.subr.bf16.mxu0 0
  %2704 = vmatpush1.bf16.msra.mxu0 %v2681
  %2705 = vmatprep.subr.bf16.mxu0 0
  %2706 = vmatpush2.bf16.msra.mxu0 0
  %2707 = vmatprep.subr.bf16.mxu0 0
  %2708 = vmatpush2.bf16.msra.mxu0 0
  %2709 = vmatprep.subr.bf16.mxu0 0
  %2710 = vmatpush2.bf16.msra.mxu0 0
  %2711 = vmatprep.subr.bf16.mxu0 0
  %2712 = vmatpush2.bf16.msra.mxu0 0
  %2713 = vmatprep.subr.bf16.mxu0 0
  %2714 = vmatpush2.bf16.msra.mxu0 0
  %2715 = vmatprep.subr.bf16.mxu0 0
  %2716 = vmatpush2.bf16.msra.mxu0 0
  %2717 = vmatprep.subr.bf16.mxu0 0
  %2718 = vmatpush2.bf16.msra.mxu0 0
  %2719 = vmatprep.subr.bf16.mxu0 0
  %2720 = vmatpush2.bf16.msra.mxu0 0
  %2721 = vmatprep.mubr.bf16.mxu0 0
  %2722 = vmatmul.mubr.bf16.gmra.mxu0 %v2687
  %v2723 = vpop.f32.mrf.mxu0
  %v2724 = vadd.f32 0.0, %v2723
  %v2725 = vpop.f32.mrf.mxu0
  %v2726 = vpop.f32.mrf.mxu0
  %v2727 = vpop.f32.mrf.mxu0
  %2728 = vdwg.mxu0
  %v2729 = vpack.c.bf16 %v2724, %v2724
  %vm2730 = vcmp.eq.s32.totalorder %v18, 1
  %v2731 = vsel %vm2730, 1, 0
  %v2732 = vcvt.s32.f32 %v2731
  %v2733 = vpack.c.bf16 %v2732, %v2732
  %v2734 = vpack.c.bf16 %v1346, %v1346
  %v2736 = vshrl.u32 %v2734, 16
  %v2738 = vrot.slane %v2736, 3
  %v2741 = vsel %vm37, %v2733, %v2738
  %v2742 = vld [vmem:[%s1 + $0x180] sm:$0xf]
  %v2743 = vld [vmem:[%s1 + $0x188] sm:$0xf]
  %v2744 = vld [vmem:[%s1 + $0x190] sm:$0xf]
  %v2745 = vld [vmem:[%s1 + $0x198] sm:$0xf]
  %v2746 = vld [vmem:[%s1 + $0x1a0] sm:$0xf]
  %v2747 = vld [vmem:[%s1 + $0x1a8] sm:$0xf]
  %v2748 = vld [vmem:[%s1 + $0x1b0] sm:$0xf]
  %v2749 = vld [vmem:[%s1 + $0x1b8] sm:$0xf]
  %v2750 = vld [vmem:[%s1 + $0x1c0] sm:$0xf]
  %v2751 = vld [vmem:[%s1 + $0x1c8] sm:$0xf]
  %v2752 = vld [vmem:[%s1 + $0x1d0] sm:$0xf]
  %v2753 = vld [vmem:[%s1 + $0x1d8] sm:$0xf]
  %v2754 = vld [vmem:[%s2 + $0x4] ss:$0 sm:$0xff]
  %v2767 = vunpack.c.l.b16 %v2742
  %v2768 = vunpack.c.l.b16 %v2743
  %v2769 = vunpack.c.l.b16 %v2744
  %v2770 = vunpack.c.l.b16 %v2745
  %v2771 = vunpack.c.l.b16 %v2746
  %v2772 = vunpack.c.l.b16 %v2747
  %v2773 = vunpack.c.l.b16 %v2748
  %v2774 = vunpack.c.l.b16 %v2749
  %v2775 = vunpack.c.l.b16 %v2750
  %v2776 = vunpack.c.l.b16 %v2751
  %v2777 = vunpack.c.l.b16 %v2752
  %v2778 = vunpack.c.l.b16 %v2753
  %v2779 = vpack.c.b16 %v2768, %v2767
  %v2780 = vpack.c.b16 %v2770, %v2769
  %v2781 = vpack.c.b16 %v2772, %v2771
  %v2782 = vpack.c.b16 %v2774, %v2773
  %v2783 = vpack.c.b16 %v2776, %v2775
  %v2784 = vpack.c.b16 %v2778, %v2777
  %vm2791 = vcmask 785408
  %v2792 = vsel %vm2791, %v2741, 0
  %2794 = vmatprep.subr.bf16.mxu0 0
  %2795 = vmatpush1.bf16.msra.mxu0 0
  %2796 = vmatprep.subr.bf16.mxu0 0
  %2797 = vmatpush1.bf16.msra.mxu0 0
  %2798 = vmatprep.subr.bf16.mxu0 0
  %2799 = vmatpush1.bf16.msra.mxu0 %v2784
  %2800 = vmatprep.subr.bf16.mxu0 0
  %2801 = vmatpush1.bf16.msra.mxu0 %v2783
  %2802 = vmatprep.subr.bf16.mxu0 0
  %2803 = vmatpush1.bf16.msra.mxu0 %v2782
  %2804 = vmatprep.subr.bf16.mxu0 0
  %2805 = vmatpush1.bf16.msra.mxu0 %v2781
  %2806 = vmatprep.subr.bf16.mxu0 0
  %2807 = vmatpush1.bf16.msra.mxu0 %v2780
  %2808 = vmatprep.subr.bf16.mxu0 0
  %2809 = vmatpush1.bf16.msra.mxu0 %v2779
  %2810 = vmatprep.subr.bf16.mxu0 0
  %2811 = vmatpush2.bf16.msra.mxu0 0
  %2812 = vmatprep.subr.bf16.mxu0 0
  %2813 = vmatpush2.bf16.msra.mxu0 0
  %2814 = vmatprep.subr.bf16.mxu0 0
  %2815 = vmatpush2.bf16.msra.mxu0 0
  %2816 = vmatprep.subr.bf16.mxu0 0
  %2817 = vmatpush2.bf16.msra.mxu0 0
  %2818 = vmatprep.subr.bf16.mxu0 0
  %2819 = vmatpush2.bf16.msra.mxu0 0
  %2820 = vmatprep.subr.bf16.mxu0 0
  %2821 = vmatpush2.bf16.msra.mxu0 0
  %2822 = vmatprep.subr.bf16.mxu0 0
  %2823 = vmatpush2.bf16.msra.mxu0 0
  %2824 = vmatprep.subr.bf16.mxu0 0
  %2825 = vmatpush2.bf16.msra.mxu0 0
  %2826 = vmatprep.mubr.bf16.mxu0 0
  %2827 = vmatmul.mubr.bf16.gmra.mxu0 %v2792
  %v2828 = vpop.f32.mrf.mxu0
  %v2829 = vadd.f32 %v2754, %v2828
  %v2830 = vpop.f32.mrf.mxu0
  %v2831 = vpop.f32.mrf.mxu0
  %v2832 = vpop.f32.mrf.mxu0
  %2833 = vdwg.mxu0
  %v2834 = vxor.u32 %v2829, 2147483648
  %v2835 = vmul.f32 %v2834, 1.442695
  %v2836 = vpow.pop %v2835
  %v2837 = vadd.f32 %v2836, 1.0
  %v2838 = vrcp.pop %v2837
  %v2839 = vmul.f32 1.0, %v2838
  %2841 = vrot.lane.b32.xlu0 %v2829, 32
  %v2842 = vpop.permute.xlu0 %2841
  %v2844 = vmul.f32 %v2839, %v2842
  %2846 = vrot.lane.b32.xlu0 %v2844, 64
  %v2847 = vpop.permute.xlu0 %2846
  %v2849 = vadd.f32 %v2829, %v2847
  %v2850 = vtanh.pop %v2849
  %v2851 = vsub.f32 1.0, %v2839
  %2853 = vrot.lane.b32.xlu0 %v2850, 96
  %v2854 = vpop.permute.xlu0 %2853
  %v2856 = vmul.f32 %v2851, %v2854
  %v2857 = vrot.slane %v1346, 7
  %2858 = vrot.lane.b32.xlu0 %v2857, 96
  %v2859 = vpop.permute.xlu0 %2858
  %v2861 = vmul.f32 %v2839, %v2859
  %v2862 = vadd.f32 %v2856, %v2861
  %v2863 = vpack.c.bf16 %v2862, %v2862
  %2865 = vrot.lane.b32.xlu0 %v2863, 96
  %v2866 = vpop.permute.xlu0 %2865
  %2867 = vrot.lane.b32.xlu0 %v2738, 64
  %v2868 = vpop.permute.xlu0 %2867
  %v2871 = vsel %vm2685, %v2866, %v2868
  %v2872 = vld [vmem:[%s1 + $0x1e0] sm:$0xf]
  %v2873 = vld [vmem:[%s1 + $0x1e8] sm:$0xf]
  %v2874 = vld [vmem:[%s1 + $0x1f0] sm:$0xf]
  %v2875 = vld [vmem:[%s1 + $0x1f8] sm:$0xf]
  %v2876 = vld [vmem:[%s1 + $0x200] sm:$0xf]
  %v2877 = vld [vmem:[%s1 + $0x208] sm:$0xf]
  %v2878 = vld [vmem:[%s1 + $0x210] sm:$0xf]
  %v2879 = vld [vmem:[%s1 + $0x218] sm:$0xf]
  %v2880 = vld [vmem:[%s2 + $0x5] ss:$0 sm:$0xff]
  %v2889 = vunpack.c.l.b16 %v2872
  %v2890 = vunpack.c.l.b16 %v2873
  %v2891 = vunpack.c.l.b16 %v2874
  %v2892 = vunpack.c.l.b16 %v2875
  %v2893 = vunpack.c.l.b16 %v2876
  %v2894 = vunpack.c.l.b16 %v2877
  %v2895 = vunpack.c.l.b16 %v2878
  %v2896 = vunpack.c.l.b16 %v2879
  %v2897 = vpack.c.b16 %v2890, %v2889
  %v2898 = vpack.c.b16 %v2892, %v2891
  %v2899 = vpack.c.b16 %v2894, %v2893
  %v2900 = vpack.c.b16 %v2896, %v2895
  %v2905 = vsel %vm37, %v2871, 0
  %2907 = vmatprep.subr.bf16.mxu0 0
  %2908 = vmatpush1.bf16.msra.mxu0 0
  %2909 = vmatprep.subr.bf16.mxu0 0
  %2910 = vmatpush1.bf16.msra.mxu0 0
  %2911 = vmatprep.subr.bf16.mxu0 0
  %2912 = vmatpush1.bf16.msra.mxu0 0
  %2913 = vmatprep.subr.bf16.mxu0 0
  %2914 = vmatpush1.bf16.msra.mxu0 0
  %2915 = vmatprep.subr.bf16.mxu0 0
  %2916 = vmatpush1.bf16.msra.mxu0 %v2900
  %2917 = vmatprep.subr.bf16.mxu0 0
  %2918 = vmatpush1.bf16.msra.mxu0 %v2899
  %2919 = vmatprep.subr.bf16.mxu0 0
  %2920 = vmatpush1.bf16.msra.mxu0 %v2898
  %2921 = vmatprep.subr.bf16.mxu0 0
  %2922 = vmatpush1.bf16.msra.mxu0 %v2897
  %2923 = vmatprep.subr.bf16.mxu0 0
  %2924 = vmatpush2.bf16.msra.mxu0 0
  %2925 = vmatprep.subr.bf16.mxu0 0
  %2926 = vmatpush2.bf16.msra.mxu0 0
  %2927 = vmatprep.subr.bf16.mxu0 0
  %2928 = vmatpush2.bf16.msra.mxu0 0
  %2929 = vmatprep.subr.bf16.mxu0 0
  %2930 = vmatpush2.bf16.msra.mxu0 0
  %2931 = vmatprep.subr.bf16.mxu0 0
  %2932 = vmatpush2.bf16.msra.mxu0 0
  %2933 = vmatprep.subr.bf16.mxu0 0
  %2934 = vmatpush2.bf16.msra.mxu0 0
  %2935 = vmatprep.subr.bf16.mxu0 0
  %2936 = vmatpush2.bf16.msra.mxu0 0
  %2937 = vmatprep.subr.bf16.mxu0 0
  %2938 = vmatpush2.bf16.msra.mxu0 0
  %2939 = vmatprep.mubr.bf16.mxu0 0
  %2940 = vmatmul.mubr.bf16.gmra.mxu0 %v2905
  %v2941 = vpop.f32.mrf.mxu0
  %v2942 = vadd.f32 %v2880, %v2941
  %v2943 = vpop.f32.mrf.mxu0
  %v2944 = vpop.f32.mrf.mxu0
  %v2945 = vpop.f32.mrf.mxu0
  %2946 = vdwg.mxu0
  %v2947 = vxor.u32 %v2942, 2147483648
  %v2948 = vmul.f32 %v2947, 1.442695
  %v2949 = vpow.pop %v2948
  %v2950 = vadd.f32 %v2949, 1.0
  %v2951 = vrcp.pop %v2950
  %v2952 = vmul.f32 1.0, %v2951
  %2954 = vrot.lane.b32.xlu0 %v2942, 32
  %v2955 = vpop.permute.xlu0 %2954
  %v2957 = vmul.f32 %v2952, %v2955
  %2959 = vrot.lane.b32.xlu0 %v2957, 64
  %v2960 = vpop.permute.xlu0 %2959
  %v2962 = vadd.f32 %v2942, %v2960
  %v2963 = vtanh.pop %v2962
  %v2964 = vsub.f32 1.0, %v2952
  %2966 = vrot.lane.b32.xlu0 %v2963, 96
  %v2967 = vpop.permute.xlu0 %2966
  %v2969 = vmul.f32 %v2964, %v2967
  %2970 = vrot.lane.b32.xlu0 %v2857, 64
  %v2971 = vpop.permute.xlu0 %2970
  %v2973 = vmul.f32 %v2952, %v2971
  %v2974 = vadd.f32 %v2969, %v2973
  %v2975 = vpack.c.bf16 %v2974, %v2974
  %2977 = vrot.lane.b32.xlu0 %v2975, 96
  %v2978 = vpop.permute.xlu0 %2977
  %v2980 = vsel %vm2685, %v2978, 0
  %2982 = vmatprep.subr.bf16.mxu0 0
  %2983 = vmatpush1.bf16.msra.mxu0 0
  %2984 = vmatprep.subr.bf16.mxu0 0
  %2985 = vmatpush1.bf16.msra.mxu0 0
  %2986 = vmatprep.subr.bf16.mxu0 0
  %2987 = vmatpush1.bf16.msra.mxu0 0
  %2988 = vmatprep.subr.bf16.mxu0 0
  %2989 = vmatpush1.bf16.msra.mxu0 0
  %2990 = vmatprep.subr.bf16.mxu0 0
  %2991 = vmatpush1.bf16.msra.mxu0 0
  %2992 = vmatprep.subr.bf16.mxu0 0
  %2993 = vmatpush1.bf16.msra.mxu0 0
  %2994 = vmatprep.subr.bf16.mxu0 0
  %2995 = vmatpush1.bf16.msra.mxu0 %v2667
  %2996 = vmatprep.subr.bf16.mxu0 0
  %2997 = vmatpush1.bf16.msra.mxu0 %v2666
  %2998 = vmatprep.subr.bf16.mxu0 0
  %2999 = vmatpush2.bf16.msra.mxu0 0
  %3000 = vmatprep.subr.bf16.mxu0 0
  %3001 = vmatpush2.bf16.msra.mxu0 0
  %3002 = vmatprep.subr.bf16.mxu0 0
  %3003 = vmatpush2.bf16.msra.mxu0 0
  %3004 = vmatprep.subr.bf16.mxu0 0
  %3005 = vmatpush2.bf16.msra.mxu0 0
  %3006 = vmatprep.subr.bf16.mxu0 0
  %3007 = vmatpush2.bf16.msra.mxu0 0
  %3008 = vmatprep.subr.bf16.mxu0 0
  %3009 = vmatpush2.bf16.msra.mxu0 0
  %3010 = vmatprep.subr.bf16.mxu0 0
  %3011 = vmatpush2.bf16.msra.mxu0 0
  %3012 = vmatprep.subr.bf16.mxu0 0
  %3013 = vmatpush2.bf16.msra.mxu0 0
  %3014 = vmatprep.mubr.bf16.mxu0 0
  %3015 = vmatmul.mubr.bf16.gmra.mxu0 %v2980
  %v3016 = vpop.f32.mrf.mxu0
  %v3017 = vadd.f32 0.0, %v3016
  %v3018 = vpop.f32.mrf.mxu0
  %v3019 = vpop.f32.mrf.mxu0
  %v3020 = vpop.f32.mrf.mxu0
  %3021 = vdwg.mxu0
  %vm3022 = vcmask 57344
  %v3023 = vsel %vm3022, %v3017, -inf
  %3024 = vmax.xlane.f32.xlu0 %v3023
  %v3025 = vpop.xlane.xlu0 %3024
  %v3026 = vsub.f32 %v3017, %v3025
  %v3027 = vmul.f32 %v3026, 1.442695
  %v3028 = vpow.pop %v3027
  %v3029 = vsel %vm3022, %v3028, 0.0
  %3030 = vadd.xlane.f32.xlu0 %v3029
  %v3031 = vpop.xlane.xlu0 %3030
  %v3032 = vrcp.pop %v3031
  %v3033 = vpack.c.bf16 %v3028, %v3028
  %vm3034 = vcmask 64512
  %v3036 = vsel %vm3034, %v3033, 0
  %vm3038 = vcmask 1043456
  %v3040 = vsel %vm3038, %v2729, 0
  %3042 = vmatprep.subr.bf16.mxu0 0
  %3043 = vmatpush1.bf16.msra.mxu0 0
  %3044 = vmatprep.subr.bf16.mxu0 0
  %3045 = vmatpush1.bf16.msra.mxu0 0
  %3046 = vmatprep.subr.bf16.mxu0 0
  %3047 = vmatpush1.bf16.msra.mxu0 0
  %3048 = vmatprep.subr.bf16.mxu0 0
  %3049 = vmatpush1.bf16.msra.mxu0 0
  %3050 = vmatprep.subr.bf16.mxu0 0
  %3051 = vmatpush1.bf16.msra.mxu0 0
  %3052 = vmatprep.subr.bf16.mxu0 0
  %3053 = vmatpush1.bf16.msra.mxu0 0
  %3054 = vmatprep.subr.bf16.mxu0 0
  %3055 = vmatpush1.bf16.msra.mxu0 0
  %3056 = vmatprep.subr.bf16.mxu0 0
  %3057 = vmatpush1.bf16.msra.mxu0 %v3040
  %3058 = vmatprep.subr.bf16.mxu0 0
  %3059 = vmatpush2.bf16.msra.mxu0 0
  %3060 = vmatprep.subr.bf16.mxu0 0
  %3061 = vmatpush2.bf16.msra.mxu0 0
  %3062 = vmatprep.subr.bf16.mxu0 0
  %3063 = vmatpush2.bf16.msra.mxu0 0
  %3064 = vmatprep.subr.bf16.mxu0 0
  %3065 = vmatpush2.bf16.msra.mxu0 0
  %3066 = vmatprep.subr.bf16.mxu0 0
  %3067 = vmatpush2.bf16.msra.mxu0 0
  %3068 = vmatprep.subr.bf16.mxu0 0
  %3069 = vmatpush2.bf16.msra.mxu0 0
  %3070 = vmatprep.subr.bf16.mxu0 0
  %3071 = vmatpush2.bf16.msra.mxu0 0
  %3072 = vmatprep.subr.bf16.mxu0 0
  %3073 = vmatpush2.bf16.msra.mxu0 0
  %3074 = vmatprep.mubr.bf16.mxu0 0
  %3075 = vmatmul.mubr.bf16.gmra.mxu0 %v3036
  %v3076 = vpop.f32.mrf.mxu0
  %v3077 = vadd.f32 0.0, %v3076
  %v3078 = vpop.f32.mrf.mxu0
  %v3079 = vpop.f32.mrf.mxu0
  %v3080 = vpop.f32.mrf.mxu0
  %3081 = vdwg.mxu0
  %v3082 = vmul.f32 %v3077, %v3032
  %v3083 = vld [vmem:[%s1 + $0x220] sm:$0xf]
  %v3084 = vld [vmem:[%s1 + $0x228] sm:$0xf]
  %v3085 = vld [vmem:[%s1 + $0x230] sm:$0xf]
  %v3086 = vld [vmem:[%s1 + $0x238] sm:$0xf]
  %v3091 = vunpack.c.l.b16 %v3083
  %v3092 = vunpack.c.l.b16 %v3084
  %v3093 = vunpack.c.l.b16 %v3085
  %v3094 = vunpack.c.l.b16 %v3086
  %v3095 = vpack.c.b16 %v3092, %v3091
  %v3096 = vpack.c.b16 %v3094, %v3093
  %3099 = vmatprep.subr.bf16.mxu0 0
  %3100 = vmatpush1.bf16.msra.mxu0 0
  %3101 = vmatprep.subr.bf16.mxu0 0
  %3102 = vmatpush1.bf16.msra.mxu0 0
  %3103 = vmatprep.subr.bf16.mxu0 0
  %3104 = vmatpush1.bf16.msra.mxu0 0
  %3105 = vmatprep.subr.bf16.mxu0 0
  %3106 = vmatpush1.bf16.msra.mxu0 0
  %3107 = vmatprep.subr.bf16.mxu0 0
  %3108 = vmatpush1.bf16.msra.mxu0 0
  %3109 = vmatprep.subr.bf16.mxu0 0
  %3110 = vmatpush1.bf16.msra.mxu0 0
  %3111 = vmatprep.subr.bf16.mxu0 0
  %3112 = vmatpush1.bf16.msra.mxu0 %v3096
  %3113 = vmatprep.subr.bf16.mxu0 0
  %3114 = vmatpush1.bf16.msra.mxu0 %v3095
  %3115 = vmatprep.subr.bf16.mxu0 0
  %3116 = vmatpush2.bf16.msra.mxu0 0
  %3117 = vmatprep.subr.bf16.mxu0 0
  %3118 = vmatpush2.bf16.msra.mxu0 0
  %3119 = vmatprep.subr.bf16.mxu0 0
  %3120 = vmatpush2.bf16.msra.mxu0 0
  %3121 = vmatprep.subr.bf16.mxu0 0
  %3122 = vmatpush2.bf16.msra.mxu0 0
  %3123 = vmatprep.subr.bf16.mxu0 0
  %3124 = vmatpush2.bf16.msra.mxu0 0
  %3125 = vmatprep.subr.bf16.mxu0 0
  %3126 = vmatpush2.bf16.msra.mxu0 0
  %3127 = vmatprep.subr.bf16.mxu0 0
  %3128 = vmatpush2.bf16.msra.mxu0 0
  %3129 = vmatprep.subr.bf16.mxu0 0
  %3130 = vmatpush2.bf16.msra.mxu0 0
  %3131 = vmatprep.mubr.bf16.mxu0 0
  %3132 = vmatmul.mubr.bf16.gmra.mxu0 %v2980
  %v3133 = vpop.f32.mrf.mxu0
  %v3134 = vadd.f32 %v3082, %v3133
  %v3135 = vpop.f32.mrf.mxu0
  %v3136 = vpop.f32.mrf.mxu0
  %v3137 = vpop.f32.mrf.mxu0
  %3138 = vdwg.mxu0
  %v3139 = vld [vmem:[%s2 + $0x6] ss:$0 sm:$0xff]
  %v3140 = vadd.f32 %v3134, %v3139
  %v3141 = vtanh.pop %v3140
  %v3142 = vpack.c.bf16 %v3141, %v3141
  %v3143 = vld [vmem:[%s1 + $0x260] sm:$0xf]
  %v3144 = vld [vmem:[%s1 + $0x268] sm:$0xf]
  %v3145 = vld [vmem:[%s1 + $0x270] sm:$0xf]
  %v3146 = vld [vmem:[%s1 + $0x278] sm:$0xf]
  %v3147 = vld [vmem:[%s2 + $0x7] ss:$0 sm:$0xff]
  %v3152 = vunpack.c.l.b16 %v3143
  %v3153 = vunpack.c.l.b16 %v3144
  %v3154 = vunpack.c.l.b16 %v3145
  %v3155 = vunpack.c.l.b16 %v3146
  %v3156 = vpack.c.b16 %v3153, %v3152
  %v3157 = vpack.c.b16 %v3155, %v3154
  %v3161 = vsel %vm2685, %v3142, 0
  %3163 = vmatprep.subr.bf16.mxu0 0
  %3164 = vmatpush1.bf16.msra.mxu0 0
  %3165 = vmatprep.subr.bf16.mxu0 0
  %3166 = vmatpush1.bf16.msra.mxu0 0
  %3167 = vmatprep.subr.bf16.mxu0 0
  %3168 = vmatpush1.bf16.msra.mxu0 0
  %3169 = vmatprep.subr.bf16.mxu0 0
  %3170 = vmatpush1.bf16.msra.mxu0 0
  %3171 = vmatprep.subr.bf16.mxu0 0
  %3172 = vmatpush1.bf16.msra.mxu0 0
  %3173 = vmatprep.subr.bf16.mxu0 0
  %3174 = vmatpush1.bf16.msra.mxu0 0
  %3175 = vmatprep.subr.bf16.mxu0 0
  %3176 = vmatpush1.bf16.msra.mxu0 %v3157
  %3177 = vmatprep.subr.bf16.mxu0 0
  %3178 = vmatpush1.bf16.msra.mxu0 %v3156
  %3179 = vmatprep.subr.bf16.mxu0 0
  %3180 = vmatpush2.bf16.msra.mxu0 0
  %3181 = vmatprep.subr.bf16.mxu0 0
  %3182 = vmatpush2.bf16.msra.mxu0 0
  %3183 = vmatprep.subr.bf16.mxu0 0
  %3184 = vmatpush2.bf16.msra.mxu0 0
  %3185 = vmatprep.subr.bf16.mxu0 0
  %3186 = vmatpush2.bf16.msra.mxu0 0
  %3187 = vmatprep.subr.bf16.mxu0 0
  %3188 = vmatpush2.bf16.msra.mxu0 0
  %3189 = vmatprep.subr.bf16.mxu0 0
  %3190 = vmatpush2.bf16.msra.mxu0 0
  %3191 = vmatprep.subr.bf16.mxu0 0
  %3192 = vmatpush2.bf16.msra.mxu0 0
  %3193 = vmatprep.subr.bf16.mxu0 0
  %3194 = vmatpush2.bf16.msra.mxu0 0
  %3195 = vmatprep.mubr.bf16.mxu0 0
  %3196 = vmatmul.mubr.bf16.gmra.mxu0 %v3161
  %v3197 = vpop.f32.mrf.mxu0
  %v3198 = vadd.f32 %v3147, %v3197
  %v3199 = vpop.f32.mrf.mxu0
  %v3200 = vpop.f32.mrf.mxu0
  %v3201 = vpop.f32.mrf.mxu0
  %3202 = vdwg.mxu0
  %vm3203 = vcmask 516096
  %v3204 = vsel %vm3203, %v3198, -inf
  %3205 = vmax.xlane.f32.xlu0 %v3204
  %v3206 = vpop.xlane.xlu0 %3205
  %v3207 = vsub.f32 %v3198, %v3206
  %v3208 = vmul.f32 %v3207, 1.442695
  %v3209 = vpow.pop %v3208
  %v3210 = vsel %vm3203, %v3209, 0.0
  %3211 = vadd.xlane.f32.xlu0 %v3210
  %v3212 = vpop.xlane.xlu0 %3211
  %v3213 = vrcp.pop %v3212
  %vm3214 = vcmp.ge.f32.partialorder %v3198, %v3206
  %v3215 = vsel %vm3214, %v18, 64
  %v3216 = vsel %vm3203, %v3215, 2147483647
  %v3217 = vand.u32 %v3216, 65535
  %v3218 = vshra.s32 %v3216, 16
  %v3219 = vcvt.s32.f32 %v3217
  %v3220 = vcvt.s32.f32 %v3218
  %3221 = vmin.xlane.f32.xlu0 %v3220
  %v3222 = vpop.xlane.xlu0 %3221
  %vm3223 = vcmp.eq.f32.partialorder %v3220, %v3222
  %v3224 = vsel %vm3223, %v3219, inf
  %3225 = vmin.xlane.f32.xlu0 %v3224
  %v3226 = vpop.xlane.xlu0 %3225
  %v3227 = vcvt.f32.s32 %v3226
  %v3228 = vcvt.f32.s32 %v3222
  %v3229 = vshll.u32 %v3228, 16
  %v3230 = vadd.s32 %v3229, %v3227
  %vm3231 = vcmp.eq.s32.totalorder %v18, 0
  %v3232 = vsel %vm3231, %v3230, 0
  %v3233 = vsel %vm3231, %v3213, 0.0
  %vm3234 = vcmp.eq.s32.totalorder %v18, %v3230
  %v3235 = vsel %vm3234, 1, 0
  %v3236 = vcvt.s32.f32 %v3235
  %v3237 = vpack.c.bf16 %v3236, %v3236
  %3238 = vrot.lane.b32.xlu0 %v2863, 32
  %v3239 = vpop.permute.xlu0 %3238
  %v3242 = vsel %vm37, %v3237, %v3239
  %v3243 = vsel %vm2791, %v3242, 0
  %3245 = vmatprep.subr.bf16.mxu0 0
  %3246 = vmatpush1.bf16.msra.mxu0 0
  %3247 = vmatprep.subr.bf16.mxu0 0
  %3248 = vmatpush1.bf16.msra.mxu0 0
  %3249 = vmatprep.subr.bf16.mxu0 0
  %3250 = vmatpush1.bf16.msra.mxu0 %v2784
  %3251 = vmatprep.subr.bf16.mxu0 0
  %3252 = vmatpush1.bf16.msra.mxu0 %v2783
  %3253 = vmatprep.subr.bf16.mxu0 0
  %3254 = vmatpush1.bf16.msra.mxu0 %v2782
  %3255 = vmatprep.subr.bf16.mxu0 0
  %3256 = vmatpush1.bf16.msra.mxu0 %v2781
  %3257 = vmatprep.subr.bf16.mxu0 0
  %3258 = vmatpush1.bf16.msra.mxu0 %v2780
  %3259 = vmatprep.subr.bf16.mxu0 0
  %3260 = vmatpush1.bf16.msra.mxu0 %v2779
  %3261 = vmatprep.subr.bf16.mxu0 0
  %3262 = vmatpush2.bf16.msra.mxu0 0
  %3263 = vmatprep.subr.bf16.mxu0 0
  %3264 = vmatpush2.bf16.msra.mxu0 0
  %3265 = vmatprep.subr.bf16.mxu0 0
  %3266 = vmatpush2.bf16.msra.mxu0 0
  %3267 = vmatprep.subr.bf16.mxu0 0
  %3268 = vmatpush2.bf16.msra.mxu0 0
  %3269 = vmatprep.subr.bf16.mxu0 0
  %3270 = vmatpush2.bf16.msra.mxu0 0
  %3271 = vmatprep.subr.bf16.mxu0 0
  %3272 = vmatpush2.bf16.msra.mxu0 0
  %3273 = vmatprep.subr.bf16.mxu0 0
  %3274 = vmatpush2.bf16.msra.mxu0 0
  %3275 = vmatprep.subr.bf16.mxu0 0
  %3276 = vmatpush2.bf16.msra.mxu0 0
  %3277 = vmatprep.mubr.bf16.mxu0 0
  %3278 = vmatmul.mubr.bf16.gmra.mxu0 %v3243
  %v3279 = vpop.f32.mrf.mxu0
  %v3280 = vadd.f32 %v2754, %v3279
  %v3281 = vpop.f32.mrf.mxu0
  %v3282 = vpop.f32.mrf.mxu0
  %v3283 = vpop.f32.mrf.mxu0
  %3284 = vdwg.mxu0
  %v3285 = vxor.u32 %v3280, 2147483648
  %v3286 = vmul.f32 %v3285, 1.442695
  %v3287 = vpow.pop %v3286
  %v3288 = vadd.f32 %v3287, 1.0
  %v3289 = vrcp.pop %v3288
  %v3290 = vmul.f32 1.0, %v3289
  %3292 = vrot.lane.b32.xlu0 %v3280, 32
  %v3293 = vpop.permute.xlu0 %3292
  %v3295 = vmul.f32 %v3290, %v3293
  %3297 = vrot.lane.b32.xlu0 %v3295, 64
  %v3298 = vpop.permute.xlu0 %3297
  %v3300 = vadd.f32 %v3280, %v3298
  %v3301 = vtanh.pop %v3300
  %v3302 = vsub.f32 1.0, %v3290
  %3304 = vrot.lane.b32.xlu0 %v3301, 96
  %v3305 = vpop.permute.xlu0 %3304
  %v3307 = vmul.f32 %v3302, %v3305
  %v3308 = vmul.f32 %v3290, %v2862
  %v3309 = vadd.f32 %v3307, %v3308
  %v3310 = vpack.c.bf16 %v3309, %v3309
  %3312 = vrot.lane.b32.xlu0 %v3310, 96
  %v3313 = vpop.permute.xlu0 %3312
  %v3316 = vsel %vm2685, %v3313, %v2975
  %v3317 = vsel %vm37, %v3316, 0
  %3319 = vmatprep.subr.bf16.mxu0 0
  %3320 = vmatpush1.bf16.msra.mxu0 0
  %3321 = vmatprep.subr.bf16.mxu0 0
  %3322 = vmatpush1.bf16.msra.mxu0 0
  %3323 = vmatprep.subr.bf16.mxu0 0
  %3324 = vmatpush1.bf16.msra.mxu0 0
  %3325 = vmatprep.subr.bf16.mxu0 0
  %3326 = vmatpush1.bf16.msra.mxu0 0
  %3327 = vmatprep.subr.bf16.mxu0 0
  %3328 = vmatpush1.bf16.msra.mxu0 %v2900
  %3329 = vmatprep.subr.bf16.mxu0 0
  %3330 = vmatpush1.bf16.msra.mxu0 %v2899
  %3331 = vmatprep.subr.bf16.mxu0 0
  %3332 = vmatpush1.bf16.msra.mxu0 %v2898
  %3333 = vmatprep.subr.bf16.mxu0 0
  %3334 = vmatpush1.bf16.msra.mxu0 %v2897
  %3335 = vmatprep.subr.bf16.mxu0 0
  %3336 = vmatpush2.bf16.msra.mxu0 0
  %3337 = vmatprep.subr.bf16.mxu0 0
  %3338 = vmatpush2.bf16.msra.mxu0 0
  %3339 = vmatprep.subr.bf16.mxu0 0
  %3340 = vmatpush2.bf16.msra.mxu0 0
  %3341 = vmatprep.subr.bf16.mxu0 0
  %3342 = vmatpush2.bf16.msra.mxu0 0
  %3343 = vmatprep.subr.bf16.mxu0 0
  %3344 = vmatpush2.bf16.msra.mxu0 0
  %3345 = vmatprep.subr.bf16.mxu0 0
  %3346 = vmatpush2.bf16.msra.mxu0 0
  %3347 = vmatprep.subr.bf16.mxu0 0
  %3348 = vmatpush2.bf16.msra.mxu0 0
  %3349 = vmatprep.subr.bf16.mxu0 0
  %3350 = vmatpush2.bf16.msra.mxu0 0
  %3351 = vmatprep.mubr.bf16.mxu0 0
  %3352 = vmatmul.mubr.bf16.gmra.mxu0 %v3317
  %v3353 = vpop.f32.mrf.mxu0
  %v3354 = vadd.f32 %v2880, %v3353
  %v3355 = vpop.f32.mrf.mxu0
  %v3356 = vpop.f32.mrf.mxu0
  %v3357 = vpop.f32.mrf.mxu0
  %3358 = vdwg.mxu0
  %v3359 = vxor.u32 %v3354, 2147483648
  %v3360 = vmul.f32 %v3359, 1.442695
  %v3361 = vpow.pop %v3360
  %v3362 = vadd.f32 %v3361, 1.0
  %v3363 = vrcp.pop %v3362
  %v3364 = vmul.f32 1.0, %v3363
  %3366 = vrot.lane.b32.xlu0 %v3354, 32
  %v3367 = vpop.permute.xlu0 %3366
  %v3369 = vmul.f32 %v3364, %v3367
  %3371 = vrot.lane.b32.xlu0 %v3369, 64
  %v3372 = vpop.permute.xlu0 %3371
  %v3374 = vadd.f32 %v3354, %v3372
  %v3375 = vtanh.pop %v3374
  %v3376 = vsub.f32 1.0, %v3364
  %3378 = vrot.lane.b32.xlu0 %v3375, 96
  %v3379 = vpop.permute.xlu0 %3378
  %v3381 = vmul.f32 %v3376, %v3379
  %v3382 = vmul.f32 %v3364, %v2974
  %v3383 = vadd.f32 %v3381, %v3382
  %v3384 = vpack.c.bf16 %v3383, %v3383
  %3386 = vrot.lane.b32.xlu0 %v3384, 96
  %v3387 = vpop.permute.xlu0 %3386
  %v3389 = vsel %vm2685, %v3387, 0
  %3391 = vmatprep.subr.bf16.mxu0 0
  %3392 = vmatpush1.bf16.msra.mxu0 0
  %3393 = vmatprep.subr.bf16.mxu0 0
  %3394 = vmatpush1.bf16.msra.mxu0 0
  %3395 = vmatprep.subr.bf16.mxu0 0
  %3396 = vmatpush1.bf16.msra.mxu0 0
  %3397 = vmatprep.subr.bf16.mxu0 0
  %3398 = vmatpush1.bf16.msra.mxu0 0
  %3399 = vmatprep.subr.bf16.mxu0 0
  %3400 = vmatpush1.bf16.msra.mxu0 0
  %3401 = vmatprep.subr.bf16.mxu0 0
  %3402 = vmatpush1.bf16.msra.mxu0 0
  %3403 = vmatprep.subr.bf16.mxu0 0
  %3404 = vmatpush1.bf16.msra.mxu0 %v2667
  %3405 = vmatprep.subr.bf16.mxu0 0
  %3406 = vmatpush1.bf16.msra.mxu0 %v2666
  %3407 = vmatprep.subr.bf16.mxu0 0
  %3408 = vmatpush2.bf16.msra.mxu0 0
  %3409 = vmatprep.subr.bf16.mxu0 0
  %3410 = vmatpush2.bf16.msra.mxu0 0
  %3411 = vmatprep.subr.bf16.mxu0 0
  %3412 = vmatpush2.bf16.msra.mxu0 0
  %3413 = vmatprep.subr.bf16.mxu0 0
  %3414 = vmatpush2.bf16.msra.mxu0 0
  %3415 = vmatprep.subr.bf16.mxu0 0
  %3416 = vmatpush2.bf16.msra.mxu0 0
  %3417 = vmatprep.subr.bf16.mxu0 0
  %3418 = vmatpush2.bf16.msra.mxu0 0
  %3419 = vmatprep.subr.bf16.mxu0 0
  %3420 = vmatpush2.bf16.msra.mxu0 0
  %3421 = vmatprep.subr.bf16.mxu0 0
  %3422 = vmatpush2.bf16.msra.mxu0 0
  %3423 = vmatprep.mubr.bf16.mxu0 0
  %3424 = vmatmul.mubr.bf16.gmra.mxu0 %v3389
  %v3425 = vpop.f32.mrf.mxu0
  %v3426 = vadd.f32 0.0, %v3425
  %v3427 = vpop.f32.mrf.mxu0
  %v3428 = vpop.f32.mrf.mxu0
  %v3429 = vpop.f32.mrf.mxu0
  %3430 = vdwg.mxu0
  %v3431 = vsel %vm3022, %v3426, -inf
  %3432 = vmax.xlane.f32.xlu0 %v3431
  %v3433 = vpop.xlane.xlu0 %3432
  %v3434 = vsub.f32 %v3426, %v3433
  %v3435 = vmul.f32 %v3434, 1.442695
  %v3436 = vpow.pop %v3435
  %v3437 = vsel %vm3022, %v3436, 0.0
  %3438 = vadd.xlane.f32.xlu0 %v3437
  %v3439 = vpop.xlane.xlu0 %3438
  %v3440 = vrcp.pop %v3439
  %v3441 = vpack.c.bf16 %v3436, %v3436
  %v3443 = vsel %vm3034, %v3441, 0
  %3445 = vmatprep.subr.bf16.mxu0 0
  %3446 = vmatpush1.bf16.msra.mxu0 0
  %3447 = vmatprep.subr.bf16.mxu0 0
  %3448 = vmatpush1.bf16.msra.mxu0 0
  %3449 = vmatprep.subr.bf16.mxu0 0
  %3450 = vmatpush1.bf16.msra.mxu0 0
  %3451 = vmatprep.subr.bf16.mxu0 0
  %3452 = vmatpush1.bf16.msra.mxu0 0
  %3453 = vmatprep.subr.bf16.mxu0 0
  %3454 = vmatpush1.bf16.msra.mxu0 0
  %3455 = vmatprep.subr.bf16.mxu0 0
  %3456 = vmatpush1.bf16.msra.mxu0 0
  %3457 = vmatprep.subr.bf16.mxu0 0
  %3458 = vmatpush1.bf16.msra.mxu0 0
  %3459 = vmatprep.subr.bf16.mxu0 0
  %3460 = vmatpush1.bf16.msra.mxu0 %v3040
  %3461 = vmatprep.subr.bf16.mxu0 0
  %3462 = vmatpush2.bf16.msra.mxu0 0
  %3463 = vmatprep.subr.bf16.mxu0 0
  %3464 = vmatpush2.bf16.msra.mxu0 0
  %3465 = vmatprep.subr.bf16.mxu0 0
  %3466 = vmatpush2.bf16.msra.mxu0 0
  %3467 = vmatprep.subr.bf16.mxu0 0
  %3468 = vmatpush2.bf16.msra.mxu0 0
  %3469 = vmatprep.subr.bf16.mxu0 0
  %3470 = vmatpush2.bf16.msra.mxu0 0
  %3471 = vmatprep.subr.bf16.mxu0 0
  %3472 = vmatpush2.bf16.msra.mxu0 0
  %3473 = vmatprep.subr.bf16.mxu0 0
  %3474 = vmatpush2.bf16.msra.mxu0 0
  %3475 = vmatprep.subr.bf16.mxu0 0
  %3476 = vmatpush2.bf16.msra.mxu0 0
  %3477 = vmatprep.mubr.bf16.mxu0 0
  %3478 = vmatmul.mubr.bf16.gmra.mxu0 %v3443
  %v3479 = vpop.f32.mrf.mxu0
  %v3480 = vadd.f32 0.0, %v3479
  %v3481 = vpop.f32.mrf.mxu0
  %v3482 = vpop.f32.mrf.mxu0
  %v3483 = vpop.f32.mrf.mxu0
  %3484 = vdwg.mxu0
  %v3485 = vmul.f32 %v3480, %v3440
  %3486 = vmatprep.subr.bf16.mxu0 0
  %3487 = vmatpush1.bf16.msra.mxu0 0
  %3488 = vmatprep.subr.bf16.mxu0 0
  %3489 = vmatpush1.bf16.msra.mxu0 0
  %3490 = vmatprep.subr.bf16.mxu0 0
  %3491 = vmatpush1.bf16.msra.mxu0 0
  %3492 = vmatprep.subr.bf16.mxu0 0
  %3493 = vmatpush1.bf16.msra.mxu0 0
  %3494 = vmatprep.subr.bf16.mxu0 0
  %3495 = vmatpush1.bf16.msra.mxu0 0
  %3496 = vmatprep.subr.bf16.mxu0 0
  %3497 = vmatpush1.bf16.msra.mxu0 0
  %3498 = vmatprep.subr.bf16.mxu0 0
  %3499 = vmatpush1.bf16.msra.mxu0 %v3096
  %3500 = vmatprep.subr.bf16.mxu0 0
  %3501 = vmatpush1.bf16.msra.mxu0 %v3095
  %3502 = vmatprep.subr.bf16.mxu0 0
  %3503 = vmatpush2.bf16.msra.mxu0 0
  %3504 = vmatprep.subr.bf16.mxu0 0
  %3505 = vmatpush2.bf16.msra.mxu0 0
  %3506 = vmatprep.subr.bf16.mxu0 0
  %3507 = vmatpush2.bf16.msra.mxu0 0
  %3508 = vmatprep.subr.bf16.mxu0 0
  %3509 = vmatpush2.bf16.msra.mxu0 0
  %3510 = vmatprep.subr.bf16.mxu0 0
  %3511 = vmatpush2.bf16.msra.mxu0 0
  %3512 = vmatprep.subr.bf16.mxu0 0
  %3513 = vmatpush2.bf16.msra.mxu0 0
  %3514 = vmatprep.subr.bf16.mxu0 0
  %3515 = vmatpush2.bf16.msra.mxu0 0
  %3516 = vmatprep.subr.bf16.mxu0 0
  %3517 = vmatpush2.bf16.msra.mxu0 0
  %3518 = vmatprep.mubr.bf16.mxu0 0
  %3519 = vmatmul.mubr.bf16.gmra.mxu0 %v3389
  %v3520 = vpop.f32.mrf.mxu0
  %v3521 = vadd.f32 %v3485, %v3520
  %v3522 = vpop.f32.mrf.mxu0
  %v3523 = vpop.f32.mrf.mxu0
  %v3524 = vpop.f32.mrf.mxu0
  %3525 = vdwg.mxu0
  %v3526 = vadd.f32 %v3521, %v3139
  %v3527 = vtanh.pop %v3526
  %v3528 = vpack.c.bf16 %v3527, %v3527
  %v3530 = vsel %vm2685, %v3528, 0
  %3532 = vmatprep.subr.bf16.mxu0 0
  %3533 = vmatpush1.bf16.msra.mxu0 0
  %3534 = vmatprep.subr.bf16.mxu0 0
  %3535 = vmatpush1.bf16.msra.mxu0 0
  %3536 = vmatprep.subr.bf16.mxu0 0
  %3537 = vmatpush1.bf16.msra.mxu0 0
  %3538 = vmatprep.subr.bf16.mxu0 0
  %3539 = vmatpush1.bf16.msra.mxu0 0
  %3540 = vmatprep.subr.bf16.mxu0 0
  %3541 = vmatpush1.bf16.msra.mxu0 0
  %3542 = vmatprep.subr.bf16.mxu0 0
  %3543 = vmatpush1.bf16.msra.mxu0 0
  %3544 = vmatprep.subr.bf16.mxu0 0
  %3545 = vmatpush1.bf16.msra.mxu0 %v3157
  %3546 = vmatprep.subr.bf16.mxu0 0
  %3547 = vmatpush1.bf16.msra.mxu0 %v3156
  %3548 = vmatprep.subr.bf16.mxu0 0
  %3549 = vmatpush2.bf16.msra.mxu0 0
  %3550 = vmatprep.subr.bf16.mxu0 0
  %3551 = vmatpush2.bf16.msra.mxu0 0
  %3552 = vmatprep.subr.bf16.mxu0 0
  %3553 = vmatpush2.bf16.msra.mxu0 0
  %3554 = vmatprep.subr.bf16.mxu0 0
  %3555 = vmatpush2.bf16.msra.mxu0 0
  %3556 = vmatprep.subr.bf16.mxu0 0
  %3557 = vmatpush2.bf16.msra.mxu0 0
  %3558 = vmatprep.subr.bf16.mxu0 0
  %3559 = vmatpush2.bf16.msra.mxu0 0
  %3560 = vmatprep.subr.bf16.mxu0 0
  %3561 = vmatpush2.bf16.msra.mxu0 0
  %3562 = vmatprep.subr.bf16.mxu0 0
  %3563 = vmatpush2.bf16.msra.mxu0 0
  %3564 = vmatprep.mubr.bf16.mxu0 0
  %3565 = vmatmul.mubr.bf16.gmra.mxu0 %v3530
  %v3566 = vpop.f32.mrf.mxu0
  %v3567 = vadd.f32 %v3147, %v3566
  %v3568 = vpop.f32.mrf.mxu0
  %v3569 = vpop.f32.mrf.mxu0
  %v3570 = vpop.f32.mrf.mxu0
  %3571 = vdwg.mxu0
  %v3572 = vsel %vm3203, %v3567, -inf
  %3573 = vmax.xlane.f32.xlu0 %v3572
  %v3574 = vpop.xlane.xlu0 %3573
  %v3575 = vsub.f32 %v3567, %v3574
  %v3576 = vmul.f32 %v3575, 1.442695
  %v3577 = vpow.pop %v3576
  %v3578 = vsel %vm3203, %v3577, 0.0
  %3579 = vadd.xlane.f32.xlu0 %v3578
  %v3580 = vpop.xlane.xlu0 %3579
  %v3581 = vrcp.pop %v3580
  %vm3582 = vcmp.ge.f32.partialorder %v3567, %v3574
  %v3583 = vsel %vm3582, %v18, 64
  %v3584 = vsel %vm3203, %v3583, 2147483647
  %v3585 = vand.u32 %v3584, 65535
  %v3586 = vshra.s32 %v3584, 16
  %v3587 = vcvt.s32.f32 %v3585
  %v3588 = vcvt.s32.f32 %v3586
  %3589 = vmin.xlane.f32.xlu0 %v3588
  %v3590 = vpop.xlane.xlu0 %3589
  %vm3591 = vcmp.eq.f32.partialorder %v3588, %v3590
  %v3592 = vsel %vm3591, %v3587, inf
  %3593 = vmin.xlane.f32.xlu0 %v3592
  %v3594 = vpop.xlane.xlu0 %3593
  %v3595 = vcvt.f32.s32 %v3594
  %v3596 = vcvt.f32.s32 %v3590
  %v3597 = vshll.u32 %v3596, 16
  %v3598 = vadd.s32 %v3597, %v3595
  %v3599 = vsel %vm2730, %v3598, %v3232
  %v3600 = vsel %vm2730, %v3581, %v3233
  %vm3601 = vcmp.eq.s32.totalorder %v18, %v3598
  %v3602 = vsel %vm3601, 1, 0
  %v3603 = vcvt.s32.f32 %v3602
  %v3604 = vpack.c.bf16 %v3603, %v3603
  %3605 = vrot.lane.b32.xlu0 %v3310, 32
  %v3606 = vpop.permute.xlu0 %3605
  %v3609 = vsel %vm37, %v3604, %v3606
  %v3610 = vsel %vm2791, %v3609, 0
  %3612 = vmatprep.subr.bf16.mxu0 0
  %3613 = vmatpush1.bf16.msra.mxu0 0
  %3614 = vmatprep.subr.bf16.mxu0 0
  %3615 = vmatpush1.bf16.msra.mxu0 0
  %3616 = vmatprep.subr.bf16.mxu0 0
  %3617 = vmatpush1.bf16.msra.mxu0 %v2784
  %3618 = vmatprep.subr.bf16.mxu0 0
  %3619 = vmatpush1.bf16.msra.mxu0 %v2783
  %3620 = vmatprep.subr.bf16.mxu0 0
  %3621 = vmatpush1.bf16.msra.mxu0 %v2782
  %3622 = vmatprep.subr.bf16.mxu0 0
  %3623 = vmatpush1.bf16.msra.mxu0 %v2781
  %3624 = vmatprep.subr.bf16.mxu0 0
  %3625 = vmatpush1.bf16.msra.mxu0 %v2780
  %3626 = vmatprep.subr.bf16.mxu0 0
  %3627 = vmatpush1.bf16.msra.mxu0 %v2779
  %3628 = vmatprep.subr.bf16.mxu0 0
  %3629 = vmatpush2.bf16.msra.mxu0 0
  %3630 = vmatprep.subr.bf16.mxu0 0
  %3631 = vmatpush2.bf16.msra.mxu0 0
  %3632 = vmatprep.subr.bf16.mxu0 0
  %3633 = vmatpush2.bf16.msra.mxu0 0
  %3634 = vmatprep.subr.bf16.mxu0 0
  %3635 = vmatpush2.bf16.msra.mxu0 0
  %3636 = vmatprep.subr.bf16.mxu0 0
  %3637 = vmatpush2.bf16.msra.mxu0 0
  %3638 = vmatprep.subr.bf16.mxu0 0
  %3639 = vmatpush2.bf16.msra.mxu0 0
  %3640 = vmatprep.subr.bf16.mxu0 0
  %3641 = vmatpush2.bf16.msra.mxu0 0
  %3642 = vmatprep.subr.bf16.mxu0 0
  %3643 = vmatpush2.bf16.msra.mxu0 0
  %3644 = vmatprep.mubr.bf16.mxu0 0
  %3645 = vmatmul.mubr.bf16.gmra.mxu0 %v3610
  %v3646 = vpop.f32.mrf.mxu0
  %v3647 = vadd.f32 %v2754, %v3646
  %v3648 = vpop.f32.mrf.mxu0
  %v3649 = vpop.f32.mrf.mxu0
  %v3650 = vpop.f32.mrf.mxu0
  %3651 = vdwg.mxu0
  %v3652 = vxor.u32 %v3647, 2147483648
  %v3653 = vmul.f32 %v3652, 1.442695
  %v3654 = vpow.pop %v3653
  %v3655 = vadd.f32 %v3654, 1.0
  %v3656 = vrcp.pop %v3655
  %v3657 = vmul.f32 1.0, %v3656
  %3659 = vrot.lane.b32.xlu0 %v3647, 32
  %v3660 = vpop.permute.xlu0 %3659
  %v3662 = vmul.f32 %v3657, %v3660
  %3664 = vrot.lane.b32.xlu0 %v3662, 64
  %v3665 = vpop.permute.xlu0 %3664
  %v3667 = vadd.f32 %v3647, %v3665
  %v3668 = vtanh.pop %v3667
  %v3669 = vsub.f32 1.0, %v3657
  %3671 = vrot.lane.b32.xlu0 %v3668, 96
  %v3672 = vpop.permute.xlu0 %3671
  %v3674 = vmul.f32 %v3669, %v3672
  %v3675 = vmul.f32 %v3657, %v3309
  %v3676 = vadd.f32 %v3674, %v3675
  %v3677 = vpack.c.bf16 %v3676, %v3676
  %3679 = vrot.lane.b32.xlu0 %v3677, 96
  %v3680 = vpop.permute.xlu0 %3679
  %v3683 = vsel %vm2685, %v3680, %v3384
  %v3684 = vsel %vm37, %v3683, 0
  %3686 = vmatprep.subr.bf16.mxu0 0
  %3687 = vmatpush1.bf16.msra.mxu0 0
  %3688 = vmatprep.subr.bf16.mxu0 0
  %3689 = vmatpush1.bf16.msra.mxu0 0
  %3690 = vmatprep.subr.bf16.mxu0 0
  %3691 = vmatpush1.bf16.msra.mxu0 0
  %3692 = vmatprep.subr.bf16.mxu0 0
  %3693 = vmatpush1.bf16.msra.mxu0 0
  %3694 = vmatprep.subr.bf16.mxu0 0
  %3695 = vmatpush1.bf16.msra.mxu0 %v2900
  %3696 = vmatprep.subr.bf16.mxu0 0
  %3697 = vmatpush1.bf16.msra.mxu0 %v2899
  %3698 = vmatprep.subr.bf16.mxu0 0
  %3699 = vmatpush1.bf16.msra.mxu0 %v2898
  %3700 = vmatprep.subr.bf16.mxu0 0
  %3701 = vmatpush1.bf16.msra.mxu0 %v2897
  %3702 = vmatprep.subr.bf16.mxu0 0
  %3703 = vmatpush2.bf16.msra.mxu0 0
  %3704 = vmatprep.subr.bf16.mxu0 0
  %3705 = vmatpush2.bf16.msra.mxu0 0
  %3706 = vmatprep.subr.bf16.mxu0 0
  %3707 = vmatpush2.bf16.msra.mxu0 0
  %3708 = vmatprep.subr.bf16.mxu0 0
  %3709 = vmatpush2.bf16.msra.mxu0 0
  %3710 = vmatprep.subr.bf16.mxu0 0
  %3711 = vmatpush2.bf16.msra.mxu0 0
  %3712 = vmatprep.subr.bf16.mxu0 0
  %3713 = vmatpush2.bf16.msra.mxu0 0
  %3714 = vmatprep.subr.bf16.mxu0 0
  %3715 = vmatpush2.bf16.msra.mxu0 0
  %3716 = vmatprep.subr.bf16.mxu0 0
  %3717 = vmatpush2.bf16.msra.mxu0 0
  %3718 = vmatprep.mubr.bf16.mxu0 0
  %3719 = vmatmul.mubr.bf16.gmra.mxu0 %v3684
  %v3720 = vpop.f32.mrf.mxu0
  %v3721 = vadd.f32 %v2880, %v3720
  %v3722 = vpop.f32.mrf.mxu0
  %v3723 = vpop.f32.mrf.mxu0
  %v3724 = vpop.f32.mrf.mxu0
  %3725 = vdwg.mxu0
  %v3726 = vxor.u32 %v3721, 2147483648
  %v3727 = vmul.f32 %v3726, 1.442695
  %v3728 = vpow.pop %v3727
  %v3729 = vadd.f32 %v3728, 1.0
  %v3730 = vrcp.pop %v3729
  %v3731 = vmul.f32 1.0, %v3730
  %3733 = vrot.lane.b32.xlu0 %v3721, 32
  %v3734 = vpop.permute.xlu0 %3733
  %v3736 = vmul.f32 %v3731, %v3734
  %3738 = vrot.lane.b32.xlu0 %v3736, 64
  %v3739 = vpop.permute.xlu0 %3738
  %v3741 = vadd.f32 %v3721, %v3739
  %v3742 = vtanh.pop %v3741
  %v3743 = vsub.f32 1.0, %v3731
  %3745 = vrot.lane.b32.xlu0 %v3742, 96
  %v3746 = vpop.permute.xlu0 %3745
  %v3748 = vmul.f32 %v3743, %v3746
  %v3749 = vmul.f32 %v3731, %v3383
  %v3750 = vadd.f32 %v3748, %v3749
  %v3751 = vpack.c.bf16 %v3750, %v3750
  %3753 = vrot.lane.b32.xlu0 %v3751, 96
  %v3754 = vpop.permute.xlu0 %3753
  %v3756 = vsel %vm2685, %v3754, 0
  %3758 = vmatprep.subr.bf16.mxu0 0
  %3759 = vmatpush1.bf16.msra.mxu0 0
  %3760 = vmatprep.subr.bf16.mxu0 0
  %3761 = vmatpush1.bf16.msra.mxu0 0
  %3762 = vmatprep.subr.bf16.mxu0 0
  %3763 = vmatpush1.bf16.msra.mxu0 0
  %3764 = vmatprep.subr.bf16.mxu0 0
  %3765 = vmatpush1.bf16.msra.mxu0 0
  %3766 = vmatprep.subr.bf16.mxu0 0
  %3767 = vmatpush1.bf16.msra.mxu0 0
  %3768 = vmatprep.subr.bf16.mxu0 0
  %3769 = vmatpush1.bf16.msra.mxu0 0
  %3770 = vmatprep.subr.bf16.mxu0 0
  %3771 = vmatpush1.bf16.msra.mxu0 %v2667
  %3772 = vmatprep.subr.bf16.mxu0 0
  %3773 = vmatpush1.bf16.msra.mxu0 %v2666
  %3774 = vmatprep.subr.bf16.mxu0 0
  %3775 = vmatpush2.bf16.msra.mxu0 0
  %3776 = vmatprep.subr.bf16.mxu0 0
  %3777 = vmatpush2.bf16.msra.mxu0 0
  %3778 = vmatprep.subr.bf16.mxu0 0
  %3779 = vmatpush2.bf16.msra.mxu0 0
  %3780 = vmatprep.subr.bf16.mxu0 0
  %3781 = vmatpush2.bf16.msra.mxu0 0
  %3782 = vmatprep.subr.bf16.mxu0 0
  %3783 = vmatpush2.bf16.msra.mxu0 0
  %3784 = vmatprep.subr.bf16.mxu0 0
  %3785 = vmatpush2.bf16.msra.mxu0 0
  %3786 = vmatprep.subr.bf16.mxu0 0
  %3787 = vmatpush2.bf16.msra.mxu0 0
  %3788 = vmatprep.subr.bf16.mxu0 0
  %3789 = vmatpush2.bf16.msra.mxu0 0
  %3790 = vmatprep.mubr.bf16.mxu0 0
  %3791 = vmatmul.mubr.bf16.gmra.mxu0 %v3756
  %v3792 = vpop.f32.mrf.mxu0
  %v3793 = vadd.f32 0.0, %v3792
  %v3794 = vpop.f32.mrf.mxu0
  %v3795 = vpop.f32.mrf.mxu0
  %v3796 = vpop.f32.mrf.mxu0
  %3797 = vdwg.mxu0
  %v3798 = vsel %vm3022, %v3793, -inf
  %3799 = vmax.xlane.f32.xlu0 %v3798
  %v3800 = vpop.xlane.xlu0 %3799
  %v3801 = vsub.f32 %v3793, %v3800
  %v3802 = vmul.f32 %v3801, 1.442695
  %v3803 = vpow.pop %v3802
  %v3804 = vsel %vm3022, %v3803, 0.0
  %3805 = vadd.xlane.f32.xlu0 %v3804
  %v3806 = vpop.xlane.xlu0 %3805
  %v3807 = vrcp.pop %v3806
  %v3808 = vpack.c.bf16 %v3803, %v3803
  %v3810 = vsel %vm3034, %v3808, 0
  %3812 = vmatprep.subr.bf16.mxu0 0
  %3813 = vmatpush1.bf16.msra.mxu0 0
  %3814 = vmatprep.subr.bf16.mxu0 0
  %3815 = vmatpush1.bf16.msra.mxu0 0
  %3816 = vmatprep.subr.bf16.mxu0 0
  %3817 = vmatpush1.bf16.msra.mxu0 0
  %3818 = vmatprep.subr.bf16.mxu0 0
  %3819 = vmatpush1.bf16.msra.mxu0 0
  %3820 = vmatprep.subr.bf16.mxu0 0
  %3821 = vmatpush1.bf16.msra.mxu0 0
  %3822 = vmatprep.subr.bf16.mxu0 0
  %3823 = vmatpush1.bf16.msra.mxu0 0
  %3824 = vmatprep.subr.bf16.mxu0 0
  %3825 = vmatpush1.bf16.msra.mxu0 0
  %3826 = vmatprep.subr.bf16.mxu0 0
  %3827 = vmatpush1.bf16.msra.mxu0 %v3040
  %3828 = vmatprep.subr.bf16.mxu0 0
  %3829 = vmatpush2.bf16.msra.mxu0 0
  %3830 = vmatprep.subr.bf16.mxu0 0
  %3831 = vmatpush2.bf16.msra.mxu0 0
  %3832 = vmatprep.subr.bf16.mxu0 0
  %3833 = vmatpush2.bf16.msra.mxu0 0
  %3834 = vmatprep.subr.bf16.mxu0 0
  %3835 = vmatpush2.bf16.msra.mxu0 0
  %3836 = vmatprep.subr.bf16.mxu0 0
  %3837 = vmatpush2.bf16.msra.mxu0 0
  %3838 = vmatprep.subr.bf16.mxu0 0
  %3839 = vmatpush2.bf16.msra.mxu0 0
  %3840 = vmatprep.subr.bf16.mxu0 0
  %3841 = vmatpush2.bf16.msra.mxu0 0
  %3842 = vmatprep.subr.bf16.mxu0 0
  %3843 = vmatpush2.bf16.msra.mxu0 0
  %3844 = vmatprep.mubr.bf16.mxu0 0
  %3845 = vmatmul.mubr.bf16.gmra.mxu0 %v3810
  %v3846 = vpop.f32.mrf.mxu0
  %v3847 = vadd.f32 0.0, %v3846
  %v3848 = vpop.f32.mrf.mxu0
  %v3849 = vpop.f32.mrf.mxu0
  %v3850 = vpop.f32.mrf.mxu0
  %3851 = vdwg.mxu0
  %v3852 = vmul.f32 %v3847, %v3807
  %3853 = vmatprep.subr.bf16.mxu0 0
  %3854 = vmatpush1.bf16.msra.mxu0 0
  %3855 = vmatprep.subr.bf16.mxu0 0
  %3856 = vmatpush1.bf16.msra.mxu0 0
  %3857 = vmatprep.subr.bf16.mxu0 0
  %3858 = vmatpush1.bf16.msra.mxu0 0
  %3859 = vmatprep.subr.bf16.mxu0 0
  %3860 = vmatpush1.bf16.msra.mxu0 0
  %3861 = vmatprep.subr.bf16.mxu0 0
  %3862 = vmatpush1.bf16.msra.mxu0 0
  %3863 = vmatprep.subr.bf16.mxu0 0
  %3864 = vmatpush1.bf16.msra.mxu0 0
  %3865 = vmatprep.subr.bf16.mxu0 0
  %3866 = vmatpush1.bf16.msra.mxu0 %v3096
  %3867 = vmatprep.subr.bf16.mxu0 0
  %3868 = vmatpush1.bf16.msra.mxu0 %v3095
  %3869 = vmatprep.subr.bf16.mxu0 0
  %3870 = vmatpush2.bf16.msra.mxu0 0
  %3871 = vmatprep.subr.bf16.mxu0 0
  %3872 = vmatpush2.bf16.msra.mxu0 0
  %3873 = vmatprep.subr.bf16.mxu0 0
  %3874 = vmatpush2.bf16.msra.mxu0 0
  %3875 = vmatprep.subr.bf16.mxu0 0
  %3876 = vmatpush2.bf16.msra.mxu0 0
  %3877 = vmatprep.subr.bf16.mxu0 0
  %3878 = vmatpush2.bf16.msra.mxu0 0
  %3879 = vmatprep.subr.bf16.mxu0 0
  %3880 = vmatpush2.bf16.msra.mxu0 0
  %3881 = vmatprep.subr.bf16.mxu0 0
  %3882 = vmatpush2.bf16.msra.mxu0 0
  %3883 = vmatprep.subr.bf16.mxu0 0
  %3884 = vmatpush2.bf16.msra.mxu0 0
  %3885 = vmatprep.mubr.bf16.mxu0 0
  %3886 = vmatmul.mubr.bf16.gmra.mxu0 %v3756
  %v3887 = vpop.f32.mrf.mxu0
  %v3888 = vadd.f32 %v3852, %v3887
  %v3889 = vpop.f32.mrf.mxu0
  %v3890 = vpop.f32.mrf.mxu0
  %v3891 = vpop.f32.mrf.mxu0
  %3892 = vdwg.mxu0
  %v3893 = vadd.f32 %v3888, %v3139
  %v3894 = vtanh.pop %v3893
  %v3895 = vpack.c.bf16 %v3894, %v3894
  %v3897 = vsel %vm2685, %v3895, 0
  %3899 = vmatprep.subr.bf16.mxu0 0
  %3900 = vmatpush1.bf16.msra.mxu0 0
  %3901 = vmatprep.subr.bf16.mxu0 0
  %3902 = vmatpush1.bf16.msra.mxu0 0
  %3903 = vmatprep.subr.bf16.mxu0 0
  %3904 = vmatpush1.bf16.msra.mxu0 0
  %3905 = vmatprep.subr.bf16.mxu0 0
  %3906 = vmatpush1.bf16.msra.mxu0 0
  %3907 = vmatprep.subr.bf16.mxu0 0
  %3908 = vmatpush1.bf16.msra.mxu0 0
  %3909 = vmatprep.subr.bf16.mxu0 0
  %3910 = vmatpush1.bf16.msra.mxu0 0
  %3911 = vmatprep.subr.bf16.mxu0 0
  %3912 = vmatpush1.bf16.msra.mxu0 %v3157
  %3913 = vmatprep.subr.bf16.mxu0 0
  %3914 = vmatpush1.bf16.msra.mxu0 %v3156
  %3915 = vmatprep.subr.bf16.mxu0 0
  %3916 = vmatpush2.bf16.msra.mxu0 0
  %3917 = vmatprep.subr.bf16.mxu0 0
  %3918 = vmatpush2.bf16.msra.mxu0 0
  %3919 = vmatprep.subr.bf16.mxu0 0
  %3920 = vmatpush2.bf16.msra.mxu0 0
  %3921 = vmatprep.subr.bf16.mxu0 0
  %3922 = vmatpush2.bf16.msra.mxu0 0
  %3923 = vmatprep.subr.bf16.mxu0 0
  %3924 = vmatpush2.bf16.msra.mxu0 0
  %3925 = vmatprep.subr.bf16.mxu0 0
  %3926 = vmatpush2.bf16.msra.mxu0 0
  %3927 = vmatprep.subr.bf16.mxu0 0
  %3928 = vmatpush2.bf16.msra.mxu0 0
  %3929 = vmatprep.subr.bf16.mxu0 0
  %3930 = vmatpush2.bf16.msra.mxu0 0
  %3931 = vmatprep.mubr.bf16.mxu0 0
  %3932 = vmatmul.mubr.bf16.gmra.mxu0 %v3897
  %v3933 = vpop.f32.mrf.mxu0
  %v3934 = vadd.f32 %v3147, %v3933
  %v3935 = vpop.f32.mrf.mxu0
  %v3936 = vpop.f32.mrf.mxu0
  %v3937 = vpop.f32.mrf.mxu0
  %3938 = vdwg.mxu0
  %v3939 = vsel %vm3203, %v3934, -inf
  %3940 = vmax.xlane.f32.xlu0 %v3939
  %v3941 = vpop.xlane.xlu0 %3940
  %v3942 = vsub.f32 %v3934, %v3941
  %v3943 = vmul.f32 %v3942, 1.442695
  %v3944 = vpow.pop %v3943
  %v3945 = vsel %vm3203, %v3944, 0.0
  %3946 = vadd.xlane.f32.xlu0 %v3945
  %v3947 = vpop.xlane.xlu0 %3946
  %v3948 = vrcp.pop %v3947
  %vm3949 = vcmp.ge.f32.partialorder %v3934, %v3941
  %v3950 = vsel %vm3949, %v18, 64
  %v3951 = vsel %vm3203, %v3950, 2147483647
  %v3952 = vand.u32 %v3951, 65535
  %v3953 = vshra.s32 %v3951, 16
  %v3954 = vcvt.s32.f32 %v3952
  %v3955 = vcvt.s32.f32 %v3953
  %3956 = vmin.xlane.f32.xlu0 %v3955
  %v3957 = vpop.xlane.xlu0 %3956
  %vm3958 = vcmp.eq.f32.partialorder %v3955, %v3957
  %v3959 = vsel %vm3958, %v3954, inf
  %3960 = vmin.xlane.f32.xlu0 %v3959
  %v3961 = vpop.xlane.xlu0 %3960
  %v3962 = vcvt.f32.s32 %v3961
  %v3963 = vcvt.f32.s32 %v3957
  %v3964 = vshll.u32 %v3963, 16
  %v3965 = vadd.s32 %v3964, %v3962
  %vm3966 = vcmp.eq.s32.totalorder %v18, 2
  %v3967 = vsel %vm3966, %v3965, %v3599
  %v3968 = vsel %vm3966, %v3948, %v3600
  %vm3969 = vcmp.eq.s32.totalorder %v18, %v3965
  %v3970 = vsel %vm3969, 1, 0
  %v3971 = vcvt.s32.f32 %v3970
  %v3972 = vpack.c.bf16 %v3971, %v3971
  %3973 = vrot.lane.b32.xlu0 %v3677, 32
  %v3974 = vpop.permute.xlu0 %3973
  %v3977 = vsel %vm37, %v3972, %v3974
  %v3978 = vsel %vm2791, %v3977, 0
  %3980 = vmatprep.subr.bf16.mxu0 0
  %3981 = vmatpush1.bf16.msra.mxu0 0
  %3982 = vmatprep.subr.bf16.mxu0 0
  %3983 = vmatpush1.bf16.msra.mxu0 0
  %3984 = vmatprep.subr.bf16.mxu0 0
  %3985 = vmatpush1.bf16.msra.mxu0 %v2784
  %3986 = vmatprep.subr.bf16.mxu0 0
  %3987 = vmatpush1.bf16.msra.mxu0 %v2783
  %3988 = vmatprep.subr.bf16.mxu0 0
  %3989 = vmatpush1.bf16.msra.mxu0 %v2782
  %3990 = vmatprep.subr.bf16.mxu0 0
  %3991 = vmatpush1.bf16.msra.mxu0 %v2781
  %3992 = vmatprep.subr.bf16.mxu0 0
  %3993 = vmatpush1.bf16.msra.mxu0 %v2780
  %3994 = vmatprep.subr.bf16.mxu0 0
  %3995 = vmatpush1.bf16.msra.mxu0 %v2779
  %3996 = vmatprep.subr.bf16.mxu0 0
  %3997 = vmatpush2.bf16.msra.mxu0 0
  %3998 = vmatprep.subr.bf16.mxu0 0
  %3999 = vmatpush2.bf16.msra.mxu0 0
  %4000 = vmatprep.subr.bf16.mxu0 0
  %4001 = vmatpush2.bf16.msra.mxu0 0
  %4002 = vmatprep.subr.bf16.mxu0 0
  %4003 = vmatpush2.bf16.msra.mxu0 0
  %4004 = vmatprep.subr.bf16.mxu0 0
  %4005 = vmatpush2.bf16.msra.mxu0 0
  %4006 = vmatprep.subr.bf16.mxu0 0
  %4007 = vmatpush2.bf16.msra.mxu0 0
  %4008 = vmatprep.subr.bf16.mxu0 0
  %4009 = vmatpush2.bf16.msra.mxu0 0
  %4010 = vmatprep.subr.bf16.mxu0 0
  %4011 = vmatpush2.bf16.msra.mxu0 0
  %4012 = vmatprep.mubr.bf16.mxu0 0
  %4013 = vmatmul.mubr.bf16.gmra.mxu0 %v3978
  %v4014 = vpop.f32.mrf.mxu0
  %v4015 = vadd.f32 %v2754, %v4014
  %v4016 = vpop.f32.mrf.mxu0
  %v4017 = vpop.f32.mrf.mxu0
  %v4018 = vpop.f32.mrf.mxu0
  %4019 = vdwg.mxu0
  %v4020 = vxor.u32 %v4015, 2147483648
  %v4021 = vmul.f32 %v4020, 1.442695
  %v4022 = vpow.pop %v4021
  %v4023 = vadd.f32 %v4022, 1.0
  %v4024 = vrcp.pop %v4023
  %v4025 = vmul.f32 1.0, %v4024
  %4027 = vrot.lane.b32.xlu0 %v4015, 32
  %v4028 = vpop.permute.xlu0 %4027
  %v4030 = vmul.f32 %v4025, %v4028
  %4032 = vrot.lane.b32.xlu0 %v4030, 64
  %v4033 = vpop.permute.xlu0 %4032
  %v4035 = vadd.f32 %v4015, %v4033
  %v4036 = vtanh.pop %v4035
  %v4037 = vsub.f32 1.0, %v4025
  %4039 = vrot.lane.b32.xlu0 %v4036, 96
  %v4040 = vpop.permute.xlu0 %4039
  %v4042 = vmul.f32 %v4037, %v4040
  %v4043 = vmul.f32 %v4025, %v3676
  %v4044 = vadd.f32 %v4042, %v4043
  %v4045 = vpack.c.bf16 %v4044, %v4044
  %4047 = vrot.lane.b32.xlu0 %v4045, 96
  %v4048 = vpop.permute.xlu0 %4047
  %v4051 = vsel %vm2685, %v4048, %v3751
  %v4052 = vsel %vm37, %v4051, 0
  %4054 = vmatprep.subr.bf16.mxu0 0
  %4055 = vmatpush1.bf16.msra.mxu0 0
  %4056 = vmatprep.subr.bf16.mxu0 0
  %4057 = vmatpush1.bf16.msra.mxu0 0
  %4058 = vmatprep.subr.bf16.mxu0 0
  %4059 = vmatpush1.bf16.msra.mxu0 0
  %4060 = vmatprep.subr.bf16.mxu0 0
  %4061 = vmatpush1.bf16.msra.mxu0 0
  %4062 = vmatprep.subr.bf16.mxu0 0
  %4063 = vmatpush1.bf16.msra.mxu0 %v2900
  %4064 = vmatprep.subr.bf16.mxu0 0
  %4065 = vmatpush1.bf16.msra.mxu0 %v2899
  %4066 = vmatprep.subr.bf16.mxu0 0
  %4067 = vmatpush1.bf16.msra.mxu0 %v2898
  %4068 = vmatprep.subr.bf16.mxu0 0
  %4069 = vmatpush1.bf16.msra.mxu0 %v2897
  %4070 = vmatprep.subr.bf16.mxu0 0
  %4071 = vmatpush2.bf16.msra.mxu0 0
  %4072 = vmatprep.subr.bf16.mxu0 0
  %4073 = vmatpush2.bf16.msra.mxu0 0
  %4074 = vmatprep.subr.bf16.mxu0 0
  %4075 = vmatpush2.bf16.msra.mxu0 0
  %4076 = vmatprep.subr.bf16.mxu0 0
  %4077 = vmatpush2.bf16.msra.mxu0 0
  %4078 = vmatprep.subr.bf16.mxu0 0
  %4079 = vmatpush2.bf16.msra.mxu0 0
  %4080 = vmatprep.subr.bf16.mxu0 0
  %4081 = vmatpush2.bf16.msra.mxu0 0
  %4082 = vmatprep.subr.bf16.mxu0 0
  %4083 = vmatpush2.bf16.msra.mxu0 0
  %4084 = vmatprep.subr.bf16.mxu0 0
  %4085 = vmatpush2.bf16.msra.mxu0 0
  %4086 = vmatprep.mubr.bf16.mxu0 0
  %4087 = vmatmul.mubr.bf16.gmra.mxu0 %v4052
  %v4088 = vpop.f32.mrf.mxu0
  %v4089 = vadd.f32 %v2880, %v4088
  %v4090 = vpop.f32.mrf.mxu0
  %v4091 = vpop.f32.mrf.mxu0
  %v4092 = vpop.f32.mrf.mxu0
  %4093 = vdwg.mxu0
  %v4094 = vxor.u32 %v4089, 2147483648
  %v4095 = vmul.f32 %v4094, 1.442695
  %v4096 = vpow.pop %v4095
  %v4097 = vadd.f32 %v4096, 1.0
  %v4098 = vrcp.pop %v4097
  %v4099 = vmul.f32 1.0, %v4098
  %4101 = vrot.lane.b32.xlu0 %v4089, 32
  %v4102 = vpop.permute.xlu0 %4101
  %v4104 = vmul.f32 %v4099, %v4102
  %4106 = vrot.lane.b32.xlu0 %v4104, 64
  %v4107 = vpop.permute.xlu0 %4106
  %v4109 = vadd.f32 %v4089, %v4107
  %v4110 = vtanh.pop %v4109
  %v4111 = vsub.f32 1.0, %v4099
  %4113 = vrot.lane.b32.xlu0 %v4110, 96
  %v4114 = vpop.permute.xlu0 %4113
  %v4116 = vmul.f32 %v4111, %v4114
  %v4117 = vmul.f32 %v4099, %v3750
  %v4118 = vadd.f32 %v4116, %v4117
  %v4119 = vpack.c.bf16 %v4118, %v4118
  %4121 = vrot.lane.b32.xlu0 %v4119, 96
  %v4122 = vpop.permute.xlu0 %4121
  %v4124 = vsel %vm2685, %v4122, 0
  %4126 = vmatprep.subr.bf16.mxu0 0
  %4127 = vmatpush1.bf16.msra.mxu0 0
  %4128 = vmatprep.subr.bf16.mxu0 0
  %4129 = vmatpush1.bf16.msra.mxu0 0
  %4130 = vmatprep.subr.bf16.mxu0 0
  %4131 = vmatpush1.bf16.msra.mxu0 0
  %4132 = vmatprep.subr.bf16.mxu0 0
  %4133 = vmatpush1.bf16.msra.mxu0 0
  %4134 = vmatprep.subr.bf16.mxu0 0
  %4135 = vmatpush1.bf16.msra.mxu0 0
  %4136 = vmatprep.subr.bf16.mxu0 0
  %4137 = vmatpush1.bf16.msra.mxu0 0
  %4138 = vmatprep.subr.bf16.mxu0 0
  %4139 = vmatpush1.bf16.msra.mxu0 %v2667
  %4140 = vmatprep.subr.bf16.mxu0 0
  %4141 = vmatpush1.bf16.msra.mxu0 %v2666
  %4142 = vmatprep.subr.bf16.mxu0 0
  %4143 = vmatpush2.bf16.msra.mxu0 0
  %4144 = vmatprep.subr.bf16.mxu0 0
  %4145 = vmatpush2.bf16.msra.mxu0 0
  %4146 = vmatprep.subr.bf16.mxu0 0
  %4147 = vmatpush2.bf16.msra.mxu0 0
  %4148 = vmatprep.subr.bf16.mxu0 0
  %4149 = vmatpush2.bf16.msra.mxu0 0
  %4150 = vmatprep.subr.bf16.mxu0 0
  %4151 = vmatpush2.bf16.msra.mxu0 0
  %4152 = vmatprep.subr.bf16.mxu0 0
  %4153 = vmatpush2.bf16.msra.mxu0 0
  %4154 = vmatprep.subr.bf16.mxu0 0
  %4155 = vmatpush2.bf16.msra.mxu0 0
  %4156 = vmatprep.subr.bf16.mxu0 0
  %4157 = vmatpush2.bf16.msra.mxu0 0
  %4158 = vmatprep.mubr.bf16.mxu0 0
  %4159 = vmatmul.mubr.bf16.gmra.mxu0 %v4124
  %v4160 = vpop.f32.mrf.mxu0
  %v4161 = vadd.f32 0.0, %v4160
  %v4162 = vpop.f32.mrf.mxu0
  %v4163 = vpop.f32.mrf.mxu0
  %v4164 = vpop.f32.mrf.mxu0
  %4165 = vdwg.mxu0
  %v4166 = vsel %vm3022, %v4161, -inf
  %4167 = vmax.xlane.f32.xlu0 %v4166
  %v4168 = vpop.xlane.xlu0 %4167
  %v4169 = vsub.f32 %v4161, %v4168
  %v4170 = vmul.f32 %v4169, 1.442695
  %v4171 = vpow.pop %v4170
  %v4172 = vsel %vm3022, %v4171, 0.0
  %4173 = vadd.xlane.f32.xlu0 %v4172
  %v4174 = vpop.xlane.xlu0 %4173
  %v4175 = vrcp.pop %v4174
  %v4176 = vpack.c.bf16 %v4171, %v4171
  %v4178 = vsel %vm3034, %v4176, 0
  %4180 = vmatprep.subr.bf16.mxu0 0
  %4181 = vmatpush1.bf16.msra.mxu0 0
  %4182 = vmatprep.subr.bf16.mxu0 0
  %4183 = vmatpush1.bf16.msra.mxu0 0
  %4184 = vmatprep.subr.bf16.mxu0 0
  %4185 = vmatpush1.bf16.msra.mxu0 0
  %4186 = vmatprep.subr.bf16.mxu0 0
  %4187 = vmatpush1.bf16.msra.mxu0 0
  %4188 = vmatprep.subr.bf16.mxu0 0
  %4189 = vmatpush1.bf16.msra.mxu0 0
  %4190 = vmatprep.subr.bf16.mxu0 0
  %4191 = vmatpush1.bf16.msra.mxu0 0
  %4192 = vmatprep.subr.bf16.mxu0 0
  %4193 = vmatpush1.bf16.msra.mxu0 0
  %4194 = vmatprep.subr.bf16.mxu0 0
  %4195 = vmatpush1.bf16.msra.mxu0 %v3040
  %4196 = vmatprep.subr.bf16.mxu0 0
  %4197 = vmatpush2.bf16.msra.mxu0 0
  %4198 = vmatprep.subr.bf16.mxu0 0
  %4199 = vmatpush2.bf16.msra.mxu0 0
  %4200 = vmatprep.subr.bf16.mxu0 0
  %4201 = vmatpush2.bf16.msra.mxu0 0
  %4202 = vmatprep.subr.bf16.mxu0 0
  %4203 = vmatpush2.bf16.msra.mxu0 0
  %4204 = vmatprep.subr.bf16.mxu0 0
  %4205 = vmatpush2.bf16.msra.mxu0 0
  %4206 = vmatprep.subr.bf16.mxu0 0
  %4207 = vmatpush2.bf16.msra.mxu0 0
  %4208 = vmatprep.subr.bf16.mxu0 0
  %4209 = vmatpush2.bf16.msra.mxu0 0
  %4210 = vmatprep.subr.bf16.mxu0 0
  %4211 = vmatpush2.bf16.msra.mxu0 0
  %4212 = vmatprep.mubr.bf16.mxu0 0
  %4213 = vmatmul.mubr.bf16.gmra.mxu0 %v4178
  %v4214 = vpop.f32.mrf.mxu0
  %v4215 = vadd.f32 0.0, %v4214
  %v4216 = vpop.f32.mrf.mxu0
  %v4217 = vpop.f32.mrf.mxu0
  %v4218 = vpop.f32.mrf.mxu0
  %4219 = vdwg.mxu0
  %v4220 = vmul.f32 %v4215, %v4175
  %4221 = vmatprep.subr.bf16.mxu0 0
  %4222 = vmatpush1.bf16.msra.mxu0 0
  %4223 = vmatprep.subr.bf16.mxu0 0
  %4224 = vmatpush1.bf16.msra.mxu0 0
  %4225 = vmatprep.subr.bf16.mxu0 0
  %4226 = vmatpush1.bf16.msra.mxu0 0
  %4227 = vmatprep.subr.bf16.mxu0 0
  %4228 = vmatpush1.bf16.msra.mxu0 0
  %4229 = vmatprep.subr.bf16.mxu0 0
  %4230 = vmatpush1.bf16.msra.mxu0 0
  %4231 = vmatprep.subr.bf16.mxu0 0
  %4232 = vmatpush1.bf16.msra.mxu0 0
  %4233 = vmatprep.subr.bf16.mxu0 0
  %4234 = vmatpush1.bf16.msra.mxu0 %v3096
  %4235 = vmatprep.subr.bf16.mxu0 0
  %4236 = vmatpush1.bf16.msra.mxu0 %v3095
  %4237 = vmatprep.subr.bf16.mxu0 0
  %4238 = vmatpush2.bf16.msra.mxu0 0
  %4239 = vmatprep.subr.bf16.mxu0 0
  %4240 = vmatpush2.bf16.msra.mxu0 0
  %4241 = vmatprep.subr.bf16.mxu0 0
  %4242 = vmatpush2.bf16.msra.mxu0 0
  %4243 = vmatprep.subr.bf16.mxu0 0
  %4244 = vmatpush2.bf16.msra.mxu0 0
  %4245 = vmatprep.subr.bf16.mxu0 0
  %4246 = vmatpush2.bf16.msra.mxu0 0
  %4247 = vmatprep.subr.bf16.mxu0 0
  %4248 = vmatpush2.bf16.msra.mxu0 0
  %4249 = vmatprep.subr.bf16.mxu0 0
  %4250 = vmatpush2.bf16.msra.mxu0 0
  %4251 = vmatprep.subr.bf16.mxu0 0
  %4252 = vmatpush2.bf16.msra.mxu0 0
  %4253 = vmatprep.mubr.bf16.mxu0 0
  %4254 = vmatmul.mubr.bf16.gmra.mxu0 %v4124
  %v4255 = vpop.f32.mrf.mxu0
  %v4256 = vadd.f32 %v4220, %v4255
  %v4257 = vpop.f32.mrf.mxu0
  %v4258 = vpop.f32.mrf.mxu0
  %v4259 = vpop.f32.mrf.mxu0
  %4260 = vdwg.mxu0
  %v4261 = vadd.f32 %v4256, %v3139
  %v4262 = vtanh.pop %v4261
  %v4263 = vpack.c.bf16 %v4262, %v4262
  %v4265 = vsel %vm2685, %v4263, 0
  %4267 = vmatprep.subr.bf16.mxu0 0
  %4268 = vmatpush1.bf16.msra.mxu0 0
  %4269 = vmatprep.subr.bf16.mxu0 0
  %4270 = vmatpush1.bf16.msra.mxu0 0
  %4271 = vmatprep.subr.bf16.mxu0 0
  %4272 = vmatpush1.bf16.msra.mxu0 0
  %4273 = vmatprep.subr.bf16.mxu0 0
  %4274 = vmatpush1.bf16.msra.mxu0 0
  %4275 = vmatprep.subr.bf16.mxu0 0
  %4276 = vmatpush1.bf16.msra.mxu0 0
  %4277 = vmatprep.subr.bf16.mxu0 0
  %4278 = vmatpush1.bf16.msra.mxu0 0
  %4279 = vmatprep.subr.bf16.mxu0 0
  %4280 = vmatpush1.bf16.msra.mxu0 %v3157
  %4281 = vmatprep.subr.bf16.mxu0 0
  %4282 = vmatpush1.bf16.msra.mxu0 %v3156
  %4283 = vmatprep.subr.bf16.mxu0 0
  %4284 = vmatpush2.bf16.msra.mxu0 0
  %4285 = vmatprep.subr.bf16.mxu0 0
  %4286 = vmatpush2.bf16.msra.mxu0 0
  %4287 = vmatprep.subr.bf16.mxu0 0
  %4288 = vmatpush2.bf16.msra.mxu0 0
  %4289 = vmatprep.subr.bf16.mxu0 0
  %4290 = vmatpush2.bf16.msra.mxu0 0
  %4291 = vmatprep.subr.bf16.mxu0 0
  %4292 = vmatpush2.bf16.msra.mxu0 0
  %4293 = vmatprep.subr.bf16.mxu0 0
  %4294 = vmatpush2.bf16.msra.mxu0 0
  %4295 = vmatprep.subr.bf16.mxu0 0
  %4296 = vmatpush2.bf16.msra.mxu0 0
  %4297 = vmatprep.subr.bf16.mxu0 0
  %4298 = vmatpush2.bf16.msra.mxu0 0
  %4299 = vmatprep.mubr.bf16.mxu0 0
  %4300 = vmatmul.mubr.bf16.gmra.mxu0 %v4265
  %v4301 = vpop.f32.mrf.mxu0
  %v4302 = vadd.f32 %v3147, %v4301
  %v4303 = vpop.f32.mrf.mxu0
  %v4304 = vpop.f32.mrf.mxu0
  %v4305 = vpop.f32.mrf.mxu0
  %4306 = vdwg.mxu0
  %v4307 = vsel %vm3203, %v4302, -inf
  %4308 = vmax.xlane.f32.xlu0 %v4307
  %v4309 = vpop.xlane.xlu0 %4308
  %v4310 = vsub.f32 %v4302, %v4309
  %v4311 = vmul.f32 %v4310, 1.442695
  %v4312 = vpow.pop %v4311
  %v4313 = vsel %vm3203, %v4312, 0.0
  %4314 = vadd.xlane.f32.xlu0 %v4313
  %v4315 = vpop.xlane.xlu0 %4314
  %v4316 = vrcp.pop %v4315
  %vm4317 = vcmp.ge.f32.partialorder %v4302, %v4309
  %v4318 = vsel %vm4317, %v18, 64
  %v4319 = vsel %vm3203, %v4318, 2147483647
  %v4320 = vand.u32 %v4319, 65535
  %v4321 = vshra.s32 %v4319, 16
  %v4322 = vcvt.s32.f32 %v4320
  %v4323 = vcvt.s32.f32 %v4321
  %4324 = vmin.xlane.f32.xlu0 %v4323
  %v4325 = vpop.xlane.xlu0 %4324
  %vm4326 = vcmp.eq.f32.partialorder %v4323, %v4325
  %v4327 = vsel %vm4326, %v4322, inf
  %4328 = vmin.xlane.f32.xlu0 %v4327
  %v4329 = vpop.xlane.xlu0 %4328
  %v4330 = vcvt.f32.s32 %v4329
  %v4331 = vcvt.f32.s32 %v4325
  %v4332 = vshll.u32 %v4331, 16
  %v4333 = vadd.s32 %v4332, %v4330
  %vm4334 = vcmp.eq.s32.totalorder %v18, 3
  %v4335 = vsel %vm4334, %v4333, %v3967
  %v4336 = vsel %vm4334, %v4316, %v3968
  %vm4337 = vcmp.eq.s32.totalorder %v18, %v4333
  %v4338 = vsel %vm4337, 1, 0
  %v4339 = vcvt.s32.f32 %v4338
  %v4340 = vpack.c.bf16 %v4339, %v4339
  %4341 = vrot.lane.b32.xlu0 %v4045, 32
  %v4342 = vpop.permute.xlu0 %4341
  %v4345 = vsel %vm37, %v4340, %v4342
  %v4346 = vsel %vm2791, %v4345, 0
  %4348 = vmatprep.subr.bf16.mxu0 0
  %4349 = vmatpush1.bf16.msra.mxu0 0
  %4350 = vmatprep.subr.bf16.mxu0 0
  %4351 = vmatpush1.bf16.msra.mxu0 0
  %4352 = vmatprep.subr.bf16.mxu0 0
  %4353 = vmatpush1.bf16.msra.mxu0 %v2784
  %4354 = vmatprep.subr.bf16.mxu0 0
  %4355 = vmatpush1.bf16.msra.mxu0 %v2783
  %4356 = vmatprep.subr.bf16.mxu0 0
  %4357 = vmatpush1.bf16.msra.mxu0 %v2782
  %4358 = vmatprep.subr.bf16.mxu0 0
  %4359 = vmatpush1.bf16.msra.mxu0 %v2781
  %4360 = vmatprep.subr.bf16.mxu0 0
  %4361 = vmatpush1.bf16.msra.mxu0 %v2780
  %4362 = vmatprep.subr.bf16.mxu0 0
  %4363 = vmatpush1.bf16.msra.mxu0 %v2779
  %4364 = vmatprep.subr.bf16.mxu0 0
  %4365 = vmatpush2.bf16.msra.mxu0 0
  %4366 = vmatprep.subr.bf16.mxu0 0
  %4367 = vmatpush2.bf16.msra.mxu0 0
  %4368 = vmatprep.subr.bf16.mxu0 0
  %4369 = vmatpush2.bf16.msra.mxu0 0
  %4370 = vmatprep.subr.bf16.mxu0 0
  %4371 = vmatpush2.bf16.msra.mxu0 0
  %4372 = vmatprep.subr.bf16.mxu0 0
  %4373 = vmatpush2.bf16.msra.mxu0 0
  %4374 = vmatprep.subr.bf16.mxu0 0
  %4375 = vmatpush2.bf16.msra.mxu0 0
  %4376 = vmatprep.subr.bf16.mxu0 0
  %4377 = vmatpush2.bf16.msra.mxu0 0
  %4378 = vmatprep.subr.bf16.mxu0 0
  %4379 = vmatpush2.bf16.msra.mxu0 0
  %4380 = vmatprep.mubr.bf16.mxu0 0
  %4381 = vmatmul.mubr.bf16.gmra.mxu0 %v4346
  %v4382 = vpop.f32.mrf.mxu0
  %v4383 = vadd.f32 %v2754, %v4382
  %v4384 = vpop.f32.mrf.mxu0
  %v4385 = vpop.f32.mrf.mxu0
  %v4386 = vpop.f32.mrf.mxu0
  %4387 = vdwg.mxu0
  %v4388 = vxor.u32 %v4383, 2147483648
  %v4389 = vmul.f32 %v4388, 1.442695
  %v4390 = vpow.pop %v4389
  %v4391 = vadd.f32 %v4390, 1.0
  %v4392 = vrcp.pop %v4391
  %v4393 = vmul.f32 1.0, %v4392
  %4395 = vrot.lane.b32.xlu0 %v4383, 32
  %v4396 = vpop.permute.xlu0 %4395
  %v4398 = vmul.f32 %v4393, %v4396
  %4400 = vrot.lane.b32.xlu0 %v4398, 64
  %v4401 = vpop.permute.xlu0 %4400
  %v4403 = vadd.f32 %v4383, %v4401
  %v4404 = vtanh.pop %v4403
  %v4405 = vsub.f32 1.0, %v4393
  %4407 = vrot.lane.b32.xlu0 %v4404, 96
  %v4408 = vpop.permute.xlu0 %4407
  %v4410 = vmul.f32 %v4405, %v4408
  %v4411 = vmul.f32 %v4393, %v4044
  %v4412 = vadd.f32 %v4410, %v4411
  %v4413 = vpack.c.bf16 %v4412, %v4412
  %4415 = vrot.lane.b32.xlu0 %v4413, 96
  %v4416 = vpop.permute.xlu0 %4415
  %v4419 = vsel %vm2685, %v4416, %v4119
  %v4420 = vsel %vm37, %v4419, 0
  %4422 = vmatprep.subr.bf16.mxu0 0
  %4423 = vmatpush1.bf16.msra.mxu0 0
  %4424 = vmatprep.subr.bf16.mxu0 0
  %4425 = vmatpush1.bf16.msra.mxu0 0
  %4426 = vmatprep.subr.bf16.mxu0 0
  %4427 = vmatpush1.bf16.msra.mxu0 0
  %4428 = vmatprep.subr.bf16.mxu0 0
  %4429 = vmatpush1.bf16.msra.mxu0 0
  %4430 = vmatprep.subr.bf16.mxu0 0
  %4431 = vmatpush1.bf16.msra.mxu0 %v2900
  %4432 = vmatprep.subr.bf16.mxu0 0
  %4433 = vmatpush1.bf16.msra.mxu0 %v2899
  %4434 = vmatprep.subr.bf16.mxu0 0
  %4435 = vmatpush1.bf16.msra.mxu0 %v2898
  %4436 = vmatprep.subr.bf16.mxu0 0
  %4437 = vmatpush1.bf16.msra.mxu0 %v2897
  %4438 = vmatprep.subr.bf16.mxu0 0
  %4439 = vmatpush2.bf16.msra.mxu0 0
  %4440 = vmatprep.subr.bf16.mxu0 0
  %4441 = vmatpush2.bf16.msra.mxu0 0
  %4442 = vmatprep.subr.bf16.mxu0 0
  %4443 = vmatpush2.bf16.msra.mxu0 0
  %4444 = vmatprep.subr.bf16.mxu0 0
  %4445 = vmatpush2.bf16.msra.mxu0 0
  %4446 = vmatprep.subr.bf16.mxu0 0
  %4447 = vmatpush2.bf16.msra.mxu0 0
  %4448 = vmatprep.subr.bf16.mxu0 0
  %4449 = vmatpush2.bf16.msra.mxu0 0
  %4450 = vmatprep.subr.bf16.mxu0 0
  %4451 = vmatpush2.bf16.msra.mxu0 0
  %4452 = vmatprep.subr.bf16.mxu0 0
  %4453 = vmatpush2.bf16.msra.mxu0 0
  %4454 = vmatprep.mubr.bf16.mxu0 0
  %4455 = vmatmul.mubr.bf16.gmra.mxu0 %v4420
  %v4456 = vpop.f32.mrf.mxu0
  %v4457 = vadd.f32 %v2880, %v4456
  %v4458 = vpop.f32.mrf.mxu0
  %v4459 = vpop.f32.mrf.mxu0
  %v4460 = vpop.f32.mrf.mxu0
  %4461 = vdwg.mxu0
  %v4462 = vxor.u32 %v4457, 2147483648
  %v4463 = vmul.f32 %v4462, 1.442695
  %v4464 = vpow.pop %v4463
  %v4465 = vadd.f32 %v4464, 1.0
  %v4466 = vrcp.pop %v4465
  %v4467 = vmul.f32 1.0, %v4466
  %4469 = vrot.lane.b32.xlu0 %v4457, 32
  %v4470 = vpop.permute.xlu0 %4469
  %v4472 = vmul.f32 %v4467, %v4470
  %4474 = vrot.lane.b32.xlu0 %v4472, 64
  %v4475 = vpop.permute.xlu0 %4474
  %v4477 = vadd.f32 %v4457, %v4475
  %v4478 = vtanh.pop %v4477
  %v4479 = vsub.f32 1.0, %v4467
  %4481 = vrot.lane.b32.xlu0 %v4478, 96
  %v4482 = vpop.permute.xlu0 %4481
  %v4484 = vmul.f32 %v4479, %v4482
  %v4485 = vmul.f32 %v4467, %v4118
  %v4486 = vadd.f32 %v4484, %v4485
  %v4487 = vpack.c.bf16 %v4486, %v4486
  %4489 = vrot.lane.b32.xlu0 %v4487, 96
  %v4490 = vpop.permute.xlu0 %4489
  %v4492 = vsel %vm2685, %v4490, 0
  %4494 = vmatprep.subr.bf16.mxu0 0
  %4495 = vmatpush1.bf16.msra.mxu0 0
  %4496 = vmatprep.subr.bf16.mxu0 0
  %4497 = vmatpush1.bf16.msra.mxu0 0
  %4498 = vmatprep.subr.bf16.mxu0 0
  %4499 = vmatpush1.bf16.msra.mxu0 0
  %4500 = vmatprep.subr.bf16.mxu0 0
  %4501 = vmatpush1.bf16.msra.mxu0 0
  %4502 = vmatprep.subr.bf16.mxu0 0
  %4503 = vmatpush1.bf16.msra.mxu0 0
  %4504 = vmatprep.subr.bf16.mxu0 0
  %4505 = vmatpush1.bf16.msra.mxu0 0
  %4506 = vmatprep.subr.bf16.mxu0 0
  %4507 = vmatpush1.bf16.msra.mxu0 %v2667
  %4508 = vmatprep.subr.bf16.mxu0 0
  %4509 = vmatpush1.bf16.msra.mxu0 %v2666
  %4510 = vmatprep.subr.bf16.mxu0 0
  %4511 = vmatpush2.bf16.msra.mxu0 0
  %4512 = vmatprep.subr.bf16.mxu0 0
  %4513 = vmatpush2.bf16.msra.mxu0 0
  %4514 = vmatprep.subr.bf16.mxu0 0
  %4515 = vmatpush2.bf16.msra.mxu0 0
  %4516 = vmatprep.subr.bf16.mxu0 0
  %4517 = vmatpush2.bf16.msra.mxu0 0
  %4518 = vmatprep.subr.bf16.mxu0 0
  %4519 = vmatpush2.bf16.msra.mxu0 0
  %4520 = vmatprep.subr.bf16.mxu0 0
  %4521 = vmatpush2.bf16.msra.mxu0 0
  %4522 = vmatprep.subr.bf16.mxu0 0
  %4523 = vmatpush2.bf16.msra.mxu0 0
  %4524 = vmatprep.subr.bf16.mxu0 0
  %4525 = vmatpush2.bf16.msra.mxu0 0
  %4526 = vmatprep.mubr.bf16.mxu0 0
  %4527 = vmatmul.mubr.bf16.gmra.mxu0 %v4492
  %v4528 = vpop.f32.mrf.mxu0
  %v4529 = vadd.f32 0.0, %v4528
  %v4530 = vpop.f32.mrf.mxu0
  %v4531 = vpop.f32.mrf.mxu0
  %v4532 = vpop.f32.mrf.mxu0
  %4533 = vdwg.mxu0
  %v4534 = vsel %vm3022, %v4529, -inf
  %4535 = vmax.xlane.f32.xlu0 %v4534
  %v4536 = vpop.xlane.xlu0 %4535
  %v4537 = vsub.f32 %v4529, %v4536
  %v4538 = vmul.f32 %v4537, 1.442695
  %v4539 = vpow.pop %v4538
  %v4540 = vsel %vm3022, %v4539, 0.0
  %4541 = vadd.xlane.f32.xlu0 %v4540
  %v4542 = vpop.xlane.xlu0 %4541
  %v4543 = vrcp.pop %v4542
  %v4544 = vpack.c.bf16 %v4539, %v4539
  %v4546 = vsel %vm3034, %v4544, 0
  %4548 = vmatprep.subr.bf16.mxu0 0
  %4549 = vmatpush1.bf16.msra.mxu0 0
  %4550 = vmatprep.subr.bf16.mxu0 0
  %4551 = vmatpush1.bf16.msra.mxu0 0
  %4552 = vmatprep.subr.bf16.mxu0 0
  %4553 = vmatpush1.bf16.msra.mxu0 0
  %4554 = vmatprep.subr.bf16.mxu0 0
  %4555 = vmatpush1.bf16.msra.mxu0 0
  %4556 = vmatprep.subr.bf16.mxu0 0
  %4557 = vmatpush1.bf16.msra.mxu0 0
  %4558 = vmatprep.subr.bf16.mxu0 0
  %4559 = vmatpush1.bf16.msra.mxu0 0
  %4560 = vmatprep.subr.bf16.mxu0 0
  %4561 = vmatpush1.bf16.msra.mxu0 0
  %4562 = vmatprep.subr.bf16.mxu0 0
  %4563 = vmatpush1.bf16.msra.mxu0 %v3040
  %4564 = vmatprep.subr.bf16.mxu0 0
  %4565 = vmatpush2.bf16.msra.mxu0 0
  %4566 = vmatprep.subr.bf16.mxu0 0
  %4567 = vmatpush2.bf16.msra.mxu0 0
  %4568 = vmatprep.subr.bf16.mxu0 0
  %4569 = vmatpush2.bf16.msra.mxu0 0
  %4570 = vmatprep.subr.bf16.mxu0 0
  %4571 = vmatpush2.bf16.msra.mxu0 0
  %4572 = vmatprep.subr.bf16.mxu0 0
  %4573 = vmatpush2.bf16.msra.mxu0 0
  %4574 = vmatprep.subr.bf16.mxu0 0
  %4575 = vmatpush2.bf16.msra.mxu0 0
  %4576 = vmatprep.subr.bf16.mxu0 0
  %4577 = vmatpush2.bf16.msra.mxu0 0
  %4578 = vmatprep.subr.bf16.mxu0 0
  %4579 = vmatpush2.bf16.msra.mxu0 0
  %4580 = vmatprep.mubr.bf16.mxu0 0
  %4581 = vmatmul.mubr.bf16.gmra.mxu0 %v4546
  %v4582 = vpop.f32.mrf.mxu0
  %v4583 = vadd.f32 0.0, %v4582
  %v4584 = vpop.f32.mrf.mxu0
  %v4585 = vpop.f32.mrf.mxu0
  %v4586 = vpop.f32.mrf.mxu0
  %4587 = vdwg.mxu0
  %v4588 = vmul.f32 %v4583, %v4543
  %4589 = vmatprep.subr.bf16.mxu0 0
  %4590 = vmatpush1.bf16.msra.mxu0 0
  %4591 = vmatprep.subr.bf16.mxu0 0
  %4592 = vmatpush1.bf16.msra.mxu0 0
  %4593 = vmatprep.subr.bf16.mxu0 0
  %4594 = vmatpush1.bf16.msra.mxu0 0
  %4595 = vmatprep.subr.bf16.mxu0 0
  %4596 = vmatpush1.bf16.msra.mxu0 0
  %4597 = vmatprep.subr.bf16.mxu0 0
  %4598 = vmatpush1.bf16.msra.mxu0 0
  %4599 = vmatprep.subr.bf16.mxu0 0
  %4600 = vmatpush1.bf16.msra.mxu0 0
  %4601 = vmatprep.subr.bf16.mxu0 0
  %4602 = vmatpush1.bf16.msra.mxu0 %v3096
  %4603 = vmatprep.subr.bf16.mxu0 0
  %4604 = vmatpush1.bf16.msra.mxu0 %v3095
  %4605 = vmatprep.subr.bf16.mxu0 0
  %4606 = vmatpush2.bf16.msra.mxu0 0
  %4607 = vmatprep.subr.bf16.mxu0 0
  %4608 = vmatpush2.bf16.msra.mxu0 0
  %4609 = vmatprep.subr.bf16.mxu0 0
  %4610 = vmatpush2.bf16.msra.mxu0 0
  %4611 = vmatprep.subr.bf16.mxu0 0
  %4612 = vmatpush2.bf16.msra.mxu0 0
  %4613 = vmatprep.subr.bf16.mxu0 0
  %4614 = vmatpush2.bf16.msra.mxu0 0
  %4615 = vmatprep.subr.bf16.mxu0 0
  %4616 = vmatpush2.bf16.msra.mxu0 0
  %4617 = vmatprep.subr.bf16.mxu0 0
  %4618 = vmatpush2.bf16.msra.mxu0 0
  %4619 = vmatprep.subr.bf16.mxu0 0
  %4620 = vmatpush2.bf16.msra.mxu0 0
  %4621 = vmatprep.mubr.bf16.mxu0 0
  %4622 = vmatmul.mubr.bf16.gmra.mxu0 %v4492
  %v4623 = vpop.f32.mrf.mxu0
  %v4624 = vadd.f32 %v4588, %v4623
  %v4625 = vpop.f32.mrf.mxu0
  %v4626 = vpop.f32.mrf.mxu0
  %v4627 = vpop.f32.mrf.mxu0
  %4628 = vdwg.mxu0
  %v4629 = vadd.f32 %v4624, %v3139
  %v4630 = vtanh.pop %v4629
  %v4631 = vpack.c.bf16 %v4630, %v4630
  %v4633 = vsel %vm2685, %v4631, 0
  %4635 = vmatprep.subr.bf16.mxu0 0
  %4636 = vmatpush1.bf16.msra.mxu0 0
  %4637 = vmatprep.subr.bf16.mxu0 0
  %4638 = vmatpush1.bf16.msra.mxu0 0
  %4639 = vmatprep.subr.bf16.mxu0 0
  %4640 = vmatpush1.bf16.msra.mxu0 0
  %4641 = vmatprep.subr.bf16.mxu0 0
  %4642 = vmatpush1.bf16.msra.mxu0 0
  %4643 = vmatprep.subr.bf16.mxu0 0
  %4644 = vmatpush1.bf16.msra.mxu0 0
  %4645 = vmatprep.subr.bf16.mxu0 0
  %4646 = vmatpush1.bf16.msra.mxu0 0
  %4647 = vmatprep.subr.bf16.mxu0 0
  %4648 = vmatpush1.bf16.msra.mxu0 %v3157
  %4649 = vmatprep.subr.bf16.mxu0 0
  %4650 = vmatpush1.bf16.msra.mxu0 %v3156
  %4651 = vmatprep.subr.bf16.mxu0 0
  %4652 = vmatpush2.bf16.msra.mxu0 0
  %4653 = vmatprep.subr.bf16.mxu0 0
  %4654 = vmatpush2.bf16.msra.mxu0 0
  %4655 = vmatprep.subr.bf16.mxu0 0
  %4656 = vmatpush2.bf16.msra.mxu0 0
  %4657 = vmatprep.subr.bf16.mxu0 0
  %4658 = vmatpush2.bf16.msra.mxu0 0
  %4659 = vmatprep.subr.bf16.mxu0 0
  %4660 = vmatpush2.bf16.msra.mxu0 0
  %4661 = vmatprep.subr.bf16.mxu0 0
  %4662 = vmatpush2.bf16.msra.mxu0 0
  %4663 = vmatprep.subr.bf16.mxu0 0
  %4664 = vmatpush2.bf16.msra.mxu0 0
  %4665 = vmatprep.subr.bf16.mxu0 0
  %4666 = vmatpush2.bf16.msra.mxu0 0
  %4667 = vmatprep.mubr.bf16.mxu0 0
  %4668 = vmatmul.mubr.bf16.gmra.mxu0 %v4633
  %v4669 = vpop.f32.mrf.mxu0
  %v4670 = vadd.f32 %v3147, %v4669
  %v4671 = vpop.f32.mrf.mxu0
  %v4672 = vpop.f32.mrf.mxu0
  %v4673 = vpop.f32.mrf.mxu0
  %4674 = vdwg.mxu0
  %v4675 = vsel %vm3203, %v4670, -inf
  %4676 = vmax.xlane.f32.xlu0 %v4675
  %v4677 = vpop.xlane.xlu0 %4676
  %v4678 = vsub.f32 %v4670, %v4677
  %v4679 = vmul.f32 %v4678, 1.442695
  %v4680 = vpow.pop %v4679
  %v4681 = vsel %vm3203, %v4680, 0.0
  %4682 = vadd.xlane.f32.xlu0 %v4681
  %v4683 = vpop.xlane.xlu0 %4682
  %v4684 = vrcp.pop %v4683
  %vm4685 = vcmp.ge.f32.partialorder %v4670, %v4677
  %v4686 = vsel %vm4685, %v18, 64
  %v4687 = vsel %vm3203, %v4686, 2147483647
  %v4688 = vand.u32 %v4687, 65535
  %v4689 = vshra.s32 %v4687, 16
  %v4690 = vcvt.s32.f32 %v4688
  %v4691 = vcvt.s32.f32 %v4689
  %4692 = vmin.xlane.f32.xlu0 %v4691
  %v4693 = vpop.xlane.xlu0 %4692
  %vm4694 = vcmp.eq.f32.partialorder %v4691, %v4693
  %v4695 = vsel %vm4694, %v4690, inf
  %4696 = vmin.xlane.f32.xlu0 %v4695
  %v4697 = vpop.xlane.xlu0 %4696
  %v4698 = vcvt.f32.s32 %v4697
  %v4699 = vcvt.f32.s32 %v4693
  %v4700 = vshll.u32 %v4699, 16
  %v4701 = vadd.s32 %v4700, %v4698
  %vm4702 = vcmp.eq.s32.totalorder %v18, 4
  %v4703 = vsel %vm4702, %v4701, %v4335
  %v4704 = vsel %vm4702, %v4684, %v4336
  %vm4705 = vcmp.eq.s32.totalorder %v18, %v4701
  %v4706 = vsel %vm4705, 1, 0
  %v4707 = vcvt.s32.f32 %v4706
  %v4708 = vpack.c.bf16 %v4707, %v4707
  %4709 = vrot.lane.b32.xlu0 %v4413, 32
  %v4710 = vpop.permute.xlu0 %4709
  %v4713 = vsel %vm37, %v4708, %v4710
  %v4714 = vsel %vm2791, %v4713, 0
  %4716 = vmatprep.subr.bf16.mxu0 0
  %4717 = vmatpush1.bf16.msra.mxu0 0
  %4718 = vmatprep.subr.bf16.mxu0 0
  %4719 = vmatpush1.bf16.msra.mxu0 0
  %4720 = vmatprep.subr.bf16.mxu0 0
  %4721 = vmatpush1.bf16.msra.mxu0 %v2784
  %4722 = vmatprep.subr.bf16.mxu0 0
  %4723 = vmatpush1.bf16.msra.mxu0 %v2783
  %4724 = vmatprep.subr.bf16.mxu0 0
  %4725 = vmatpush1.bf16.msra.mxu0 %v2782
  %4726 = vmatprep.subr.bf16.mxu0 0
  %4727 = vmatpush1.bf16.msra.mxu0 %v2781
  %4728 = vmatprep.subr.bf16.mxu0 0
  %4729 = vmatpush1.bf16.msra.mxu0 %v2780
  %4730 = vmatprep.subr.bf16.mxu0 0
  %4731 = vmatpush1.bf16.msra.mxu0 %v2779
  %4732 = vmatprep.subr.bf16.mxu0 0
  %4733 = vmatpush2.bf16.msra.mxu0 0
  %4734 = vmatprep.subr.bf16.mxu0 0
  %4735 = vmatpush2.bf16.msra.mxu0 0
  %4736 = vmatprep.subr.bf16.mxu0 0
  %4737 = vmatpush2.bf16.msra.mxu0 0
  %4738 = vmatprep.subr.bf16.mxu0 0
  %4739 = vmatpush2.bf16.msra.mxu0 0
  %4740 = vmatprep.subr.bf16.mxu0 0
  %4741 = vmatpush2.bf16.msra.mxu0 0
  %4742 = vmatprep.subr.bf16.mxu0 0
  %4743 = vmatpush2.bf16.msra.mxu0 0
  %4744 = vmatprep.subr.bf16.mxu0 0
  %4745 = vmatpush2.bf16.msra.mxu0 0
  %4746 = vmatprep.subr.bf16.mxu0 0
  %4747 = vmatpush2.bf16.msra.mxu0 0
  %4748 = vmatprep.mubr.bf16.mxu0 0
  %4749 = vmatmul.mubr.bf16.gmra.mxu0 %v4714
  %v4750 = vpop.f32.mrf.mxu0
  %v4751 = vadd.f32 %v2754, %v4750
  %v4752 = vpop.f32.mrf.mxu0
  %v4753 = vpop.f32.mrf.mxu0
  %v4754 = vpop.f32.mrf.mxu0
  %4755 = vdwg.mxu0
  %v4756 = vxor.u32 %v4751, 2147483648
  %v4757 = vmul.f32 %v4756, 1.442695
  %v4758 = vpow.pop %v4757
  %v4759 = vadd.f32 %v4758, 1.0
  %v4760 = vrcp.pop %v4759
  %v4761 = vmul.f32 1.0, %v4760
  %4763 = vrot.lane.b32.xlu0 %v4751, 32
  %v4764 = vpop.permute.xlu0 %4763
  %v4766 = vmul.f32 %v4761, %v4764
  %4768 = vrot.lane.b32.xlu0 %v4766, 64
  %v4769 = vpop.permute.xlu0 %4768
  %v4771 = vadd.f32 %v4751, %v4769
  %v4772 = vtanh.pop %v4771
  %v4773 = vsub.f32 1.0, %v4761
  %4775 = vrot.lane.b32.xlu0 %v4772, 96
  %v4776 = vpop.permute.xlu0 %4775
  %v4778 = vmul.f32 %v4773, %v4776
  %v4779 = vmul.f32 %v4761, %v4412
  %v4780 = vadd.f32 %v4778, %v4779
  %v4781 = vpack.c.bf16 %v4780, %v4780
  %4783 = vrot.lane.b32.xlu0 %v4781, 96
  %v4784 = vpop.permute.xlu0 %4783
  %v4787 = vsel %vm2685, %v4784, %v4487
  %v4788 = vsel %vm37, %v4787, 0
  %4790 = vmatprep.subr.bf16.mxu0 0
  %4791 = vmatpush1.bf16.msra.mxu0 0
  %4792 = vmatprep.subr.bf16.mxu0 0
  %4793 = vmatpush1.bf16.msra.mxu0 0
  %4794 = vmatprep.subr.bf16.mxu0 0
  %4795 = vmatpush1.bf16.msra.mxu0 0
  %4796 = vmatprep.subr.bf16.mxu0 0
  %4797 = vmatpush1.bf16.msra.mxu0 0
  %4798 = vmatprep.subr.bf16.mxu0 0
  %4799 = vmatpush1.bf16.msra.mxu0 %v2900
  %4800 = vmatprep.subr.bf16.mxu0 0
  %4801 = vmatpush1.bf16.msra.mxu0 %v2899
  %4802 = vmatprep.subr.bf16.mxu0 0
  %4803 = vmatpush1.bf16.msra.mxu0 %v2898
  %4804 = vmatprep.subr.bf16.mxu0 0
  %4805 = vmatpush1.bf16.msra.mxu0 %v2897
  %4806 = vmatprep.subr.bf16.mxu0 0
  %4807 = vmatpush2.bf16.msra.mxu0 0
  %4808 = vmatprep.subr.bf16.mxu0 0
  %4809 = vmatpush2.bf16.msra.mxu0 0
  %4810 = vmatprep.subr.bf16.mxu0 0
  %4811 = vmatpush2.bf16.msra.mxu0 0
  %4812 = vmatprep.subr.bf16.mxu0 0
  %4813 = vmatpush2.bf16.msra.mxu0 0
  %4814 = vmatprep.subr.bf16.mxu0 0
  %4815 = vmatpush2.bf16.msra.mxu0 0
  %4816 = vmatprep.subr.bf16.mxu0 0
  %4817 = vmatpush2.bf16.msra.mxu0 0
  %4818 = vmatprep.subr.bf16.mxu0 0
  %4819 = vmatpush2.bf16.msra.mxu0 0
  %4820 = vmatprep.subr.bf16.mxu0 0
  %4821 = vmatpush2.bf16.msra.mxu0 0
  %4822 = vmatprep.mubr.bf16.mxu0 0
  %4823 = vmatmul.mubr.bf16.gmra.mxu0 %v4788
  %v4824 = vpop.f32.mrf.mxu0
  %v4825 = vadd.f32 %v2880, %v4824
  %v4826 = vpop.f32.mrf.mxu0
  %v4827 = vpop.f32.mrf.mxu0
  %v4828 = vpop.f32.mrf.mxu0
  %4829 = vdwg.mxu0
  %v4830 = vxor.u32 %v4825, 2147483648
  %v4831 = vmul.f32 %v4830, 1.442695
  %v4832 = vpow.pop %v4831
  %v4833 = vadd.f32 %v4832, 1.0
  %v4834 = vrcp.pop %v4833
  %v4835 = vmul.f32 1.0, %v4834
  %4837 = vrot.lane.b32.xlu0 %v4825, 32
  %v4838 = vpop.permute.xlu0 %4837
  %v4840 = vmul.f32 %v4835, %v4838
  %4842 = vrot.lane.b32.xlu0 %v4840, 64
  %v4843 = vpop.permute.xlu0 %4842
  %v4845 = vadd.f32 %v4825, %v4843
  %v4846 = vtanh.pop %v4845
  %v4847 = vsub.f32 1.0, %v4835
  %4849 = vrot.lane.b32.xlu0 %v4846, 96
  %v4850 = vpop.permute.xlu0 %4849
  %v4852 = vmul.f32 %v4847, %v4850
  %v4853 = vmul.f32 %v4835, %v4486
  %v4854 = vadd.f32 %v4852, %v4853
  %v4855 = vpack.c.bf16 %v4854, %v4854
  %4857 = vrot.lane.b32.xlu0 %v4855, 96
  %v4858 = vpop.permute.xlu0 %4857
  %v4860 = vsel %vm2685, %v4858, 0
  %4862 = vmatprep.subr.bf16.mxu0 0
  %4863 = vmatpush1.bf16.msra.mxu0 0
  %4864 = vmatprep.subr.bf16.mxu0 0
  %4865 = vmatpush1.bf16.msra.mxu0 0
  %4866 = vmatprep.subr.bf16.mxu0 0
  %4867 = vmatpush1.bf16.msra.mxu0 0
  %4868 = vmatprep.subr.bf16.mxu0 0
  %4869 = vmatpush1.bf16.msra.mxu0 0
  %4870 = vmatprep.subr.bf16.mxu0 0
  %4871 = vmatpush1.bf16.msra.mxu0 0
  %4872 = vmatprep.subr.bf16.mxu0 0
  %4873 = vmatpush1.bf16.msra.mxu0 0
  %4874 = vmatprep.subr.bf16.mxu0 0
  %4875 = vmatpush1.bf16.msra.mxu0 %v2667
  %4876 = vmatprep.subr.bf16.mxu0 0
  %4877 = vmatpush1.bf16.msra.mxu0 %v2666
  %4878 = vmatprep.subr.bf16.mxu0 0
  %4879 = vmatpush2.bf16.msra.mxu0 0
  %4880 = vmatprep.subr.bf16.mxu0 0
  %4881 = vmatpush2.bf16.msra.mxu0 0
  %4882 = vmatprep.subr.bf16.mxu0 0
  %4883 = vmatpush2.bf16.msra.mxu0 0
  %4884 = vmatprep.subr.bf16.mxu0 0
  %4885 = vmatpush2.bf16.msra.mxu0 0
  %4886 = vmatprep.subr.bf16.mxu0 0
  %4887 = vmatpush2.bf16.msra.mxu0 0
  %4888 = vmatprep.subr.bf16.mxu0 0
  %4889 = vmatpush2.bf16.msra.mxu0 0
  %4890 = vmatprep.subr.bf16.mxu0 0
  %4891 = vmatpush2.bf16.msra.mxu0 0
  %4892 = vmatprep.subr.bf16.mxu0 0
  %4893 = vmatpush2.bf16.msra.mxu0 0
  %4894 = vmatprep.mubr.bf16.mxu0 0
  %4895 = vmatmul.mubr.bf16.gmra.mxu0 %v4860
  %v4896 = vpop.f32.mrf.mxu0
  %v4897 = vadd.f32 0.0, %v4896
  %v4898 = vpop.f32.mrf.mxu0
  %v4899 = vpop.f32.mrf.mxu0
  %v4900 = vpop.f32.mrf.mxu0
  %4901 = vdwg.mxu0
  %v4902 = vsel %vm3022, %v4897, -inf
  %4903 = vmax.xlane.f32.xlu0 %v4902
  %v4904 = vpop.xlane.xlu0 %4903
  %v4905 = vsub.f32 %v4897, %v4904
  %v4906 = vmul.f32 %v4905, 1.442695
  %v4907 = vpow.pop %v4906
  %v4908 = vsel %vm3022, %v4907, 0.0
  %4909 = vadd.xlane.f32.xlu0 %v4908
  %v4910 = vpop.xlane.xlu0 %4909
  %v4911 = vrcp.pop %v4910
  %v4912 = vpack.c.bf16 %v4907, %v4907
  %v4914 = vsel %vm3034, %v4912, 0
  %4916 = vmatprep.subr.bf16.mxu0 0
  %4917 = vmatpush1.bf16.msra.mxu0 0
  %4918 = vmatprep.subr.bf16.mxu0 0
  %4919 = vmatpush1.bf16.msra.mxu0 0
  %4920 = vmatprep.subr.bf16.mxu0 0
  %4921 = vmatpush1.bf16.msra.mxu0 0
  %4922 = vmatprep.subr.bf16.mxu0 0
  %4923 = vmatpush1.bf16.msra.mxu0 0
  %4924 = vmatprep.subr.bf16.mxu0 0
  %4925 = vmatpush1.bf16.msra.mxu0 0
  %4926 = vmatprep.subr.bf16.mxu0 0
  %4927 = vmatpush1.bf16.msra.mxu0 0
  %4928 = vmatprep.subr.bf16.mxu0 0
  %4929 = vmatpush1.bf16.msra.mxu0 0
  %4930 = vmatprep.subr.bf16.mxu0 0
  %4931 = vmatpush1.bf16.msra.mxu0 %v3040
  %4932 = vmatprep.subr.bf16.mxu0 0
  %4933 = vmatpush2.bf16.msra.mxu0 0
  %4934 = vmatprep.subr.bf16.mxu0 0
  %4935 = vmatpush2.bf16.msra.mxu0 0
  %4936 = vmatprep.subr.bf16.mxu0 0
  %4937 = vmatpush2.bf16.msra.mxu0 0
  %4938 = vmatprep.subr.bf16.mxu0 0
  %4939 = vmatpush2.bf16.msra.mxu0 0
  %4940 = vmatprep.subr.bf16.mxu0 0
  %4941 = vmatpush2.bf16.msra.mxu0 0
  %4942 = vmatprep.subr.bf16.mxu0 0
  %4943 = vmatpush2.bf16.msra.mxu0 0
  %4944 = vmatprep.subr.bf16.mxu0 0
  %4945 = vmatpush2.bf16.msra.mxu0 0
  %4946 = vmatprep.subr.bf16.mxu0 0
  %4947 = vmatpush2.bf16.msra.mxu0 0
  %4948 = vmatprep.mubr.bf16.mxu0 0
  %4949 = vmatmul.mubr.bf16.gmra.mxu0 %v4914
  %v4950 = vpop.f32.mrf.mxu0
  %v4951 = vadd.f32 0.0, %v4950
  %v4952 = vpop.f32.mrf.mxu0
  %v4953 = vpop.f32.mrf.mxu0
  %v4954 = vpop.f32.mrf.mxu0
  %4955 = vdwg.mxu0
  %v4956 = vmul.f32 %v4951, %v4911
  %4957 = vmatprep.subr.bf16.mxu0 0
  %4958 = vmatpush1.bf16.msra.mxu0 0
  %4959 = vmatprep.subr.bf16.mxu0 0
  %4960 = vmatpush1.bf16.msra.mxu0 0
  %4961 = vmatprep.subr.bf16.mxu0 0
  %4962 = vmatpush1.bf16.msra.mxu0 0
  %4963 = vmatprep.subr.bf16.mxu0 0
  %4964 = vmatpush1.bf16.msra.mxu0 0
  %4965 = vmatprep.subr.bf16.mxu0 0
  %4966 = vmatpush1.bf16.msra.mxu0 0
  %4967 = vmatprep.subr.bf16.mxu0 0
  %4968 = vmatpush1.bf16.msra.mxu0 0
  %4969 = vmatprep.subr.bf16.mxu0 0
  %4970 = vmatpush1.bf16.msra.mxu0 %v3096
  %4971 = vmatprep.subr.bf16.mxu0 0
  %4972 = vmatpush1.bf16.msra.mxu0 %v3095
  %4973 = vmatprep.subr.bf16.mxu0 0
  %4974 = vmatpush2.bf16.msra.mxu0 0
  %4975 = vmatprep.subr.bf16.mxu0 0
  %4976 = vmatpush2.bf16.msra.mxu0 0
  %4977 = vmatprep.subr.bf16.mxu0 0
  %4978 = vmatpush2.bf16.msra.mxu0 0
  %4979 = vmatprep.subr.bf16.mxu0 0
  %4980 = vmatpush2.bf16.msra.mxu0 0
  %4981 = vmatprep.subr.bf16.mxu0 0
  %4982 = vmatpush2.bf16.msra.mxu0 0
  %4983 = vmatprep.subr.bf16.mxu0 0
  %4984 = vmatpush2.bf16.msra.mxu0 0
  %4985 = vmatprep.subr.bf16.mxu0 0
  %4986 = vmatpush2.bf16.msra.mxu0 0
  %4987 = vmatprep.subr.bf16.mxu0 0
  %4988 = vmatpush2.bf16.msra.mxu0 0
  %4989 = vmatprep.mubr.bf16.mxu0 0
  %4990 = vmatmul.mubr.bf16.gmra.mxu0 %v4860
  %v4991 = vpop.f32.mrf.mxu0
  %v4992 = vadd.f32 %v4956, %v4991
  %v4993 = vpop.f32.mrf.mxu0
  %v4994 = vpop.f32.mrf.mxu0
  %v4995 = vpop.f32.mrf.mxu0
  %4996 = vdwg.mxu0
  %v4997 = vadd.f32 %v4992, %v3139
  %v4998 = vtanh.pop %v4997
  %v4999 = vpack.c.bf16 %v4998, %v4998
  %v5001 = vsel %vm2685, %v4999, 0
  %5003 = vmatprep.subr.bf16.mxu0 0
  %5004 = vmatpush1.bf16.msra.mxu0 0
  %5005 = vmatprep.subr.bf16.mxu0 0
  %5006 = vmatpush1.bf16.msra.mxu0 0
  %5007 = vmatprep.subr.bf16.mxu0 0
  %5008 = vmatpush1.bf16.msra.mxu0 0
  %5009 = vmatprep.subr.bf16.mxu0 0
  %5010 = vmatpush1.bf16.msra.mxu0 0
  %5011 = vmatprep.subr.bf16.mxu0 0
  %5012 = vmatpush1.bf16.msra.mxu0 0
  %5013 = vmatprep.subr.bf16.mxu0 0
  %5014 = vmatpush1.bf16.msra.mxu0 0
  %5015 = vmatprep.subr.bf16.mxu0 0
  %5016 = vmatpush1.bf16.msra.mxu0 %v3157
  %5017 = vmatprep.subr.bf16.mxu0 0
  %5018 = vmatpush1.bf16.msra.mxu0 %v3156
  %5019 = vmatprep.subr.bf16.mxu0 0
  %5020 = vmatpush2.bf16.msra.mxu0 0
  %5021 = vmatprep.subr.bf16.mxu0 0
  %5022 = vmatpush2.bf16.msra.mxu0 0
  %5023 = vmatprep.subr.bf16.mxu0 0
  %5024 = vmatpush2.bf16.msra.mxu0 0
  %5025 = vmatprep.subr.bf16.mxu0 0
  %5026 = vmatpush2.bf16.msra.mxu0 0
  %5027 = vmatprep.subr.bf16.mxu0 0
  %5028 = vmatpush2.bf16.msra.mxu0 0
  %5029 = vmatprep.subr.bf16.mxu0 0
  %5030 = vmatpush2.bf16.msra.mxu0 0
  %5031 = vmatprep.subr.bf16.mxu0 0
  %5032 = vmatpush2.bf16.msra.mxu0 0
  %5033 = vmatprep.subr.bf16.mxu0 0
  %5034 = vmatpush2.bf16.msra.mxu0 0
  %5035 = vmatprep.mubr.bf16.mxu0 0
  %5036 = vmatmul.mubr.bf16.gmra.mxu0 %v5001
  %v5037 = vpop.f32.mrf.mxu0
  %v5038 = vadd.f32 %v3147, %v5037
  %v5039 = vpop.f32.mrf.mxu0
  %v5040 = vpop.f32.mrf.mxu0
  %v5041 = vpop.f32.mrf.mxu0
  %5042 = vdwg.mxu0
  %v5043 = vsel %vm3203, %v5038, -inf
  %5044 = vmax.xlane.f32.xlu0 %v5043
  %v5045 = vpop.xlane.xlu0 %5044
  %v5046 = vsub.f32 %v5038, %v5045
  %v5047 = vmul.f32 %v5046, 1.442695
  %v5048 = vpow.pop %v5047
  %v5049 = vsel %vm3203, %v5048, 0.0
  %5050 = vadd.xlane.f32.xlu0 %v5049
  %v5051 = vpop.xlane.xlu0 %5050
  %v5052 = vrcp.pop %v5051
  %vm5053 = vcmp.ge.f32.partialorder %v5038, %v5045
  %v5054 = vsel %vm5053, %v18, 64
  %v5055 = vsel %vm3203, %v5054, 2147483647
  %v5056 = vand.u32 %v5055, 65535
  %v5057 = vshra.s32 %v5055, 16
  %v5058 = vcvt.s32.f32 %v5056
  %v5059 = vcvt.s32.f32 %v5057
  %5060 = vmin.xlane.f32.xlu0 %v5059
  %v5061 = vpop.xlane.xlu0 %5060
  %vm5062 = vcmp.eq.f32.partialorder %v5059, %v5061
  %v5063 = vsel %vm5062, %v5058, inf
  %5064 = vmin.xlane.f32.xlu0 %v5063
  %v5065 = vpop.xlane.xlu0 %5064
  %v5066 = vcvt.f32.s32 %v5065
  %v5067 = vcvt.f32.s32 %v5061
  %v5068 = vshll.u32 %v5067, 16
  %v5069 = vadd.s32 %v5068, %v5066
  %vm5070 = vcmp.eq.s32.totalorder %v18, 5
  %v5071 = vsel %vm5070, %v5069, %v4703
  %v5072 = vsel %vm5070, %v5052, %v4704
  %vm5073 = vcmp.eq.s32.totalorder %v18, %v5069
  %v5074 = vsel %vm5073, 1, 0
  %v5075 = vcvt.s32.f32 %v5074
  %v5076 = vpack.c.bf16 %v5075, %v5075
  %5077 = vrot.lane.b32.xlu0 %v4781, 32
  %v5078 = vpop.permute.xlu0 %5077
  %v5081 = vsel %vm37, %v5076, %v5078
  %v5082 = vsel %vm2791, %v5081, 0
  %5084 = vmatprep.subr.bf16.mxu0 0
  %5085 = vmatpush1.bf16.msra.mxu0 0
  %5086 = vmatprep.subr.bf16.mxu0 0
  %5087 = vmatpush1.bf16.msra.mxu0 0
  %5088 = vmatprep.subr.bf16.mxu0 0
  %5089 = vmatpush1.bf16.msra.mxu0 %v2784
  %5090 = vmatprep.subr.bf16.mxu0 0
  %5091 = vmatpush1.bf16.msra.mxu0 %v2783
  %5092 = vmatprep.subr.bf16.mxu0 0
  %5093 = vmatpush1.bf16.msra.mxu0 %v2782
  %5094 = vmatprep.subr.bf16.mxu0 0
  %5095 = vmatpush1.bf16.msra.mxu0 %v2781
  %5096 = vmatprep.subr.bf16.mxu0 0
  %5097 = vmatpush1.bf16.msra.mxu0 %v2780
  %5098 = vmatprep.subr.bf16.mxu0 0
  %5099 = vmatpush1.bf16.msra.mxu0 %v2779
  %5100 = vmatprep.subr.bf16.mxu0 0
  %5101 = vmatpush2.bf16.msra.mxu0 0
  %5102 = vmatprep.subr.bf16.mxu0 0
  %5103 = vmatpush2.bf16.msra.mxu0 0
  %5104 = vmatprep.subr.bf16.mxu0 0
  %5105 = vmatpush2.bf16.msra.mxu0 0
  %5106 = vmatprep.subr.bf16.mxu0 0
  %5107 = vmatpush2.bf16.msra.mxu0 0
  %5108 = vmatprep.subr.bf16.mxu0 0
  %5109 = vmatpush2.bf16.msra.mxu0 0
  %5110 = vmatprep.subr.bf16.mxu0 0
  %5111 = vmatpush2.bf16.msra.mxu0 0
  %5112 = vmatprep.subr.bf16.mxu0 0
  %5113 = vmatpush2.bf16.msra.mxu0 0
  %5114 = vmatprep.subr.bf16.mxu0 0
  %5115 = vmatpush2.bf16.msra.mxu0 0
  %5116 = vmatprep.mubr.bf16.mxu0 0
  %5117 = vmatmul.mubr.bf16.gmra.mxu0 %v5082
  %v5118 = vpop.f32.mrf.mxu0
  %v5119 = vadd.f32 %v2754, %v5118
  %v5120 = vpop.f32.mrf.mxu0
  %v5121 = vpop.f32.mrf.mxu0
  %v5122 = vpop.f32.mrf.mxu0
  %5123 = vdwg.mxu0
  %v5124 = vxor.u32 %v5119, 2147483648
  %v5125 = vmul.f32 %v5124, 1.442695
  %v5126 = vpow.pop %v5125
  %v5127 = vadd.f32 %v5126, 1.0
  %v5128 = vrcp.pop %v5127
  %v5129 = vmul.f32 1.0, %v5128
  %5131 = vrot.lane.b32.xlu0 %v5119, 32
  %v5132 = vpop.permute.xlu0 %5131
  %v5134 = vmul.f32 %v5129, %v5132
  %5136 = vrot.lane.b32.xlu0 %v5134, 64
  %v5137 = vpop.permute.xlu0 %5136
  %v5139 = vadd.f32 %v5119, %v5137
  %v5140 = vtanh.pop %v5139
  %v5141 = vsub.f32 1.0, %v5129
  %5143 = vrot.lane.b32.xlu0 %v5140, 96
  %v5144 = vpop.permute.xlu0 %5143
  %v5146 = vmul.f32 %v5141, %v5144
  %v5147 = vmul.f32 %v5129, %v4780
  %v5148 = vadd.f32 %v5146, %v5147
  %v5149 = vpack.c.bf16 %v5148, %v5148
  %5151 = vrot.lane.b32.xlu0 %v5149, 96
  %v5152 = vpop.permute.xlu0 %5151
  %v5155 = vsel %vm2685, %v5152, %v4855
  %v5156 = vsel %vm37, %v5155, 0
  %5158 = vmatprep.subr.bf16.mxu0 0
  %5159 = vmatpush1.bf16.msra.mxu0 0
  %5160 = vmatprep.subr.bf16.mxu0 0
  %5161 = vmatpush1.bf16.msra.mxu0 0
  %5162 = vmatprep.subr.bf16.mxu0 0
  %5163 = vmatpush1.bf16.msra.mxu0 0
  %5164 = vmatprep.subr.bf16.mxu0 0
  %5165 = vmatpush1.bf16.msra.mxu0 0
  %5166 = vmatprep.subr.bf16.mxu0 0
  %5167 = vmatpush1.bf16.msra.mxu0 %v2900
  %5168 = vmatprep.subr.bf16.mxu0 0
  %5169 = vmatpush1.bf16.msra.mxu0 %v2899
  %5170 = vmatprep.subr.bf16.mxu0 0
  %5171 = vmatpush1.bf16.msra.mxu0 %v2898
  %5172 = vmatprep.subr.bf16.mxu0 0
  %5173 = vmatpush1.bf16.msra.mxu0 %v2897
  %5174 = vmatprep.subr.bf16.mxu0 0
  %5175 = vmatpush2.bf16.msra.mxu0 0
  %5176 = vmatprep.subr.bf16.mxu0 0
  %5177 = vmatpush2.bf16.msra.mxu0 0
  %5178 = vmatprep.subr.bf16.mxu0 0
  %5179 = vmatpush2.bf16.msra.mxu0 0
  %5180 = vmatprep.subr.bf16.mxu0 0
  %5181 = vmatpush2.bf16.msra.mxu0 0
  %5182 = vmatprep.subr.bf16.mxu0 0
  %5183 = vmatpush2.bf16.msra.mxu0 0
  %5184 = vmatprep.subr.bf16.mxu0 0
  %5185 = vmatpush2.bf16.msra.mxu0 0
  %5186 = vmatprep.subr.bf16.mxu0 0
  %5187 = vmatpush2.bf16.msra.mxu0 0
  %5188 = vmatprep.subr.bf16.mxu0 0
  %5189 = vmatpush2.bf16.msra.mxu0 0
  %5190 = vmatprep.mubr.bf16.mxu0 0
  %5191 = vmatmul.mubr.bf16.gmra.mxu0 %v5156
  %v5192 = vpop.f32.mrf.mxu0
  %v5193 = vadd.f32 %v2880, %v5192
  %v5194 = vpop.f32.mrf.mxu0
  %v5195 = vpop.f32.mrf.mxu0
  %v5196 = vpop.f32.mrf.mxu0
  %5197 = vdwg.mxu0
  %v5198 = vxor.u32 %v5193, 2147483648
  %v5199 = vmul.f32 %v5198, 1.442695
  %v5200 = vpow.pop %v5199
  %v5201 = vadd.f32 %v5200, 1.0
  %v5202 = vrcp.pop %v5201
  %v5203 = vmul.f32 1.0, %v5202
  %5205 = vrot.lane.b32.xlu0 %v5193, 32
  %v5206 = vpop.permute.xlu0 %5205
  %v5208 = vmul.f32 %v5203, %v5206
  %5210 = vrot.lane.b32.xlu0 %v5208, 64
  %v5211 = vpop.permute.xlu0 %5210
  %v5213 = vadd.f32 %v5193, %v5211
  %v5214 = vtanh.pop %v5213
  %v5215 = vsub.f32 1.0, %v5203
  %5217 = vrot.lane.b32.xlu0 %v5214, 96
  %v5218 = vpop.permute.xlu0 %5217
  %v5220 = vmul.f32 %v5215, %v5218
  %v5221 = vmul.f32 %v5203, %v4854
  %v5222 = vadd.f32 %v5220, %v5221
  %v5223 = vpack.c.bf16 %v5222, %v5222
  %5225 = vrot.lane.b32.xlu0 %v5223, 96
  %v5226 = vpop.permute.xlu0 %5225
  %v5228 = vsel %vm2685, %v5226, 0
  %5230 = vmatprep.subr.bf16.mxu0 0
  %5231 = vmatpush1.bf16.msra.mxu0 0
  %5232 = vmatprep.subr.bf16.mxu0 0
  %5233 = vmatpush1.bf16.msra.mxu0 0
  %5234 = vmatprep.subr.bf16.mxu0 0
  %5235 = vmatpush1.bf16.msra.mxu0 0
  %5236 = vmatprep.subr.bf16.mxu0 0
  %5237 = vmatpush1.bf16.msra.mxu0 0
  %5238 = vmatprep.subr.bf16.mxu0 0
  %5239 = vmatpush1.bf16.msra.mxu0 0
  %5240 = vmatprep.subr.bf16.mxu0 0
  %5241 = vmatpush1.bf16.msra.mxu0 0
  %5242 = vmatprep.subr.bf16.mxu0 0
  %5243 = vmatpush1.bf16.msra.mxu0 %v2667
  %5244 = vmatprep.subr.bf16.mxu0 0
  %5245 = vmatpush1.bf16.msra.mxu0 %v2666
  %5246 = vmatprep.subr.bf16.mxu0 0
  %5247 = vmatpush2.bf16.msra.mxu0 0
  %5248 = vmatprep.subr.bf16.mxu0 0
  %5249 = vmatpush2.bf16.msra.mxu0 0
  %5250 = vmatprep.subr.bf16.mxu0 0
  %5251 = vmatpush2.bf16.msra.mxu0 0
  %5252 = vmatprep.subr.bf16.mxu0 0
  %5253 = vmatpush2.bf16.msra.mxu0 0
  %5254 = vmatprep.subr.bf16.mxu0 0
  %5255 = vmatpush2.bf16.msra.mxu0 0
  %5256 = vmatprep.subr.bf16.mxu0 0
  %5257 = vmatpush2.bf16.msra.mxu0 0
  %5258 = vmatprep.subr.bf16.mxu0 0
  %5259 = vmatpush2.bf16.msra.mxu0 0
  %5260 = vmatprep.subr.bf16.mxu0 0
  %5261 = vmatpush2.bf16.msra.mxu0 0
  %5262 = vmatprep.mubr.bf16.mxu0 0
  %5263 = vmatmul.mubr.bf16.gmra.mxu0 %v5228
  %v5264 = vpop.f32.mrf.mxu0
  %v5265 = vadd.f32 0.0, %v5264
  %v5266 = vpop.f32.mrf.mxu0
  %v5267 = vpop.f32.mrf.mxu0
  %v5268 = vpop.f32.mrf.mxu0
  %5269 = vdwg.mxu0
  %v5270 = vsel %vm3022, %v5265, -inf
  %5271 = vmax.xlane.f32.xlu0 %v5270
  %v5272 = vpop.xlane.xlu0 %5271
  %v5273 = vsub.f32 %v5265, %v5272
  %v5274 = vmul.f32 %v5273, 1.442695
  %v5275 = vpow.pop %v5274
  %v5276 = vsel %vm3022, %v5275, 0.0
  %5277 = vadd.xlane.f32.xlu0 %v5276
  %v5278 = vpop.xlane.xlu0 %5277
  %v5279 = vrcp.pop %v5278
  %v5280 = vpack.c.bf16 %v5275, %v5275
  %v5282 = vsel %vm3034, %v5280, 0
  %5284 = vmatprep.subr.bf16.mxu0 0
  %5285 = vmatpush1.bf16.msra.mxu0 0
  %5286 = vmatprep.subr.bf16.mxu0 0
  %5287 = vmatpush1.bf16.msra.mxu0 0
  %5288 = vmatprep.subr.bf16.mxu0 0
  %5289 = vmatpush1.bf16.msra.mxu0 0
  %5290 = vmatprep.subr.bf16.mxu0 0
  %5291 = vmatpush1.bf16.msra.mxu0 0
  %5292 = vmatprep.subr.bf16.mxu0 0
  %5293 = vmatpush1.bf16.msra.mxu0 0
  %5294 = vmatprep.subr.bf16.mxu0 0
  %5295 = vmatpush1.bf16.msra.mxu0 0
  %5296 = vmatprep.subr.bf16.mxu0 0
  %5297 = vmatpush1.bf16.msra.mxu0 0
  %5298 = vmatprep.subr.bf16.mxu0 0
  %5299 = vmatpush1.bf16.msra.mxu0 %v3040
  %5300 = vmatprep.subr.bf16.mxu0 0
  %5301 = vmatpush2.bf16.msra.mxu0 0
  %5302 = vmatprep.subr.bf16.mxu0 0
  %5303 = vmatpush2.bf16.msra.mxu0 0
  %5304 = vmatprep.subr.bf16.mxu0 0
  %5305 = vmatpush2.bf16.msra.mxu0 0
  %5306 = vmatprep.subr.bf16.mxu0 0
  %5307 = vmatpush2.bf16.msra.mxu0 0
  %5308 = vmatprep.subr.bf16.mxu0 0
  %5309 = vmatpush2.bf16.msra.mxu0 0
  %5310 = vmatprep.subr.bf16.mxu0 0
  %5311 = vmatpush2.bf16.msra.mxu0 0
  %5312 = vmatprep.subr.bf16.mxu0 0
  %5313 = vmatpush2.bf16.msra.mxu0 0
  %5314 = vmatprep.subr.bf16.mxu0 0
  %5315 = vmatpush2.bf16.msra.mxu0 0
  %5316 = vmatprep.mubr.bf16.mxu0 0
  %5317 = vmatmul.mubr.bf16.gmra.mxu0 %v5282
  %v5318 = vpop.f32.mrf.mxu0
  %v5319 = vadd.f32 0.0, %v5318
  %v5320 = vpop.f32.mrf.mxu0
  %v5321 = vpop.f32.mrf.mxu0
  %v5322 = vpop.f32.mrf.mxu0
  %5323 = vdwg.mxu0
  %v5324 = vmul.f32 %v5319, %v5279
  %5325 = vmatprep.subr.bf16.mxu0 0
  %5326 = vmatpush1.bf16.msra.mxu0 0
  %5327 = vmatprep.subr.bf16.mxu0 0
  %5328 = vmatpush1.bf16.msra.mxu0 0
  %5329 = vmatprep.subr.bf16.mxu0 0
  %5330 = vmatpush1.bf16.msra.mxu0 0
  %5331 = vmatprep.subr.bf16.mxu0 0
  %5332 = vmatpush1.bf16.msra.mxu0 0
  %5333 = vmatprep.subr.bf16.mxu0 0
  %5334 = vmatpush1.bf16.msra.mxu0 0
  %5335 = vmatprep.subr.bf16.mxu0 0
  %5336 = vmatpush1.bf16.msra.mxu0 0
  %5337 = vmatprep.subr.bf16.mxu0 0
  %5338 = vmatpush1.bf16.msra.mxu0 %v3096
  %5339 = vmatprep.subr.bf16.mxu0 0
  %5340 = vmatpush1.bf16.msra.mxu0 %v3095
  %5341 = vmatprep.subr.bf16.mxu0 0
  %5342 = vmatpush2.bf16.msra.mxu0 0
  %5343 = vmatprep.subr.bf16.mxu0 0
  %5344 = vmatpush2.bf16.msra.mxu0 0
  %5345 = vmatprep.subr.bf16.mxu0 0
  %5346 = vmatpush2.bf16.msra.mxu0 0
  %5347 = vmatprep.subr.bf16.mxu0 0
  %5348 = vmatpush2.bf16.msra.mxu0 0
  %5349 = vmatprep.subr.bf16.mxu0 0
  %5350 = vmatpush2.bf16.msra.mxu0 0
  %5351 = vmatprep.subr.bf16.mxu0 0
  %5352 = vmatpush2.bf16.msra.mxu0 0
  %5353 = vmatprep.subr.bf16.mxu0 0
  %5354 = vmatpush2.bf16.msra.mxu0 0
  %5355 = vmatprep.subr.bf16.mxu0 0
  %5356 = vmatpush2.bf16.msra.mxu0 0
  %5357 = vmatprep.mubr.bf16.mxu0 0
  %5358 = vmatmul.mubr.bf16.gmra.mxu0 %v5228
  %v5359 = vpop.f32.mrf.mxu0
  %v5360 = vadd.f32 %v5324, %v5359
  %v5361 = vpop.f32.mrf.mxu0
  %v5362 = vpop.f32.mrf.mxu0
  %v5363 = vpop.f32.mrf.mxu0
  %5364 = vdwg.mxu0
  %v5365 = vadd.f32 %v5360, %v3139
  %v5366 = vtanh.pop %v5365
  %v5367 = vpack.c.bf16 %v5366, %v5366
  %v5369 = vsel %vm2685, %v5367, 0
  %5371 = vmatprep.subr.bf16.mxu0 0
  %5372 = vmatpush1.bf16.msra.mxu0 0
  %5373 = vmatprep.subr.bf16.mxu0 0
  %5374 = vmatpush1.bf16.msra.mxu0 0
  %5375 = vmatprep.subr.bf16.mxu0 0
  %5376 = vmatpush1.bf16.msra.mxu0 0
  %5377 = vmatprep.subr.bf16.mxu0 0
  %5378 = vmatpush1.bf16.msra.mxu0 0
  %5379 = vmatprep.subr.bf16.mxu0 0
  %5380 = vmatpush1.bf16.msra.mxu0 0
  %5381 = vmatprep.subr.bf16.mxu0 0
  %5382 = vmatpush1.bf16.msra.mxu0 0
  %5383 = vmatprep.subr.bf16.mxu0 0
  %5384 = vmatpush1.bf16.msra.mxu0 %v3157
  %5385 = vmatprep.subr.bf16.mxu0 0
  %5386 = vmatpush1.bf16.msra.mxu0 %v3156
  %5387 = vmatprep.subr.bf16.mxu0 0
  %5388 = vmatpush2.bf16.msra.mxu0 0
  %5389 = vmatprep.subr.bf16.mxu0 0
  %5390 = vmatpush2.bf16.msra.mxu0 0
  %5391 = vmatprep.subr.bf16.mxu0 0
  %5392 = vmatpush2.bf16.msra.mxu0 0
  %5393 = vmatprep.subr.bf16.mxu0 0
  %5394 = vmatpush2.bf16.msra.mxu0 0
  %5395 = vmatprep.subr.bf16.mxu0 0
  %5396 = vmatpush2.bf16.msra.mxu0 0
  %5397 = vmatprep.subr.bf16.mxu0 0
  %5398 = vmatpush2.bf16.msra.mxu0 0
  %5399 = vmatprep.subr.bf16.mxu0 0
  %5400 = vmatpush2.bf16.msra.mxu0 0
  %5401 = vmatprep.subr.bf16.mxu0 0
  %5402 = vmatpush2.bf16.msra.mxu0 0
  %5403 = vmatprep.mubr.bf16.mxu0 0
  %5404 = vmatmul.mubr.bf16.gmra.mxu0 %v5369
  %v5405 = vpop.f32.mrf.mxu0
  %v5406 = vadd.f32 %v3147, %v5405
  %v5407 = vpop.f32.mrf.mxu0
  %v5408 = vpop.f32.mrf.mxu0
  %v5409 = vpop.f32.mrf.mxu0
  %5410 = vdwg.mxu0
  %v5411 = vsel %vm3203, %v5406, -inf
  %5412 = vmax.xlane.f32.xlu0 %v5411
  %v5413 = vpop.xlane.xlu0 %5412
  %v5414 = vsub.f32 %v5406, %v5413
  %v5415 = vmul.f32 %v5414, 1.442695
  %v5416 = vpow.pop %v5415
  %v5417 = vsel %vm3203, %v5416, 0.0
  %5418 = vadd.xlane.f32.xlu0 %v5417
  %v5419 = vpop.xlane.xlu0 %5418
  %v5420 = vrcp.pop %v5419
  %vm5421 = vcmp.ge.f32.partialorder %v5406, %v5413
  %v5422 = vsel %vm5421, %v18, 64
  %v5423 = vsel %vm3203, %v5422, 2147483647
  %v5424 = vand.u32 %v5423, 65535
  %v5425 = vshra.s32 %v5423, 16
  %v5426 = vcvt.s32.f32 %v5424
  %v5427 = vcvt.s32.f32 %v5425
  %5428 = vmin.xlane.f32.xlu0 %v5427
  %v5429 = vpop.xlane.xlu0 %5428
  %vm5430 = vcmp.eq.f32.partialorder %v5427, %v5429
  %v5431 = vsel %vm5430, %v5426, inf
  %5432 = vmin.xlane.f32.xlu0 %v5431
  %v5433 = vpop.xlane.xlu0 %5432
  %v5434 = vcvt.f32.s32 %v5433
  %v5435 = vcvt.f32.s32 %v5429
  %v5436 = vshll.u32 %v5435, 16
  %v5437 = vadd.s32 %v5436, %v5434
  %vm5438 = vcmp.eq.s32.totalorder %v18, 6
  %v5439 = vsel %vm5438, %v5437, %v5071
  %v5440 = vsel %vm5438, %v5420, %v5072
  %vm5441 = vcmp.eq.s32.totalorder %v18, %v5437
  %v5442 = vsel %vm5441, 1, 0
  %v5443 = vcvt.s32.f32 %v5442
  %v5444 = vpack.c.bf16 %v5443, %v5443
  %5445 = vrot.lane.b32.xlu0 %v5149, 32
  %v5446 = vpop.permute.xlu0 %5445
  %v5449 = vsel %vm37, %v5444, %v5446
  %v5450 = vsel %vm2791, %v5449, 0
  %5452 = vmatprep.subr.bf16.mxu0 0
  %5453 = vmatpush1.bf16.msra.mxu0 0
  %5454 = vmatprep.subr.bf16.mxu0 0
  %5455 = vmatpush1.bf16.msra.mxu0 0
  %5456 = vmatprep.subr.bf16.mxu0 0
  %5457 = vmatpush1.bf16.msra.mxu0 %v2784
  %5458 = vmatprep.subr.bf16.mxu0 0
  %5459 = vmatpush1.bf16.msra.mxu0 %v2783
  %5460 = vmatprep.subr.bf16.mxu0 0
  %5461 = vmatpush1.bf16.msra.mxu0 %v2782
  %5462 = vmatprep.subr.bf16.mxu0 0
  %5463 = vmatpush1.bf16.msra.mxu0 %v2781
  %5464 = vmatprep.subr.bf16.mxu0 0
  %5465 = vmatpush1.bf16.msra.mxu0 %v2780
  %5466 = vmatprep.subr.bf16.mxu0 0
  %5467 = vmatpush1.bf16.msra.mxu0 %v2779
  %5468 = vmatprep.subr.bf16.mxu0 0
  %5469 = vmatpush2.bf16.msra.mxu0 0
  %5470 = vmatprep.subr.bf16.mxu0 0
  %5471 = vmatpush2.bf16.msra.mxu0 0
  %5472 = vmatprep.subr.bf16.mxu0 0
  %5473 = vmatpush2.bf16.msra.mxu0 0
  %5474 = vmatprep.subr.bf16.mxu0 0
  %5475 = vmatpush2.bf16.msra.mxu0 0
  %5476 = vmatprep.subr.bf16.mxu0 0
  %5477 = vmatpush2.bf16.msra.mxu0 0
  %5478 = vmatprep.subr.bf16.mxu0 0
  %5479 = vmatpush2.bf16.msra.mxu0 0
  %5480 = vmatprep.subr.bf16.mxu0 0
  %5481 = vmatpush2.bf16.msra.mxu0 0
  %5482 = vmatprep.subr.bf16.mxu0 0
  %5483 = vmatpush2.bf16.msra.mxu0 0
  %5484 = vmatprep.mubr.bf16.mxu0 0
  %5485 = vmatmul.mubr.bf16.gmra.mxu0 %v5450
  %v5486 = vpop.f32.mrf.mxu0
  %v5487 = vadd.f32 %v2754, %v5486
  %v5488 = vpop.f32.mrf.mxu0
  %v5489 = vpop.f32.mrf.mxu0
  %v5490 = vpop.f32.mrf.mxu0
  %5491 = vdwg.mxu0
  %v5492 = vxor.u32 %v5487, 2147483648
  %v5493 = vmul.f32 %v5492, 1.442695
  %v5494 = vpow.pop %v5493
  %v5495 = vadd.f32 %v5494, 1.0
  %v5496 = vrcp.pop %v5495
  %v5497 = vmul.f32 1.0, %v5496
  %5499 = vrot.lane.b32.xlu0 %v5487, 32
  %v5500 = vpop.permute.xlu0 %5499
  %v5502 = vmul.f32 %v5497, %v5500
  %5504 = vrot.lane.b32.xlu0 %v5502, 64
  %v5505 = vpop.permute.xlu0 %5504
  %v5507 = vadd.f32 %v5487, %v5505
  %v5508 = vtanh.pop %v5507
  %v5509 = vsub.f32 1.0, %v5497
  %5511 = vrot.lane.b32.xlu0 %v5508, 96
  %v5512 = vpop.permute.xlu0 %5511
  %v5514 = vmul.f32 %v5509, %v5512
  %v5515 = vmul.f32 %v5497, %v5148
  %v5516 = vadd.f32 %v5514, %v5515
  %v5517 = vpack.c.bf16 %v5516, %v5516
  %5519 = vrot.lane.b32.xlu0 %v5517, 96
  %v5520 = vpop.permute.xlu0 %5519
  %v5523 = vsel %vm2685, %v5520, %v5223
  %v5524 = vsel %vm37, %v5523, 0
  %5526 = vmatprep.subr.bf16.mxu0 0
  %5527 = vmatpush1.bf16.msra.mxu0 0
  %5528 = vmatprep.subr.bf16.mxu0 0
  %5529 = vmatpush1.bf16.msra.mxu0 0
  %5530 = vmatprep.subr.bf16.mxu0 0
  %5531 = vmatpush1.bf16.msra.mxu0 0
  %5532 = vmatprep.subr.bf16.mxu0 0
  %5533 = vmatpush1.bf16.msra.mxu0 0
  %5534 = vmatprep.subr.bf16.mxu0 0
  %5535 = vmatpush1.bf16.msra.mxu0 %v2900
  %5536 = vmatprep.subr.bf16.mxu0 0
  %5537 = vmatpush1.bf16.msra.mxu0 %v2899
  %5538 = vmatprep.subr.bf16.mxu0 0
  %5539 = vmatpush1.bf16.msra.mxu0 %v2898
  %5540 = vmatprep.subr.bf16.mxu0 0
  %5541 = vmatpush1.bf16.msra.mxu0 %v2897
  %5542 = vmatprep.subr.bf16.mxu0 0
  %5543 = vmatpush2.bf16.msra.mxu0 0
  %5544 = vmatprep.subr.bf16.mxu0 0
  %5545 = vmatpush2.bf16.msra.mxu0 0
  %5546 = vmatprep.subr.bf16.mxu0 0
  %5547 = vmatpush2.bf16.msra.mxu0 0
  %5548 = vmatprep.subr.bf16.mxu0 0
  %5549 = vmatpush2.bf16.msra.mxu0 0
  %5550 = vmatprep.subr.bf16.mxu0 0
  %5551 = vmatpush2.bf16.msra.mxu0 0
  %5552 = vmatprep.subr.bf16.mxu0 0
  %5553 = vmatpush2.bf16.msra.mxu0 0
  %5554 = vmatprep.subr.bf16.mxu0 0
  %5555 = vmatpush2.bf16.msra.mxu0 0
  %5556 = vmatprep.subr.bf16.mxu0 0
  %5557 = vmatpush2.bf16.msra.mxu0 0
  %5558 = vmatprep.mubr.bf16.mxu0 0
  %5559 = vmatmul.mubr.bf16.gmra.mxu0 %v5524
  %v5560 = vpop.f32.mrf.mxu0
  %v5561 = vadd.f32 %v2880, %v5560
  %v5562 = vpop.f32.mrf.mxu0
  %v5563 = vpop.f32.mrf.mxu0
  %v5564 = vpop.f32.mrf.mxu0
  %5565 = vdwg.mxu0
  %v5566 = vxor.u32 %v5561, 2147483648
  %v5567 = vmul.f32 %v5566, 1.442695
  %v5568 = vpow.pop %v5567
  %v5569 = vadd.f32 %v5568, 1.0
  %v5570 = vrcp.pop %v5569
  %v5571 = vmul.f32 1.0, %v5570
  %5573 = vrot.lane.b32.xlu0 %v5561, 32
  %v5574 = vpop.permute.xlu0 %5573
  %v5576 = vmul.f32 %v5571, %v5574
  %5578 = vrot.lane.b32.xlu0 %v5576, 64
  %v5579 = vpop.permute.xlu0 %5578
  %v5581 = vadd.f32 %v5561, %v5579
  %v5582 = vtanh.pop %v5581
  %v5583 = vsub.f32 1.0, %v5571
  %5585 = vrot.lane.b32.xlu0 %v5582, 96
  %v5586 = vpop.permute.xlu0 %5585
  %v5588 = vmul.f32 %v5583, %v5586
  %v5589 = vmul.f32 %v5571, %v5222
  %v5590 = vadd.f32 %v5588, %v5589
  %v5591 = vpack.c.bf16 %v5590, %v5590
  %5593 = vrot.lane.b32.xlu0 %v5591, 96
  %v5594 = vpop.permute.xlu0 %5593
  %v5596 = vsel %vm2685, %v5594, 0
  %5598 = vmatprep.subr.bf16.mxu0 0
  %5599 = vmatpush1.bf16.msra.mxu0 0
  %5600 = vmatprep.subr.bf16.mxu0 0
  %5601 = vmatpush1.bf16.msra.mxu0 0
  %5602 = vmatprep.subr.bf16.mxu0 0
  %5603 = vmatpush1.bf16.msra.mxu0 0
  %5604 = vmatprep.subr.bf16.mxu0 0
  %5605 = vmatpush1.bf16.msra.mxu0 0
  %5606 = vmatprep.subr.bf16.mxu0 0
  %5607 = vmatpush1.bf16.msra.mxu0 0
  %5608 = vmatprep.subr.bf16.mxu0 0
  %5609 = vmatpush1.bf16.msra.mxu0 0
  %5610 = vmatprep.subr.bf16.mxu0 0
  %5611 = vmatpush1.bf16.msra.mxu0 %v2667
  %5612 = vmatprep.subr.bf16.mxu0 0
  %5613 = vmatpush1.bf16.msra.mxu0 %v2666
  %5614 = vmatprep.subr.bf16.mxu0 0
  %5615 = vmatpush2.bf16.msra.mxu0 0
  %5616 = vmatprep.subr.bf16.mxu0 0
  %5617 = vmatpush2.bf16.msra.mxu0 0
  %5618 = vmatprep.subr.bf16.mxu0 0
  %5619 = vmatpush2.bf16.msra.mxu0 0
  %5620 = vmatprep.subr.bf16.mxu0 0
  %5621 = vmatpush2.bf16.msra.mxu0 0
  %5622 = vmatprep.subr.bf16.mxu0 0
  %5623 = vmatpush2.bf16.msra.mxu0 0
  %5624 = vmatprep.subr.bf16.mxu0 0
  %5625 = vmatpush2.bf16.msra.mxu0 0
  %5626 = vmatprep.subr.bf16.mxu0 0
  %5627 = vmatpush2.bf16.msra.mxu0 0
  %5628 = vmatprep.subr.bf16.mxu0 0
  %5629 = vmatpush2.bf16.msra.mxu0 0
  %5630 = vmatprep.mubr.bf16.mxu0 0
  %5631 = vmatmul.mubr.bf16.gmra.mxu0 %v5596
  %v5632 = vpop.f32.mrf.mxu0
  %v5633 = vadd.f32 0.0, %v5632
  %v5634 = vpop.f32.mrf.mxu0
  %v5635 = vpop.f32.mrf.mxu0
  %v5636 = vpop.f32.mrf.mxu0
  %5637 = vdwg.mxu0
  %v5638 = vsel %vm3022, %v5633, -inf
  %5639 = vmax.xlane.f32.xlu0 %v5638
  %v5640 = vpop.xlane.xlu0 %5639
  %v5641 = vsub.f32 %v5633, %v5640
  %v5642 = vmul.f32 %v5641, 1.442695
  %v5643 = vpow.pop %v5642
  %v5644 = vsel %vm3022, %v5643, 0.0
  %5645 = vadd.xlane.f32.xlu0 %v5644
  %v5646 = vpop.xlane.xlu0 %5645
  %v5647 = vrcp.pop %v5646
  %v5648 = vpack.c.bf16 %v5643, %v5643
  %v5650 = vsel %vm3034, %v5648, 0
  %5652 = vmatprep.subr.bf16.mxu0 0
  %5653 = vmatpush1.bf16.msra.mxu0 0
  %5654 = vmatprep.subr.bf16.mxu0 0
  %5655 = vmatpush1.bf16.msra.mxu0 0
  %5656 = vmatprep.subr.bf16.mxu0 0
  %5657 = vmatpush1.bf16.msra.mxu0 0
  %5658 = vmatprep.subr.bf16.mxu0 0
  %5659 = vmatpush1.bf16.msra.mxu0 0
  %5660 = vmatprep.subr.bf16.mxu0 0
  %5661 = vmatpush1.bf16.msra.mxu0 0
  %5662 = vmatprep.subr.bf16.mxu0 0
  %5663 = vmatpush1.bf16.msra.mxu0 0
  %5664 = vmatprep.subr.bf16.mxu0 0
  %5665 = vmatpush1.bf16.msra.mxu0 0
  %5666 = vmatprep.subr.bf16.mxu0 0
  %5667 = vmatpush1.bf16.msra.mxu0 %v3040
  %5668 = vmatprep.subr.bf16.mxu0 0
  %5669 = vmatpush2.bf16.msra.mxu0 0
  %5670 = vmatprep.subr.bf16.mxu0 0
  %5671 = vmatpush2.bf16.msra.mxu0 0
  %5672 = vmatprep.subr.bf16.mxu0 0
  %5673 = vmatpush2.bf16.msra.mxu0 0
  %5674 = vmatprep.subr.bf16.mxu0 0
  %5675 = vmatpush2.bf16.msra.mxu0 0
  %5676 = vmatprep.subr.bf16.mxu0 0
  %5677 = vmatpush2.bf16.msra.mxu0 0
  %5678 = vmatprep.subr.bf16.mxu0 0
  %5679 = vmatpush2.bf16.msra.mxu0 0
  %5680 = vmatprep.subr.bf16.mxu0 0
  %5681 = vmatpush2.bf16.msra.mxu0 0
  %5682 = vmatprep.subr.bf16.mxu0 0
  %5683 = vmatpush2.bf16.msra.mxu0 0
  %5684 = vmatprep.mubr.bf16.mxu0 0
  %5685 = vmatmul.mubr.bf16.gmra.mxu0 %v5650
  %v5686 = vpop.f32.mrf.mxu0
  %v5687 = vadd.f32 0.0, %v5686
  %v5688 = vpop.f32.mrf.mxu0
  %v5689 = vpop.f32.mrf.mxu0
  %v5690 = vpop.f32.mrf.mxu0
  %5691 = vdwg.mxu0
  %v5692 = vmul.f32 %v5687, %v5647
  %5693 = vmatprep.subr.bf16.mxu0 0
  %5694 = vmatpush1.bf16.msra.mxu0 0
  %5695 = vmatprep.subr.bf16.mxu0 0
  %5696 = vmatpush1.bf16.msra.mxu0 0
  %5697 = vmatprep.subr.bf16.mxu0 0
  %5698 = vmatpush1.bf16.msra.mxu0 0
  %5699 = vmatprep.subr.bf16.mxu0 0
  %5700 = vmatpush1.bf16.msra.mxu0 0
  %5701 = vmatprep.subr.bf16.mxu0 0
  %5702 = vmatpush1.bf16.msra.mxu0 0
  %5703 = vmatprep.subr.bf16.mxu0 0
  %5704 = vmatpush1.bf16.msra.mxu0 0
  %5705 = vmatprep.subr.bf16.mxu0 0
  %5706 = vmatpush1.bf16.msra.mxu0 %v3096
  %5707 = vmatprep.subr.bf16.mxu0 0
  %5708 = vmatpush1.bf16.msra.mxu0 %v3095
  %5709 = vmatprep.subr.bf16.mxu0 0
  %5710 = vmatpush2.bf16.msra.mxu0 0
  %5711 = vmatprep.subr.bf16.mxu0 0
  %5712 = vmatpush2.bf16.msra.mxu0 0
  %5713 = vmatprep.subr.bf16.mxu0 0
  %5714 = vmatpush2.bf16.msra.mxu0 0
  %5715 = vmatprep.subr.bf16.mxu0 0
  %5716 = vmatpush2.bf16.msra.mxu0 0
  %5717 = vmatprep.subr.bf16.mxu0 0
  %5718 = vmatpush2.bf16.msra.mxu0 0
  %5719 = vmatprep.subr.bf16.mxu0 0
  %5720 = vmatpush2.bf16.msra.mxu0 0
  %5721 = vmatprep.subr.bf16.mxu0 0
  %5722 = vmatpush2.bf16.msra.mxu0 0
  %5723 = vmatprep.subr.bf16.mxu0 0
  %5724 = vmatpush2.bf16.msra.mxu0 0
  %5725 = vmatprep.mubr.bf16.mxu0 0
  %5726 = vmatmul.mubr.bf16.gmra.mxu0 %v5596
  %v5727 = vpop.f32.mrf.mxu0
  %v5728 = vadd.f32 %v5692, %v5727
  %v5729 = vpop.f32.mrf.mxu0
  %v5730 = vpop.f32.mrf.mxu0
  %v5731 = vpop.f32.mrf.mxu0
  %5732 = vdwg.mxu0
  %v5733 = vadd.f32 %v5728, %v3139
  %v5734 = vtanh.pop %v5733
  %v5735 = vpack.c.bf16 %v5734, %v5734
  %v5737 = vsel %vm2685, %v5735, 0
  %5739 = vmatprep.subr.bf16.mxu0 0
  %5740 = vmatpush1.bf16.msra.mxu0 0
  %5741 = vmatprep.subr.bf16.mxu0 0
  %5742 = vmatpush1.bf16.msra.mxu0 0
  %5743 = vmatprep.subr.bf16.mxu0 0
  %5744 = vmatpush1.bf16.msra.mxu0 0
  %5745 = vmatprep.subr.bf16.mxu0 0
  %5746 = vmatpush1.bf16.msra.mxu0 0
  %5747 = vmatprep.subr.bf16.mxu0 0
  %5748 = vmatpush1.bf16.msra.mxu0 0
  %5749 = vmatprep.subr.bf16.mxu0 0
  %5750 = vmatpush1.bf16.msra.mxu0 0
  %5751 = vmatprep.subr.bf16.mxu0 0
  %5752 = vmatpush1.bf16.msra.mxu0 %v3157
  %5753 = vmatprep.subr.bf16.mxu0 0
  %5754 = vmatpush1.bf16.msra.mxu0 %v3156
  %5755 = vmatprep.subr.bf16.mxu0 0
  %5756 = vmatpush2.bf16.msra.mxu0 0
  %5757 = vmatprep.subr.bf16.mxu0 0
  %5758 = vmatpush2.bf16.msra.mxu0 0
  %5759 = vmatprep.subr.bf16.mxu0 0
  %5760 = vmatpush2.bf16.msra.mxu0 0
  %5761 = vmatprep.subr.bf16.mxu0 0
  %5762 = vmatpush2.bf16.msra.mxu0 0
  %5763 = vmatprep.subr.bf16.mxu0 0
  %5764 = vmatpush2.bf16.msra.mxu0 0
  %5765 = vmatprep.subr.bf16.mxu0 0
  %5766 = vmatpush2.bf16.msra.mxu0 0
  %5767 = vmatprep.subr.bf16.mxu0 0
  %5768 = vmatpush2.bf16.msra.mxu0 0
  %5769 = vmatprep.subr.bf16.mxu0 0
  %5770 = vmatpush2.bf16.msra.mxu0 0
  %5771 = vmatprep.mubr.bf16.mxu0 0
  %5772 = vmatmul.mubr.bf16.gmra.mxu0 %v5737
  %v5773 = vpop.f32.mrf.mxu0
  %v5774 = vadd.f32 %v3147, %v5773
  %v5775 = vpop.f32.mrf.mxu0
  %v5776 = vpop.f32.mrf.mxu0
  %v5777 = vpop.f32.mrf.mxu0
  %5778 = vdwg.mxu0
  %v5779 = vsel %vm3203, %v5774, -inf
  %5780 = vmax.xlane.f32.xlu0 %v5779
  %v5781 = vpop.xlane.xlu0 %5780
  %v5782 = vsub.f32 %v5774, %v5781
  %v5783 = vmul.f32 %v5782, 1.442695
  %v5784 = vpow.pop %v5783
  %v5785 = vsel %vm3203, %v5784, 0.0
  %5786 = vadd.xlane.f32.xlu0 %v5785
  %v5787 = vpop.xlane.xlu0 %5786
  %v5788 = vrcp.pop %v5787
  %vm5789 = vcmp.ge.f32.partialorder %v5774, %v5781
  %v5790 = vsel %vm5789, %v18, 64
  %v5791 = vsel %vm3203, %v5790, 2147483647
  %v5792 = vand.u32 %v5791, 65535
  %v5793 = vshra.s32 %v5791, 16
  %v5794 = vcvt.s32.f32 %v5792
  %v5795 = vcvt.s32.f32 %v5793
  %5796 = vmin.xlane.f32.xlu0 %v5795
  %v5797 = vpop.xlane.xlu0 %5796
  %vm5798 = vcmp.eq.f32.partialorder %v5795, %v5797
  %v5799 = vsel %vm5798, %v5794, inf
  %5800 = vmin.xlane.f32.xlu0 %v5799
  %v5801 = vpop.xlane.xlu0 %5800
  %v5802 = vcvt.f32.s32 %v5801
  %v5803 = vcvt.f32.s32 %v5797
  %v5804 = vshll.u32 %v5803, 16
  %v5805 = vadd.s32 %v5804, %v5802
  %vm5806 = vcmp.eq.s32.totalorder %v18, 7
  %v5807 = vsel %vm5806, %v5805, %v5439
  %v5808 = vsel %vm5806, %v5788, %v5440
  %vm5809 = vcmp.eq.s32.totalorder %v18, %v5805
  %v5810 = vsel %vm5809, 1, 0
  %v5811 = vcvt.s32.f32 %v5810
  %v5812 = vpack.c.bf16 %v5811, %v5811
  %5813 = vrot.lane.b32.xlu0 %v5517, 32
  %v5814 = vpop.permute.xlu0 %5813
  %v5817 = vsel %vm37, %v5812, %v5814
  %v5818 = vsel %vm2791, %v5817, 0
  %5820 = vmatprep.subr.bf16.mxu0 0
  %5821 = vmatpush1.bf16.msra.mxu0 0
  %5822 = vmatprep.subr.bf16.mxu0 0
  %5823 = vmatpush1.bf16.msra.mxu0 0
  %5824 = vmatprep.subr.bf16.mxu0 0
  %5825 = vmatpush1.bf16.msra.mxu0 %v2784
  %5826 = vmatprep.subr.bf16.mxu0 0
  %5827 = vmatpush1.bf16.msra.mxu0 %v2783
  %5828 = vmatprep.subr.bf16.mxu0 0
  %5829 = vmatpush1.bf16.msra.mxu0 %v2782
  %5830 = vmatprep.subr.bf16.mxu0 0
  %5831 = vmatpush1.bf16.msra.mxu0 %v2781
  %5832 = vmatprep.subr.bf16.mxu0 0
  %5833 = vmatpush1.bf16.msra.mxu0 %v2780
  %5834 = vmatprep.subr.bf16.mxu0 0
  %5835 = vmatpush1.bf16.msra.mxu0 %v2779
  %5836 = vmatprep.subr.bf16.mxu0 0
  %5837 = vmatpush2.bf16.msra.mxu0 0
  %5838 = vmatprep.subr.bf16.mxu0 0
  %5839 = vmatpush2.bf16.msra.mxu0 0
  %5840 = vmatprep.subr.bf16.mxu0 0
  %5841 = vmatpush2.bf16.msra.mxu0 0
  %5842 = vmatprep.subr.bf16.mxu0 0
  %5843 = vmatpush2.bf16.msra.mxu0 0
  %5844 = vmatprep.subr.bf16.mxu0 0
  %5845 = vmatpush2.bf16.msra.mxu0 0
  %5846 = vmatprep.subr.bf16.mxu0 0
  %5847 = vmatpush2.bf16.msra.mxu0 0
  %5848 = vmatprep.subr.bf16.mxu0 0
  %5849 = vmatpush2.bf16.msra.mxu0 0
  %5850 = vmatprep.subr.bf16.mxu0 0
  %5851 = vmatpush2.bf16.msra.mxu0 0
  %5852 = vmatprep.mubr.bf16.mxu0 0
  %5853 = vmatmul.mubr.bf16.gmra.mxu0 %v5818
  %v5854 = vpop.f32.mrf.mxu0
  %v5855 = vadd.f32 %v2754, %v5854
  %v5856 = vpop.f32.mrf.mxu0
  %v5857 = vpop.f32.mrf.mxu0
  %v5858 = vpop.f32.mrf.mxu0
  %5859 = vdwg.mxu0
  %v5860 = vxor.u32 %v5855, 2147483648
  %v5861 = vmul.f32 %v5860, 1.442695
  %v5862 = vpow.pop %v5861
  %v5863 = vadd.f32 %v5862, 1.0
  %v5864 = vrcp.pop %v5863
  %v5865 = vmul.f32 1.0, %v5864
  %5867 = vrot.lane.b32.xlu0 %v5855, 32
  %v5868 = vpop.permute.xlu0 %5867
  %v5870 = vmul.f32 %v5865, %v5868
  %5872 = vrot.lane.b32.xlu0 %v5870, 64
  %v5873 = vpop.permute.xlu0 %5872
  %v5875 = vadd.f32 %v5855, %v5873
  %v5876 = vtanh.pop %v5875
  %v5877 = vsub.f32 1.0, %v5865
  %5879 = vrot.lane.b32.xlu0 %v5876, 96
  %v5880 = vpop.permute.xlu0 %5879
  %v5882 = vmul.f32 %v5877, %v5880
  %v5883 = vmul.f32 %v5865, %v5516
  %v5884 = vadd.f32 %v5882, %v5883
  %v5885 = vpack.c.bf16 %v5884, %v5884
  %5887 = vrot.lane.b32.xlu0 %v5885, 96
  %v5888 = vpop.permute.xlu0 %5887
  %v5891 = vsel %vm2685, %v5888, %v5591
  %v5892 = vsel %vm37, %v5891, 0
  %5894 = vmatprep.subr.bf16.mxu0 0
  %5895 = vmatpush1.bf16.msra.mxu0 0
  %5896 = vmatprep.subr.bf16.mxu0 0
  %5897 = vmatpush1.bf16.msra.mxu0 0
  %5898 = vmatprep.subr.bf16.mxu0 0
  %5899 = vmatpush1.bf16.msra.mxu0 0
  %5900 = vmatprep.subr.bf16.mxu0 0
  %5901 = vmatpush1.bf16.msra.mxu0 0
  %5902 = vmatprep.subr.bf16.mxu0 0
  %5903 = vmatpush1.bf16.msra.mxu0 %v2900
  %5904 = vmatprep.subr.bf16.mxu0 0
  %5905 = vmatpush1.bf16.msra.mxu0 %v2899
  %5906 = vmatprep.subr.bf16.mxu0 0
  %5907 = vmatpush1.bf16.msra.mxu0 %v2898
  %5908 = vmatprep.subr.bf16.mxu0 0
  %5909 = vmatpush1.bf16.msra.mxu0 %v2897
  %5910 = vmatprep.subr.bf16.mxu0 0
  %5911 = vmatpush2.bf16.msra.mxu0 0
  %5912 = vmatprep.subr.bf16.mxu0 0
  %5913 = vmatpush2.bf16.msra.mxu0 0
  %5914 = vmatprep.subr.bf16.mxu0 0
  %5915 = vmatpush2.bf16.msra.mxu0 0
  %5916 = vmatprep.subr.bf16.mxu0 0
  %5917 = vmatpush2.bf16.msra.mxu0 0
  %5918 = vmatprep.subr.bf16.mxu0 0
  %5919 = vmatpush2.bf16.msra.mxu0 0
  %5920 = vmatprep.subr.bf16.mxu0 0
  %5921 = vmatpush2.bf16.msra.mxu0 0
  %5922 = vmatprep.subr.bf16.mxu0 0
  %5923 = vmatpush2.bf16.msra.mxu0 0
  %5924 = vmatprep.subr.bf16.mxu0 0
  %5925 = vmatpush2.bf16.msra.mxu0 0
  %5926 = vmatprep.mubr.bf16.mxu0 0
  %5927 = vmatmul.mubr.bf16.gmra.mxu0 %v5892
  %v5928 = vpop.f32.mrf.mxu0
  %v5929 = vadd.f32 %v2880, %v5928
  %v5930 = vpop.f32.mrf.mxu0
  %v5931 = vpop.f32.mrf.mxu0
  %v5932 = vpop.f32.mrf.mxu0
  %5933 = vdwg.mxu0
  %v5934 = vxor.u32 %v5929, 2147483648
  %v5935 = vmul.f32 %v5934, 1.442695
  %v5936 = vpow.pop %v5935
  %v5937 = vadd.f32 %v5936, 1.0
  %v5938 = vrcp.pop %v5937
  %v5939 = vmul.f32 1.0, %v5938
  %5941 = vrot.lane.b32.xlu0 %v5929, 32
  %v5942 = vpop.permute.xlu0 %5941
  %v5944 = vmul.f32 %v5939, %v5942
  %5946 = vrot.lane.b32.xlu0 %v5944, 64
  %v5947 = vpop.permute.xlu0 %5946
  %v5949 = vadd.f32 %v5929, %v5947
  %v5950 = vtanh.pop %v5949
  %v5951 = vsub.f32 1.0, %v5939
  %5953 = vrot.lane.b32.xlu0 %v5950, 96
  %v5954 = vpop.permute.xlu0 %5953
  %v5956 = vmul.f32 %v5951, %v5954
  %v5957 = vmul.f32 %v5939, %v5590
  %v5958 = vadd.f32 %v5956, %v5957
  %v5959 = vpack.c.bf16 %v5958, %v5958
  %5961 = vrot.lane.b32.xlu0 %v5959, 96
  %v5962 = vpop.permute.xlu0 %5961
  %v5964 = vsel %vm2685, %v5962, 0
  %5966 = vmatprep.subr.bf16.mxu0 0
  %5967 = vmatpush1.bf16.msra.mxu0 0
  %5968 = vmatprep.subr.bf16.mxu0 0
  %5969 = vmatpush1.bf16.msra.mxu0 0
  %5970 = vmatprep.subr.bf16.mxu0 0
  %5971 = vmatpush1.bf16.msra.mxu0 0
  %5972 = vmatprep.subr.bf16.mxu0 0
  %5973 = vmatpush1.bf16.msra.mxu0 0
  %5974 = vmatprep.subr.bf16.mxu0 0
  %5975 = vmatpush1.bf16.msra.mxu0 0
  %5976 = vmatprep.subr.bf16.mxu0 0
  %5977 = vmatpush1.bf16.msra.mxu0 0
  %5978 = vmatprep.subr.bf16.mxu0 0
  %5979 = vmatpush1.bf16.msra.mxu0 %v2667
  %5980 = vmatprep.subr.bf16.mxu0 0
  %5981 = vmatpush1.bf16.msra.mxu0 %v2666
  %5982 = vmatprep.subr.bf16.mxu0 0
  %5983 = vmatpush2.bf16.msra.mxu0 0
  %5984 = vmatprep.subr.bf16.mxu0 0
  %5985 = vmatpush2.bf16.msra.mxu0 0
  %5986 = vmatprep.subr.bf16.mxu0 0
  %5987 = vmatpush2.bf16.msra.mxu0 0
  %5988 = vmatprep.subr.bf16.mxu0 0
  %5989 = vmatpush2.bf16.msra.mxu0 0
  %5990 = vmatprep.subr.bf16.mxu0 0
  %5991 = vmatpush2.bf16.msra.mxu0 0
  %5992 = vmatprep.subr.bf16.mxu0 0
  %5993 = vmatpush2.bf16.msra.mxu0 0
  %5994 = vmatprep.subr.bf16.mxu0 0
  %5995 = vmatpush2.bf16.msra.mxu0 0
  %5996 = vmatprep.subr.bf16.mxu0 0
  %5997 = vmatpush2.bf16.msra.mxu0 0
  %5998 = vmatprep.mubr.bf16.mxu0 0
  %5999 = vmatmul.mubr.bf16.gmra.mxu0 %v5964
  %v6000 = vpop.f32.mrf.mxu0
  %v6001 = vadd.f32 0.0, %v6000
  %v6002 = vpop.f32.mrf.mxu0
  %v6003 = vpop.f32.mrf.mxu0
  %v6004 = vpop.f32.mrf.mxu0
  %6005 = vdwg.mxu0
  %v6006 = vsel %vm3022, %v6001, -inf
  %6007 = vmax.xlane.f32.xlu0 %v6006
  %v6008 = vpop.xlane.xlu0 %6007
  %v6009 = vsub.f32 %v6001, %v6008
  %v6010 = vmul.f32 %v6009, 1.442695
  %v6011 = vpow.pop %v6010
  %v6012 = vsel %vm3022, %v6011, 0.0
  %6013 = vadd.xlane.f32.xlu0 %v6012
  %v6014 = vpop.xlane.xlu0 %6013
  %v6015 = vrcp.pop %v6014
  %v6016 = vpack.c.bf16 %v6011, %v6011
  %v6018 = vsel %vm3034, %v6016, 0
  %6020 = vmatprep.subr.bf16.mxu0 0
  %6021 = vmatpush1.bf16.msra.mxu0 0
  %6022 = vmatprep.subr.bf16.mxu0 0
  %6023 = vmatpush1.bf16.msra.mxu0 0
  %6024 = vmatprep.subr.bf16.mxu0 0
  %6025 = vmatpush1.bf16.msra.mxu0 0
  %6026 = vmatprep.subr.bf16.mxu0 0
  %6027 = vmatpush1.bf16.msra.mxu0 0
  %6028 = vmatprep.subr.bf16.mxu0 0
  %6029 = vmatpush1.bf16.msra.mxu0 0
  %6030 = vmatprep.subr.bf16.mxu0 0
  %6031 = vmatpush1.bf16.msra.mxu0 0
  %6032 = vmatprep.subr.bf16.mxu0 0
  %6033 = vmatpush1.bf16.msra.mxu0 0
  %6034 = vmatprep.subr.bf16.mxu0 0
  %6035 = vmatpush1.bf16.msra.mxu0 %v3040
  %6036 = vmatprep.subr.bf16.mxu0 0
  %6037 = vmatpush2.bf16.msra.mxu0 0
  %6038 = vmatprep.subr.bf16.mxu0 0
  %6039 = vmatpush2.bf16.msra.mxu0 0
  %6040 = vmatprep.subr.bf16.mxu0 0
  %6041 = vmatpush2.bf16.msra.mxu0 0
  %6042 = vmatprep.subr.bf16.mxu0 0
  %6043 = vmatpush2.bf16.msra.mxu0 0
  %6044 = vmatprep.subr.bf16.mxu0 0
  %6045 = vmatpush2.bf16.msra.mxu0 0
  %6046 = vmatprep.subr.bf16.mxu0 0
  %6047 = vmatpush2.bf16.msra.mxu0 0
  %6048 = vmatprep.subr.bf16.mxu0 0
  %6049 = vmatpush2.bf16.msra.mxu0 0
  %6050 = vmatprep.subr.bf16.mxu0 0
  %6051 = vmatpush2.bf16.msra.mxu0 0
  %6052 = vmatprep.mubr.bf16.mxu0 0
  %6053 = vmatmul.mubr.bf16.gmra.mxu0 %v6018
  %v6054 = vpop.f32.mrf.mxu0
  %v6055 = vadd.f32 0.0, %v6054
  %v6056 = vpop.f32.mrf.mxu0
  %v6057 = vpop.f32.mrf.mxu0
  %v6058 = vpop.f32.mrf.mxu0
  %6059 = vdwg.mxu0
  %v6060 = vmul.f32 %v6055, %v6015
  %6061 = vmatprep.subr.bf16.mxu0 0
  %6062 = vmatpush1.bf16.msra.mxu0 0
  %6063 = vmatprep.subr.bf16.mxu0 0
  %6064 = vmatpush1.bf16.msra.mxu0 0
  %6065 = vmatprep.subr.bf16.mxu0 0
  %6066 = vmatpush1.bf16.msra.mxu0 0
  %6067 = vmatprep.subr.bf16.mxu0 0
  %6068 = vmatpush1.bf16.msra.mxu0 0
  %6069 = vmatprep.subr.bf16.mxu0 0
  %6070 = vmatpush1.bf16.msra.mxu0 0
  %6071 = vmatprep.subr.bf16.mxu0 0
  %6072 = vmatpush1.bf16.msra.mxu0 0
  %6073 = vmatprep.subr.bf16.mxu0 0
  %6074 = vmatpush1.bf16.msra.mxu0 %v3096
  %6075 = vmatprep.subr.bf16.mxu0 0
  %6076 = vmatpush1.bf16.msra.mxu0 %v3095
  %6077 = vmatprep.subr.bf16.mxu0 0
  %6078 = vmatpush2.bf16.msra.mxu0 0
  %6079 = vmatprep.subr.bf16.mxu0 0
  %6080 = vmatpush2.bf16.msra.mxu0 0
  %6081 = vmatprep.subr.bf16.mxu0 0
  %6082 = vmatpush2.bf16.msra.mxu0 0
  %6083 = vmatprep.subr.bf16.mxu0 0
  %6084 = vmatpush2.bf16.msra.mxu0 0
  %6085 = vmatprep.subr.bf16.mxu0 0
  %6086 = vmatpush2.bf16.msra.mxu0 0
  %6087 = vmatprep.subr.bf16.mxu0 0
  %6088 = vmatpush2.bf16.msra.mxu0 0
  %6089 = vmatprep.subr.bf16.mxu0 0
  %6090 = vmatpush2.bf16.msra.mxu0 0
  %6091 = vmatprep.subr.bf16.mxu0 0
  %6092 = vmatpush2.bf16.msra.mxu0 0
  %6093 = vmatprep.mubr.bf16.mxu0 0
  %6094 = vmatmul.mubr.bf16.gmra.mxu0 %v5964
  %v6095 = vpop.f32.mrf.mxu0
  %v6096 = vadd.f32 %v6060, %v6095
  %v6097 = vpop.f32.mrf.mxu0
  %v6098 = vpop.f32.mrf.mxu0
  %v6099 = vpop.f32.mrf.mxu0
  %6100 = vdwg.mxu0
  %v6101 = vadd.f32 %v6096, %v3139
  %v6102 = vtanh.pop %v6101
  %v6103 = vpack.c.bf16 %v6102, %v6102
  %v6105 = vsel %vm2685, %v6103, 0
  %6107 = vmatprep.subr.bf16.mxu0 0
  %6108 = vmatpush1.bf16.msra.mxu0 0
  %6109 = vmatprep.subr.bf16.mxu0 0
  %6110 = vmatpush1.bf16.msra.mxu0 0
  %6111 = vmatprep.subr.bf16.mxu0 0
  %6112 = vmatpush1.bf16.msra.mxu0 0
  %6113 = vmatprep.subr.bf16.mxu0 0
  %6114 = vmatpush1.bf16.msra.mxu0 0
  %6115 = vmatprep.subr.bf16.mxu0 0
  %6116 = vmatpush1.bf16.msra.mxu0 0
  %6117 = vmatprep.subr.bf16.mxu0 0
  %6118 = vmatpush1.bf16.msra.mxu0 0
  %6119 = vmatprep.subr.bf16.mxu0 0
  %6120 = vmatpush1.bf16.msra.mxu0 %v3157
  %6121 = vmatprep.subr.bf16.mxu0 0
  %6122 = vmatpush1.bf16.msra.mxu0 %v3156
  %6123 = vmatprep.subr.bf16.mxu0 0
  %6124 = vmatpush2.bf16.msra.mxu0 0
  %6125 = vmatprep.subr.bf16.mxu0 0
  %6126 = vmatpush2.bf16.msra.mxu0 0
  %6127 = vmatprep.subr.bf16.mxu0 0
  %6128 = vmatpush2.bf16.msra.mxu0 0
  %6129 = vmatprep.subr.bf16.mxu0 0
  %6130 = vmatpush2.bf16.msra.mxu0 0
  %6131 = vmatprep.subr.bf16.mxu0 0
  %6132 = vmatpush2.bf16.msra.mxu0 0
  %6133 = vmatprep.subr.bf16.mxu0 0
  %6134 = vmatpush2.bf16.msra.mxu0 0
  %6135 = vmatprep.subr.bf16.mxu0 0
  %6136 = vmatpush2.bf16.msra.mxu0 0
  %6137 = vmatprep.subr.bf16.mxu0 0
  %6138 = vmatpush2.bf16.msra.mxu0 0
  %6139 = vmatprep.mubr.bf16.mxu0 0
  %6140 = vmatmul.mubr.bf16.gmra.mxu0 %v6105
  %v6141 = vpop.f32.mrf.mxu0
  %v6142 = vadd.f32 %v3147, %v6141
  %v6143 = vpop.f32.mrf.mxu0
  %v6144 = vpop.f32.mrf.mxu0
  %v6145 = vpop.f32.mrf.mxu0
  %6146 = vdwg.mxu0
  %v6147 = vsel %vm3203, %v6142, -inf
  %6148 = vmax.xlane.f32.xlu0 %v6147
  %v6149 = vpop.xlane.xlu0 %6148
  %v6150 = vsub.f32 %v6142, %v6149
  %v6151 = vmul.f32 %v6150, 1.442695
  %v6152 = vpow.pop %v6151
  %v6153 = vsel %vm3203, %v6152, 0.0
  %6154 = vadd.xlane.f32.xlu0 %v6153
  %v6155 = vpop.xlane.xlu0 %6154
  %v6156 = vrcp.pop %v6155
  %vm6157 = vcmp.ge.f32.partialorder %v6142, %v6149
  %v6158 = vsel %vm6157, %v18, 64
  %v6159 = vsel %vm3203, %v6158, 2147483647
  %v6160 = vand.u32 %v6159, 65535
  %v6161 = vshra.s32 %v6159, 16
  %v6162 = vcvt.s32.f32 %v6160
  %v6163 = vcvt.s32.f32 %v6161
  %6164 = vmin.xlane.f32.xlu0 %v6163
  %v6165 = vpop.xlane.xlu0 %6164
  %vm6166 = vcmp.eq.f32.partialorder %v6163, %v6165
  %v6167 = vsel %vm6166, %v6162, inf
  %6168 = vmin.xlane.f32.xlu0 %v6167
  %v6169 = vpop.xlane.xlu0 %6168
  %v6170 = vcvt.f32.s32 %v6169
  %v6171 = vcvt.f32.s32 %v6165
  %v6172 = vshll.u32 %v6171, 16
  %v6173 = vadd.s32 %v6172, %v6170
  %vm6174 = vcmp.eq.s32.totalorder %v18, 8
  %v6175 = vsel %vm6174, %v6173, %v5807
  %v6176 = vsel %vm6174, %v6156, %v5808
  %vm6177 = vcmp.eq.s32.totalorder %v18, %v6173
  %v6178 = vsel %vm6177, 1, 0
  %v6179 = vcvt.s32.f32 %v6178
  %v6180 = vpack.c.bf16 %v6179, %v6179
  %6181 = vrot.lane.b32.xlu0 %v5885, 32
  %v6182 = vpop.permute.xlu0 %6181
  %v6185 = vsel %vm37, %v6180, %v6182
  %v6186 = vsel %vm2791, %v6185, 0
  %6188 = vmatprep.subr.bf16.mxu0 0
  %6189 = vmatpush1.bf16.msra.mxu0 0
  %6190 = vmatprep.subr.bf16.mxu0 0
  %6191 = vmatpush1.bf16.msra.mxu0 0
  %6192 = vmatprep.subr.bf16.mxu0 0
  %6193 = vmatpush1.bf16.msra.mxu0 %v2784
  %6194 = vmatprep.subr.bf16.mxu0 0
  %6195 = vmatpush1.bf16.msra.mxu0 %v2783
  %6196 = vmatprep.subr.bf16.mxu0 0
  %6197 = vmatpush1.bf16.msra.mxu0 %v2782
  %6198 = vmatprep.subr.bf16.mxu0 0
  %6199 = vmatpush1.bf16.msra.mxu0 %v2781
  %6200 = vmatprep.subr.bf16.mxu0 0
  %6201 = vmatpush1.bf16.msra.mxu0 %v2780
  %6202 = vmatprep.subr.bf16.mxu0 0
  %6203 = vmatpush1.bf16.msra.mxu0 %v2779
  %6204 = vmatprep.subr.bf16.mxu0 0
  %6205 = vmatpush2.bf16.msra.mxu0 0
  %6206 = vmatprep.subr.bf16.mxu0 0
  %6207 = vmatpush2.bf16.msra.mxu0 0
  %6208 = vmatprep.subr.bf16.mxu0 0
  %6209 = vmatpush2.bf16.msra.mxu0 0
  %6210 = vmatprep.subr.bf16.mxu0 0
  %6211 = vmatpush2.bf16.msra.mxu0 0
  %6212 = vmatprep.subr.bf16.mxu0 0
  %6213 = vmatpush2.bf16.msra.mxu0 0
  %6214 = vmatprep.subr.bf16.mxu0 0
  %6215 = vmatpush2.bf16.msra.mxu0 0
  %6216 = vmatprep.subr.bf16.mxu0 0
  %6217 = vmatpush2.bf16.msra.mxu0 0
  %6218 = vmatprep.subr.bf16.mxu0 0
  %6219 = vmatpush2.bf16.msra.mxu0 0
  %6220 = vmatprep.mubr.bf16.mxu0 0
  %6221 = vmatmul.mubr.bf16.gmra.mxu0 %v6186
  %v6222 = vpop.f32.mrf.mxu0
  %v6223 = vadd.f32 %v2754, %v6222
  %v6224 = vpop.f32.mrf.mxu0
  %v6225 = vpop.f32.mrf.mxu0
  %v6226 = vpop.f32.mrf.mxu0
  %6227 = vdwg.mxu0
  %v6228 = vxor.u32 %v6223, 2147483648
  %v6229 = vmul.f32 %v6228, 1.442695
  %v6230 = vpow.pop %v6229
  %v6231 = vadd.f32 %v6230, 1.0
  %v6232 = vrcp.pop %v6231
  %v6233 = vmul.f32 1.0, %v6232
  %6235 = vrot.lane.b32.xlu0 %v6223, 32
  %v6236 = vpop.permute.xlu0 %6235
  %v6238 = vmul.f32 %v6233, %v6236
  %6240 = vrot.lane.b32.xlu0 %v6238, 64
  %v6241 = vpop.permute.xlu0 %6240
  %v6243 = vadd.f32 %v6223, %v6241
  %v6244 = vtanh.pop %v6243
  %v6245 = vsub.f32 1.0, %v6233
  %6247 = vrot.lane.b32.xlu0 %v6244, 96
  %v6248 = vpop.permute.xlu0 %6247
  %v6250 = vmul.f32 %v6245, %v6248
  %v6251 = vmul.f32 %v6233, %v5884
  %v6252 = vadd.f32 %v6250, %v6251
  %v6253 = vpack.c.bf16 %v6252, %v6252
  %6255 = vrot.lane.b32.xlu0 %v6253, 96
  %v6256 = vpop.permute.xlu0 %6255
  %v6259 = vsel %vm2685, %v6256, %v5959
  %v6260 = vsel %vm37, %v6259, 0
  %6262 = vmatprep.subr.bf16.mxu0 0
  %6263 = vmatpush1.bf16.msra.mxu0 0
  %6264 = vmatprep.subr.bf16.mxu0 0
  %6265 = vmatpush1.bf16.msra.mxu0 0
  %6266 = vmatprep.subr.bf16.mxu0 0
  %6267 = vmatpush1.bf16.msra.mxu0 0
  %6268 = vmatprep.subr.bf16.mxu0 0
  %6269 = vmatpush1.bf16.msra.mxu0 0
  %6270 = vmatprep.subr.bf16.mxu0 0
  %6271 = vmatpush1.bf16.msra.mxu0 %v2900
  %6272 = vmatprep.subr.bf16.mxu0 0
  %6273 = vmatpush1.bf16.msra.mxu0 %v2899
  %6274 = vmatprep.subr.bf16.mxu0 0
  %6275 = vmatpush1.bf16.msra.mxu0 %v2898
  %6276 = vmatprep.subr.bf16.mxu0 0
  %6277 = vmatpush1.bf16.msra.mxu0 %v2897
  %6278 = vmatprep.subr.bf16.mxu0 0
  %6279 = vmatpush2.bf16.msra.mxu0 0
  %6280 = vmatprep.subr.bf16.mxu0 0
  %6281 = vmatpush2.bf16.msra.mxu0 0
  %6282 = vmatprep.subr.bf16.mxu0 0
  %6283 = vmatpush2.bf16.msra.mxu0 0
  %6284 = vmatprep.subr.bf16.mxu0 0
  %6285 = vmatpush2.bf16.msra.mxu0 0
  %6286 = vmatprep.subr.bf16.mxu0 0
  %6287 = vmatpush2.bf16.msra.mxu0 0
  %6288 = vmatprep.subr.bf16.mxu0 0
  %6289 = vmatpush2.bf16.msra.mxu0 0
  %6290 = vmatprep.subr.bf16.mxu0 0
  %6291 = vmatpush2.bf16.msra.mxu0 0
  %6292 = vmatprep.subr.bf16.mxu0 0
  %6293 = vmatpush2.bf16.msra.mxu0 0
  %6294 = vmatprep.mubr.bf16.mxu0 0
  %6295 = vmatmul.mubr.bf16.gmra.mxu0 %v6260
  %v6296 = vpop.f32.mrf.mxu0
  %v6297 = vadd.f32 %v2880, %v6296
  %v6298 = vpop.f32.mrf.mxu0
  %v6299 = vpop.f32.mrf.mxu0
  %v6300 = vpop.f32.mrf.mxu0
  %6301 = vdwg.mxu0
  %v6302 = vxor.u32 %v6297, 2147483648
  %v6303 = vmul.f32 %v6302, 1.442695
  %v6304 = vpow.pop %v6303
  %v6305 = vadd.f32 %v6304, 1.0
  %v6306 = vrcp.pop %v6305
  %v6307 = vmul.f32 1.0, %v6306
  %6309 = vrot.lane.b32.xlu0 %v6297, 32
  %v6310 = vpop.permute.xlu0 %6309
  %v6312 = vmul.f32 %v6307, %v6310
  %6314 = vrot.lane.b32.xlu0 %v6312, 64
  %v6315 = vpop.permute.xlu0 %6314
  %v6317 = vadd.f32 %v6297, %v6315
  %v6318 = vtanh.pop %v6317
  %v6319 = vsub.f32 1.0, %v6307
  %6321 = vrot.lane.b32.xlu0 %v6318, 96
  %v6322 = vpop.permute.xlu0 %6321
  %v6324 = vmul.f32 %v6319, %v6322
  %v6325 = vmul.f32 %v6307, %v5958
  %v6326 = vadd.f32 %v6324, %v6325
  %v6327 = vpack.c.bf16 %v6326, %v6326
  %6329 = vrot.lane.b32.xlu0 %v6327, 96
  %v6330 = vpop.permute.xlu0 %6329
  %v6332 = vsel %vm2685, %v6330, 0
  %6334 = vmatprep.subr.bf16.mxu0 0
  %6335 = vmatpush1.bf16.msra.mxu0 0
  %6336 = vmatprep.subr.bf16.mxu0 0
  %6337 = vmatpush1.bf16.msra.mxu0 0
  %6338 = vmatprep.subr.bf16.mxu0 0
  %6339 = vmatpush1.bf16.msra.mxu0 0
  %6340 = vmatprep.subr.bf16.mxu0 0
  %6341 = vmatpush1.bf16.msra.mxu0 0
  %6342 = vmatprep.subr.bf16.mxu0 0
  %6343 = vmatpush1.bf16.msra.mxu0 0
  %6344 = vmatprep.subr.bf16.mxu0 0
  %6345 = vmatpush1.bf16.msra.mxu0 0
  %6346 = vmatprep.subr.bf16.mxu0 0
  %6347 = vmatpush1.bf16.msra.mxu0 %v2667
  %6348 = vmatprep.subr.bf16.mxu0 0
  %6349 = vmatpush1.bf16.msra.mxu0 %v2666
  %6350 = vmatprep.subr.bf16.mxu0 0
  %6351 = vmatpush2.bf16.msra.mxu0 0
  %6352 = vmatprep.subr.bf16.mxu0 0
  %6353 = vmatpush2.bf16.msra.mxu0 0
  %6354 = vmatprep.subr.bf16.mxu0 0
  %6355 = vmatpush2.bf16.msra.mxu0 0
  %6356 = vmatprep.subr.bf16.mxu0 0
  %6357 = vmatpush2.bf16.msra.mxu0 0
  %6358 = vmatprep.subr.bf16.mxu0 0
  %6359 = vmatpush2.bf16.msra.mxu0 0
  %6360 = vmatprep.subr.bf16.mxu0 0
  %6361 = vmatpush2.bf16.msra.mxu0 0
  %6362 = vmatprep.subr.bf16.mxu0 0
  %6363 = vmatpush2.bf16.msra.mxu0 0
  %6364 = vmatprep.subr.bf16.mxu0 0
  %6365 = vmatpush2.bf16.msra.mxu0 0
  %6366 = vmatprep.mubr.bf16.mxu0 0
  %6367 = vmatmul.mubr.bf16.gmra.mxu0 %v6332
  %v6368 = vpop.f32.mrf.mxu0
  %v6369 = vadd.f32 0.0, %v6368
  %v6370 = vpop.f32.mrf.mxu0
  %v6371 = vpop.f32.mrf.mxu0
  %v6372 = vpop.f32.mrf.mxu0
  %6373 = vdwg.mxu0
  %v6374 = vsel %vm3022, %v6369, -inf
  %6375 = vmax.xlane.f32.xlu0 %v6374
  %v6376 = vpop.xlane.xlu0 %6375
  %v6377 = vsub.f32 %v6369, %v6376
  %v6378 = vmul.f32 %v6377, 1.442695
  %v6379 = vpow.pop %v6378
  %v6380 = vsel %vm3022, %v6379, 0.0
  %6381 = vadd.xlane.f32.xlu0 %v6380
  %v6382 = vpop.xlane.xlu0 %6381
  %v6383 = vrcp.pop %v6382
  %v6384 = vpack.c.bf16 %v6379, %v6379
  %v6386 = vsel %vm3034, %v6384, 0
  %6388 = vmatprep.subr.bf16.mxu0 0
  %6389 = vmatpush1.bf16.msra.mxu0 0
  %6390 = vmatprep.subr.bf16.mxu0 0
  %6391 = vmatpush1.bf16.msra.mxu0 0
  %6392 = vmatprep.subr.bf16.mxu0 0
  %6393 = vmatpush1.bf16.msra.mxu0 0
  %6394 = vmatprep.subr.bf16.mxu0 0
  %6395 = vmatpush1.bf16.msra.mxu0 0
  %6396 = vmatprep.subr.bf16.mxu0 0
  %6397 = vmatpush1.bf16.msra.mxu0 0
  %6398 = vmatprep.subr.bf16.mxu0 0
  %6399 = vmatpush1.bf16.msra.mxu0 0
  %6400 = vmatprep.subr.bf16.mxu0 0
  %6401 = vmatpush1.bf16.msra.mxu0 0
  %6402 = vmatprep.subr.bf16.mxu0 0
  %6403 = vmatpush1.bf16.msra.mxu0 %v3040
  %6404 = vmatprep.subr.bf16.mxu0 0
  %6405 = vmatpush2.bf16.msra.mxu0 0
  %6406 = vmatprep.subr.bf16.mxu0 0
  %6407 = vmatpush2.bf16.msra.mxu0 0
  %6408 = vmatprep.subr.bf16.mxu0 0
  %6409 = vmatpush2.bf16.msra.mxu0 0
  %6410 = vmatprep.subr.bf16.mxu0 0
  %6411 = vmatpush2.bf16.msra.mxu0 0
  %6412 = vmatprep.subr.bf16.mxu0 0
  %6413 = vmatpush2.bf16.msra.mxu0 0
  %6414 = vmatprep.subr.bf16.mxu0 0
  %6415 = vmatpush2.bf16.msra.mxu0 0
  %6416 = vmatprep.subr.bf16.mxu0 0
  %6417 = vmatpush2.bf16.msra.mxu0 0
  %6418 = vmatprep.subr.bf16.mxu0 0
  %6419 = vmatpush2.bf16.msra.mxu0 0
  %6420 = vmatprep.mubr.bf16.mxu0 0
  %6421 = vmatmul.mubr.bf16.gmra.mxu0 %v6386
  %v6422 = vpop.f32.mrf.mxu0
  %v6423 = vadd.f32 0.0, %v6422
  %v6424 = vpop.f32.mrf.mxu0
  %v6425 = vpop.f32.mrf.mxu0
  %v6426 = vpop.f32.mrf.mxu0
  %6427 = vdwg.mxu0
  %v6428 = vmul.f32 %v6423, %v6383
  %6429 = vmatprep.subr.bf16.mxu0 0
  %6430 = vmatpush1.bf16.msra.mxu0 0
  %6431 = vmatprep.subr.bf16.mxu0 0
  %6432 = vmatpush1.bf16.msra.mxu0 0
  %6433 = vmatprep.subr.bf16.mxu0 0
  %6434 = vmatpush1.bf16.msra.mxu0 0
  %6435 = vmatprep.subr.bf16.mxu0 0
  %6436 = vmatpush1.bf16.msra.mxu0 0
  %6437 = vmatprep.subr.bf16.mxu0 0
  %6438 = vmatpush1.bf16.msra.mxu0 0
  %6439 = vmatprep.subr.bf16.mxu0 0
  %6440 = vmatpush1.bf16.msra.mxu0 0
  %6441 = vmatprep.subr.bf16.mxu0 0
  %6442 = vmatpush1.bf16.msra.mxu0 %v3096
  %6443 = vmatprep.subr.bf16.mxu0 0
  %6444 = vmatpush1.bf16.msra.mxu0 %v3095
  %6445 = vmatprep.subr.bf16.mxu0 0
  %6446 = vmatpush2.bf16.msra.mxu0 0
  %6447 = vmatprep.subr.bf16.mxu0 0
  %6448 = vmatpush2.bf16.msra.mxu0 0
  %6449 = vmatprep.subr.bf16.mxu0 0
  %6450 = vmatpush2.bf16.msra.mxu0 0
  %6451 = vmatprep.subr.bf16.mxu0 0
  %6452 = vmatpush2.bf16.msra.mxu0 0
  %6453 = vmatprep.subr.bf16.mxu0 0
  %6454 = vmatpush2.bf16.msra.mxu0 0
  %6455 = vmatprep.subr.bf16.mxu0 0
  %6456 = vmatpush2.bf16.msra.mxu0 0
  %6457 = vmatprep.subr.bf16.mxu0 0
  %6458 = vmatpush2.bf16.msra.mxu0 0
  %6459 = vmatprep.subr.bf16.mxu0 0
  %6460 = vmatpush2.bf16.msra.mxu0 0
  %6461 = vmatprep.mubr.bf16.mxu0 0
  %6462 = vmatmul.mubr.bf16.gmra.mxu0 %v6332
  %v6463 = vpop.f32.mrf.mxu0
  %v6464 = vadd.f32 %v6428, %v6463
  %v6465 = vpop.f32.mrf.mxu0
  %v6466 = vpop.f32.mrf.mxu0
  %v6467 = vpop.f32.mrf.mxu0
  %6468 = vdwg.mxu0
  %v6469 = vadd.f32 %v6464, %v3139
  %v6470 = vtanh.pop %v6469
  %v6471 = vpack.c.bf16 %v6470, %v6470
  %v6473 = vsel %vm2685, %v6471, 0
  %6475 = vmatprep.subr.bf16.mxu0 0
  %6476 = vmatpush1.bf16.msra.mxu0 0
  %6477 = vmatprep.subr.bf16.mxu0 0
  %6478 = vmatpush1.bf16.msra.mxu0 0
  %6479 = vmatprep.subr.bf16.mxu0 0
  %6480 = vmatpush1.bf16.msra.mxu0 0
  %6481 = vmatprep.subr.bf16.mxu0 0
  %6482 = vmatpush1.bf16.msra.mxu0 0
  %6483 = vmatprep.subr.bf16.mxu0 0
  %6484 = vmatpush1.bf16.msra.mxu0 0
  %6485 = vmatprep.subr.bf16.mxu0 0
  %6486 = vmatpush1.bf16.msra.mxu0 0
  %6487 = vmatprep.subr.bf16.mxu0 0
  %6488 = vmatpush1.bf16.msra.mxu0 %v3157
  %6489 = vmatprep.subr.bf16.mxu0 0
  %6490 = vmatpush1.bf16.msra.mxu0 %v3156
  %6491 = vmatprep.subr.bf16.mxu0 0
  %6492 = vmatpush2.bf16.msra.mxu0 0
  %6493 = vmatprep.subr.bf16.mxu0 0
  %6494 = vmatpush2.bf16.msra.mxu0 0
  %6495 = vmatprep.subr.bf16.mxu0 0
  %6496 = vmatpush2.bf16.msra.mxu0 0
  %6497 = vmatprep.subr.bf16.mxu0 0
  %6498 = vmatpush2.bf16.msra.mxu0 0
  %6499 = vmatprep.subr.bf16.mxu0 0
  %6500 = vmatpush2.bf16.msra.mxu0 0
  %6501 = vmatprep.subr.bf16.mxu0 0
  %6502 = vmatpush2.bf16.msra.mxu0 0
  %6503 = vmatprep.subr.bf16.mxu0 0
  %6504 = vmatpush2.bf16.msra.mxu0 0
  %6505 = vmatprep.subr.bf16.mxu0 0
  %6506 = vmatpush2.bf16.msra.mxu0 0
  %6507 = vmatprep.mubr.bf16.mxu0 0
  %6508 = vmatmul.mubr.bf16.gmra.mxu0 %v6473
  %v6509 = vpop.f32.mrf.mxu0
  %v6510 = vadd.f32 %v3147, %v6509
  %v6511 = vpop.f32.mrf.mxu0
  %v6512 = vpop.f32.mrf.mxu0
  %v6513 = vpop.f32.mrf.mxu0
  %6514 = vdwg.mxu0
  %v6515 = vsel %vm3203, %v6510, -inf
  %6516 = vmax.xlane.f32.xlu0 %v6515
  %v6517 = vpop.xlane.xlu0 %6516
  %v6518 = vsub.f32 %v6510, %v6517
  %v6519 = vmul.f32 %v6518, 1.442695
  %v6520 = vpow.pop %v6519
  %v6521 = vsel %vm3203, %v6520, 0.0
  %6522 = vadd.xlane.f32.xlu0 %v6521
  %v6523 = vpop.xlane.xlu0 %6522
  %v6524 = vrcp.pop %v6523
  %vm6525 = vcmp.ge.f32.partialorder %v6510, %v6517
  %v6526 = vsel %vm6525, %v18, 64
  %v6527 = vsel %vm3203, %v6526, 2147483647
  %v6528 = vand.u32 %v6527, 65535
  %v6529 = vshra.s32 %v6527, 16
  %v6530 = vcvt.s32.f32 %v6528
  %v6531 = vcvt.s32.f32 %v6529
  %6532 = vmin.xlane.f32.xlu0 %v6531
  %v6533 = vpop.xlane.xlu0 %6532
  %vm6534 = vcmp.eq.f32.partialorder %v6531, %v6533
  %v6535 = vsel %vm6534, %v6530, inf
  %6536 = vmin.xlane.f32.xlu0 %v6535
  %v6537 = vpop.xlane.xlu0 %6536
  %v6538 = vcvt.f32.s32 %v6537
  %v6539 = vcvt.f32.s32 %v6533
  %v6540 = vshll.u32 %v6539, 16
  %v6541 = vadd.s32 %v6540, %v6538
  %vm6542 = vcmp.eq.s32.totalorder %v18, 9
  %v6543 = vsel %vm6542, %v6541, %v6175
  %v6544 = vsel %vm6542, %v6524, %v6176
  %6545 = vst [vmem:[%s3] sm:$0x1] %v6543
  %6546 = vst [vmem:[%s4] sm:$0x1] %v6544
  // Predicated region
  $region14: #{greedy_search_decode.1} parent=0 // pred_check
    _
  $region15: #{greedy_search_decode.1} parent=0 // pred_check_branch
    %6548 = sbr.rel (0) target = $region17
  $region16: #{greedy_search_decode.1} parent=0 // pred_region
    _
  $region17: #{greedy_search_decode.1} parent=0 // pred_fallthru
    _
  // Predicated region
  $region18: #{greedy_search_decode.1} parent=0 // pred_check
    _
  $region19: #{greedy_search_decode.1} parent=0 // pred_check_branch
    %6550 = sbr.rel (0) target = $region21
  $region20: #{greedy_search_decode.1} parent=0 // pred_region
    _
  $region21: #{greedy_search_decode.1} parent=0 // pred_fallthru
    _
  // Predicated region
  $region22: #{greedy_search_decode.1} parent=0 // pred_check
    _
  $region23: #{greedy_search_decode.1} parent=0 // pred_check_branch
    %6552 = sbr.rel (0) target = $region25
  $region24: #{greedy_search_decode.1} parent=0 // pred_region
    _
  $region25: #{greedy_search_decode.1} parent=0 // pred_fallthru
    _
  // Predicated region
  $region26: #{greedy_search_decode.1} parent=0 // pred_check
    _
  $region27: #{greedy_search_decode.1} parent=0 // pred_check_branch
    %6554 = sbr.rel (0) target = $region29
  $region28: #{greedy_search_decode.1} parent=0 // pred_region
    _
  $region29: #{greedy_search_decode.1} parent=0 // pred_fallthru
    _

</llo_original>
